<compile_context>
chip_gen: v7x
topology: tpu7x:2x2x1
jax: 0.10.0
libtpu: 0.0.40
codegen_flags: <defaults>
</compile_context>

<pallas_src>
import functools

import jax
import jax.numpy as jnp
from jax import lax
from jax.experimental import pallas as pl
from jax.experimental.pallas import tpu as pltpu

EPS = 1e-5  # BatchNorm2d default eps


# ---------------------------------------------------------------------------
# Fused BlockBBranch kernel (one image per grid step)
# ---------------------------------------------------------------------------
def _shift_rows(v, s):
    """out[r] = v[r + s] if 0 <= r + s < R else 0   (static shift s)."""
    if s == 0:
        return v
    R, C = v.shape
    z = jnp.zeros((abs(s), C), v.dtype)
    if s > 0:
        return jnp.concatenate([v[s:], z], axis=0)
    return jnp.concatenate([z, v[:R + s]], axis=0)


def _blockb_kernel(x_ref, wb_ref, sb_ref, bb_ref,
                   w17_ref, s17_ref, b17_ref,
                   w71_ref, s71_ref, b71_ref,
                   ws_ref, ss_ref, bs_ref,
                   o_ref, *, H, W):
    HW = H * W
    bf16 = jnp.bfloat16
    f32 = jnp.float32

    x = x_ref[0]                                                # (HW, 1152) bf16

    # ---- fused branch0-stage0 (1152->128) + branch1 (1152->192) 1x1 + BN + ReLU
    y = jnp.dot(x, wb_ref[...], preferred_element_type=f32)    # (HW, 320)
    y = jnp.maximum(y * sb_ref[...] + bb_ref[...], 0.0)
    t0 = y[:, :128]                                            # branch0 stage0 (f32)
    x1 = y[:, 128:]                                            # branch1 output (192, f32)

    # ---- branch0 stage1: (1,7) conv 128->160, pad W by 3, as ONE K=896 matmul
    w_pos = lax.broadcasted_iota(jnp.int32, (HW, 1), 0) % W    # w coord of each row
    cols = []
    for k in range(7):
        s = k - 3                                              # shift along W
        sh = _shift_rows(t0, s)
        if s != 0:
            valid = jnp.logical_and(w_pos + s >= 0, w_pos + s < W)
            sh = jnp.where(valid, sh, 0.0)
        cols.append(sh.astype(bf16))
    patch = jnp.concatenate(cols, axis=-1)                     # (HW, 896)
    y = jnp.dot(patch, w17_ref[...], preferred_element_type=f32)
    t1 = jnp.maximum(y * s17_ref[...] + b17_ref[...], 0.0)     # (HW, 160) f32

    # ---- branch0 stage2: (7,1) conv 160->192, pad H by 3, as ONE K=1120 matmul
    cols = []
    for k in range(7):
        s = (k - 3) * W                                        # shift along H (rows of W)
        cols.append(_shift_rows(t1, s).astype(bf16))           # boundary rows -> zeros
    patch = jnp.concatenate(cols, axis=-1)                     # (HW, 1120)
    y = jnp.dot(patch, w71_ref[...], preferred_element_type=f32)
    x0 = jnp.maximum(y * s71_ref[...] + b71_ref[...], 0.0)     # (HW, 192) f32

    # ---- cat([x0, x1]) + stem 1x1 (384->1152) + BN (no ReLU) ----
    cat = jnp.concatenate([x0, x1], axis=-1).astype(bf16)      # (HW, 384)
    y = jnp.dot(cat, ws_ref[...], preferred_element_type=f32)  # (HW, 1152)
    o_ref[0] = (y * ss_ref[...] + bs_ref[...]).astype(o_ref.dtype)


# ---------------------------------------------------------------------------
# Wrapper: NCHW in/out (PyTorch interface parity), single pallas_call
# ---------------------------------------------------------------------------
def block_b_branch_forward(x_nchw, kp):
    N, C, H, W = x_nchw.shape
    assert C == 1152
    HW = H * W
    # NHWC, flattened spatial, bf16 operands for the MXU.
    # TODO(synk): in a full network keep NHWC end-to-end to drop these transposes.
    x = jnp.transpose(x_nchw, (0, 2, 3, 1)).reshape(N, HW, C).astype(jnp.bfloat16)

    out_flat = pl.pallas_call(
        functools.partial(_blockb_kernel, H=H, W=W),
        out_shape=jax.ShapeDtypeStruct((N, HW, 1152), jnp.float32),
        grid=(N,),
        in_specs=[
            pl.BlockSpec((1, HW, 1152), lambda n: (n, 0, 0)),   # x (per image)
            pl.BlockSpec((1152, 320), lambda n: (0, 0)),        # fused 1x1 weights
            pl.BlockSpec((1, 320), lambda n: (0, 0)),           # fused 1x1 BN scale
            pl.BlockSpec((1, 320), lambda n: (0, 0)),           # fused 1x1 BN bias
            pl.BlockSpec((896, 160), lambda n: (0, 0)),         # (1,7) im2col weight
            pl.BlockSpec((1, 160), lambda n: (0, 0)),
            pl.BlockSpec((1, 160), lambda n: (0, 0)),
            pl.BlockSpec((1120, 192), lambda n: (0, 0)),        # (7,1) im2col weight
            pl.BlockSpec((1, 192), lambda n: (0, 0)),
            pl.BlockSpec((1, 192), lambda n: (0, 0)),
            pl.BlockSpec((384, 1152), lambda n: (0, 0)),        # stem 1x1 weight
            pl.BlockSpec((1, 1152), lambda n: (0, 0)),
            pl.BlockSpec((1, 1152), lambda n: (0, 0)),
        ],
        out_specs=pl.BlockSpec((1, HW, 1152), lambda n: (n, 0, 0)),
        compiler_params=pltpu.CompilerParams(dimension_semantics=("parallel",)),
    )(x, kp["wb"], kp["sb"], kp["bb"],
      kp["w17"], kp["s17"], kp["b17"],
      kp["w71"], kp["s71"], kp["b71"],
      kp["ws"], kp["ss"], kp["bs"])

    return jnp.transpose(out_flat.reshape(N, H, W, 1152), (0, 3, 1, 2))


# ---------------------------------------------------------------------------
# Deterministic synthetic parameters (conv: HWIO; BN folded to scale/bias)
# ---------------------------------------------------------------------------
def init_conv(key, kh, kw, cin, cout):
    fan_in = kh * kw * cin
    return jax.random.normal(key, (kh, kw, cin, cout), jnp.float32) / jnp.sqrt(
        jnp.float32(fan_in))


def init_bn(key, c):
    k1, k2, k3, k4 = jax.random.split(key, 4)
    gamma = 1.0 + 0.1 * jax.random.normal(k1, (c,), jnp.float32)
    beta = 0.1 * jax.random.normal(k2, (c,), jnp.float32)
    mean = 0.1 * jax.random.normal(k3, (c,), jnp.float32)
    var = jax.random.uniform(k4, (c,), jnp.float32, minval=0.5, maxval=1.5)
    scale = gamma / jnp.sqrt(var + EPS)
    bias = beta - mean * scale
    return scale.reshape(1, c), bias.reshape(1, c)


def make_params(key):
    ks = jax.random.split(key, 10)
    p = {}
    p["b0c0_w"] = init_conv(ks[0], 1, 1, 1152, 128)
    p["b0c0_s"], p["b0c0_b"] = init_bn(ks[1], 128)
    p["b0c1_w"] = init_conv(ks[2], 1, 7, 128, 160)
    p["b0c1_s"], p["b0c1_b"] = init_bn(ks[3], 160)
    p["b0c2_w"] = init_conv(ks[4], 7, 1, 160, 192)
    p["b0c2_s"], p["b0c2_b"] = init_bn(ks[5], 192)
    p["b1_w"] = init_conv(ks[6], 1, 1, 1152, 192)
    p["b1_s"], p["b1_b"] = init_bn(ks[7], 192)
    p["stem_w"] = init_conv(ks[8], 1, 1, 384, 1152)
    p["stem_s"], p["stem_b"] = init_bn(ks[9], 1152)
    return p


def prepare_kernel_params(raw):
    """Fold weights into the fused / im2col layouts the kernel consumes (bf16)."""
    bf16 = jnp.bfloat16
    wb = jnp.concatenate([raw["b0c0_w"][0, 0], raw["b1_w"][0, 0]], axis=1)  # (1152,320)
    sb = jnp.concatenate([raw["b0c0_s"], raw["b1_s"]], axis=1)
    bb = jnp.concatenate([raw["b0c0_b"], raw["b1_b"]], axis=1)
    w17 = raw["b0c1_w"][0].reshape(7 * 128, 160)        # (kw, ci) major -> (896,160)
    w71 = raw["b0c2_w"][:, 0].reshape(7 * 160, 192)     # (kh, ci) major -> (1120,192)
    ws = raw["stem_w"][0, 0]                            # (384, 1152)
    return dict(
        wb=wb.astype(bf16), sb=sb, bb=bb,
        w17=w17.astype(bf16), s17=raw["b0c1_s"], b17=raw["b0c1_b"],
        w71=w71.astype(bf16), s71=raw["b0c2_s"], b71=raw["b0c2_b"],
        ws=ws.astype(bf16), ss=raw["stem_s"], bs=raw["stem_b"])


# ---------------------------------------------------------------------------
# Pure-JAX reference (same bf16 operand / f32 accumulate discipline)
# ---------------------------------------------------------------------------
def ref_forward(x_nchw, raw):
    dn = ("NHWC", "HWIO", "NHWC")
    x = jnp.transpose(x_nchw, (0, 2, 3, 1)).astype(jnp.float32)

    def cbr(z, w, scale, bias, pad, relu=True):
        y = lax.conv_general_dilated(
            z.astype(jnp.bfloat16), w.astype(jnp.bfloat16), (1, 1), pad,
            dimension_numbers=dn, preferred_element_type=jnp.float32)
        y = y * scale.reshape(1, 1, 1, -1) + bias.reshape(1, 1, 1, -1)
        return jnp.maximum(y, 0.0) if relu else y

    t = cbr(x, raw["b0c0_w"], raw["b0c0_s"], raw["b0c0_b"], "VALID")
    t = cbr(t, raw["b0c1_w"], raw["b0c1_s"], raw["b0c1_b"], ((0, 0), (3, 3)))
    x0 = cbr(t, raw["b0c2_w"], raw["b0c2_s"], raw["b0c2_b"], ((3, 3), (0, 0)))
    x1 = cbr(x, raw["b1_w"], raw["b1_s"], raw["b1_b"], "VALID")
    out = jnp.concatenate([x0, x1], axis=-1)
    out = cbr(out, raw["stem_w"], raw["stem_s"], raw["stem_b"], "VALID", relu=False)
    return jnp.transpose(out, (0, 3, 1, 2))


if __name__ == "__main__":
    key = jax.random.PRNGKey(0)
    kx, kparam = jax.random.split(key)
    N, C, H, W = 2, 1152, 8, 8                 # 1152 input channels fixed by module
    x = jax.random.normal(kx, (N, C, H, W), jnp.float32)
    raw = make_params(kparam)
    kp = prepare_kernel_params(raw)

    out = jax.block_until_ready(block_b_branch_forward(x, kp))
    ref = jax.block_until_ready(ref_forward(x, raw))

    assert out.shape == (N, C, H, W)
    err = float(jnp.max(jnp.abs(out - ref)))
    assert err < 2e-2, f"max abs err too large: {err}"
    print("KERNEL_OK")
</pallas_src>

<mosaic_0001>
module attributes {stable_mosaic.version = 11 : i64} {
  func.func @_blockb_kernel(%arg0: i32, %arg1: memref<1x64x1152xbf16, #tpu.memory_space<vmem>>, %arg2: memref<1152x320xbf16, #tpu.memory_space<vmem>>, %arg3: memref<1x320xf32, #tpu.memory_space<vmem>>, %arg4: memref<1x320xf32, #tpu.memory_space<vmem>>, %arg5: memref<896x160xbf16, #tpu.memory_space<vmem>>, %arg6: memref<1x160xf32, #tpu.memory_space<vmem>>, %arg7: memref<1x160xf32, #tpu.memory_space<vmem>>, %arg8: memref<1120x192xbf16, #tpu.memory_space<vmem>>, %arg9: memref<1x192xf32, #tpu.memory_space<vmem>>, %arg10: memref<1x192xf32, #tpu.memory_space<vmem>>, %arg11: memref<384x1152xbf16, #tpu.memory_space<vmem>>, %arg12: memref<1x1152xf32, #tpu.memory_space<vmem>>, %arg13: memref<1x1152xf32, #tpu.memory_space<vmem>>, %arg14: memref<1x64x1152xf32, #tpu.memory_space<vmem>>) attributes {dimension_semantics = [#tpu.dimension_semantics<parallel>], iteration_bounds = array<i64: 2>, scalar_prefetch = 0 : i64, scratch_operands = 0 : i64, tpu.core_type = #tpu.core_type<tc>, window_params = [{transform_indices = @transform_0, window_bounds = array<i64: 1, 64, 1152>}, {pipeline_mode = #tpu.pipeline_mode<synchronous>, transform_indices = @transform_1, window_bounds = array<i64: 1152, 320>}, {pipeline_mode = #tpu.pipeline_mode<synchronous>, transform_indices = @transform_2, window_bounds = array<i64: 1, 320>}, {pipeline_mode = #tpu.pipeline_mode<synchronous>, transform_indices = @transform_3, window_bounds = array<i64: 1, 320>}, {pipeline_mode = #tpu.pipeline_mode<synchronous>, transform_indices = @transform_4, window_bounds = array<i64: 896, 160>}, {pipeline_mode = #tpu.pipeline_mode<synchronous>, transform_indices = @transform_5, window_bounds = array<i64: 1, 160>}, {pipeline_mode = #tpu.pipeline_mode<synchronous>, transform_indices = @transform_6, window_bounds = array<i64: 1, 160>}, {pipeline_mode = #tpu.pipeline_mode<synchronous>, transform_indices = @transform_7, window_bounds = array<i64: 1120, 192>}, {pipeline_mode = #tpu.pipeline_mode<synchronous>, transform_indices = @transform_8, window_bounds = array<i64: 1, 192>}, {pipeline_mode = #tpu.pipeline_mode<synchronous>, transform_indices = @transform_9, window_bounds = array<i64: 1, 192>}, {pipeline_mode = #tpu.pipeline_mode<synchronous>, transform_indices = @transform_10, window_bounds = array<i64: 384, 1152>}, {pipeline_mode = #tpu.pipeline_mode<synchronous>, transform_indices = @transform_11, window_bounds = array<i64: 1, 1152>}, {pipeline_mode = #tpu.pipeline_mode<synchronous>, transform_indices = @transform_12, window_bounds = array<i64: 1, 1152>}, {transform_indices = @transform_13, window_bounds = array<i64: 1, 64, 1152>}]} {
    %c0 = arith.constant 0 : index
    %c0_0 = arith.constant 0 : index
    %c0_1 = arith.constant 0 : index
    %0 = vector.load %arg1[%c0, %c0_0, %c0_1] : memref<1x64x1152xbf16, #tpu.memory_space<vmem>>, vector<1x64x1152xbf16>
    %1 = vector.shape_cast %0 : vector<1x64x1152xbf16> to vector<64x1152xbf16>
    %c0_2 = arith.constant 0 : index
    %c0_3 = arith.constant 0 : index
    %2 = vector.load %arg2[%c0_2, %c0_3] : memref<1152x320xbf16, #tpu.memory_space<vmem>>, vector<1152x320xbf16>
    %cst = arith.constant dense<0.000000e+00> : vector<64x320xf32>
    %3 = tpu.matmul %1, %2, %cst {dimension_numbers = #tpu.dot_dimension_numbers<[1], [0], [0], [1], [0, 0, 1, 1], [], []>} : vector<64x1152xbf16>, vector<1152x320xbf16>, vector<64x320xf32> -> vector<64x320xf32>
    %c0_4 = arith.constant 0 : index
    %c0_5 = arith.constant 0 : index
    %4 = vector.load %arg3[%c0_4, %c0_5] : memref<1x320xf32, #tpu.memory_space<vmem>>, vector<1x320xf32>
    %5 = vector.broadcast %4 : vector<1x320xf32> to vector<64x320xf32>
    %6 = arith.mulf %3, %5 : vector<64x320xf32>
    %c0_6 = arith.constant 0 : index
    %c0_7 = arith.constant 0 : index
    %7 = vector.load %arg4[%c0_6, %c0_7] : memref<1x320xf32, #tpu.memory_space<vmem>>, vector<1x320xf32>
    %8 = vector.broadcast %7 : vector<1x320xf32> to vector<64x320xf32>
    %9 = arith.addf %6, %8 : vector<64x320xf32>
    %cst_8 = arith.constant 0.000000e+00 : f32
    %10 = vector.broadcast %cst_8 : f32 to vector<64x320xf32>
    %11 = arith.maximumf %9, %10 : vector<64x320xf32>
    %12 = vector.extract_strided_slice %11 {offsets = [0, 0], sizes = [64, 128], strides = [1, 1]} : vector<64x320xf32> to vector<64x128xf32>
    %13 = vector.extract_strided_slice %11 {offsets = [0, 128], sizes = [64, 192], strides = [1, 1]} : vector<64x320xf32> to vector<64x192xf32>
    %14 = tpu.iota {dimensions = array<i32: 0>} : vector<64x1xi32>
    %c8_i32 = arith.constant 8 : i32
    %c0_i32 = arith.constant 0 : i32
    %15 = arith.cmpi eq, %c8_i32, %c0_i32 : i32
    %c1_i32 = arith.constant 1 : i32
    %16 = arith.select %15, %c1_i32, %c8_i32 : i32
    %17 = vector.broadcast %16 : i32 to vector<64x1xi32>
    %18 = arith.remsi %14, %17 : vector<64x1xi32>
    %c0_i32_9 = arith.constant 0 : i32
    %19 = vector.broadcast %c0_i32_9 : i32 to vector<64x1xi32>
    %20 = arith.cmpi ne, %18, %19 : vector<64x1xi32>
    %c0_i32_10 = arith.constant 0 : i32
    %21 = vector.broadcast %c0_i32_10 : i32 to vector<64x1xi32>
    %22 = arith.cmpi slt, %18, %21 : vector<64x1xi32>
    %c0_i32_11 = arith.constant 0 : i32
    %23 = arith.cmpi slt, %16, %c0_i32_11 : i32
    %24 = vector.broadcast %23 : i1 to vector<64x1xi1>
    %25 = vector.broadcast %24 : vector<64x1xi1> to vector<64x1xi1>
    %26 = arith.xori %22, %25 : vector<64x1xi1>
    %27 = arith.andi %26, %20 : vector<64x1xi1>
    %28 = vector.broadcast %16 : i32 to vector<64x1xi32>
    %29 = arith.addi %18, %28 : vector<64x1xi32>
    %30 = arith.select %27, %29, %18 : vector<64x1xi1>, vector<64x1xi32>
    %cst_12 = arith.constant 0.000000e+00 : f32
    %31 = vector.broadcast %cst_12 : f32 to vector<3x128xf32>
    %32 = vector.extract_strided_slice %12 {offsets = [0, 0], sizes = [61, 128], strides = [1, 1]} : vector<64x128xf32> to vector<61x128xf32>
    %33 = tpu.concatenate %31, %32 in 0 : vector<3x128xf32>, vector<61x128xf32> -> vector<64x128xf32>
    %c-3_i32 = arith.constant -3 : i32
    %34 = vector.broadcast %c-3_i32 : i32 to vector<64x1xi32>
    %35 = arith.addi %30, %34 : vector<64x1xi32>
    %c0_i32_13 = arith.constant 0 : i32
    %36 = vector.broadcast %c0_i32_13 : i32 to vector<64x1xi32>
    %37 = arith.cmpi sge, %35, %36 : vector<64x1xi32>
    %c-3_i32_14 = arith.constant -3 : i32
    %38 = vector.broadcast %c-3_i32_14 : i32 to vector<64x1xi32>
    %39 = arith.addi %30, %38 : vector<64x1xi32>
    %c8_i32_15 = arith.constant 8 : i32
    %40 = vector.broadcast %c8_i32_15 : i32 to vector<64x1xi32>
    %41 = arith.cmpi slt, %39, %40 : vector<64x1xi32>
    %42 = arith.andi %37, %41 : vector<64x1xi1>
    %cst_16 = arith.constant 0.000000e+00 : f32
    %43 = vector.shape_cast %42 : vector<64x1xi1> to vector<64x1xi1>
    %44 = vector.broadcast %43 : vector<64x1xi1> to vector<64x128xi1>
    %45 = vector.broadcast %cst_16 : f32 to vector<64x128xf32>
    %46 = arith.select %44, %33, %45 : vector<64x128xi1>, vector<64x128xf32>
    %47 = arith.truncf %46 : vector<64x128xf32> to vector<64x128xbf16>
    %cst_17 = arith.constant 0.000000e+00 : f32
    %48 = vector.broadcast %cst_17 : f32 to vector<2x128xf32>
    %49 = vector.extract_strided_slice %12 {offsets = [0, 0], sizes = [62, 128], strides = [1, 1]} : vector<64x128xf32> to vector<62x128xf32>
    %50 = tpu.concatenate %48, %49 in 0 : vector<2x128xf32>, vector<62x128xf32> -> vector<64x128xf32>
    %c-2_i32 = arith.constant -2 : i32
    %51 = vector.broadcast %c-2_i32 : i32 to vector<64x1xi32>
    %52 = arith.addi %30, %51 : vector<64x1xi32>
    %c0_i32_18 = arith.constant 0 : i32
    %53 = vector.broadcast %c0_i32_18 : i32 to vector<64x1xi32>
    %54 = arith.cmpi sge, %52, %53 : vector<64x1xi32>
    %c-2_i32_19 = arith.constant -2 : i32
    %55 = vector.broadcast %c-2_i32_19 : i32 to vector<64x1xi32>
    %56 = arith.addi %30, %55 : vector<64x1xi32>
    %c8_i32_20 = arith.constant 8 : i32
    %57 = vector.broadcast %c8_i32_20 : i32 to vector<64x1xi32>
    %58 = arith.cmpi slt, %56, %57 : vector<64x1xi32>
    %59 = arith.andi %54, %58 : vector<64x1xi1>
    %cst_21 = arith.constant 0.000000e+00 : f32
    %60 = vector.shape_cast %59 : vector<64x1xi1> to vector<64x1xi1>
    %61 = vector.broadcast %60 : vector<64x1xi1> to vector<64x128xi1>
    %62 = vector.broadcast %cst_21 : f32 to vector<64x128xf32>
    %63 = arith.select %61, %50, %62 : vector<64x128xi1>, vector<64x128xf32>
    %64 = arith.truncf %63 : vector<64x128xf32> to vector<64x128xbf16>
    %cst_22 = arith.constant 0.000000e+00 : f32
    %65 = vector.broadcast %cst_22 : f32 to vector<1x128xf32>
    %66 = vector.extract_strided_slice %12 {offsets = [0, 0], sizes = [63, 128], strides = [1, 1]} : vector<64x128xf32> to vector<63x128xf32>
    %67 = tpu.concatenate %65, %66 in 0 : vector<1x128xf32>, vector<63x128xf32> -> vector<64x128xf32>
    %c-1_i32 = arith.constant -1 : i32
    %68 = vector.broadcast %c-1_i32 : i32 to vector<64x1xi32>
    %69 = arith.addi %30, %68 : vector<64x1xi32>
    %c0_i32_23 = arith.constant 0 : i32
    %70 = vector.broadcast %c0_i32_23 : i32 to vector<64x1xi32>
    %71 = arith.cmpi sge, %69, %70 : vector<64x1xi32>
    %c-1_i32_24 = arith.constant -1 : i32
    %72 = vector.broadcast %c-1_i32_24 : i32 to vector<64x1xi32>
    %73 = arith.addi %30, %72 : vector<64x1xi32>
    %c8_i32_25 = arith.constant 8 : i32
    %74 = vector.broadcast %c8_i32_25 : i32 to vector<64x1xi32>
    %75 = arith.cmpi slt, %73, %74 : vector<64x1xi32>
    %76 = arith.andi %71, %75 : vector<64x1xi1>
    %cst_26 = arith.constant 0.000000e+00 : f32
    %77 = vector.shape_cast %76 : vector<64x1xi1> to vector<64x1xi1>
    %78 = vector.broadcast %77 : vector<64x1xi1> to vector<64x128xi1>
    %79 = vector.broadcast %cst_26 : f32 to vector<64x128xf32>
    %80 = arith.select %78, %67, %79 : vector<64x128xi1>, vector<64x128xf32>
    %81 = arith.truncf %80 : vector<64x128xf32> to vector<64x128xbf16>
    %82 = arith.truncf %12 : vector<64x128xf32> to vector<64x128xbf16>
    %cst_27 = arith.constant 0.000000e+00 : f32
    %83 = vector.broadcast %cst_27 : f32 to vector<1x128xf32>
    %84 = vector.extract_strided_slice %12 {offsets = [1, 0], sizes = [63, 128], strides = [1, 1]} : vector<64x128xf32> to vector<63x128xf32>
    %85 = tpu.concatenate %84, %83 in 0 : vector<63x128xf32>, vector<1x128xf32> -> vector<64x128xf32>
    %c1_i32_28 = arith.constant 1 : i32
    %86 = vector.broadcast %c1_i32_28 : i32 to vector<64x1xi32>
    %87 = arith.addi %30, %86 : vector<64x1xi32>
    %c0_i32_29 = arith.constant 0 : i32
    %88 = vector.broadcast %c0_i32_29 : i32 to vector<64x1xi32>
    %89 = arith.cmpi sge, %87, %88 : vector<64x1xi32>
    %c1_i32_30 = arith.constant 1 : i32
    %90 = vector.broadcast %c1_i32_30 : i32 to vector<64x1xi32>
    %91 = arith.addi %30, %90 : vector<64x1xi32>
    %c8_i32_31 = arith.constant 8 : i32
    %92 = vector.broadcast %c8_i32_31 : i32 to vector<64x1xi32>
    %93 = arith.cmpi slt, %91, %92 : vector<64x1xi32>
    %94 = arith.andi %89, %93 : vector<64x1xi1>
    %cst_32 = arith.constant 0.000000e+00 : f32
    %95 = vector.shape_cast %94 : vector<64x1xi1> to vector<64x1xi1>
    %96 = vector.broadcast %95 : vector<64x1xi1> to vector<64x128xi1>
    %97 = vector.broadcast %cst_32 : f32 to vector<64x128xf32>
    %98 = arith.select %96, %85, %97 : vector<64x128xi1>, vector<64x128xf32>
    %99 = arith.truncf %98 : vector<64x128xf32> to vector<64x128xbf16>
    %cst_33 = arith.constant 0.000000e+00 : f32
    %100 = vector.broadcast %cst_33 : f32 to vector<2x128xf32>
    %101 = vector.extract_strided_slice %12 {offsets = [2, 0], sizes = [62, 128], strides = [1, 1]} : vector<64x128xf32> to vector<62x128xf32>
    %102 = tpu.concatenate %101, %100 in 0 : vector<62x128xf32>, vector<2x128xf32> -> vector<64x128xf32>
    %c2_i32 = arith.constant 2 : i32
    %103 = vector.broadcast %c2_i32 : i32 to vector<64x1xi32>
    %104 = arith.addi %30, %103 : vector<64x1xi32>
    %c0_i32_34 = arith.constant 0 : i32
    %105 = vector.broadcast %c0_i32_34 : i32 to vector<64x1xi32>
    %106 = arith.cmpi sge, %104, %105 : vector<64x1xi32>
    %c2_i32_35 = arith.constant 2 : i32
    %107 = vector.broadcast %c2_i32_35 : i32 to vector<64x1xi32>
    %108 = arith.addi %30, %107 : vector<64x1xi32>
    %c8_i32_36 = arith.constant 8 : i32
    %109 = vector.broadcast %c8_i32_36 : i32 to vector<64x1xi32>
    %110 = arith.cmpi slt, %108, %109 : vector<64x1xi32>
    %111 = arith.andi %106, %110 : vector<64x1xi1>
    %cst_37 = arith.constant 0.000000e+00 : f32
    %112 = vector.shape_cast %111 : vector<64x1xi1> to vector<64x1xi1>
    %113 = vector.broadcast %112 : vector<64x1xi1> to vector<64x128xi1>
    %114 = vector.broadcast %cst_37 : f32 to vector<64x128xf32>
    %115 = arith.select %113, %102, %114 : vector<64x128xi1>, vector<64x128xf32>
    %116 = arith.truncf %115 : vector<64x128xf32> to vector<64x128xbf16>
    %cst_38 = arith.constant 0.000000e+00 : f32
    %117 = vector.broadcast %cst_38 : f32 to vector<3x128xf32>
    %118 = vector.extract_strided_slice %12 {offsets = [3, 0], sizes = [61, 128], strides = [1, 1]} : vector<64x128xf32> to vector<61x128xf32>
    %119 = tpu.concatenate %118, %117 in 0 : vector<61x128xf32>, vector<3x128xf32> -> vector<64x128xf32>
    %c3_i32 = arith.constant 3 : i32
    %120 = vector.broadcast %c3_i32 : i32 to vector<64x1xi32>
    %121 = arith.addi %30, %120 : vector<64x1xi32>
    %c0_i32_39 = arith.constant 0 : i32
    %122 = vector.broadcast %c0_i32_39 : i32 to vector<64x1xi32>
    %123 = arith.cmpi sge, %121, %122 : vector<64x1xi32>
    %c3_i32_40 = arith.constant 3 : i32
    %124 = vector.broadcast %c3_i32_40 : i32 to vector<64x1xi32>
    %125 = arith.addi %30, %124 : vector<64x1xi32>
    %c8_i32_41 = arith.constant 8 : i32
    %126 = vector.broadcast %c8_i32_41 : i32 to vector<64x1xi32>
    %127 = arith.cmpi slt, %125, %126 : vector<64x1xi32>
    %128 = arith.andi %123, %127 : vector<64x1xi1>
    %cst_42 = arith.constant 0.000000e+00 : f32
    %129 = vector.shape_cast %128 : vector<64x1xi1> to vector<64x1xi1>
    %130 = vector.broadcast %129 : vector<64x1xi1> to vector<64x128xi1>
    %131 = vector.broadcast %cst_42 : f32 to vector<64x128xf32>
    %132 = arith.select %130, %119, %131 : vector<64x128xi1>, vector<64x128xf32>
    %133 = arith.truncf %132 : vector<64x128xf32> to vector<64x128xbf16>
    %134 = tpu.concatenate %47, %64, %81, %82, %99, %116, %133 in 1 : vector<64x128xbf16>, vector<64x128xbf16>, vector<64x128xbf16>, vector<64x128xbf16>, vector<64x128xbf16>, vector<64x128xbf16>, vector<64x128xbf16> -> vector<64x896xbf16>
    %c0_43 = arith.constant 0 : index
    %c0_44 = arith.constant 0 : index
    %135 = vector.load %arg5[%c0_43, %c0_44] : memref<896x160xbf16, #tpu.memory_space<vmem>>, vector<896x160xbf16>
    %cst_45 = arith.constant dense<0.000000e+00> : vector<64x160xf32>
    %136 = tpu.matmul %134, %135, %cst_45 {dimension_numbers = #tpu.dot_dimension_numbers<[1], [0], [0], [1], [0, 0, 1, 1], [], []>} : vector<64x896xbf16>, vector<896x160xbf16>, vector<64x160xf32> -> vector<64x160xf32>
    %c0_46 = arith.constant 0 : index
    %c0_47 = arith.constant 0 : index
    %137 = vector.load %arg6[%c0_46, %c0_47] : memref<1x160xf32, #tpu.memory_space<vmem>>, vector<1x160xf32>
    %138 = vector.broadcast %137 : vector<1x160xf32> to vector<64x160xf32>
    %139 = arith.mulf %136, %138 : vector<64x160xf32>
    %c0_48 = arith.constant 0 : index
    %c0_49 = arith.constant 0 : index
    %140 = vector.load %arg7[%c0_48, %c0_49] : memref<1x160xf32, #tpu.memory_space<vmem>>, vector<1x160xf32>
    %141 = vector.broadcast %140 : vector<1x160xf32> to vector<64x160xf32>
    %142 = arith.addf %139, %141 : vector<64x160xf32>
    %cst_50 = arith.constant 0.000000e+00 : f32
    %143 = vector.broadcast %cst_50 : f32 to vector<64x160xf32>
    %144 = arith.maximumf %142, %143 : vector<64x160xf32>
    %cst_51 = arith.constant 0.000000e+00 : f32
    %145 = vector.broadcast %cst_51 : f32 to vector<24x160xf32>
    %146 = vector.extract_strided_slice %144 {offsets = [0, 0], sizes = [40, 160], strides = [1, 1]} : vector<64x160xf32> to vector<40x160xf32>
    %147 = tpu.concatenate %145, %146 in 0 : vector<24x160xf32>, vector<40x160xf32> -> vector<64x160xf32>
    %148 = arith.truncf %147 : vector<64x160xf32> to vector<64x160xbf16>
    %cst_52 = arith.constant 0.000000e+00 : f32
    %149 = vector.broadcast %cst_52 : f32 to vector<16x160xf32>
    %150 = vector.extract_strided_slice %144 {offsets = [0, 0], sizes = [48, 160], strides = [1, 1]} : vector<64x160xf32> to vector<48x160xf32>
    %151 = tpu.concatenate %149, %150 in 0 : vector<16x160xf32>, vector<48x160xf32> -> vector<64x160xf32>
    %152 = arith.truncf %151 : vector<64x160xf32> to vector<64x160xbf16>
    %cst_53 = arith.constant 0.000000e+00 : f32
    %153 = vector.broadcast %cst_53 : f32 to vector<8x160xf32>
    %154 = vector.extract_strided_slice %144 {offsets = [0, 0], sizes = [56, 160], strides = [1, 1]} : vector<64x160xf32> to vector<56x160xf32>
    %155 = tpu.concatenate %153, %154 in 0 : vector<8x160xf32>, vector<56x160xf32> -> vector<64x160xf32>
    %156 = arith.truncf %155 : vector<64x160xf32> to vector<64x160xbf16>
    %157 = arith.truncf %144 : vector<64x160xf32> to vector<64x160xbf16>
    %cst_54 = arith.constant 0.000000e+00 : f32
    %158 = vector.broadcast %cst_54 : f32 to vector<8x160xf32>
    %159 = vector.extract_strided_slice %144 {offsets = [8, 0], sizes = [56, 160], strides = [1, 1]} : vector<64x160xf32> to vector<56x160xf32>
    %160 = tpu.concatenate %159, %158 in 0 : vector<56x160xf32>, vector<8x160xf32> -> vector<64x160xf32>
    %161 = arith.truncf %160 : vector<64x160xf32> to vector<64x160xbf16>
    %cst_55 = arith.constant 0.000000e+00 : f32
    %162 = vector.broadcast %cst_55 : f32 to vector<16x160xf32>
    %163 = vector.extract_strided_slice %144 {offsets = [16, 0], sizes = [48, 160], strides = [1, 1]} : vector<64x160xf32> to vector<48x160xf32>
    %164 = tpu.concatenate %163, %162 in 0 : vector<48x160xf32>, vector<16x160xf32> -> vector<64x160xf32>
    %165 = arith.truncf %164 : vector<64x160xf32> to vector<64x160xbf16>
    %cst_56 = arith.constant 0.000000e+00 : f32
    %166 = vector.broadcast %cst_56 : f32 to vector<24x160xf32>
    %167 = vector.extract_strided_slice %144 {offsets = [24, 0], sizes = [40, 160], strides = [1, 1]} : vector<64x160xf32> to vector<40x160xf32>
    %168 = tpu.concatenate %167, %166 in 0 : vector<40x160xf32>, vector<24x160xf32> -> vector<64x160xf32>
    %169 = arith.truncf %168 : vector<64x160xf32> to vector<64x160xbf16>
    %170 = tpu.concatenate %148, %152, %156, %157, %161, %165, %169 in 1 : vector<64x160xbf16>, vector<64x160xbf16>, vector<64x160xbf16>, vector<64x160xbf16>, vector<64x160xbf16>, vector<64x160xbf16>, vector<64x160xbf16> -> vector<64x1120xbf16>
    %c0_57 = arith.constant 0 : index
    %c0_58 = arith.constant 0 : index
    %171 = vector.load %arg8[%c0_57, %c0_58] : memref<1120x192xbf16, #tpu.memory_space<vmem>>, vector<1120x192xbf16>
    %cst_59 = arith.constant dense<0.000000e+00> : vector<64x192xf32>
    %172 = tpu.matmul %170, %171, %cst_59 {dimension_numbers = #tpu.dot_dimension_numbers<[1], [0], [0], [1], [0, 0, 1, 1], [], []>} : vector<64x1120xbf16>, vector<1120x192xbf16>, vector<64x192xf32> -> vector<64x192xf32>
    %c0_60 = arith.constant 0 : index
    %c0_61 = arith.constant 0 : index
    %173 = vector.load %arg9[%c0_60, %c0_61] : memref<1x192xf32, #tpu.memory_space<vmem>>, vector<1x192xf32>
    %174 = vector.broadcast %173 : vector<1x192xf32> to vector<64x192xf32>
    %175 = arith.mulf %172, %174 : vector<64x192xf32>
    %c0_62 = arith.constant 0 : index
    %c0_63 = arith.constant 0 : index
    %176 = vector.load %arg10[%c0_62, %c0_63] : memref<1x192xf32, #tpu.memory_space<vmem>>, vector<1x192xf32>
    %177 = vector.broadcast %176 : vector<1x192xf32> to vector<64x192xf32>
    %178 = arith.addf %175, %177 : vector<64x192xf32>
    %cst_64 = arith.constant 0.000000e+00 : f32
    %179 = vector.broadcast %cst_64 : f32 to vector<64x192xf32>
    %180 = arith.maximumf %178, %179 : vector<64x192xf32>
    %181 = tpu.concatenate %180, %13 in 1 : vector<64x192xf32>, vector<64x192xf32> -> vector<64x384xf32>
    %182 = arith.truncf %181 : vector<64x384xf32> to vector<64x384xbf16>
    %c0_65 = arith.constant 0 : index
    %c0_66 = arith.constant 0 : index
    %183 = vector.load %arg11[%c0_65, %c0_66] : memref<384x1152xbf16, #tpu.memory_space<vmem>>, vector<384x1152xbf16>
    %cst_67 = arith.constant dense<0.000000e+00> : vector<64x1152xf32>
    %184 = tpu.matmul %182, %183, %cst_67 {dimension_numbers = #tpu.dot_dimension_numbers<[1], [0], [0], [1], [0, 0, 1, 1], [], []>} : vector<64x384xbf16>, vector<384x1152xbf16>, vector<64x1152xf32> -> vector<64x1152xf32>
    %c0_68 = arith.constant 0 : index
    %c0_69 = arith.constant 0 : index
    %185 = vector.load %arg12[%c0_68, %c0_69] : memref<1x1152xf32, #tpu.memory_space<vmem>>, vector<1x1152xf32>
    %186 = vector.broadcast %185 : vector<1x1152xf32> to vector<64x1152xf32>
    %187 = arith.mulf %184, %186 : vector<64x1152xf32>
    %c0_70 = arith.constant 0 : index
    %c0_71 = arith.constant 0 : index
    %188 = vector.load %arg13[%c0_70, %c0_71] : memref<1x1152xf32, #tpu.memory_space<vmem>>, vector<1x1152xf32>
    %189 = vector.broadcast %188 : vector<1x1152xf32> to vector<64x1152xf32>
    %190 = arith.addf %187, %189 : vector<64x1152xf32>
    %c0_72 = arith.constant 0 : index
    %c0_73 = arith.constant 0 : index
    %c0_74 = arith.constant 0 : index
    %191 = vector.load %arg14[%c0_72, %c0_73, %c0_74] : memref<1x64x1152xf32, #tpu.memory_space<vmem>>, vector<1x64x1152xf32>
    %192 = vector.shape_cast %191 : vector<1x64x1152xf32> to vector<64x1152xf32>
    %193 = vector.shape_cast %190 : vector<64x1152xf32> to vector<1x64x1152xf32>
    tpu.vector_store %arg14[%c0_72, %c0_73, %c0_74], %193 {strides = array<i32>} : memref<1x64x1152xf32, #tpu.memory_space<vmem>>, vector<1x64x1152xf32>,
    return
  }
  func.func @transform_0(%arg0: i32) -> (i32, i32, i32) {
    %c0_i32 = arith.constant 0 : i32
    %c0_i32_0 = arith.constant 0 : i32
    %c0_i32_1 = arith.constant 0 : i32
    return %arg0, %c0_i32, %c0_i32_0 : i32, i32, i32
  }
  func.func @transform_1(%arg0: i32) -> (i32, i32) {
    %c0_i32 = arith.constant 0 : i32
    %c0_i32_0 = arith.constant 0 : i32
    %c0_i32_1 = arith.constant 0 : i32
    return %c0_i32, %c0_i32_0 : i32, i32
  }
  func.func @transform_2(%arg0: i32) -> (i32, i32) {
    %c0_i32 = arith.constant 0 : i32
    %c0_i32_0 = arith.constant 0 : i32
    %c0_i32_1 = arith.constant 0 : i32
    return %c0_i32, %c0_i32_0 : i32, i32
  }
  func.func @transform_3(%arg0: i32) -> (i32, i32) {
    %c0_i32 = arith.constant 0 : i32
    %c0_i32_0 = arith.constant 0 : i32
    %c0_i32_1 = arith.constant 0 : i32
    return %c0_i32, %c0_i32_0 : i32, i32
  }
  func.func @transform_4(%arg0: i32) -> (i32, i32) {
    %c0_i32 = arith.constant 0 : i32
    %c0_i32_0 = arith.constant 0 : i32
    %c0_i32_1 = arith.constant 0 : i32
    return %c0_i32, %c0_i32_0 : i32, i32
  }
  func.func @transform_5(%arg0: i32) -> (i32, i32) {
    %c0_i32 = arith.constant 0 : i32
    %c0_i32_0 = arith.constant 0 : i32
    %c0_i32_1 = arith.constant 0 : i32
    return %c0_i32, %c0_i32_0 : i32, i32
  }
  func.func @transform_6(%arg0: i32) -> (i32, i32) {
    %c0_i32 = arith.constant 0 : i32
    %c0_i32_0 = arith.constant 0 : i32
    %c0_i32_1 = arith.constant 0 : i32
    return %c0_i32, %c0_i32_0 : i32, i32
  }
  func.func @transform_7(%arg0: i32) -> (i32, i32) {
    %c0_i32 = arith.constant 0 : i32
    %c0_i32_0 = arith.constant 0 : i32
    %c0_i32_1 = arith.constant 0 : i32
    return %c0_i32, %c0_i32_0 : i32, i32
  }
  func.func @transform_8(%arg0: i32) -> (i32, i32) {
    %c0_i32 = arith.constant 0 : i32
    %c0_i32_0 = arith.constant 0 : i32
    %c0_i32_1 = arith.constant 0 : i32
    return %c0_i32, %c0_i32_0 : i32, i32
  }
  func.func @transform_9(%arg0: i32) -> (i32, i32) {
    %c0_i32 = arith.constant 0 : i32
    %c0_i32_0 = arith.constant 0 : i32
    %c0_i32_1 = arith.constant 0 : i32
    return %c0_i32, %c0_i32_0 : i32, i32
  }
  func.func @transform_10(%arg0: i32) -> (i32, i32) {
    %c0_i32 = arith.constant 0 : i32
    %c0_i32_0 = arith.constant 0 : i32
    %c0_i32_1 = arith.constant 0 : i32
    return %c0_i32, %c0_i32_0 : i32, i32
  }
  func.func @transform_11(%arg0: i32) -> (i32, i32) {
    %c0_i32 = arith.constant 0 : i32
    %c0_i32_0 = arith.constant 0 : i32
    %c0_i32_1 = arith.constant 0 : i32
    return %c0_i32, %c0_i32_0 : i32, i32
  }
  func.func @transform_12(%arg0: i32) -> (i32, i32) {
    %c0_i32 = arith.constant 0 : i32
    %c0_i32_0 = arith.constant 0 : i32
    %c0_i32_1 = arith.constant 0 : i32
    return %c0_i32, %c0_i32_0 : i32, i32
  }
  func.func @transform_13(%arg0: i32) -> (i32, i32, i32) {
    %c0_i32 = arith.constant 0 : i32
    %c0_i32_0 = arith.constant 0 : i32
    %c0_i32_1 = arith.constant 0 : i32
    return %arg0, %c0_i32, %c0_i32_0 : i32, i32, i32
  }
}

</mosaic_0001>

<llo_original>
// kernel: tpu_custom_call.1
$region0: #{tpu_custom_call.1}
  #allocation0 [shape = 'u32[]', space=smem, size = 0x4, offset = 0x4, fixed_abs, tag = 'smem constant byte address 0x4 - core index']
  #allocation1 [shape = 'u32[144,128]{1,0:T(1,128)}', space=vmem, size = 0x12000, scoped, tag = 'internal scratch']
  %s0 = inlined_call_operand.vmem [shape: bf16[2,64,1152], index: 0, kind: input, shape index: {}]
  %s1 = inlined_call_operand.vmem [shape: bf16[1152,320], index: 1, kind: input, shape index: {}]
  %s2 = inlined_call_operand.vmem [shape: f32[1,320], index: 2, kind: input, shape index: {}]
  %s3 = inlined_call_operand.vmem [shape: f32[1,320], index: 3, kind: input, shape index: {}]
  %s4 = inlined_call_operand.vmem [shape: bf16[896,160], index: 4, kind: input, shape index: {}]
  %s5 = inlined_call_operand.vmem [shape: f32[1,160], index: 5, kind: input, shape index: {}]
  %s6 = inlined_call_operand.vmem [shape: f32[1,160], index: 6, kind: input, shape index: {}]
  %s7 = inlined_call_operand.vmem [shape: bf16[1120,192], index: 7, kind: input, shape index: {}]
  %s8 = inlined_call_operand.vmem [shape: f32[1,192], index: 8, kind: input, shape index: {}]
  %s9 = inlined_call_operand.vmem [shape: f32[1,192], index: 9, kind: input, shape index: {}]
  %s10 = inlined_call_operand.vmem [shape: bf16[384,1152], index: 10, kind: input, shape index: {}]
  %s11 = inlined_call_operand.vmem [shape: f32[1,1152], index: 11, kind: input, shape index: {}]
  %s12 = inlined_call_operand.vmem [shape: f32[1,1152], index: 12, kind: input, shape index: {}]
  %s13 = inlined_call_operand.hbm [shape: f32[2,64,1152], index: 13, kind: output, shape index: {}]
  %s14 = sld [smem:[#allocation0]]
  $region85: #{tpu_custom_call.1} parent=0
    _
  %s16 = ssub.s32 1, %s14
  %s17 = scalar_select 0, %s16, %s14
  $region1: #{tpu_custom_call.1} parent=0
    #allocation2 [shape = 'u8[589824]{0}', space=vmem, size = 0x90000, scoped, tag = 'output window, operand 0']
    #allocation3 [shape = 's32[2]{0}', space=sflag, size = 0x8, scoped, tag = 'scoped memory for tpu_custom_call.1']
    %18 = vsyncpa [#allocation3], 0
    %s19 = scalar_lea.sflag [#allocation3], 1
    %20 = vsyncpa %s19, 0
    loop: start=0, step=1, limit=4
    $region2: #{tpu_custom_call.1} parent=1 // loop_pre_header
      _
    $region3: #{tpu_custom_call.1} parent=1 // loop_header
      %s22 = sphi 0, %s26
      %p23 = scmp.ge.s32.totalorder %s22, 4
      %s32 = sphi 0, %s34
      %s35 = sphi 0, %s32
      %s36 = sphi 0, %s35
      %s52 = sphi 0, %s36
      %s56 = sphi 0, %s56
      %s58 = sphi 0, %s56
      %s59 = sphi 0, %s58
      %s73 = sphi 0, %s59
      %s77 = sphi 0, %s77
      %s79 = sphi 0, %s77
      %s80 = sphi 0, %s79
      %s94 = sphi 0, %s80
      %s98 = sphi 0, %s98
      %s100 = sphi 0, %s98
      %s101 = sphi 0, %s100
      %s115 = sphi 0, %s101
      %s119 = sphi 0, %s119
      %s121 = sphi 0, %s119
      %s122 = sphi 0, %s121
      %s136 = sphi 0, %s122
      %s140 = sphi 0, %s140
      %s142 = sphi 0, %s140
      %s143 = sphi 0, %s142
      %s157 = sphi 0, %s143
      %s161 = sphi 0, %s161
      %s163 = sphi 0, %s161
      %s164 = sphi 0, %s163
      %s178 = sphi 0, %s164
      %s182 = sphi 0, %s182
      %s184 = sphi 0, %s182
      %s185 = sphi 0, %s184
      %s199 = sphi 0, %s185
      %s203 = sphi 0, %s203
      %s205 = sphi 0, %s203
      %s206 = sphi 0, %s205
      %s220 = sphi 0, %s206
      %s224 = sphi 0, %s224
      %s226 = sphi 0, %s224
      %s227 = sphi 0, %s226
      %s241 = sphi 0, %s227
      %s245 = sphi 0, %s245
      %s247 = sphi 0, %s245
      %s248 = sphi 0, %s247
      %s262 = sphi 0, %s248
      %s266 = sphi 0, %s266
      %s268 = sphi 0, %s266
      %s269 = sphi 0, %s268
      %s283 = sphi 0, %s269
      %s287 = sphi 0, %s287
      %s289 = sphi 0, %s287
      %s290 = sphi 0, %s289
      %s304 = sphi 0, %s290
      %s310 = sphi 0, %s312
      %s313 = sphi 0, %s310
      %s314 = sphi 0, %s313
      %s330 = sphi 0, %s314
    $region4: #{tpu_custom_call.1} parent=1 // loop_header_branch
      %25 = sbr.rel (%p23) target = $region8
    $region5: #{tpu_custom_call.1} parent=1 // loop_body
      %s27 = ssub.s32 %s22, 1
      %s28 = ssub.s32 %s22, 2
      %s29 = sadd.s32 %s22, 1
      %s30 = ssub.s32 %s22, %s29
      %p31 = scmp.eq.s32.totalorder %s30, 0
      %s33 = sadd.s32 %s32, 1
      %s34 = scalar_select %p31, %s32, %s33
      %p37 = pneg %p31
      %p38 = scmp.eq.s32.totalorder %s22, 1
      %p39 = por %p37, %p38
      %p40 = scmp.ne.s32.totalorder %s32, %s35
      %p41 = scmp.eq.s32.totalorder %s22, 0
      %p42 = por %p40, %p41
      %p43 = scmp.ne.s32.totalorder %s32, %s35
      %p44 = scmp.eq.s32.totalorder %s27, 1
      %p45 = por %p43, %p44
      %p46 = scmp.ne.s32.totalorder %s35, %s36
      %p47 = scmp.eq.s32.totalorder %s27, 0
      %p48 = por %p46, %p47
      %p49 = scmp.ne.s32.totalorder %s35, %s36
      %p50 = scmp.eq.s32.totalorder %s28, 1
      %p51 = por %p49, %p50
      %p53 = scmp.ne.s32.totalorder %s36, %s52
      %p54 = scmp.eq.s32.totalorder %s28, 0
      %p55 = por %p53, %p54
      %s57 = sadd.s32 %s56, 1
      %p60 = scmp.eq.s32.totalorder %s22, 1
      %p61 = scmp.ne.s32.totalorder %s56, %s58
      %p62 = scmp.eq.s32.totalorder %s22, 0
      %p63 = por %p61, %p62
      %p64 = scmp.ne.s32.totalorder %s56, %s58
      %p65 = scmp.eq.s32.totalorder %s27, 1
      %p66 = por %p64, %p65
      %p67 = scmp.ne.s32.totalorder %s58, %s59
      %p68 = scmp.eq.s32.totalorder %s27, 0
      %p69 = por %p67, %p68
      %p70 = scmp.ne.s32.totalorder %s58, %s59
      %p71 = scmp.eq.s32.totalorder %s28, 1
      %p72 = por %p70, %p71
      %p74 = scmp.ne.s32.totalorder %s59, %s73
      %p75 = scmp.eq.s32.totalorder %s28, 0
      %p76 = por %p74, %p75
      %s78 = sadd.s32 %s77, 1
      %p81 = scmp.eq.s32.totalorder %s22, 1
      %p82 = scmp.ne.s32.totalorder %s77, %s79
      %p83 = scmp.eq.s32.totalorder %s22, 0
      %p84 = por %p82, %p83
      %p85 = scmp.ne.s32.totalorder %s77, %s79
      %p86 = scmp.eq.s32.totalorder %s27, 1
      %p87 = por %p85, %p86
      %p88 = scmp.ne.s32.totalorder %s79, %s80
      %p89 = scmp.eq.s32.totalorder %s27, 0
      %p90 = por %p88, %p89
      %p91 = scmp.ne.s32.totalorder %s79, %s80
      %p92 = scmp.eq.s32.totalorder %s28, 1
      %p93 = por %p91, %p92
      %p95 = scmp.ne.s32.totalorder %s80, %s94
      %p96 = scmp.eq.s32.totalorder %s28, 0
      %p97 = por %p95, %p96
      %s99 = sadd.s32 %s98, 1
      %p102 = scmp.eq.s32.totalorder %s22, 1
      %p103 = scmp.ne.s32.totalorder %s98, %s100
      %p104 = scmp.eq.s32.totalorder %s22, 0
      %p105 = por %p103, %p104
      %p106 = scmp.ne.s32.totalorder %s98, %s100
      %p107 = scmp.eq.s32.totalorder %s27, 1
      %p108 = por %p106, %p107
      %p109 = scmp.ne.s32.totalorder %s100, %s101
      %p110 = scmp.eq.s32.totalorder %s27, 0
      %p111 = por %p109, %p110
      %p112 = scmp.ne.s32.totalorder %s100, %s101
      %p113 = scmp.eq.s32.totalorder %s28, 1
      %p114 = por %p112, %p113
      %p116 = scmp.ne.s32.totalorder %s101, %s115
      %p117 = scmp.eq.s32.totalorder %s28, 0
      %p118 = por %p116, %p117
      %s120 = sadd.s32 %s119, 1
      %p123 = scmp.eq.s32.totalorder %s22, 1
      %p124 = scmp.ne.s32.totalorder %s119, %s121
      %p125 = scmp.eq.s32.totalorder %s22, 0
      %p126 = por %p124, %p125
      %p127 = scmp.ne.s32.totalorder %s119, %s121
      %p128 = scmp.eq.s32.totalorder %s27, 1
      %p129 = por %p127, %p128
      %p130 = scmp.ne.s32.totalorder %s121, %s122
      %p131 = scmp.eq.s32.totalorder %s27, 0
      %p132 = por %p130, %p131
      %p133 = scmp.ne.s32.totalorder %s121, %s122
      %p134 = scmp.eq.s32.totalorder %s28, 1
      %p135 = por %p133, %p134
      %p137 = scmp.ne.s32.totalorder %s122, %s136
      %p138 = scmp.eq.s32.totalorder %s28, 0
      %p139 = por %p137, %p138
      %s141 = sadd.s32 %s140, 1
      %p144 = scmp.eq.s32.totalorder %s22, 1
      %p145 = scmp.ne.s32.totalorder %s140, %s142
      %p146 = scmp.eq.s32.totalorder %s22, 0
      %p147 = por %p145, %p146
      %p148 = scmp.ne.s32.totalorder %s140, %s142
      %p149 = scmp.eq.s32.totalorder %s27, 1
      %p150 = por %p148, %p149
      %p151 = scmp.ne.s32.totalorder %s142, %s143
      %p152 = scmp.eq.s32.totalorder %s27, 0
      %p153 = por %p151, %p152
      %p154 = scmp.ne.s32.totalorder %s142, %s143
      %p155 = scmp.eq.s32.totalorder %s28, 1
      %p156 = por %p154, %p155
      %p158 = scmp.ne.s32.totalorder %s143, %s157
      %p159 = scmp.eq.s32.totalorder %s28, 0
      %p160 = por %p158, %p159
      %s162 = sadd.s32 %s161, 1
      %p165 = scmp.eq.s32.totalorder %s22, 1
      %p166 = scmp.ne.s32.totalorder %s161, %s163
      %p167 = scmp.eq.s32.totalorder %s22, 0
      %p168 = por %p166, %p167
      %p169 = scmp.ne.s32.totalorder %s161, %s163
      %p170 = scmp.eq.s32.totalorder %s27, 1
      %p171 = por %p169, %p170
      %p172 = scmp.ne.s32.totalorder %s163, %s164
      %p173 = scmp.eq.s32.totalorder %s27, 0
      %p174 = por %p172, %p173
      %p175 = scmp.ne.s32.totalorder %s163, %s164
      %p176 = scmp.eq.s32.totalorder %s28, 1
      %p177 = por %p175, %p176
      %p179 = scmp.ne.s32.totalorder %s164, %s178
      %p180 = scmp.eq.s32.totalorder %s28, 0
      %p181 = por %p179, %p180
      %s183 = sadd.s32 %s182, 1
      %p186 = scmp.eq.s32.totalorder %s22, 1
      %p187 = scmp.ne.s32.totalorder %s182, %s184
      %p188 = scmp.eq.s32.totalorder %s22, 0
      %p189 = por %p187, %p188
      %p190 = scmp.ne.s32.totalorder %s182, %s184
      %p191 = scmp.eq.s32.totalorder %s27, 1
      %p192 = por %p190, %p191
      %p193 = scmp.ne.s32.totalorder %s184, %s185
      %p194 = scmp.eq.s32.totalorder %s27, 0
      %p195 = por %p193, %p194
      %p196 = scmp.ne.s32.totalorder %s184, %s185
      %p197 = scmp.eq.s32.totalorder %s28, 1
      %p198 = por %p196, %p197
      %p200 = scmp.ne.s32.totalorder %s185, %s199
      %p201 = scmp.eq.s32.totalorder %s28, 0
      %p202 = por %p200, %p201
      %s204 = sadd.s32 %s203, 1
      %p207 = scmp.eq.s32.totalorder %s22, 1
      %p208 = scmp.ne.s32.totalorder %s203, %s205
      %p209 = scmp.eq.s32.totalorder %s22, 0
      %p210 = por %p208, %p209
      %p211 = scmp.ne.s32.totalorder %s203, %s205
      %p212 = scmp.eq.s32.totalorder %s27, 1
      %p213 = por %p211, %p212
      %p214 = scmp.ne.s32.totalorder %s205, %s206
      %p215 = scmp.eq.s32.totalorder %s27, 0
      %p216 = por %p214, %p215
      %p217 = scmp.ne.s32.totalorder %s205, %s206
      %p218 = scmp.eq.s32.totalorder %s28, 1
      %p219 = por %p217, %p218
      %p221 = scmp.ne.s32.totalorder %s206, %s220
      %p222 = scmp.eq.s32.totalorder %s28, 0
      %p223 = por %p221, %p222
      %s225 = sadd.s32 %s224, 1
      %p228 = scmp.eq.s32.totalorder %s22, 1
      %p229 = scmp.ne.s32.totalorder %s224, %s226
      %p230 = scmp.eq.s32.totalorder %s22, 0
      %p231 = por %p229, %p230
      %p232 = scmp.ne.s32.totalorder %s224, %s226
      %p233 = scmp.eq.s32.totalorder %s27, 1
      %p234 = por %p232, %p233
      %p235 = scmp.ne.s32.totalorder %s226, %s227
      %p236 = scmp.eq.s32.totalorder %s27, 0
      %p237 = por %p235, %p236
      %p238 = scmp.ne.s32.totalorder %s226, %s227
      %p239 = scmp.eq.s32.totalorder %s28, 1
      %p240 = por %p238, %p239
      %p242 = scmp.ne.s32.totalorder %s227, %s241
      %p243 = scmp.eq.s32.totalorder %s28, 0
      %p244 = por %p242, %p243
      %s246 = sadd.s32 %s245, 1
      %p249 = scmp.eq.s32.totalorder %s22, 1
      %p250 = scmp.ne.s32.totalorder %s245, %s247
      %p251 = scmp.eq.s32.totalorder %s22, 0
      %p252 = por %p250, %p251
      %p253 = scmp.ne.s32.totalorder %s245, %s247
      %p254 = scmp.eq.s32.totalorder %s27, 1
      %p255 = por %p253, %p254
      %p256 = scmp.ne.s32.totalorder %s247, %s248
      %p257 = scmp.eq.s32.totalorder %s27, 0
      %p258 = por %p256, %p257
      %p259 = scmp.ne.s32.totalorder %s247, %s248
      %p260 = scmp.eq.s32.totalorder %s28, 1
      %p261 = por %p259, %p260
      %p263 = scmp.ne.s32.totalorder %s248, %s262
      %p264 = scmp.eq.s32.totalorder %s28, 0
      %p265 = por %p263, %p264
      %s267 = sadd.s32 %s266, 1
      %p270 = scmp.eq.s32.totalorder %s22, 1
      %p271 = scmp.ne.s32.totalorder %s266, %s268
      %p272 = scmp.eq.s32.totalorder %s22, 0
      %p273 = por %p271, %p272
      %p274 = scmp.ne.s32.totalorder %s266, %s268
      %p275 = scmp.eq.s32.totalorder %s27, 1
      %p276 = por %p274, %p275
      %p277 = scmp.ne.s32.totalorder %s268, %s269
      %p278 = scmp.eq.s32.totalorder %s27, 0
      %p279 = por %p277, %p278
      %p280 = scmp.ne.s32.totalorder %s268, %s269
      %p281 = scmp.eq.s32.totalorder %s28, 1
      %p282 = por %p280, %p281
      %p284 = scmp.ne.s32.totalorder %s269, %s283
      %p285 = scmp.eq.s32.totalorder %s28, 0
      %p286 = por %p284, %p285
      %s288 = sadd.s32 %s287, 1
      %p291 = scmp.eq.s32.totalorder %s22, 1
      %p292 = scmp.ne.s32.totalorder %s287, %s289
      %p293 = scmp.eq.s32.totalorder %s22, 0
      %p294 = por %p292, %p293
      %p295 = scmp.ne.s32.totalorder %s287, %s289
      %p296 = scmp.eq.s32.totalorder %s27, 1
      %p297 = por %p295, %p296
      %p298 = scmp.ne.s32.totalorder %s289, %s290
      %p299 = scmp.eq.s32.totalorder %s27, 0
      %p300 = por %p298, %p299
      %p301 = scmp.ne.s32.totalorder %s289, %s290
      %p302 = scmp.eq.s32.totalorder %s28, 1
      %p303 = por %p301, %p302
      %p305 = scmp.ne.s32.totalorder %s290, %s304
      %p306 = scmp.eq.s32.totalorder %s28, 0
      %p307 = por %p305, %p306
      %s308 = ssub.s32 %s22, %s29
      %p309 = scmp.eq.s32.totalorder %s308, 0
      %s311 = sadd.s32 %s310, 1
      %s312 = scalar_select %p309, %s310, %s311
      %p315 = pneg %p309
      %p316 = scmp.eq.s32.totalorder %s22, 1
      %p317 = por %p315, %p316
      %p318 = scmp.ne.s32.totalorder %s310, %s313
      %p319 = scmp.eq.s32.totalorder %s22, 0
      %p320 = por %p318, %p319
      %p321 = scmp.ne.s32.totalorder %s310, %s313
      %p322 = scmp.eq.s32.totalorder %s27, 1
      %p323 = por %p321, %p322
      %p324 = scmp.ne.s32.totalorder %s313, %s314
      %p325 = scmp.eq.s32.totalorder %s27, 0
      %p326 = por %p324, %p325
      %p327 = scmp.ne.s32.totalorder %s313, %s314
      %p328 = scmp.eq.s32.totalorder %s28, 1
      %p329 = por %p327, %p328
      %p331 = scmp.ne.s32.totalorder %s314, %s330
      %p332 = scmp.eq.s32.totalorder %s28, 0
      %p333 = por %p331, %p332
      %p334 = scmp.le.s32.totalorder 1, %s22
      %p335 = scmp.lt.s32.totalorder %s22, 3
      %p336 = pnand %p334, %p335
      %p337 = pneg %p336
      // Predicated region
      $region9: #{tpu_custom_call.1} parent=5 // pred_check
        _
      $region10: #{tpu_custom_call.1} parent=5 // pred_check_branch
        %339 = sbr.rel (%p336) target = $region12
      $region11: #{tpu_custom_call.1} parent=5 // pred_region
        %s340 = ssub.s32 %s22, 1
        // Predicated region
        $region13: #{tpu_custom_call.1} parent=11 // pred_check
          %p341 = pneg %p69
        $region14: #{tpu_custom_call.1} parent=11 // pred_check_branch
          %343 = sbr.rel (%p341) target = $region16
        $region15: #{tpu_custom_call.1} parent=11 // pred_region
          _
        $region16: #{tpu_custom_call.1} parent=11 // pred_fallthru
          _
        // Predicated region
        $region17: #{tpu_custom_call.1} parent=11 // pred_check
          %p344 = pneg %p90
        $region18: #{tpu_custom_call.1} parent=11 // pred_check_branch
          %346 = sbr.rel (%p344) target = $region20
        $region19: #{tpu_custom_call.1} parent=11 // pred_region
          _
        $region20: #{tpu_custom_call.1} parent=11 // pred_fallthru
          _
        // Predicated region
        $region21: #{tpu_custom_call.1} parent=11 // pred_check
          %p347 = pneg %p111
        $region22: #{tpu_custom_call.1} parent=11 // pred_check_branch
          %349 = sbr.rel (%p347) target = $region24
        $region23: #{tpu_custom_call.1} parent=11 // pred_region
          _
        $region24: #{tpu_custom_call.1} parent=11 // pred_fallthru
          _
        // Predicated region
        $region25: #{tpu_custom_call.1} parent=11 // pred_check
          %p350 = pneg %p132
        $region26: #{tpu_custom_call.1} parent=11 // pred_check_branch
          %352 = sbr.rel (%p350) target = $region28
        $region27: #{tpu_custom_call.1} parent=11 // pred_region
          _
        $region28: #{tpu_custom_call.1} parent=11 // pred_fallthru
          _
        // Predicated region
        $region29: #{tpu_custom_call.1} parent=11 // pred_check
          %p353 = pneg %p153
        $region30: #{tpu_custom_call.1} parent=11 // pred_check_branch
          %355 = sbr.rel (%p353) target = $region32
        $region31: #{tpu_custom_call.1} parent=11 // pred_region
          _
        $region32: #{tpu_custom_call.1} parent=11 // pred_fallthru
          _
        // Predicated region
        $region33: #{tpu_custom_call.1} parent=11 // pred_check
          %p356 = pneg %p174
        $region34: #{tpu_custom_call.1} parent=11 // pred_check_branch
          %358 = sbr.rel (%p356) target = $region36
        $region35: #{tpu_custom_call.1} parent=11 // pred_region
          _
        $region36: #{tpu_custom_call.1} parent=11 // pred_fallthru
          _
        // Predicated region
        $region37: #{tpu_custom_call.1} parent=11 // pred_check
          %p359 = pneg %p195
        $region38: #{tpu_custom_call.1} parent=11 // pred_check_branch
          %361 = sbr.rel (%p359) target = $region40
        $region39: #{tpu_custom_call.1} parent=11 // pred_region
          _
        $region40: #{tpu_custom_call.1} parent=11 // pred_fallthru
          _
        // Predicated region
        $region41: #{tpu_custom_call.1} parent=11 // pred_check
          %p362 = pneg %p216
        $region42: #{tpu_custom_call.1} parent=11 // pred_check_branch
          %364 = sbr.rel (%p362) target = $region44
        $region43: #{tpu_custom_call.1} parent=11 // pred_region
          _
        $region44: #{tpu_custom_call.1} parent=11 // pred_fallthru
          _
        // Predicated region
        $region45: #{tpu_custom_call.1} parent=11 // pred_check
          %p365 = pneg %p237
        $region46: #{tpu_custom_call.1} parent=11 // pred_check_branch
          %367 = sbr.rel (%p365) target = $region48
        $region47: #{tpu_custom_call.1} parent=11 // pred_region
          _
        $region48: #{tpu_custom_call.1} parent=11 // pred_fallthru
          _
        // Predicated region
        $region49: #{tpu_custom_call.1} parent=11 // pred_check
          %p368 = pneg %p258
        $region50: #{tpu_custom_call.1} parent=11 // pred_check_branch
          %370 = sbr.rel (%p368) target = $region52
        $region51: #{tpu_custom_call.1} parent=11 // pred_region
          _
        $region52: #{tpu_custom_call.1} parent=11 // pred_fallthru
          _
        // Predicated region
        $region53: #{tpu_custom_call.1} parent=11 // pred_check
          %p371 = pneg %p279
        $region54: #{tpu_custom_call.1} parent=11 // pred_check_branch
          %373 = sbr.rel (%p371) target = $region56
        $region55: #{tpu_custom_call.1} parent=11 // pred_region
          _
        $region56: #{tpu_custom_call.1} parent=11 // pred_fallthru
          _
        // Predicated region
        $region57: #{tpu_custom_call.1} parent=11 // pred_check
          %p374 = pneg %p300
        $region58: #{tpu_custom_call.1} parent=11 // pred_check_branch
          %376 = sbr.rel (%p374) target = $region60
        $region59: #{tpu_custom_call.1} parent=11 // pred_region
          _
        $region60: #{tpu_custom_call.1} parent=11 // pred_fallthru
          _
      $region12: #{tpu_custom_call.1} parent=5 // pred_fallthru
        _
      %p377 = scmp.lt.s32.totalorder %s22, 2
      // Predicated region
      $region61: #{tpu_custom_call.1} parent=5 // pred_check
        %p378 = pneg %p377
      $region62: #{tpu_custom_call.1} parent=5 // pred_check_branch
        %380 = sbr.rel (%p378) target = $region64
      $region63: #{tpu_custom_call.1} parent=5 // pred_region
        // Predicated region
        $region65: #{tpu_custom_call.1} parent=63 // pred_check
          %p381 = pneg %p42
        $region66: #{tpu_custom_call.1} parent=63 // pred_check_branch
          %383 = sbr.rel (%p381) target = $region68
        $region67: #{tpu_custom_call.1} parent=63 // pred_region
          %p384 = scmp.lt.s32.totalorder %s22, 1
          %s385 = scalar_select %p384, %s22, 1
          %s386 = smul.addr %s385, 72
          %s387 = smul.addr %s386, 4
          %s388 = scalar_lea.vmem %s0, %s387
        $region68: #{tpu_custom_call.1} parent=63 // pred_fallthru
          _
      $region64: #{tpu_custom_call.1} parent=5 // pred_fallthru
        _
      %p389 = scmp.le.s32.totalorder 1, %s22
      %p390 = scmp.lt.s32.totalorder %s22, 3
      %p391 = pnand %p389, %p390
      %p392 = pneg %p391
      // Predicated region
      $region69: #{tpu_custom_call.1} parent=5 // pred_check
        _
      $region70: #{tpu_custom_call.1} parent=5 // pred_check_branch
        %394 = sbr.rel (%p391) target = $region72
      $region71: #{tpu_custom_call.1} parent=5 // pred_region
        %s395 = ssub.s32 %s22, 1
        %p396 = scmp.lt.s32.totalorder %s27, 1
        %s397 = scalar_select %p396, %s27, 1
        %s398 = smul.addr %s397, 72
        %s399 = smul.addr %s398, 4
        %s400 = scalar_lea.vmem %s0, %s399
        %p401 = pneg %p48
        %p402 = pneg %p45
        %p403 = pneg %p69
        %p404 = pneg %p66
        %p405 = pneg %p90
        %p406 = pneg %p87
        %p407 = pneg %p111
        %p408 = pneg %p108
        %p409 = pneg %p132
        %p410 = pneg %p129
        %p411 = pneg %p153
        %p412 = pneg %p150
        %p413 = pneg %p174
        %p414 = pneg %p171
        %p415 = pneg %p195
        %p416 = pneg %p192
        %p417 = pneg %p216
        %p418 = pneg %p213
        %p419 = pneg %p237
        %p420 = pneg %p234
        %p421 = pneg %p258
        %p422 = pneg %p255
        %p423 = pneg %p279
        %p424 = pneg %p276
        %p425 = pneg %p300
        %p426 = pneg %p297
        %p427 = pneg %p326
        %p428 = pneg %p323
        %s429 = sand.u32 %s313, 1
        %s430 = scalar_lea.sflag [#allocation3], %s429
        %s431 = sand.u32 %s313, 1
        %s432 = smul.addr %s431, 576
        %s433 = scalar_lea.vmem [#allocation2], %s432
        %p434 = scmp.lt.s32.totalorder %s27, 1
        %s435 = scalar_select %p434, %s27, 1
        %s436 = smul.addr %s435, 72
        %s437 = smul.addr %s436, 4
        %s438 = scalar_lea.vmem %s0, %s437
        %v440 = vld [vmem:[%s438] sm:$0xff]
        %v441 = vld [vmem:[%s438 + $0x8] sm:$0xff]
        %v442 = vld [vmem:[%s438 + $0x10] sm:$0xff]
        %v443 = vld [vmem:[%s438 + $0x18] sm:$0xff]
        %v444 = vld [vmem:[%s438 + $0x20] sm:$0xf]
        %v445 = vld [vmem:[%s438 + $0x24] sm:$0xff]
        %v446 = vld [vmem:[%s438 + $0x2c] sm:$0xff]
        %v447 = vld [vmem:[%s438 + $0x34] sm:$0xff]
        %v448 = vld [vmem:[%s438 + $0x3c] sm:$0xff]
        %v449 = vld [vmem:[%s438 + $0x44] sm:$0xf]
        %v450 = vld [vmem:[%s438 + $0x48] sm:$0xff]
        %v451 = vld [vmem:[%s438 + $0x50] sm:$0xff]
        %v452 = vld [vmem:[%s438 + $0x58] sm:$0xff]
        %v453 = vld [vmem:[%s438 + $0x60] sm:$0xff]
        %v454 = vld [vmem:[%s438 + $0x68] sm:$0xf]
        %v455 = vld [vmem:[%s438 + $0x6c] sm:$0xff]
        %v456 = vld [vmem:[%s438 + $0x74] sm:$0xff]
        %v457 = vld [vmem:[%s438 + $0x7c] sm:$0xff]
        %v458 = vld [vmem:[%s438 + $0x84] sm:$0xff]
        %v459 = vld [vmem:[%s438 + $0x8c] sm:$0xf]
        %v460 = vld [vmem:[%s438 + $0x90] sm:$0xff]
        %v461 = vld [vmem:[%s438 + $0x98] sm:$0xff]
        %v462 = vld [vmem:[%s438 + $0xa0] sm:$0xff]
        %v463 = vld [vmem:[%s438 + $0xa8] sm:$0xff]
        %v464 = vld [vmem:[%s438 + $0xb0] sm:$0xf]
        %v465 = vld [vmem:[%s438 + $0xb4] sm:$0xff]
        %v466 = vld [vmem:[%s438 + $0xbc] sm:$0xff]
        %v467 = vld [vmem:[%s438 + $0xc4] sm:$0xff]
        %v468 = vld [vmem:[%s438 + $0xcc] sm:$0xff]
        %v469 = vld [vmem:[%s438 + $0xd4] sm:$0xf]
        %v470 = vld [vmem:[%s438 + $0xd8] sm:$0xff]
        %v471 = vld [vmem:[%s438 + $0xe0] sm:$0xff]
        %v472 = vld [vmem:[%s438 + $0xe8] sm:$0xff]
        %v473 = vld [vmem:[%s438 + $0xf0] sm:$0xff]
        %v474 = vld [vmem:[%s438 + $0xf8] sm:$0xf]
        %v475 = vld [vmem:[%s438 + $0xfc] sm:$0xff]
        %v476 = vld [vmem:[%s438 + $0x104] sm:$0xff]
        %v477 = vld [vmem:[%s438 + $0x10c] sm:$0xff]
        %v478 = vld [vmem:[%s438 + $0x114] sm:$0xff]
        %v479 = vld [vmem:[%s438 + $0x11c] sm:$0xf]
        %v480 = vld [vmem:[%s1] sm:$0xff]
        %v481 = vld [vmem:[%s1 + $0x8] sm:$0xf]
        %v482 = vld [vmem:[%s1 + $0xc] sm:$0xff]
        %v483 = vld [vmem:[%s1 + $0x14] sm:$0xf]
        %v484 = vld [vmem:[%s1 + $0x18] sm:$0xff]
        %v485 = vld [vmem:[%s1 + $0x20] sm:$0xf]
        %v486 = vld [vmem:[%s1 + $0x24] sm:$0xff]
        %v487 = vld [vmem:[%s1 + $0x2c] sm:$0xf]
        %v488 = vld [vmem:[%s1 + $0x30] sm:$0xff]
        %v489 = vld [vmem:[%s1 + $0x38] sm:$0xf]
        %v490 = vld [vmem:[%s1 + $0x3c] sm:$0xff]
        %v491 = vld [vmem:[%s1 + $0x44] sm:$0xf]
        %v492 = vld [vmem:[%s1 + $0x48] sm:$0xff]
        %v493 = vld [vmem:[%s1 + $0x50] sm:$0xf]
        %v494 = vld [vmem:[%s1 + $0x54] sm:$0xff]
        %v495 = vld [vmem:[%s1 + $0x5c] sm:$0xf]
        %v496 = vld [vmem:[%s1 + $0x60] sm:$0xff]
        %v497 = vld [vmem:[%s1 + $0x68] sm:$0xf]
        %v498 = vld [vmem:[%s1 + $0x6c] sm:$0xff]
        %v499 = vld [vmem:[%s1 + $0x74] sm:$0xf]
        %v500 = vld [vmem:[%s1 + $0x78] sm:$0xff]
        %v501 = vld [vmem:[%s1 + $0x80] sm:$0xf]
        %v502 = vld [vmem:[%s1 + $0x84] sm:$0xff]
        %v503 = vld [vmem:[%s1 + $0x8c] sm:$0xf]
        %v504 = vld [vmem:[%s1 + $0x90] sm:$0xff]
        %v505 = vld [vmem:[%s1 + $0x98] sm:$0xf]
        %v506 = vld [vmem:[%s1 + $0x9c] sm:$0xff]
        %v507 = vld [vmem:[%s1 + $0xa4] sm:$0xf]
        %v508 = vld [vmem:[%s1 + $0xa8] sm:$0xff]
        %v509 = vld [vmem:[%s1 + $0xb0] sm:$0xf]
        %v510 = vld [vmem:[%s1 + $0xb4] sm:$0xff]
        %v511 = vld [vmem:[%s1 + $0xbc] sm:$0xf]
        %v512 = vld [vmem:[%s1 + $0xc0] sm:$0xff]
        %v513 = vld [vmem:[%s1 + $0xc8] sm:$0xf]
        %v514 = vld [vmem:[%s1 + $0xcc] sm:$0xff]
        %v515 = vld [vmem:[%s1 + $0xd4] sm:$0xf]
        %v516 = vld [vmem:[%s1 + $0xd8] sm:$0xff]
        %v517 = vld [vmem:[%s1 + $0xe0] sm:$0xf]
        %v518 = vld [vmem:[%s1 + $0xe4] sm:$0xff]
        %v519 = vld [vmem:[%s1 + $0xec] sm:$0xf]
        %v520 = vld [vmem:[%s1 + $0xf0] sm:$0xff]
        %v521 = vld [vmem:[%s1 + $0xf8] sm:$0xf]
        %v522 = vld [vmem:[%s1 + $0xfc] sm:$0xff]
        %v523 = vld [vmem:[%s1 + $0x104] sm:$0xf]
        %v524 = vld [vmem:[%s1 + $0x108] sm:$0xff]
        %v525 = vld [vmem:[%s1 + $0x110] sm:$0xf]
        %v526 = vld [vmem:[%s1 + $0x114] sm:$0xff]
        %v527 = vld [vmem:[%s1 + $0x11c] sm:$0xf]
        %v528 = vld [vmem:[%s1 + $0x120] sm:$0xff]
        %v529 = vld [vmem:[%s1 + $0x128] sm:$0xf]
        %v530 = vld [vmem:[%s1 + $0x12c] sm:$0xff]
        %v531 = vld [vmem:[%s1 + $0x134] sm:$0xf]
        %v532 = vld [vmem:[%s1 + $0x138] sm:$0xff]
        %v533 = vld [vmem:[%s1 + $0x140] sm:$0xf]
        %v534 = vld [vmem:[%s1 + $0x144] sm:$0xff]
        %v535 = vld [vmem:[%s1 + $0x14c] sm:$0xf]
        %v536 = vld [vmem:[%s1 + $0x150] sm:$0xff]
        %v537 = vld [vmem:[%s1 + $0x158] sm:$0xf]
        %v538 = vld [vmem:[%s1 + $0x15c] sm:$0xff]
        %v539 = vld [vmem:[%s1 + $0x164] sm:$0xf]
        %v540 = vld [vmem:[%s1 + $0x168] sm:$0xff]
        %v541 = vld [vmem:[%s1 + $0x170] sm:$0xf]
        %v542 = vld [vmem:[%s1 + $0x174] sm:$0xff]
        %v543 = vld [vmem:[%s1 + $0x17c] sm:$0xf]
        %v544 = vld [vmem:[%s1 + $0x180] sm:$0xff]
        %v545 = vld [vmem:[%s1 + $0x188] sm:$0xf]
        %v546 = vld [vmem:[%s1 + $0x18c] sm:$0xff]
        %v547 = vld [vmem:[%s1 + $0x194] sm:$0xf]
        %v548 = vld [vmem:[%s1 + $0x198] sm:$0xff]
        %v549 = vld [vmem:[%s1 + $0x1a0] sm:$0xf]
        %v550 = vld [vmem:[%s1 + $0x1a4] sm:$0xff]
        %v551 = vld [vmem:[%s1 + $0x1ac] sm:$0xf]
        %v552 = vld [vmem:[%s1 + $0x1b0] sm:$0xff]
        %v553 = vld [vmem:[%s1 + $0x1b8] sm:$0xf]
        %v554 = vld [vmem:[%s1 + $0x1bc] sm:$0xff]
        %v555 = vld [vmem:[%s1 + $0x1c4] sm:$0xf]
        %v556 = vld [vmem:[%s1 + $0x1c8] sm:$0xff]
        %v557 = vld [vmem:[%s1 + $0x1d0] sm:$0xf]
        %v558 = vld [vmem:[%s1 + $0x1d4] sm:$0xff]
        %v559 = vld [vmem:[%s1 + $0x1dc] sm:$0xf]
        %v560 = vld [vmem:[%s1 + $0x1e0] sm:$0xff]
        %v561 = vld [vmem:[%s1 + $0x1e8] sm:$0xf]
        %v562 = vld [vmem:[%s1 + $0x1ec] sm:$0xff]
        %v563 = vld [vmem:[%s1 + $0x1f4] sm:$0xf]
        %v564 = vld [vmem:[%s1 + $0x1f8] sm:$0xff]
        %v565 = vld [vmem:[%s1 + $0x200] sm:$0xf]
        %v566 = vld [vmem:[%s1 + $0x204] sm:$0xff]
        %v567 = vld [vmem:[%s1 + $0x20c] sm:$0xf]
        %v568 = vld [vmem:[%s1 + $0x210] sm:$0xff]
        %v569 = vld [vmem:[%s1 + $0x218] sm:$0xf]
        %v570 = vld [vmem:[%s1 + $0x21c] sm:$0xff]
        %v571 = vld [vmem:[%s1 + $0x224] sm:$0xf]
        %v572 = vld [vmem:[%s1 + $0x228] sm:$0xff]
        %v573 = vld [vmem:[%s1 + $0x230] sm:$0xf]
        %v574 = vld [vmem:[%s1 + $0x234] sm:$0xff]
        %v575 = vld [vmem:[%s1 + $0x23c] sm:$0xf]
        %v576 = vld [vmem:[%s1 + $0x240] sm:$0xff]
        %v577 = vld [vmem:[%s1 + $0x248] sm:$0xf]
        %v578 = vld [vmem:[%s1 + $0x24c] sm:$0xff]
        %v579 = vld [vmem:[%s1 + $0x254] sm:$0xf]
        %v580 = vld [vmem:[%s1 + $0x258] sm:$0xff]
        %v581 = vld [vmem:[%s1 + $0x260] sm:$0xf]
        %v582 = vld [vmem:[%s1 + $0x264] sm:$0xff]
        %v583 = vld [vmem:[%s1 + $0x26c] sm:$0xf]
        %v584 = vld [vmem:[%s1 + $0x270] sm:$0xff]
        %v585 = vld [vmem:[%s1 + $0x278] sm:$0xf]
        %v586 = vld [vmem:[%s1 + $0x27c] sm:$0xff]
        %v587 = vld [vmem:[%s1 + $0x284] sm:$0xf]
        %v588 = vld [vmem:[%s1 + $0x288] sm:$0xff]
        %v589 = vld [vmem:[%s1 + $0x290] sm:$0xf]
        %v590 = vld [vmem:[%s1 + $0x294] sm:$0xff]
        %v591 = vld [vmem:[%s1 + $0x29c] sm:$0xf]
        %v592 = vld [vmem:[%s1 + $0x2a0] sm:$0xff]
        %v593 = vld [vmem:[%s1 + $0x2a8] sm:$0xf]
        %v594 = vld [vmem:[%s1 + $0x2ac] sm:$0xff]
        %v595 = vld [vmem:[%s1 + $0x2b4] sm:$0xf]
        %v596 = vld [vmem:[%s1 + $0x2b8] sm:$0xff]
        %v597 = vld [vmem:[%s1 + $0x2c0] sm:$0xf]
        %v598 = vld [vmem:[%s1 + $0x2c4] sm:$0xff]
        %v599 = vld [vmem:[%s1 + $0x2cc] sm:$0xf]
        %v600 = vld [vmem:[%s1 + $0x2d0] sm:$0xff]
        %v601 = vld [vmem:[%s1 + $0x2d8] sm:$0xf]
        %v602 = vld [vmem:[%s1 + $0x2dc] sm:$0xff]
        %v603 = vld [vmem:[%s1 + $0x2e4] sm:$0xf]
        %v604 = vld [vmem:[%s1 + $0x2e8] sm:$0xff]
        %v605 = vld [vmem:[%s1 + $0x2f0] sm:$0xf]
        %v606 = vld [vmem:[%s1 + $0x2f4] sm:$0xff]
        %v607 = vld [vmem:[%s1 + $0x2fc] sm:$0xf]
        %v608 = vld [vmem:[%s1 + $0x300] sm:$0xff]
        %v609 = vld [vmem:[%s1 + $0x308] sm:$0xf]
        %v610 = vld [vmem:[%s1 + $0x30c] sm:$0xff]
        %v611 = vld [vmem:[%s1 + $0x314] sm:$0xf]
        %v612 = vld [vmem:[%s1 + $0x318] sm:$0xff]
        %v613 = vld [vmem:[%s1 + $0x320] sm:$0xf]
        %v614 = vld [vmem:[%s1 + $0x324] sm:$0xff]
        %v615 = vld [vmem:[%s1 + $0x32c] sm:$0xf]
        %v616 = vld [vmem:[%s1 + $0x330] sm:$0xff]
        %v617 = vld [vmem:[%s1 + $0x338] sm:$0xf]
        %v618 = vld [vmem:[%s1 + $0x33c] sm:$0xff]
        %v619 = vld [vmem:[%s1 + $0x344] sm:$0xf]
        %v620 = vld [vmem:[%s1 + $0x348] sm:$0xff]
        %v621 = vld [vmem:[%s1 + $0x350] sm:$0xf]
        %v622 = vld [vmem:[%s1 + $0x354] sm:$0xff]
        %v623 = vld [vmem:[%s1 + $0x35c] sm:$0xf]
        %v624 = vld [vmem:[%s1 + $0x360] sm:$0xff]
        %v625 = vld [vmem:[%s1 + $0x368] sm:$0xf]
        %v626 = vld [vmem:[%s1 + $0x36c] sm:$0xff]
        %v627 = vld [vmem:[%s1 + $0x374] sm:$0xf]
        %v628 = vld [vmem:[%s1 + $0x378] sm:$0xff]
        %v629 = vld [vmem:[%s1 + $0x380] sm:$0xf]
        %v630 = vld [vmem:[%s1 + $0x384] sm:$0xff]
        %v631 = vld [vmem:[%s1 + $0x38c] sm:$0xf]
        %v632 = vld [vmem:[%s1 + $0x390] sm:$0xff]
        %v633 = vld [vmem:[%s1 + $0x398] sm:$0xf]
        %v634 = vld [vmem:[%s1 + $0x39c] sm:$0xff]
        %v635 = vld [vmem:[%s1 + $0x3a4] sm:$0xf]
        %v636 = vld [vmem:[%s1 + $0x3a8] sm:$0xff]
        %v637 = vld [vmem:[%s1 + $0x3b0] sm:$0xf]
        %v638 = vld [vmem:[%s1 + $0x3b4] sm:$0xff]
        %v639 = vld [vmem:[%s1 + $0x3bc] sm:$0xf]
        %v640 = vld [vmem:[%s1 + $0x3c0] sm:$0xff]
        %v641 = vld [vmem:[%s1 + $0x3c8] sm:$0xf]
        %v642 = vld [vmem:[%s1 + $0x3cc] sm:$0xff]
        %v643 = vld [vmem:[%s1 + $0x3d4] sm:$0xf]
        %v644 = vld [vmem:[%s1 + $0x3d8] sm:$0xff]
        %v645 = vld [vmem:[%s1 + $0x3e0] sm:$0xf]
        %v646 = vld [vmem:[%s1 + $0x3e4] sm:$0xff]
        %v647 = vld [vmem:[%s1 + $0x3ec] sm:$0xf]
        %v648 = vld [vmem:[%s1 + $0x3f0] sm:$0xff]
        %v649 = vld [vmem:[%s1 + $0x3f8] sm:$0xf]
        %v650 = vld [vmem:[%s1 + $0x3fc] sm:$0xff]
        %v651 = vld [vmem:[%s1 + $0x404] sm:$0xf]
        %v652 = vld [vmem:[%s1 + $0x408] sm:$0xff]
        %v653 = vld [vmem:[%s1 + $0x410] sm:$0xf]
        %v654 = vld [vmem:[%s1 + $0x414] sm:$0xff]
        %v655 = vld [vmem:[%s1 + $0x41c] sm:$0xf]
        %v656 = vld [vmem:[%s1 + $0x420] sm:$0xff]
        %v657 = vld [vmem:[%s1 + $0x428] sm:$0xf]
        %v658 = vld [vmem:[%s1 + $0x42c] sm:$0xff]
        %v659 = vld [vmem:[%s1 + $0x434] sm:$0xf]
        %v660 = vld [vmem:[%s1 + $0x438] sm:$0xff]
        %v661 = vld [vmem:[%s1 + $0x440] sm:$0xf]
        %v662 = vld [vmem:[%s1 + $0x444] sm:$0xff]
        %v663 = vld [vmem:[%s1 + $0x44c] sm:$0xf]
        %v664 = vld [vmem:[%s1 + $0x450] sm:$0xff]
        %v665 = vld [vmem:[%s1 + $0x458] sm:$0xf]
        %v666 = vld [vmem:[%s1 + $0x45c] sm:$0xff]
        %v667 = vld [vmem:[%s1 + $0x464] sm:$0xf]
        %v668 = vld [vmem:[%s1 + $0x468] sm:$0xff]
        %v669 = vld [vmem:[%s1 + $0x470] sm:$0xf]
        %v670 = vld [vmem:[%s1 + $0x474] sm:$0xff]
        %v671 = vld [vmem:[%s1 + $0x47c] sm:$0xf]
        %v672 = vld [vmem:[%s1 + $0x480] sm:$0xff]
        %v673 = vld [vmem:[%s1 + $0x488] sm:$0xf]
        %v674 = vld [vmem:[%s1 + $0x48c] sm:$0xff]
        %v675 = vld [vmem:[%s1 + $0x494] sm:$0xf]
        %v676 = vld [vmem:[%s1 + $0x498] sm:$0xff]
        %v677 = vld [vmem:[%s1 + $0x4a0] sm:$0xf]
        %v678 = vld [vmem:[%s1 + $0x4a4] sm:$0xff]
        %v679 = vld [vmem:[%s1 + $0x4ac] sm:$0xf]
        %v680 = vld [vmem:[%s1 + $0x4b0] sm:$0xff]
        %v681 = vld [vmem:[%s1 + $0x4b8] sm:$0xf]
        %v682 = vld [vmem:[%s1 + $0x4bc] sm:$0xff]
        %v683 = vld [vmem:[%s1 + $0x4c4] sm:$0xf]
        %v684 = vld [vmem:[%s1 + $0x4c8] sm:$0xff]
        %v685 = vld [vmem:[%s1 + $0x4d0] sm:$0xf]
        %v686 = vld [vmem:[%s1 + $0x4d4] sm:$0xff]
        %v687 = vld [vmem:[%s1 + $0x4dc] sm:$0xf]
        %v688 = vld [vmem:[%s1 + $0x4e0] sm:$0xff]
        %v689 = vld [vmem:[%s1 + $0x4e8] sm:$0xf]
        %v690 = vld [vmem:[%s1 + $0x4ec] sm:$0xff]
        %v691 = vld [vmem:[%s1 + $0x4f4] sm:$0xf]
        %v692 = vld [vmem:[%s1 + $0x4f8] sm:$0xff]
        %v693 = vld [vmem:[%s1 + $0x500] sm:$0xf]
        %v694 = vld [vmem:[%s1 + $0x504] sm:$0xff]
        %v695 = vld [vmem:[%s1 + $0x50c] sm:$0xf]
        %v696 = vld [vmem:[%s1 + $0x510] sm:$0xff]
        %v697 = vld [vmem:[%s1 + $0x518] sm:$0xf]
        %v698 = vld [vmem:[%s1 + $0x51c] sm:$0xff]
        %v699 = vld [vmem:[%s1 + $0x524] sm:$0xf]
        %v700 = vld [vmem:[%s1 + $0x528] sm:$0xff]
        %v701 = vld [vmem:[%s1 + $0x530] sm:$0xf]
        %v702 = vld [vmem:[%s1 + $0x534] sm:$0xff]
        %v703 = vld [vmem:[%s1 + $0x53c] sm:$0xf]
        %v704 = vld [vmem:[%s1 + $0x540] sm:$0xff]
        %v705 = vld [vmem:[%s1 + $0x548] sm:$0xf]
        %v706 = vld [vmem:[%s1 + $0x54c] sm:$0xff]
        %v707 = vld [vmem:[%s1 + $0x554] sm:$0xf]
        %v708 = vld [vmem:[%s1 + $0x558] sm:$0xff]
        %v709 = vld [vmem:[%s1 + $0x560] sm:$0xf]
        %v710 = vld [vmem:[%s1 + $0x564] sm:$0xff]
        %v711 = vld [vmem:[%s1 + $0x56c] sm:$0xf]
        %v712 = vld [vmem:[%s1 + $0x570] sm:$0xff]
        %v713 = vld [vmem:[%s1 + $0x578] sm:$0xf]
        %v714 = vld [vmem:[%s1 + $0x57c] sm:$0xff]
        %v715 = vld [vmem:[%s1 + $0x584] sm:$0xf]
        %v716 = vld [vmem:[%s1 + $0x588] sm:$0xff]
        %v717 = vld [vmem:[%s1 + $0x590] sm:$0xf]
        %v718 = vld [vmem:[%s1 + $0x594] sm:$0xff]
        %v719 = vld [vmem:[%s1 + $0x59c] sm:$0xf]
        %v720 = vld [vmem:[%s1 + $0x5a0] sm:$0xff]
        %v721 = vld [vmem:[%s1 + $0x5a8] sm:$0xf]
        %v722 = vld [vmem:[%s1 + $0x5ac] sm:$0xff]
        %v723 = vld [vmem:[%s1 + $0x5b4] sm:$0xf]
        %v724 = vld [vmem:[%s1 + $0x5b8] sm:$0xff]
        %v725 = vld [vmem:[%s1 + $0x5c0] sm:$0xf]
        %v726 = vld [vmem:[%s1 + $0x5c4] sm:$0xff]
        %v727 = vld [vmem:[%s1 + $0x5cc] sm:$0xf]
        %v728 = vld [vmem:[%s1 + $0x5d0] sm:$0xff]
        %v729 = vld [vmem:[%s1 + $0x5d8] sm:$0xf]
        %v730 = vld [vmem:[%s1 + $0x5dc] sm:$0xff]
        %v731 = vld [vmem:[%s1 + $0x5e4] sm:$0xf]
        %v732 = vld [vmem:[%s1 + $0x5e8] sm:$0xff]
        %v733 = vld [vmem:[%s1 + $0x5f0] sm:$0xf]
        %v734 = vld [vmem:[%s1 + $0x5f4] sm:$0xff]
        %v735 = vld [vmem:[%s1 + $0x5fc] sm:$0xf]
        %v736 = vld [vmem:[%s1 + $0x600] sm:$0xff]
        %v737 = vld [vmem:[%s1 + $0x608] sm:$0xf]
        %v738 = vld [vmem:[%s1 + $0x60c] sm:$0xff]
        %v739 = vld [vmem:[%s1 + $0x614] sm:$0xf]
        %v740 = vld [vmem:[%s1 + $0x618] sm:$0xff]
        %v741 = vld [vmem:[%s1 + $0x620] sm:$0xf]
        %v742 = vld [vmem:[%s1 + $0x624] sm:$0xff]
        %v743 = vld [vmem:[%s1 + $0x62c] sm:$0xf]
        %v744 = vld [vmem:[%s1 + $0x630] sm:$0xff]
        %v745 = vld [vmem:[%s1 + $0x638] sm:$0xf]
        %v746 = vld [vmem:[%s1 + $0x63c] sm:$0xff]
        %v747 = vld [vmem:[%s1 + $0x644] sm:$0xf]
        %v748 = vld [vmem:[%s1 + $0x648] sm:$0xff]
        %v749 = vld [vmem:[%s1 + $0x650] sm:$0xf]
        %v750 = vld [vmem:[%s1 + $0x654] sm:$0xff]
        %v751 = vld [vmem:[%s1 + $0x65c] sm:$0xf]
        %v752 = vld [vmem:[%s1 + $0x660] sm:$0xff]
        %v753 = vld [vmem:[%s1 + $0x668] sm:$0xf]
        %v754 = vld [vmem:[%s1 + $0x66c] sm:$0xff]
        %v755 = vld [vmem:[%s1 + $0x674] sm:$0xf]
        %v756 = vld [vmem:[%s1 + $0x678] sm:$0xff]
        %v757 = vld [vmem:[%s1 + $0x680] sm:$0xf]
        %v758 = vld [vmem:[%s1 + $0x684] sm:$0xff]
        %v759 = vld [vmem:[%s1 + $0x68c] sm:$0xf]
        %v760 = vld [vmem:[%s1 + $0x690] sm:$0xff]
        %v761 = vld [vmem:[%s1 + $0x698] sm:$0xf]
        %v762 = vld [vmem:[%s1 + $0x69c] sm:$0xff]
        %v763 = vld [vmem:[%s1 + $0x6a4] sm:$0xf]
        %v764 = vld [vmem:[%s1 + $0x6a8] sm:$0xff]
        %v765 = vld [vmem:[%s1 + $0x6b0] sm:$0xf]
        %v766 = vld [vmem:[%s1 + $0x6b4] sm:$0xff]
        %v767 = vld [vmem:[%s1 + $0x6bc] sm:$0xf]
        %v808 = vunpack.c.l.b16 %v440
        %v809 = vunpack.c.h.b16 %v440
        %v810 = vunpack.c.l.b16 %v441
        %v811 = vunpack.c.h.b16 %v441
        %v812 = vunpack.c.l.b16 %v442
        %v813 = vunpack.c.h.b16 %v442
        %v814 = vunpack.c.l.b16 %v443
        %v815 = vunpack.c.h.b16 %v443
        %v816 = vunpack.c.l.b16 %v444
        %v817 = vunpack.c.l.b16 %v445
        %v818 = vunpack.c.h.b16 %v445
        %v819 = vunpack.c.l.b16 %v446
        %v820 = vunpack.c.h.b16 %v446
        %v821 = vunpack.c.l.b16 %v447
        %v822 = vunpack.c.h.b16 %v447
        %v823 = vunpack.c.l.b16 %v448
        %v824 = vunpack.c.h.b16 %v448
        %v825 = vunpack.c.l.b16 %v449
        %v826 = vunpack.c.l.b16 %v450
        %v827 = vunpack.c.h.b16 %v450
        %v828 = vunpack.c.l.b16 %v451
        %v829 = vunpack.c.h.b16 %v451
        %v830 = vunpack.c.l.b16 %v452
        %v831 = vunpack.c.h.b16 %v452
        %v832 = vunpack.c.l.b16 %v453
        %v833 = vunpack.c.h.b16 %v453
        %v834 = vunpack.c.l.b16 %v454
        %v835 = vunpack.c.l.b16 %v455
        %v836 = vunpack.c.h.b16 %v455
        %v837 = vunpack.c.l.b16 %v456
        %v838 = vunpack.c.h.b16 %v456
        %v839 = vunpack.c.l.b16 %v457
        %v840 = vunpack.c.h.b16 %v457
        %v841 = vunpack.c.l.b16 %v458
        %v842 = vunpack.c.h.b16 %v458
        %v843 = vunpack.c.l.b16 %v459
        %v844 = vunpack.c.l.b16 %v460
        %v845 = vunpack.c.h.b16 %v460
        %v846 = vunpack.c.l.b16 %v461
        %v847 = vunpack.c.h.b16 %v461
        %v848 = vunpack.c.l.b16 %v462
        %v849 = vunpack.c.h.b16 %v462
        %v850 = vunpack.c.l.b16 %v463
        %v851 = vunpack.c.h.b16 %v463
        %v852 = vunpack.c.l.b16 %v464
        %v853 = vunpack.c.l.b16 %v465
        %v854 = vunpack.c.h.b16 %v465
        %v855 = vunpack.c.l.b16 %v466
        %v856 = vunpack.c.h.b16 %v466
        %v857 = vunpack.c.l.b16 %v467
        %v858 = vunpack.c.h.b16 %v467
        %v859 = vunpack.c.l.b16 %v468
        %v860 = vunpack.c.h.b16 %v468
        %v861 = vunpack.c.l.b16 %v469
        %v862 = vunpack.c.l.b16 %v470
        %v863 = vunpack.c.h.b16 %v470
        %v864 = vunpack.c.l.b16 %v471
        %v865 = vunpack.c.h.b16 %v471
        %v866 = vunpack.c.l.b16 %v472
        %v867 = vunpack.c.h.b16 %v472
        %v868 = vunpack.c.l.b16 %v473
        %v869 = vunpack.c.h.b16 %v473
        %v870 = vunpack.c.l.b16 %v474
        %v871 = vunpack.c.l.b16 %v475
        %v872 = vunpack.c.h.b16 %v475
        %v873 = vunpack.c.l.b16 %v476
        %v874 = vunpack.c.h.b16 %v476
        %v875 = vunpack.c.l.b16 %v477
        %v876 = vunpack.c.h.b16 %v477
        %v877 = vunpack.c.l.b16 %v478
        %v878 = vunpack.c.h.b16 %v478
        %v879 = vunpack.c.l.b16 %v479
        %v880 = vpack.c.b16 %v817, %v808
        %v881 = vpack.c.b16 %v818, %v809
        %v882 = vpack.c.b16 %v819, %v810
        %v883 = vpack.c.b16 %v820, %v811
        %v884 = vpack.c.b16 %v821, %v812
        %v885 = vpack.c.b16 %v822, %v813
        %v886 = vpack.c.b16 %v823, %v814
        %v887 = vpack.c.b16 %v824, %v815
        %v888 = vpack.c.b16 %v825, %v816
        %v889 = vpack.c.b16 %v835, %v826
        %v890 = vpack.c.b16 %v836, %v827
        %v891 = vpack.c.b16 %v837, %v828
        %v892 = vpack.c.b16 %v838, %v829
        %v893 = vpack.c.b16 %v839, %v830
        %v894 = vpack.c.b16 %v840, %v831
        %v895 = vpack.c.b16 %v841, %v832
        %v896 = vpack.c.b16 %v842, %v833
        %v897 = vpack.c.b16 %v843, %v834
        %v898 = vpack.c.b16 %v853, %v844
        %v899 = vpack.c.b16 %v854, %v845
        %v900 = vpack.c.b16 %v855, %v846
        %v901 = vpack.c.b16 %v856, %v847
        %v902 = vpack.c.b16 %v857, %v848
        %v903 = vpack.c.b16 %v858, %v849
        %v904 = vpack.c.b16 %v859, %v850
        %v905 = vpack.c.b16 %v860, %v851
        %v906 = vpack.c.b16 %v861, %v852
        %v907 = vpack.c.b16 %v871, %v862
        %v908 = vpack.c.b16 %v872, %v863
        %v909 = vpack.c.b16 %v873, %v864
        %v910 = vpack.c.b16 %v874, %v865
        %v911 = vpack.c.b16 %v875, %v866
        %v912 = vpack.c.b16 %v876, %v867
        %v913 = vpack.c.b16 %v877, %v868
        %v914 = vpack.c.b16 %v878, %v869
        %v915 = vpack.c.b16 %v879, %v870
        %v1240 = vunpack.c.l.b16 %v480
        %v1241 = vunpack.c.h.b16 %v480
        %v1242 = vunpack.c.l.b16 %v481
        %v1243 = vunpack.c.l.b16 %v482
        %v1244 = vunpack.c.h.b16 %v482
        %v1245 = vunpack.c.l.b16 %v483
        %v1246 = vunpack.c.l.b16 %v484
        %v1247 = vunpack.c.h.b16 %v484
        %v1248 = vunpack.c.l.b16 %v485
        %v1249 = vunpack.c.l.b16 %v486
        %v1250 = vunpack.c.h.b16 %v486
        %v1251 = vunpack.c.l.b16 %v487
        %v1252 = vunpack.c.l.b16 %v488
        %v1253 = vunpack.c.h.b16 %v488
        %v1254 = vunpack.c.l.b16 %v489
        %v1255 = vunpack.c.l.b16 %v490
        %v1256 = vunpack.c.h.b16 %v490
        %v1257 = vunpack.c.l.b16 %v491
        %v1258 = vunpack.c.l.b16 %v492
        %v1259 = vunpack.c.h.b16 %v492
        %v1260 = vunpack.c.l.b16 %v493
        %v1261 = vunpack.c.l.b16 %v494
        %v1262 = vunpack.c.h.b16 %v494
        %v1263 = vunpack.c.l.b16 %v495
        %v1264 = vunpack.c.l.b16 %v496
        %v1265 = vunpack.c.h.b16 %v496
        %v1266 = vunpack.c.l.b16 %v497
        %v1267 = vunpack.c.l.b16 %v498
        %v1268 = vunpack.c.h.b16 %v498
        %v1269 = vunpack.c.l.b16 %v499
        %v1270 = vunpack.c.l.b16 %v500
        %v1271 = vunpack.c.h.b16 %v500
        %v1272 = vunpack.c.l.b16 %v501
        %v1273 = vunpack.c.l.b16 %v502
        %v1274 = vunpack.c.h.b16 %v502
        %v1275 = vunpack.c.l.b16 %v503
        %v1276 = vunpack.c.l.b16 %v504
        %v1277 = vunpack.c.h.b16 %v504
        %v1278 = vunpack.c.l.b16 %v505
        %v1279 = vunpack.c.l.b16 %v506
        %v1280 = vunpack.c.h.b16 %v506
        %v1281 = vunpack.c.l.b16 %v507
        %v1282 = vunpack.c.l.b16 %v508
        %v1283 = vunpack.c.h.b16 %v508
        %v1284 = vunpack.c.l.b16 %v509
        %v1285 = vunpack.c.l.b16 %v510
        %v1286 = vunpack.c.h.b16 %v510
        %v1287 = vunpack.c.l.b16 %v511
        %v1288 = vunpack.c.l.b16 %v512
        %v1289 = vunpack.c.h.b16 %v512
        %v1290 = vunpack.c.l.b16 %v513
        %v1291 = vunpack.c.l.b16 %v514
        %v1292 = vunpack.c.h.b16 %v514
        %v1293 = vunpack.c.l.b16 %v515
        %v1294 = vunpack.c.l.b16 %v516
        %v1295 = vunpack.c.h.b16 %v516
        %v1296 = vunpack.c.l.b16 %v517
        %v1297 = vunpack.c.l.b16 %v518
        %v1298 = vunpack.c.h.b16 %v518
        %v1299 = vunpack.c.l.b16 %v519
        %v1300 = vunpack.c.l.b16 %v520
        %v1301 = vunpack.c.h.b16 %v520
        %v1302 = vunpack.c.l.b16 %v521
        %v1303 = vunpack.c.l.b16 %v522
        %v1304 = vunpack.c.h.b16 %v522
        %v1305 = vunpack.c.l.b16 %v523
        %v1306 = vunpack.c.l.b16 %v524
        %v1307 = vunpack.c.h.b16 %v524
        %v1308 = vunpack.c.l.b16 %v525
        %v1309 = vunpack.c.l.b16 %v526
        %v1310 = vunpack.c.h.b16 %v526
        %v1311 = vunpack.c.l.b16 %v527
        %v1312 = vunpack.c.l.b16 %v528
        %v1313 = vunpack.c.h.b16 %v528
        %v1314 = vunpack.c.l.b16 %v529
        %v1315 = vunpack.c.l.b16 %v530
        %v1316 = vunpack.c.h.b16 %v530
        %v1317 = vunpack.c.l.b16 %v531
        %v1318 = vunpack.c.l.b16 %v532
        %v1319 = vunpack.c.h.b16 %v532
        %v1320 = vunpack.c.l.b16 %v533
        %v1321 = vunpack.c.l.b16 %v534
        %v1322 = vunpack.c.h.b16 %v534
        %v1323 = vunpack.c.l.b16 %v535
        %v1324 = vunpack.c.l.b16 %v536
        %v1325 = vunpack.c.h.b16 %v536
        %v1326 = vunpack.c.l.b16 %v537
        %v1327 = vunpack.c.l.b16 %v538
        %v1328 = vunpack.c.h.b16 %v538
        %v1329 = vunpack.c.l.b16 %v539
        %v1330 = vunpack.c.l.b16 %v540
        %v1331 = vunpack.c.h.b16 %v540
        %v1332 = vunpack.c.l.b16 %v541
        %v1333 = vunpack.c.l.b16 %v542
        %v1334 = vunpack.c.h.b16 %v542
        %v1335 = vunpack.c.l.b16 %v543
        %v1336 = vunpack.c.l.b16 %v544
        %v1337 = vunpack.c.h.b16 %v544
        %v1338 = vunpack.c.l.b16 %v545
        %v1339 = vunpack.c.l.b16 %v546
        %v1340 = vunpack.c.h.b16 %v546
        %v1341 = vunpack.c.l.b16 %v547
        %v1342 = vunpack.c.l.b16 %v548
        %v1343 = vunpack.c.h.b16 %v548
        %v1344 = vunpack.c.l.b16 %v549
        %v1345 = vunpack.c.l.b16 %v550
        %v1346 = vunpack.c.h.b16 %v550
        %v1347 = vunpack.c.l.b16 %v551
        %v1348 = vunpack.c.l.b16 %v552
        %v1349 = vunpack.c.h.b16 %v552
        %v1350 = vunpack.c.l.b16 %v553
        %v1351 = vunpack.c.l.b16 %v554
        %v1352 = vunpack.c.h.b16 %v554
        %v1353 = vunpack.c.l.b16 %v555
        %v1354 = vunpack.c.l.b16 %v556
        %v1355 = vunpack.c.h.b16 %v556
        %v1356 = vunpack.c.l.b16 %v557
        %v1357 = vunpack.c.l.b16 %v558
        %v1358 = vunpack.c.h.b16 %v558
        %v1359 = vunpack.c.l.b16 %v559
        %v1360 = vunpack.c.l.b16 %v560
        %v1361 = vunpack.c.h.b16 %v560
        %v1362 = vunpack.c.l.b16 %v561
        %v1363 = vunpack.c.l.b16 %v562
        %v1364 = vunpack.c.h.b16 %v562
        %v1365 = vunpack.c.l.b16 %v563
        %v1366 = vunpack.c.l.b16 %v564
        %v1367 = vunpack.c.h.b16 %v564
        %v1368 = vunpack.c.l.b16 %v565
        %v1369 = vunpack.c.l.b16 %v566
        %v1370 = vunpack.c.h.b16 %v566
        %v1371 = vunpack.c.l.b16 %v567
        %v1372 = vunpack.c.l.b16 %v568
        %v1373 = vunpack.c.h.b16 %v568
        %v1374 = vunpack.c.l.b16 %v569
        %v1375 = vunpack.c.l.b16 %v570
        %v1376 = vunpack.c.h.b16 %v570
        %v1377 = vunpack.c.l.b16 %v571
        %v1378 = vunpack.c.l.b16 %v572
        %v1379 = vunpack.c.h.b16 %v572
        %v1380 = vunpack.c.l.b16 %v573
        %v1381 = vunpack.c.l.b16 %v574
        %v1382 = vunpack.c.h.b16 %v574
        %v1383 = vunpack.c.l.b16 %v575
        %v1384 = vunpack.c.l.b16 %v576
        %v1385 = vunpack.c.h.b16 %v576
        %v1386 = vunpack.c.l.b16 %v577
        %v1387 = vunpack.c.l.b16 %v578
        %v1388 = vunpack.c.h.b16 %v578
        %v1389 = vunpack.c.l.b16 %v579
        %v1390 = vunpack.c.l.b16 %v580
        %v1391 = vunpack.c.h.b16 %v580
        %v1392 = vunpack.c.l.b16 %v581
        %v1393 = vunpack.c.l.b16 %v582
        %v1394 = vunpack.c.h.b16 %v582
        %v1395 = vunpack.c.l.b16 %v583
        %v1396 = vunpack.c.l.b16 %v584
        %v1397 = vunpack.c.h.b16 %v584
        %v1398 = vunpack.c.l.b16 %v585
        %v1399 = vunpack.c.l.b16 %v586
        %v1400 = vunpack.c.h.b16 %v586
        %v1401 = vunpack.c.l.b16 %v587
        %v1402 = vunpack.c.l.b16 %v588
        %v1403 = vunpack.c.h.b16 %v588
        %v1404 = vunpack.c.l.b16 %v589
        %v1405 = vunpack.c.l.b16 %v590
        %v1406 = vunpack.c.h.b16 %v590
        %v1407 = vunpack.c.l.b16 %v591
        %v1408 = vunpack.c.l.b16 %v592
        %v1409 = vunpack.c.h.b16 %v592
        %v1410 = vunpack.c.l.b16 %v593
        %v1411 = vunpack.c.l.b16 %v594
        %v1412 = vunpack.c.h.b16 %v594
        %v1413 = vunpack.c.l.b16 %v595
        %v1414 = vunpack.c.l.b16 %v596
        %v1415 = vunpack.c.h.b16 %v596
        %v1416 = vunpack.c.l.b16 %v597
        %v1417 = vunpack.c.l.b16 %v598
        %v1418 = vunpack.c.h.b16 %v598
        %v1419 = vunpack.c.l.b16 %v599
        %v1420 = vunpack.c.l.b16 %v600
        %v1421 = vunpack.c.h.b16 %v600
        %v1422 = vunpack.c.l.b16 %v601
        %v1423 = vunpack.c.l.b16 %v602
        %v1424 = vunpack.c.h.b16 %v602
        %v1425 = vunpack.c.l.b16 %v603
        %v1426 = vunpack.c.l.b16 %v604
        %v1427 = vunpack.c.h.b16 %v604
        %v1428 = vunpack.c.l.b16 %v605
        %v1429 = vunpack.c.l.b16 %v606
        %v1430 = vunpack.c.h.b16 %v606
        %v1431 = vunpack.c.l.b16 %v607
        %v1432 = vunpack.c.l.b16 %v608
        %v1433 = vunpack.c.h.b16 %v608
        %v1434 = vunpack.c.l.b16 %v609
        %v1435 = vunpack.c.l.b16 %v610
        %v1436 = vunpack.c.h.b16 %v610
        %v1437 = vunpack.c.l.b16 %v611
        %v1438 = vunpack.c.l.b16 %v612
        %v1439 = vunpack.c.h.b16 %v612
        %v1440 = vunpack.c.l.b16 %v613
        %v1441 = vunpack.c.l.b16 %v614
        %v1442 = vunpack.c.h.b16 %v614
        %v1443 = vunpack.c.l.b16 %v615
        %v1444 = vunpack.c.l.b16 %v616
        %v1445 = vunpack.c.h.b16 %v616
        %v1446 = vunpack.c.l.b16 %v617
        %v1447 = vunpack.c.l.b16 %v618
        %v1448 = vunpack.c.h.b16 %v618
        %v1449 = vunpack.c.l.b16 %v619
        %v1450 = vunpack.c.l.b16 %v620
        %v1451 = vunpack.c.h.b16 %v620
        %v1452 = vunpack.c.l.b16 %v621
        %v1453 = vunpack.c.l.b16 %v622
        %v1454 = vunpack.c.h.b16 %v622
        %v1455 = vunpack.c.l.b16 %v623
        %v1456 = vunpack.c.l.b16 %v624
        %v1457 = vunpack.c.h.b16 %v624
        %v1458 = vunpack.c.l.b16 %v625
        %v1459 = vunpack.c.l.b16 %v626
        %v1460 = vunpack.c.h.b16 %v626
        %v1461 = vunpack.c.l.b16 %v627
        %v1462 = vunpack.c.l.b16 %v628
        %v1463 = vunpack.c.h.b16 %v628
        %v1464 = vunpack.c.l.b16 %v629
        %v1465 = vunpack.c.l.b16 %v630
        %v1466 = vunpack.c.h.b16 %v630
        %v1467 = vunpack.c.l.b16 %v631
        %v1468 = vunpack.c.l.b16 %v632
        %v1469 = vunpack.c.h.b16 %v632
        %v1470 = vunpack.c.l.b16 %v633
        %v1471 = vunpack.c.l.b16 %v634
        %v1472 = vunpack.c.h.b16 %v634
        %v1473 = vunpack.c.l.b16 %v635
        %v1474 = vunpack.c.l.b16 %v636
        %v1475 = vunpack.c.h.b16 %v636
        %v1476 = vunpack.c.l.b16 %v637
        %v1477 = vunpack.c.l.b16 %v638
        %v1478 = vunpack.c.h.b16 %v638
        %v1479 = vunpack.c.l.b16 %v639
        %v1480 = vunpack.c.l.b16 %v640
        %v1481 = vunpack.c.h.b16 %v640
        %v1482 = vunpack.c.l.b16 %v641
        %v1483 = vunpack.c.l.b16 %v642
        %v1484 = vunpack.c.h.b16 %v642
        %v1485 = vunpack.c.l.b16 %v643
        %v1486 = vunpack.c.l.b16 %v644
        %v1487 = vunpack.c.h.b16 %v644
        %v1488 = vunpack.c.l.b16 %v645
        %v1489 = vunpack.c.l.b16 %v646
        %v1490 = vunpack.c.h.b16 %v646
        %v1491 = vunpack.c.l.b16 %v647
        %v1492 = vunpack.c.l.b16 %v648
        %v1493 = vunpack.c.h.b16 %v648
        %v1494 = vunpack.c.l.b16 %v649
        %v1495 = vunpack.c.l.b16 %v650
        %v1496 = vunpack.c.h.b16 %v650
        %v1497 = vunpack.c.l.b16 %v651
        %v1498 = vunpack.c.l.b16 %v652
        %v1499 = vunpack.c.h.b16 %v652
        %v1500 = vunpack.c.l.b16 %v653
        %v1501 = vunpack.c.l.b16 %v654
        %v1502 = vunpack.c.h.b16 %v654
        %v1503 = vunpack.c.l.b16 %v655
        %v1504 = vunpack.c.l.b16 %v656
        %v1505 = vunpack.c.h.b16 %v656
        %v1506 = vunpack.c.l.b16 %v657
        %v1507 = vunpack.c.l.b16 %v658
        %v1508 = vunpack.c.h.b16 %v658
        %v1509 = vunpack.c.l.b16 %v659
        %v1510 = vunpack.c.l.b16 %v660
        %v1511 = vunpack.c.h.b16 %v660
        %v1512 = vunpack.c.l.b16 %v661
        %v1513 = vunpack.c.l.b16 %v662
        %v1514 = vunpack.c.h.b16 %v662
        %v1515 = vunpack.c.l.b16 %v663
        %v1516 = vunpack.c.l.b16 %v664
        %v1517 = vunpack.c.h.b16 %v664
        %v1518 = vunpack.c.l.b16 %v665
        %v1519 = vunpack.c.l.b16 %v666
        %v1520 = vunpack.c.h.b16 %v666
        %v1521 = vunpack.c.l.b16 %v667
        %v1522 = vunpack.c.l.b16 %v668
        %v1523 = vunpack.c.h.b16 %v668
        %v1524 = vunpack.c.l.b16 %v669
        %v1525 = vunpack.c.l.b16 %v670
        %v1526 = vunpack.c.h.b16 %v670
        %v1527 = vunpack.c.l.b16 %v671
        %v1528 = vunpack.c.l.b16 %v672
        %v1529 = vunpack.c.h.b16 %v672
        %v1530 = vunpack.c.l.b16 %v673
        %v1531 = vunpack.c.l.b16 %v674
        %v1532 = vunpack.c.h.b16 %v674
        %v1533 = vunpack.c.l.b16 %v675
        %v1534 = vunpack.c.l.b16 %v676
        %v1535 = vunpack.c.h.b16 %v676
        %v1536 = vunpack.c.l.b16 %v677
        %v1537 = vunpack.c.l.b16 %v678
        %v1538 = vunpack.c.h.b16 %v678
        %v1539 = vunpack.c.l.b16 %v679
        %v1540 = vunpack.c.l.b16 %v680
        %v1541 = vunpack.c.h.b16 %v680
        %v1542 = vunpack.c.l.b16 %v681
        %v1543 = vunpack.c.l.b16 %v682
        %v1544 = vunpack.c.h.b16 %v682
        %v1545 = vunpack.c.l.b16 %v683
        %v1546 = vunpack.c.l.b16 %v684
        %v1547 = vunpack.c.h.b16 %v684
        %v1548 = vunpack.c.l.b16 %v685
        %v1549 = vunpack.c.l.b16 %v686
        %v1550 = vunpack.c.h.b16 %v686
        %v1551 = vunpack.c.l.b16 %v687
        %v1552 = vunpack.c.l.b16 %v688
        %v1553 = vunpack.c.h.b16 %v688
        %v1554 = vunpack.c.l.b16 %v689
        %v1555 = vunpack.c.l.b16 %v690
        %v1556 = vunpack.c.h.b16 %v690
        %v1557 = vunpack.c.l.b16 %v691
        %v1558 = vunpack.c.l.b16 %v692
        %v1559 = vunpack.c.h.b16 %v692
        %v1560 = vunpack.c.l.b16 %v693
        %v1561 = vunpack.c.l.b16 %v694
        %v1562 = vunpack.c.h.b16 %v694
        %v1563 = vunpack.c.l.b16 %v695
        %v1564 = vunpack.c.l.b16 %v696
        %v1565 = vunpack.c.h.b16 %v696
        %v1566 = vunpack.c.l.b16 %v697
        %v1567 = vunpack.c.l.b16 %v698
        %v1568 = vunpack.c.h.b16 %v698
        %v1569 = vunpack.c.l.b16 %v699
        %v1570 = vunpack.c.l.b16 %v700
        %v1571 = vunpack.c.h.b16 %v700
        %v1572 = vunpack.c.l.b16 %v701
        %v1573 = vunpack.c.l.b16 %v702
        %v1574 = vunpack.c.h.b16 %v702
        %v1575 = vunpack.c.l.b16 %v703
        %v1576 = vunpack.c.l.b16 %v704
        %v1577 = vunpack.c.h.b16 %v704
        %v1578 = vunpack.c.l.b16 %v705
        %v1579 = vunpack.c.l.b16 %v706
        %v1580 = vunpack.c.h.b16 %v706
        %v1581 = vunpack.c.l.b16 %v707
        %v1582 = vunpack.c.l.b16 %v708
        %v1583 = vunpack.c.h.b16 %v708
        %v1584 = vunpack.c.l.b16 %v709
        %v1585 = vunpack.c.l.b16 %v710
        %v1586 = vunpack.c.h.b16 %v710
        %v1587 = vunpack.c.l.b16 %v711
        %v1588 = vunpack.c.l.b16 %v712
        %v1589 = vunpack.c.h.b16 %v712
        %v1590 = vunpack.c.l.b16 %v713
        %v1591 = vunpack.c.l.b16 %v714
        %v1592 = vunpack.c.h.b16 %v714
        %v1593 = vunpack.c.l.b16 %v715
        %v1594 = vunpack.c.l.b16 %v716
        %v1595 = vunpack.c.h.b16 %v716
        %v1596 = vunpack.c.l.b16 %v717
        %v1597 = vunpack.c.l.b16 %v718
        %v1598 = vunpack.c.h.b16 %v718
        %v1599 = vunpack.c.l.b16 %v719
        %v1600 = vunpack.c.l.b16 %v720
        %v1601 = vunpack.c.h.b16 %v720
        %v1602 = vunpack.c.l.b16 %v721
        %v1603 = vunpack.c.l.b16 %v722
        %v1604 = vunpack.c.h.b16 %v722
        %v1605 = vunpack.c.l.b16 %v723
        %v1606 = vunpack.c.l.b16 %v724
        %v1607 = vunpack.c.h.b16 %v724
        %v1608 = vunpack.c.l.b16 %v725
        %v1609 = vunpack.c.l.b16 %v726
        %v1610 = vunpack.c.h.b16 %v726
        %v1611 = vunpack.c.l.b16 %v727
        %v1612 = vunpack.c.l.b16 %v728
        %v1613 = vunpack.c.h.b16 %v728
        %v1614 = vunpack.c.l.b16 %v729
        %v1615 = vunpack.c.l.b16 %v730
        %v1616 = vunpack.c.h.b16 %v730
        %v1617 = vunpack.c.l.b16 %v731
        %v1618 = vunpack.c.l.b16 %v732
        %v1619 = vunpack.c.h.b16 %v732
        %v1620 = vunpack.c.l.b16 %v733
        %v1621 = vunpack.c.l.b16 %v734
        %v1622 = vunpack.c.h.b16 %v734
        %v1623 = vunpack.c.l.b16 %v735
        %v1624 = vunpack.c.l.b16 %v736
        %v1625 = vunpack.c.h.b16 %v736
        %v1626 = vunpack.c.l.b16 %v737
        %v1627 = vunpack.c.l.b16 %v738
        %v1628 = vunpack.c.h.b16 %v738
        %v1629 = vunpack.c.l.b16 %v739
        %v1630 = vunpack.c.l.b16 %v740
        %v1631 = vunpack.c.h.b16 %v740
        %v1632 = vunpack.c.l.b16 %v741
        %v1633 = vunpack.c.l.b16 %v742
        %v1634 = vunpack.c.h.b16 %v742
        %v1635 = vunpack.c.l.b16 %v743
        %v1636 = vunpack.c.l.b16 %v744
        %v1637 = vunpack.c.h.b16 %v744
        %v1638 = vunpack.c.l.b16 %v745
        %v1639 = vunpack.c.l.b16 %v746
        %v1640 = vunpack.c.h.b16 %v746
        %v1641 = vunpack.c.l.b16 %v747
        %v1642 = vunpack.c.l.b16 %v748
        %v1643 = vunpack.c.h.b16 %v748
        %v1644 = vunpack.c.l.b16 %v749
        %v1645 = vunpack.c.l.b16 %v750
        %v1646 = vunpack.c.h.b16 %v750
        %v1647 = vunpack.c.l.b16 %v751
        %v1648 = vunpack.c.l.b16 %v752
        %v1649 = vunpack.c.h.b16 %v752
        %v1650 = vunpack.c.l.b16 %v753
        %v1651 = vunpack.c.l.b16 %v754
        %v1652 = vunpack.c.h.b16 %v754
        %v1653 = vunpack.c.l.b16 %v755
        %v1654 = vunpack.c.l.b16 %v756
        %v1655 = vunpack.c.h.b16 %v756
        %v1656 = vunpack.c.l.b16 %v757
        %v1657 = vunpack.c.l.b16 %v758
        %v1658 = vunpack.c.h.b16 %v758
        %v1659 = vunpack.c.l.b16 %v759
        %v1660 = vunpack.c.l.b16 %v760
        %v1661 = vunpack.c.h.b16 %v760
        %v1662 = vunpack.c.l.b16 %v761
        %v1663 = vunpack.c.l.b16 %v762
        %v1664 = vunpack.c.h.b16 %v762
        %v1665 = vunpack.c.l.b16 %v763
        %v1666 = vunpack.c.l.b16 %v764
        %v1667 = vunpack.c.h.b16 %v764
        %v1668 = vunpack.c.l.b16 %v765
        %v1669 = vunpack.c.l.b16 %v766
        %v1670 = vunpack.c.h.b16 %v766
        %v1671 = vunpack.c.l.b16 %v767
        %v1672 = vpack.c.b16 %v1243, %v1240
        %v1673 = vpack.c.b16 %v1244, %v1241
        %v1674 = vpack.c.b16 %v1245, %v1242
        %v1675 = vpack.c.b16 %v1249, %v1246
        %v1676 = vpack.c.b16 %v1250, %v1247
        %v1677 = vpack.c.b16 %v1251, %v1248
        %v1678 = vpack.c.b16 %v1255, %v1252
        %v1679 = vpack.c.b16 %v1256, %v1253
        %v1680 = vpack.c.b16 %v1257, %v1254
        %v1681 = vpack.c.b16 %v1261, %v1258
        %v1682 = vpack.c.b16 %v1262, %v1259
        %v1683 = vpack.c.b16 %v1263, %v1260
        %v1684 = vpack.c.b16 %v1267, %v1264
        %v1685 = vpack.c.b16 %v1268, %v1265
        %v1686 = vpack.c.b16 %v1269, %v1266
        %v1687 = vpack.c.b16 %v1273, %v1270
        %v1688 = vpack.c.b16 %v1274, %v1271
        %v1689 = vpack.c.b16 %v1275, %v1272
        %v1690 = vpack.c.b16 %v1279, %v1276
        %v1691 = vpack.c.b16 %v1280, %v1277
        %v1692 = vpack.c.b16 %v1281, %v1278
        %v1693 = vpack.c.b16 %v1285, %v1282
        %v1694 = vpack.c.b16 %v1286, %v1283
        %v1695 = vpack.c.b16 %v1287, %v1284
        %v1696 = vpack.c.b16 %v1291, %v1288
        %v1697 = vpack.c.b16 %v1292, %v1289
        %v1698 = vpack.c.b16 %v1293, %v1290
        %v1699 = vpack.c.b16 %v1297, %v1294
        %v1700 = vpack.c.b16 %v1298, %v1295
        %v1701 = vpack.c.b16 %v1299, %v1296
        %v1702 = vpack.c.b16 %v1303, %v1300
        %v1703 = vpack.c.b16 %v1304, %v1301
        %v1704 = vpack.c.b16 %v1305, %v1302
        %v1705 = vpack.c.b16 %v1309, %v1306
        %v1706 = vpack.c.b16 %v1310, %v1307
        %v1707 = vpack.c.b16 %v1311, %v1308
        %v1708 = vpack.c.b16 %v1315, %v1312
        %v1709 = vpack.c.b16 %v1316, %v1313
        %v1710 = vpack.c.b16 %v1317, %v1314
        %v1711 = vpack.c.b16 %v1321, %v1318
        %v1712 = vpack.c.b16 %v1322, %v1319
        %v1713 = vpack.c.b16 %v1323, %v1320
        %v1714 = vpack.c.b16 %v1327, %v1324
        %v1715 = vpack.c.b16 %v1328, %v1325
        %v1716 = vpack.c.b16 %v1329, %v1326
        %v1717 = vpack.c.b16 %v1333, %v1330
        %v1718 = vpack.c.b16 %v1334, %v1331
        %v1719 = vpack.c.b16 %v1335, %v1332
        %v1720 = vpack.c.b16 %v1339, %v1336
        %v1721 = vpack.c.b16 %v1340, %v1337
        %v1722 = vpack.c.b16 %v1341, %v1338
        %v1723 = vpack.c.b16 %v1345, %v1342
        %v1724 = vpack.c.b16 %v1346, %v1343
        %v1725 = vpack.c.b16 %v1347, %v1344
        %v1726 = vpack.c.b16 %v1351, %v1348
        %v1727 = vpack.c.b16 %v1352, %v1349
        %v1728 = vpack.c.b16 %v1353, %v1350
        %v1729 = vpack.c.b16 %v1357, %v1354
        %v1730 = vpack.c.b16 %v1358, %v1355
        %v1731 = vpack.c.b16 %v1359, %v1356
        %v1732 = vpack.c.b16 %v1363, %v1360
        %v1733 = vpack.c.b16 %v1364, %v1361
        %v1734 = vpack.c.b16 %v1365, %v1362
        %v1735 = vpack.c.b16 %v1369, %v1366
        %v1736 = vpack.c.b16 %v1370, %v1367
        %v1737 = vpack.c.b16 %v1371, %v1368
        %v1738 = vpack.c.b16 %v1375, %v1372
        %v1739 = vpack.c.b16 %v1376, %v1373
        %v1740 = vpack.c.b16 %v1377, %v1374
        %v1741 = vpack.c.b16 %v1381, %v1378
        %v1742 = vpack.c.b16 %v1382, %v1379
        %v1743 = vpack.c.b16 %v1383, %v1380
        %v1744 = vpack.c.b16 %v1387, %v1384
        %v1745 = vpack.c.b16 %v1388, %v1385
        %v1746 = vpack.c.b16 %v1389, %v1386
        %v1747 = vpack.c.b16 %v1393, %v1390
        %v1748 = vpack.c.b16 %v1394, %v1391
        %v1749 = vpack.c.b16 %v1395, %v1392
        %v1750 = vpack.c.b16 %v1399, %v1396
        %v1751 = vpack.c.b16 %v1400, %v1397
        %v1752 = vpack.c.b16 %v1401, %v1398
        %v1753 = vpack.c.b16 %v1405, %v1402
        %v1754 = vpack.c.b16 %v1406, %v1403
        %v1755 = vpack.c.b16 %v1407, %v1404
        %v1756 = vpack.c.b16 %v1411, %v1408
        %v1757 = vpack.c.b16 %v1412, %v1409
        %v1758 = vpack.c.b16 %v1413, %v1410
        %v1759 = vpack.c.b16 %v1417, %v1414
        %v1760 = vpack.c.b16 %v1418, %v1415
        %v1761 = vpack.c.b16 %v1419, %v1416
        %v1762 = vpack.c.b16 %v1423, %v1420
        %v1763 = vpack.c.b16 %v1424, %v1421
        %v1764 = vpack.c.b16 %v1425, %v1422
        %v1765 = vpack.c.b16 %v1429, %v1426
        %v1766 = vpack.c.b16 %v1430, %v1427
        %v1767 = vpack.c.b16 %v1431, %v1428
        %v1768 = vpack.c.b16 %v1435, %v1432
        %v1769 = vpack.c.b16 %v1436, %v1433
        %v1770 = vpack.c.b16 %v1437, %v1434
        %v1771 = vpack.c.b16 %v1441, %v1438
        %v1772 = vpack.c.b16 %v1442, %v1439
        %v1773 = vpack.c.b16 %v1443, %v1440
        %v1774 = vpack.c.b16 %v1447, %v1444
        %v1775 = vpack.c.b16 %v1448, %v1445
        %v1776 = vpack.c.b16 %v1449, %v1446
        %v1777 = vpack.c.b16 %v1453, %v1450
        %v1778 = vpack.c.b16 %v1454, %v1451
        %v1779 = vpack.c.b16 %v1455, %v1452
        %v1780 = vpack.c.b16 %v1459, %v1456
        %v1781 = vpack.c.b16 %v1460, %v1457
        %v1782 = vpack.c.b16 %v1461, %v1458
        %v1783 = vpack.c.b16 %v1465, %v1462
        %v1784 = vpack.c.b16 %v1466, %v1463
        %v1785 = vpack.c.b16 %v1467, %v1464
        %v1786 = vpack.c.b16 %v1471, %v1468
        %v1787 = vpack.c.b16 %v1472, %v1469
        %v1788 = vpack.c.b16 %v1473, %v1470
        %v1789 = vpack.c.b16 %v1477, %v1474
        %v1790 = vpack.c.b16 %v1478, %v1475
        %v1791 = vpack.c.b16 %v1479, %v1476
        %v1792 = vpack.c.b16 %v1483, %v1480
        %v1793 = vpack.c.b16 %v1484, %v1481
        %v1794 = vpack.c.b16 %v1485, %v1482
        %v1795 = vpack.c.b16 %v1489, %v1486
        %v1796 = vpack.c.b16 %v1490, %v1487
        %v1797 = vpack.c.b16 %v1491, %v1488
        %v1798 = vpack.c.b16 %v1495, %v1492
        %v1799 = vpack.c.b16 %v1496, %v1493
        %v1800 = vpack.c.b16 %v1497, %v1494
        %v1801 = vpack.c.b16 %v1501, %v1498
        %v1802 = vpack.c.b16 %v1502, %v1499
        %v1803 = vpack.c.b16 %v1503, %v1500
        %v1804 = vpack.c.b16 %v1507, %v1504
        %v1805 = vpack.c.b16 %v1508, %v1505
        %v1806 = vpack.c.b16 %v1509, %v1506
        %v1807 = vpack.c.b16 %v1513, %v1510
        %v1808 = vpack.c.b16 %v1514, %v1511
        %v1809 = vpack.c.b16 %v1515, %v1512
        %v1810 = vpack.c.b16 %v1519, %v1516
        %v1811 = vpack.c.b16 %v1520, %v1517
        %v1812 = vpack.c.b16 %v1521, %v1518
        %v1813 = vpack.c.b16 %v1525, %v1522
        %v1814 = vpack.c.b16 %v1526, %v1523
        %v1815 = vpack.c.b16 %v1527, %v1524
        %v1816 = vpack.c.b16 %v1531, %v1528
        %v1817 = vpack.c.b16 %v1532, %v1529
        %v1818 = vpack.c.b16 %v1533, %v1530
        %v1819 = vpack.c.b16 %v1537, %v1534
        %v1820 = vpack.c.b16 %v1538, %v1535
        %v1821 = vpack.c.b16 %v1539, %v1536
        %v1822 = vpack.c.b16 %v1543, %v1540
        %v1823 = vpack.c.b16 %v1544, %v1541
        %v1824 = vpack.c.b16 %v1545, %v1542
        %v1825 = vpack.c.b16 %v1549, %v1546
        %v1826 = vpack.c.b16 %v1550, %v1547
        %v1827 = vpack.c.b16 %v1551, %v1548
        %v1828 = vpack.c.b16 %v1555, %v1552
        %v1829 = vpack.c.b16 %v1556, %v1553
        %v1830 = vpack.c.b16 %v1557, %v1554
        %v1831 = vpack.c.b16 %v1561, %v1558
        %v1832 = vpack.c.b16 %v1562, %v1559
        %v1833 = vpack.c.b16 %v1563, %v1560
        %v1834 = vpack.c.b16 %v1567, %v1564
        %v1835 = vpack.c.b16 %v1568, %v1565
        %v1836 = vpack.c.b16 %v1569, %v1566
        %v1837 = vpack.c.b16 %v1573, %v1570
        %v1838 = vpack.c.b16 %v1574, %v1571
        %v1839 = vpack.c.b16 %v1575, %v1572
        %v1840 = vpack.c.b16 %v1579, %v1576
        %v1841 = vpack.c.b16 %v1580, %v1577
        %v1842 = vpack.c.b16 %v1581, %v1578
        %v1843 = vpack.c.b16 %v1585, %v1582
        %v1844 = vpack.c.b16 %v1586, %v1583
        %v1845 = vpack.c.b16 %v1587, %v1584
        %v1846 = vpack.c.b16 %v1591, %v1588
        %v1847 = vpack.c.b16 %v1592, %v1589
        %v1848 = vpack.c.b16 %v1593, %v1590
        %v1849 = vpack.c.b16 %v1597, %v1594
        %v1850 = vpack.c.b16 %v1598, %v1595
        %v1851 = vpack.c.b16 %v1599, %v1596
        %v1852 = vpack.c.b16 %v1603, %v1600
        %v1853 = vpack.c.b16 %v1604, %v1601
        %v1854 = vpack.c.b16 %v1605, %v1602
        %v1855 = vpack.c.b16 %v1609, %v1606
        %v1856 = vpack.c.b16 %v1610, %v1607
        %v1857 = vpack.c.b16 %v1611, %v1608
        %v1858 = vpack.c.b16 %v1615, %v1612
        %v1859 = vpack.c.b16 %v1616, %v1613
        %v1860 = vpack.c.b16 %v1617, %v1614
        %v1861 = vpack.c.b16 %v1621, %v1618
        %v1862 = vpack.c.b16 %v1622, %v1619
        %v1863 = vpack.c.b16 %v1623, %v1620
        %v1864 = vpack.c.b16 %v1627, %v1624
        %v1865 = vpack.c.b16 %v1628, %v1625
        %v1866 = vpack.c.b16 %v1629, %v1626
        %v1867 = vpack.c.b16 %v1633, %v1630
        %v1868 = vpack.c.b16 %v1634, %v1631
        %v1869 = vpack.c.b16 %v1635, %v1632
        %v1870 = vpack.c.b16 %v1639, %v1636
        %v1871 = vpack.c.b16 %v1640, %v1637
        %v1872 = vpack.c.b16 %v1641, %v1638
        %v1873 = vpack.c.b16 %v1645, %v1642
        %v1874 = vpack.c.b16 %v1646, %v1643
        %v1875 = vpack.c.b16 %v1647, %v1644
        %v1876 = vpack.c.b16 %v1651, %v1648
        %v1877 = vpack.c.b16 %v1652, %v1649
        %v1878 = vpack.c.b16 %v1653, %v1650
        %v1879 = vpack.c.b16 %v1657, %v1654
        %v1880 = vpack.c.b16 %v1658, %v1655
        %v1881 = vpack.c.b16 %v1659, %v1656
        %v1882 = vpack.c.b16 %v1663, %v1660
        %v1883 = vpack.c.b16 %v1664, %v1661
        %v1884 = vpack.c.b16 %v1665, %v1662
        %v1885 = vpack.c.b16 %v1669, %v1666
        %v1886 = vpack.c.b16 %v1670, %v1667
        %v1887 = vpack.c.b16 %v1671, %v1668
        %2104 = vmatprep.subr.bf16.mxu0 %v1673
        %2105 = vmatpush1.bf16.msra.mxu0 %v1672
        %2106 = vmatprep.subr.bf16.mxu0 %v1676
        %2107 = vmatpush1.bf16.msra.mxu0 %v1675
        %2108 = vmatprep.subr.bf16.mxu0 %v1679
        %2109 = vmatpush1.bf16.msra.mxu0 %v1678
        %2110 = vmatprep.subr.bf16.mxu0 %v1682
        %2111 = vmatpush1.bf16.msra.mxu0 %v1681
        %2112 = vmatprep.subr.bf16.mxu0 %v1685
        %2113 = vmatpush1.bf16.msra.mxu0 %v1684
        %2114 = vmatprep.subr.bf16.mxu0 %v1688
        %2115 = vmatpush1.bf16.msra.mxu0 %v1687
        %2116 = vmatprep.subr.bf16.mxu0 %v1691
        %2117 = vmatpush1.bf16.msra.mxu0 %v1690
        %2118 = vmatprep.subr.bf16.mxu0 %v1694
        %2119 = vmatpush1.bf16.msra.mxu0 %v1693
        %2120 = vmatprep.subr.bf16.mxu0 %v1697
        %2121 = vmatpush1.bf16.msra.mxu0 %v1696
        %2122 = vmatprep.subr.bf16.mxu0 %v1700
        %2123 = vmatpush1.bf16.msra.mxu0 %v1699
        %2124 = vmatprep.subr.bf16.mxu0 %v1703
        %2125 = vmatpush1.bf16.msra.mxu0 %v1702
        %2126 = vmatprep.subr.bf16.mxu0 %v1706
        %2127 = vmatpush1.bf16.msra.mxu0 %v1705
        %2128 = vmatprep.subr.bf16.mxu0 %v1709
        %2129 = vmatpush1.bf16.msra.mxu0 %v1708
        %2130 = vmatprep.subr.bf16.mxu0 %v1712
        %2131 = vmatpush1.bf16.msra.mxu0 %v1711
        %2132 = vmatprep.subr.bf16.mxu0 %v1715
        %2133 = vmatpush1.bf16.msra.mxu0 %v1714
        %2134 = vmatprep.subr.bf16.mxu0 %v1718
        %2135 = vmatpush1.bf16.msra.mxu0 %v1717
        %2136 = vmatprep.mubr.bf16.mxu0 %v881
        %2137 = vmatmul.mubr.bf16.gmra.mrb[0].mxu0 %v880
        %v2138 = vpop.f32.mrb[0].mxu0
        %v2139 = vadd.f32 0.0, %v2138
        %v2140 = vpop.f32.mrb[0].mxu0
        %v2141 = vadd.f32 0.0, %v2140
        %v2142 = vpop.f32.mrb[0].mxu0
        %v2143 = vadd.f32 0.0, %v2142
        %v2144 = vpop.f32.mrb[0].mxu0
        %v2145 = vadd.f32 0.0, %v2144
        %2146 = vmatprep.mubr.bf16.mxu0 %v890
        %2147 = vmatmul.mubr.bf16.gmra.mrb[0].mxu0 %v889
        %v2148 = vpop.f32.mrb[0].mxu0
        %v2149 = vadd.f32 0.0, %v2148
        %v2150 = vpop.f32.mrb[0].mxu0
        %v2151 = vadd.f32 0.0, %v2150
        %v2152 = vpop.f32.mrb[0].mxu0
        %v2153 = vadd.f32 0.0, %v2152
        %v2154 = vpop.f32.mrb[0].mxu0
        %v2155 = vadd.f32 0.0, %v2154
        %2156 = vmatprep.mubr.bf16.mxu0 %v899
        %2157 = vmatmul.mubr.bf16.gmra.mrb[0].mxu0 %v898
        %v2158 = vpop.f32.mrb[0].mxu0
        %v2159 = vadd.f32 0.0, %v2158
        %v2160 = vpop.f32.mrb[0].mxu0
        %v2161 = vadd.f32 0.0, %v2160
        %v2162 = vpop.f32.mrb[0].mxu0
        %v2163 = vadd.f32 0.0, %v2162
        %v2164 = vpop.f32.mrb[0].mxu0
        %v2165 = vadd.f32 0.0, %v2164
        %2166 = vmatprep.mubr.bf16.mxu0 %v908
        %2167 = vmatmul.mubr.bf16.gmra.mrb[0].mxu0 %v907
        %v2168 = vpop.f32.mrb[0].mxu0
        %v2169 = vadd.f32 0.0, %v2168
        %v2170 = vpop.f32.mrb[0].mxu0
        %v2171 = vadd.f32 0.0, %v2170
        %v2172 = vpop.f32.mrb[0].mxu0
        %v2173 = vadd.f32 0.0, %v2172
        %v2174 = vpop.f32.mrb[0].mxu0
        %v2175 = vadd.f32 0.0, %v2174
        %2176 = vdwg.mxu0
        %2177 = vmatprep.subr.bf16.mxu0 %v1721
        %2178 = vmatpush1.bf16.msra.mxu0 %v1720
        %2179 = vmatprep.subr.bf16.mxu0 %v1724
        %2180 = vmatpush1.bf16.msra.mxu0 %v1723
        %2181 = vmatprep.subr.bf16.mxu0 %v1727
        %2182 = vmatpush1.bf16.msra.mxu0 %v1726
        %2183 = vmatprep.subr.bf16.mxu0 %v1730
        %2184 = vmatpush1.bf16.msra.mxu0 %v1729
        %2185 = vmatprep.subr.bf16.mxu0 %v1733
        %2186 = vmatpush1.bf16.msra.mxu0 %v1732
        %2187 = vmatprep.subr.bf16.mxu0 %v1736
        %2188 = vmatpush1.bf16.msra.mxu0 %v1735
        %2189 = vmatprep.subr.bf16.mxu0 %v1739
        %2190 = vmatpush1.bf16.msra.mxu0 %v1738
        %2191 = vmatprep.subr.bf16.mxu0 %v1742
        %2192 = vmatpush1.bf16.msra.mxu0 %v1741
        %2193 = vmatprep.subr.bf16.mxu0 %v1745
        %2194 = vmatpush1.bf16.msra.mxu0 %v1744
        %2195 = vmatprep.subr.bf16.mxu0 %v1748
        %2196 = vmatpush1.bf16.msra.mxu0 %v1747
        %2197 = vmatprep.subr.bf16.mxu0 %v1751
        %2198 = vmatpush1.bf16.msra.mxu0 %v1750
        %2199 = vmatprep.subr.bf16.mxu0 %v1754
        %2200 = vmatpush1.bf16.msra.mxu0 %v1753
        %2201 = vmatprep.subr.bf16.mxu0 %v1757
        %2202 = vmatpush1.bf16.msra.mxu0 %v1756
        %2203 = vmatprep.subr.bf16.mxu0 %v1760
        %2204 = vmatpush1.bf16.msra.mxu0 %v1759
        %2205 = vmatprep.subr.bf16.mxu0 %v1763
        %2206 = vmatpush1.bf16.msra.mxu0 %v1762
        %2207 = vmatprep.subr.bf16.mxu0 %v1766
        %2208 = vmatpush1.bf16.msra.mxu0 %v1765
        %2209 = vmatprep.mubr.bf16.mxu0 %v883
        %2210 = vmatmul.mubr.bf16.gmra.mrb[0].mxu0 %v882
        %v2211 = vpop.f32.mrb[0].mxu0
        %v2212 = vadd.f32 %v2139, %v2211
        %v2213 = vpop.f32.mrb[0].mxu0
        %v2214 = vadd.f32 %v2141, %v2213
        %v2215 = vpop.f32.mrb[0].mxu0
        %v2216 = vadd.f32 %v2143, %v2215
        %v2217 = vpop.f32.mrb[0].mxu0
        %v2218 = vadd.f32 %v2145, %v2217
        %2219 = vmatprep.mubr.bf16.mxu0 %v892
        %2220 = vmatmul.mubr.bf16.gmra.mrb[0].mxu0 %v891
        %v2221 = vpop.f32.mrb[0].mxu0
        %v2222 = vadd.f32 %v2149, %v2221
        %v2223 = vpop.f32.mrb[0].mxu0
        %v2224 = vadd.f32 %v2151, %v2223
        %v2225 = vpop.f32.mrb[0].mxu0
        %v2226 = vadd.f32 %v2153, %v2225
        %v2227 = vpop.f32.mrb[0].mxu0
        %v2228 = vadd.f32 %v2155, %v2227
        %2229 = vmatprep.mubr.bf16.mxu0 %v901
        %2230 = vmatmul.mubr.bf16.gmra.mrb[0].mxu0 %v900
        %v2231 = vpop.f32.mrb[0].mxu0
        %v2232 = vadd.f32 %v2159, %v2231
        %v2233 = vpop.f32.mrb[0].mxu0
        %v2234 = vadd.f32 %v2161, %v2233
        %v2235 = vpop.f32.mrb[0].mxu0
        %v2236 = vadd.f32 %v2163, %v2235
        %v2237 = vpop.f32.mrb[0].mxu0
        %v2238 = vadd.f32 %v2165, %v2237
        %2239 = vmatprep.mubr.bf16.mxu0 %v910
        %2240 = vmatmul.mubr.bf16.gmra.mrb[0].mxu0 %v909
        %v2241 = vpop.f32.mrb[0].mxu0
        %v2242 = vadd.f32 %v2169, %v2241
        %v2243 = vpop.f32.mrb[0].mxu0
        %v2244 = vadd.f32 %v2171, %v2243
        %v2245 = vpop.f32.mrb[0].mxu0
        %v2246 = vadd.f32 %v2173, %v2245
        %v2247 = vpop.f32.mrb[0].mxu0
        %v2248 = vadd.f32 %v2175, %v2247
        %2249 = vdwg.mxu0
        %2250 = vmatprep.subr.bf16.mxu0 %v1769
        %2251 = vmatpush1.bf16.msra.mxu0 %v1768
        %2252 = vmatprep.subr.bf16.mxu0 %v1772
        %2253 = vmatpush1.bf16.msra.mxu0 %v1771
        %2254 = vmatprep.subr.bf16.mxu0 %v1775
        %2255 = vmatpush1.bf16.msra.mxu0 %v1774
        %2256 = vmatprep.subr.bf16.mxu0 %v1778
        %2257 = vmatpush1.bf16.msra.mxu0 %v1777
        %2258 = vmatprep.subr.bf16.mxu0 %v1781
        %2259 = vmatpush1.bf16.msra.mxu0 %v1780
        %2260 = vmatprep.subr.bf16.mxu0 %v1784
        %2261 = vmatpush1.bf16.msra.mxu0 %v1783
        %2262 = vmatprep.subr.bf16.mxu0 %v1787
        %2263 = vmatpush1.bf16.msra.mxu0 %v1786
        %2264 = vmatprep.subr.bf16.mxu0 %v1790
        %2265 = vmatpush1.bf16.msra.mxu0 %v1789
        %2266 = vmatprep.subr.bf16.mxu0 %v1793
        %2267 = vmatpush1.bf16.msra.mxu0 %v1792
        %2268 = vmatprep.subr.bf16.mxu0 %v1796
        %2269 = vmatpush1.bf16.msra.mxu0 %v1795
        %2270 = vmatprep.subr.bf16.mxu0 %v1799
        %2271 = vmatpush1.bf16.msra.mxu0 %v1798
        %2272 = vmatprep.subr.bf16.mxu0 %v1802
        %2273 = vmatpush1.bf16.msra.mxu0 %v1801
        %2274 = vmatprep.subr.bf16.mxu0 %v1805
        %2275 = vmatpush1.bf16.msra.mxu0 %v1804
        %2276 = vmatprep.subr.bf16.mxu0 %v1808
        %2277 = vmatpush1.bf16.msra.mxu0 %v1807
        %2278 = vmatprep.subr.bf16.mxu0 %v1811
        %2279 = vmatpush1.bf16.msra.mxu0 %v1810
        %2280 = vmatprep.subr.bf16.mxu0 %v1814
        %2281 = vmatpush1.bf16.msra.mxu0 %v1813
        %2282 = vmatprep.mubr.bf16.mxu0 %v885
        %2283 = vmatmul.mubr.bf16.gmra.mrb[0].mxu0 %v884
        %v2284 = vpop.f32.mrb[0].mxu0
        %v2285 = vadd.f32 %v2212, %v2284
        %v2286 = vpop.f32.mrb[0].mxu0
        %v2287 = vadd.f32 %v2214, %v2286
        %v2288 = vpop.f32.mrb[0].mxu0
        %v2289 = vadd.f32 %v2216, %v2288
        %v2290 = vpop.f32.mrb[0].mxu0
        %v2291 = vadd.f32 %v2218, %v2290
        %2292 = vmatprep.mubr.bf16.mxu0 %v894
        %2293 = vmatmul.mubr.bf16.gmra.mrb[0].mxu0 %v893
        %v2294 = vpop.f32.mrb[0].mxu0
        %v2295 = vadd.f32 %v2222, %v2294
        %v2296 = vpop.f32.mrb[0].mxu0
        %v2297 = vadd.f32 %v2224, %v2296
        %v2298 = vpop.f32.mrb[0].mxu0
        %v2299 = vadd.f32 %v2226, %v2298
        %v2300 = vpop.f32.mrb[0].mxu0
        %v2301 = vadd.f32 %v2228, %v2300
        %2302 = vmatprep.mubr.bf16.mxu0 %v903
        %2303 = vmatmul.mubr.bf16.gmra.mrb[0].mxu0 %v902
        %v2304 = vpop.f32.mrb[0].mxu0
        %v2305 = vadd.f32 %v2232, %v2304
        %v2306 = vpop.f32.mrb[0].mxu0
        %v2307 = vadd.f32 %v2234, %v2306
        %v2308 = vpop.f32.mrb[0].mxu0
        %v2309 = vadd.f32 %v2236, %v2308
        %v2310 = vpop.f32.mrb[0].mxu0
        %v2311 = vadd.f32 %v2238, %v2310
        %2312 = vmatprep.mubr.bf16.mxu0 %v912
        %2313 = vmatmul.mubr.bf16.gmra.mrb[0].mxu0 %v911
        %v2314 = vpop.f32.mrb[0].mxu0
        %v2315 = vadd.f32 %v2242, %v2314
        %v2316 = vpop.f32.mrb[0].mxu0
        %v2317 = vadd.f32 %v2244, %v2316
        %v2318 = vpop.f32.mrb[0].mxu0
        %v2319 = vadd.f32 %v2246, %v2318
        %v2320 = vpop.f32.mrb[0].mxu0
        %v2321 = vadd.f32 %v2248, %v2320
        %2322 = vdwg.mxu0
        %2323 = vmatprep.subr.bf16.mxu0 %v1817
        %2324 = vmatpush1.bf16.msra.mxu0 %v1816
        %2325 = vmatprep.subr.bf16.mxu0 %v1820
        %2326 = vmatpush1.bf16.msra.mxu0 %v1819
        %2327 = vmatprep.subr.bf16.mxu0 %v1823
        %2328 = vmatpush1.bf16.msra.mxu0 %v1822
        %2329 = vmatprep.subr.bf16.mxu0 %v1826
        %2330 = vmatpush1.bf16.msra.mxu0 %v1825
        %2331 = vmatprep.subr.bf16.mxu0 %v1829
        %2332 = vmatpush1.bf16.msra.mxu0 %v1828
        %2333 = vmatprep.subr.bf16.mxu0 %v1832
        %2334 = vmatpush1.bf16.msra.mxu0 %v1831
        %2335 = vmatprep.subr.bf16.mxu0 %v1835
        %2336 = vmatpush1.bf16.msra.mxu0 %v1834
        %2337 = vmatprep.subr.bf16.mxu0 %v1838
        %2338 = vmatpush1.bf16.msra.mxu0 %v1837
        %2339 = vmatprep.subr.bf16.mxu0 %v1841
        %2340 = vmatpush1.bf16.msra.mxu0 %v1840
        %2341 = vmatprep.subr.bf16.mxu0 %v1844
        %2342 = vmatpush1.bf16.msra.mxu0 %v1843
        %2343 = vmatprep.subr.bf16.mxu0 %v1847
        %2344 = vmatpush1.bf16.msra.mxu0 %v1846
        %2345 = vmatprep.subr.bf16.mxu0 %v1850
        %2346 = vmatpush1.bf16.msra.mxu0 %v1849
        %2347 = vmatprep.subr.bf16.mxu0 %v1853
        %2348 = vmatpush1.bf16.msra.mxu0 %v1852
        %2349 = vmatprep.subr.bf16.mxu0 %v1856
        %2350 = vmatpush1.bf16.msra.mxu0 %v1855
        %2351 = vmatprep.subr.bf16.mxu0 %v1859
        %2352 = vmatpush1.bf16.msra.mxu0 %v1858
        %2353 = vmatprep.subr.bf16.mxu0 %v1862
        %2354 = vmatpush1.bf16.msra.mxu0 %v1861
        %2355 = vmatprep.mubr.bf16.mxu0 %v887
        %2356 = vmatmul.mubr.bf16.gmra.mrb[0].mxu0 %v886
        %v2357 = vpop.f32.mrb[0].mxu0
        %v2358 = vadd.f32 %v2285, %v2357
        %v2359 = vpop.f32.mrb[0].mxu0
        %v2360 = vadd.f32 %v2287, %v2359
        %v2361 = vpop.f32.mrb[0].mxu0
        %v2362 = vadd.f32 %v2289, %v2361
        %v2363 = vpop.f32.mrb[0].mxu0
        %v2364 = vadd.f32 %v2291, %v2363
        %2365 = vmatprep.mubr.bf16.mxu0 %v896
        %2366 = vmatmul.mubr.bf16.gmra.mrb[0].mxu0 %v895
        %v2367 = vpop.f32.mrb[0].mxu0
        %v2368 = vadd.f32 %v2295, %v2367
        %v2369 = vpop.f32.mrb[0].mxu0
        %v2370 = vadd.f32 %v2297, %v2369
        %v2371 = vpop.f32.mrb[0].mxu0
        %v2372 = vadd.f32 %v2299, %v2371
        %v2373 = vpop.f32.mrb[0].mxu0
        %v2374 = vadd.f32 %v2301, %v2373
        %2375 = vmatprep.mubr.bf16.mxu0 %v905
        %2376 = vmatmul.mubr.bf16.gmra.mrb[0].mxu0 %v904
        %v2377 = vpop.f32.mrb[0].mxu0
        %v2378 = vadd.f32 %v2305, %v2377
        %v2379 = vpop.f32.mrb[0].mxu0
        %v2380 = vadd.f32 %v2307, %v2379
        %v2381 = vpop.f32.mrb[0].mxu0
        %v2382 = vadd.f32 %v2309, %v2381
        %v2383 = vpop.f32.mrb[0].mxu0
        %v2384 = vadd.f32 %v2311, %v2383
        %2385 = vmatprep.mubr.bf16.mxu0 %v914
        %2386 = vmatmul.mubr.bf16.gmra.mrb[0].mxu0 %v913
        %v2387 = vpop.f32.mrb[0].mxu0
        %v2388 = vadd.f32 %v2315, %v2387
        %v2389 = vpop.f32.mrb[0].mxu0
        %v2390 = vadd.f32 %v2317, %v2389
        %v2391 = vpop.f32.mrb[0].mxu0
        %v2392 = vadd.f32 %v2319, %v2391
        %v2393 = vpop.f32.mrb[0].mxu0
        %v2394 = vadd.f32 %v2321, %v2393
        %2395 = vdwg.mxu0
        %2396 = vmatprep.subr.bf16.mxu0 %v1865
        %2397 = vmatpush1.bf16.msra.mxu0 %v1864
        %2398 = vmatprep.subr.bf16.mxu0 %v1868
        %2399 = vmatpush1.bf16.msra.mxu0 %v1867
        %2400 = vmatprep.subr.bf16.mxu0 %v1871
        %2401 = vmatpush1.bf16.msra.mxu0 %v1870
        %2402 = vmatprep.subr.bf16.mxu0 %v1874
        %2403 = vmatpush1.bf16.msra.mxu0 %v1873
        %2404 = vmatprep.subr.bf16.mxu0 %v1877
        %2405 = vmatpush1.bf16.msra.mxu0 %v1876
        %2406 = vmatprep.subr.bf16.mxu0 %v1880
        %2407 = vmatpush1.bf16.msra.mxu0 %v1879
        %2408 = vmatprep.subr.bf16.mxu0 %v1883
        %2409 = vmatpush1.bf16.msra.mxu0 %v1882
        %2410 = vmatprep.subr.bf16.mxu0 %v1886
        %2411 = vmatpush1.bf16.msra.mxu0 %v1885
        %2412 = vmatprep.subr.bf16.mxu0 0
        %2413 = vmatpush1.bf16.msra.mxu0 0
        %2414 = vmatprep.subr.bf16.mxu0 0
        %2415 = vmatpush1.bf16.msra.mxu0 0
        %2416 = vmatprep.subr.bf16.mxu0 0
        %2417 = vmatpush1.bf16.msra.mxu0 0
        %2418 = vmatprep.subr.bf16.mxu0 0
        %2419 = vmatpush1.bf16.msra.mxu0 0
        %2420 = vmatprep.subr.bf16.mxu0 0
        %2421 = vmatpush1.bf16.msra.mxu0 0
        %2422 = vmatprep.subr.bf16.mxu0 0
        %2423 = vmatpush1.bf16.msra.mxu0 0
        %2424 = vmatprep.subr.bf16.mxu0 0
        %2425 = vmatpush1.bf16.msra.mxu0 0
        %2426 = vmatprep.subr.bf16.mxu0 0
        %2427 = vmatpush1.bf16.msra.mxu0 0
        %2428 = vmatprep.mubr.bf16.mxu0 0
        %2429 = vmatmul.mubr.bf16.gmra.mrb[0].mxu0 %v888
        %v2430 = vpop.f32.mrb[0].mxu0
        %v2431 = vadd.f32 %v2358, %v2430
        %v2432 = vpop.f32.mrb[0].mxu0
        %v2433 = vadd.f32 %v2360, %v2432
        %v2434 = vpop.f32.mrb[0].mxu0
        %v2435 = vadd.f32 %v2362, %v2434
        %v2436 = vpop.f32.mrb[0].mxu0
        %v2437 = vadd.f32 %v2364, %v2436
        %2438 = vmatprep.mubr.bf16.mxu0 0
        %2439 = vmatmul.mubr.bf16.gmra.mrb[0].mxu0 %v897
        %v2440 = vpop.f32.mrb[0].mxu0
        %v2441 = vadd.f32 %v2368, %v2440
        %v2442 = vpop.f32.mrb[0].mxu0
        %v2443 = vadd.f32 %v2370, %v2442
        %v2444 = vpop.f32.mrb[0].mxu0
        %v2445 = vadd.f32 %v2372, %v2444
        %v2446 = vpop.f32.mrb[0].mxu0
        %v2447 = vadd.f32 %v2374, %v2446
        %2448 = vmatprep.mubr.bf16.mxu0 0
        %2449 = vmatmul.mubr.bf16.gmra.mrb[0].mxu0 %v906
        %v2450 = vpop.f32.mrb[0].mxu0
        %v2451 = vadd.f32 %v2378, %v2450
        %v2452 = vpop.f32.mrb[0].mxu0
        %v2453 = vadd.f32 %v2380, %v2452
        %v2454 = vpop.f32.mrb[0].mxu0
        %v2455 = vadd.f32 %v2382, %v2454
        %v2456 = vpop.f32.mrb[0].mxu0
        %v2457 = vadd.f32 %v2384, %v2456
        %2458 = vmatprep.mubr.bf16.mxu0 0
        %2459 = vmatmul.mubr.bf16.gmra.mrb[0].mxu0 %v915
        %v2460 = vpop.f32.mrb[0].mxu0
        %v2461 = vadd.f32 %v2388, %v2460
        %v2462 = vpop.f32.mrb[0].mxu0
        %v2463 = vadd.f32 %v2390, %v2462
        %v2464 = vpop.f32.mrb[0].mxu0
        %v2465 = vadd.f32 %v2392, %v2464
        %v2466 = vpop.f32.mrb[0].mxu0
        %v2467 = vadd.f32 %v2394, %v2466
        %2468 = vdwg.mxu0
        %2469 = vmatprep.subr.bf16.mxu0 0
        %2470 = vmatpush1.bf16.msra.mxu0 %v1674
        %2471 = vmatprep.subr.bf16.mxu0 0
        %2472 = vmatpush1.bf16.msra.mxu0 %v1677
        %2473 = vmatprep.subr.bf16.mxu0 0
        %2474 = vmatpush1.bf16.msra.mxu0 %v1680
        %2475 = vmatprep.subr.bf16.mxu0 0
        %2476 = vmatpush1.bf16.msra.mxu0 %v1683
        %2477 = vmatprep.subr.bf16.mxu0 0
        %2478 = vmatpush1.bf16.msra.mxu0 %v1686
        %2479 = vmatprep.subr.bf16.mxu0 0
        %2480 = vmatpush1.bf16.msra.mxu0 %v1689
        %2481 = vmatprep.subr.bf16.mxu0 0
        %2482 = vmatpush1.bf16.msra.mxu0 %v1692
        %2483 = vmatprep.subr.bf16.mxu0 0
        %2484 = vmatpush1.bf16.msra.mxu0 %v1695
        %2485 = vmatprep.subr.bf16.mxu0 0
        %2486 = vmatpush1.bf16.msra.mxu0 %v1698
        %2487 = vmatprep.subr.bf16.mxu0 0
        %2488 = vmatpush1.bf16.msra.mxu0 %v1701
        %2489 = vmatprep.subr.bf16.mxu0 0
        %2490 = vmatpush1.bf16.msra.mxu0 %v1704
        %2491 = vmatprep.subr.bf16.mxu0 0
        %2492 = vmatpush1.bf16.msra.mxu0 %v1707
        %2493 = vmatprep.subr.bf16.mxu0 0
        %2494 = vmatpush1.bf16.msra.mxu0 %v1710
        %2495 = vmatprep.subr.bf16.mxu0 0
        %2496 = vmatpush1.bf16.msra.mxu0 %v1713
        %2497 = vmatprep.subr.bf16.mxu0 0
        %2498 = vmatpush1.bf16.msra.mxu0 %v1716
        %2499 = vmatprep.subr.bf16.mxu0 0
        %2500 = vmatpush1.bf16.msra.mxu0 %v1719
        %2501 = vmatprep.mubr.bf16.mxu0 %v881
        %2502 = vmatmul.mubr.bf16.gmra.mrb[0].mxu0 %v880
        %v2503 = vpop.f32.mrb[0].mxu0
        %v2504 = vadd.f32 0.0, %v2503
        %v2505 = vpop.f32.mrb[0].mxu0
        %v2506 = vpop.f32.mrb[0].mxu0
        %v2507 = vadd.f32 0.0, %v2506
        %v2508 = vpop.f32.mrb[0].mxu0
        %2509 = vmatprep.mubr.bf16.mxu0 %v890
        %2510 = vmatmul.mubr.bf16.gmra.mrb[0].mxu0 %v889
        %v2511 = vpop.f32.mrb[0].mxu0
        %v2512 = vadd.f32 0.0, %v2511
        %v2513 = vpop.f32.mrb[0].mxu0
        %v2514 = vpop.f32.mrb[0].mxu0
        %v2515 = vadd.f32 0.0, %v2514
        %v2516 = vpop.f32.mrb[0].mxu0
        %2517 = vmatprep.mubr.bf16.mxu0 %v899
        %2518 = vmatmul.mubr.bf16.gmra.mrb[0].mxu0 %v898
        %v2519 = vpop.f32.mrb[0].mxu0
        %v2520 = vadd.f32 0.0, %v2519
        %v2521 = vpop.f32.mrb[0].mxu0
        %v2522 = vpop.f32.mrb[0].mxu0
        %v2523 = vadd.f32 0.0, %v2522
        %v2524 = vpop.f32.mrb[0].mxu0
        %2525 = vmatprep.mubr.bf16.mxu0 %v908
        %2526 = vmatmul.mubr.bf16.gmra.mrb[0].mxu0 %v907
        %v2527 = vpop.f32.mrb[0].mxu0
        %v2528 = vadd.f32 0.0, %v2527
        %v2529 = vpop.f32.mrb[0].mxu0
        %v2530 = vpop.f32.mrb[0].mxu0
        %v2531 = vadd.f32 0.0, %v2530
        %v2532 = vpop.f32.mrb[0].mxu0
        %2533 = vdwg.mxu0
        %2534 = vmatprep.subr.bf16.mxu0 0
        %2535 = vmatpush1.bf16.msra.mxu0 %v1722
        %2536 = vmatprep.subr.bf16.mxu0 0
        %2537 = vmatpush1.bf16.msra.mxu0 %v1725
        %2538 = vmatprep.subr.bf16.mxu0 0
        %2539 = vmatpush1.bf16.msra.mxu0 %v1728
        %2540 = vmatprep.subr.bf16.mxu0 0
        %2541 = vmatpush1.bf16.msra.mxu0 %v1731
        %2542 = vmatprep.subr.bf16.mxu0 0
        %2543 = vmatpush1.bf16.msra.mxu0 %v1734
        %2544 = vmatprep.subr.bf16.mxu0 0
        %2545 = vmatpush1.bf16.msra.mxu0 %v1737
        %2546 = vmatprep.subr.bf16.mxu0 0
        %2547 = vmatpush1.bf16.msra.mxu0 %v1740
        %2548 = vmatprep.subr.bf16.mxu0 0
        %2549 = vmatpush1.bf16.msra.mxu0 %v1743
        %2550 = vmatprep.subr.bf16.mxu0 0
        %2551 = vmatpush1.bf16.msra.mxu0 %v1746
        %2552 = vmatprep.subr.bf16.mxu0 0
        %2553 = vmatpush1.bf16.msra.mxu0 %v1749
        %2554 = vmatprep.subr.bf16.mxu0 0
        %2555 = vmatpush1.bf16.msra.mxu0 %v1752
        %2556 = vmatprep.subr.bf16.mxu0 0
        %2557 = vmatpush1.bf16.msra.mxu0 %v1755
        %2558 = vmatprep.subr.bf16.mxu0 0
        %2559 = vmatpush1.bf16.msra.mxu0 %v1758
        %2560 = vmatprep.subr.bf16.mxu0 0
        %2561 = vmatpush1.bf16.msra.mxu0 %v1761
        %2562 = vmatprep.subr.bf16.mxu0 0
        %2563 = vmatpush1.bf16.msra.mxu0 %v1764
        %2564 = vmatprep.subr.bf16.mxu0 0
        %2565 = vmatpush1.bf16.msra.mxu0 %v1767
        %2566 = vmatprep.mubr.bf16.mxu0 %v883
        %2567 = vmatmul.mubr.bf16.gmra.mrb[0].mxu0 %v882
        %v2568 = vpop.f32.mrb[0].mxu0
        %v2569 = vadd.f32 %v2504, %v2568
        %v2570 = vpop.f32.mrb[0].mxu0
        %v2571 = vpop.f32.mrb[0].mxu0
        %v2572 = vadd.f32 %v2507, %v2571
        %v2573 = vpop.f32.mrb[0].mxu0
        %2574 = vmatprep.mubr.bf16.mxu0 %v892
        %2575 = vmatmul.mubr.bf16.gmra.mrb[0].mxu0 %v891
        %v2576 = vpop.f32.mrb[0].mxu0
        %v2577 = vadd.f32 %v2512, %v2576
        %v2578 = vpop.f32.mrb[0].mxu0
        %v2579 = vpop.f32.mrb[0].mxu0
        %v2580 = vadd.f32 %v2515, %v2579
        %v2581 = vpop.f32.mrb[0].mxu0
        %2582 = vmatprep.mubr.bf16.mxu0 %v901
        %2583 = vmatmul.mubr.bf16.gmra.mrb[0].mxu0 %v900
        %v2584 = vpop.f32.mrb[0].mxu0
        %v2585 = vadd.f32 %v2520, %v2584
        %v2586 = vpop.f32.mrb[0].mxu0
        %v2587 = vpop.f32.mrb[0].mxu0
        %v2588 = vadd.f32 %v2523, %v2587
        %v2589 = vpop.f32.mrb[0].mxu0
        %2590 = vmatprep.mubr.bf16.mxu0 %v910
        %2591 = vmatmul.mubr.bf16.gmra.mrb[0].mxu0 %v909
        %v2592 = vpop.f32.mrb[0].mxu0
        %v2593 = vadd.f32 %v2528, %v2592
        %v2594 = vpop.f32.mrb[0].mxu0
        %v2595 = vpop.f32.mrb[0].mxu0
        %v2596 = vadd.f32 %v2531, %v2595
        %v2597 = vpop.f32.mrb[0].mxu0
        %2598 = vdwg.mxu0
        %2599 = vmatprep.subr.bf16.mxu0 0
        %2600 = vmatpush1.bf16.msra.mxu0 %v1770
        %2601 = vmatprep.subr.bf16.mxu0 0
        %2602 = vmatpush1.bf16.msra.mxu0 %v1773
        %2603 = vmatprep.subr.bf16.mxu0 0
        %2604 = vmatpush1.bf16.msra.mxu0 %v1776
        %2605 = vmatprep.subr.bf16.mxu0 0
        %2606 = vmatpush1.bf16.msra.mxu0 %v1779
        %2607 = vmatprep.subr.bf16.mxu0 0
        %2608 = vmatpush1.bf16.msra.mxu0 %v1782
        %2609 = vmatprep.subr.bf16.mxu0 0
        %2610 = vmatpush1.bf16.msra.mxu0 %v1785
        %2611 = vmatprep.subr.bf16.mxu0 0
        %2612 = vmatpush1.bf16.msra.mxu0 %v1788
        %2613 = vmatprep.subr.bf16.mxu0 0
        %2614 = vmatpush1.bf16.msra.mxu0 %v1791
        %2615 = vmatprep.subr.bf16.mxu0 0
        %2616 = vmatpush1.bf16.msra.mxu0 %v1794
        %2617 = vmatprep.subr.bf16.mxu0 0
        %2618 = vmatpush1.bf16.msra.mxu0 %v1797
        %2619 = vmatprep.subr.bf16.mxu0 0
        %2620 = vmatpush1.bf16.msra.mxu0 %v1800
        %2621 = vmatprep.subr.bf16.mxu0 0
        %2622 = vmatpush1.bf16.msra.mxu0 %v1803
        %2623 = vmatprep.subr.bf16.mxu0 0
        %2624 = vmatpush1.bf16.msra.mxu0 %v1806
        %2625 = vmatprep.subr.bf16.mxu0 0
        %2626 = vmatpush1.bf16.msra.mxu0 %v1809
        %2627 = vmatprep.subr.bf16.mxu0 0
        %2628 = vmatpush1.bf16.msra.mxu0 %v1812
        %2629 = vmatprep.subr.bf16.mxu0 0
        %2630 = vmatpush1.bf16.msra.mxu0 %v1815
        %2631 = vmatprep.mubr.bf16.mxu0 %v885
        %2632 = vmatmul.mubr.bf16.gmra.mrb[0].mxu0 %v884
        %v2633 = vpop.f32.mrb[0].mxu0
        %v2634 = vadd.f32 %v2569, %v2633
        %v2635 = vpop.f32.mrb[0].mxu0
        %v2636 = vpop.f32.mrb[0].mxu0
        %v2637 = vadd.f32 %v2572, %v2636
        %v2638 = vpop.f32.mrb[0].mxu0
        %2639 = vmatprep.mubr.bf16.mxu0 %v894
        %2640 = vmatmul.mubr.bf16.gmra.mrb[0].mxu0 %v893
        %v2641 = vpop.f32.mrb[0].mxu0
        %v2642 = vadd.f32 %v2577, %v2641
        %v2643 = vpop.f32.mrb[0].mxu0
        %v2644 = vpop.f32.mrb[0].mxu0
        %v2645 = vadd.f32 %v2580, %v2644
        %v2646 = vpop.f32.mrb[0].mxu0
        %2647 = vmatprep.mubr.bf16.mxu0 %v903
        %2648 = vmatmul.mubr.bf16.gmra.mrb[0].mxu0 %v902
        %v2649 = vpop.f32.mrb[0].mxu0
        %v2650 = vadd.f32 %v2585, %v2649
        %v2651 = vpop.f32.mrb[0].mxu0
        %v2652 = vpop.f32.mrb[0].mxu0
        %v2653 = vadd.f32 %v2588, %v2652
        %v2654 = vpop.f32.mrb[0].mxu0
        %2655 = vmatprep.mubr.bf16.mxu0 %v912
        %2656 = vmatmul.mubr.bf16.gmra.mrb[0].mxu0 %v911
        %v2657 = vpop.f32.mrb[0].mxu0
        %v2658 = vadd.f32 %v2593, %v2657
        %v2659 = vpop.f32.mrb[0].mxu0
        %v2660 = vpop.f32.mrb[0].mxu0
        %v2661 = vadd.f32 %v2596, %v2660
        %v2662 = vpop.f32.mrb[0].mxu0
        %2663 = vdwg.mxu0
        %2664 = vmatprep.subr.bf16.mxu0 0
        %2665 = vmatpush1.bf16.msra.mxu0 %v1818
        %2666 = vmatprep.subr.bf16.mxu0 0
        %2667 = vmatpush1.bf16.msra.mxu0 %v1821
        %2668 = vmatprep.subr.bf16.mxu0 0
        %2669 = vmatpush1.bf16.msra.mxu0 %v1824
        %2670 = vmatprep.subr.bf16.mxu0 0
        %2671 = vmatpush1.bf16.msra.mxu0 %v1827
        %2672 = vmatprep.subr.bf16.mxu0 0
        %2673 = vmatpush1.bf16.msra.mxu0 %v1830
        %2674 = vmatprep.subr.bf16.mxu0 0
        %2675 = vmatpush1.bf16.msra.mxu0 %v1833
        %2676 = vmatprep.subr.bf16.mxu0 0
        %2677 = vmatpush1.bf16.msra.mxu0 %v1836
        %2678 = vmatprep.subr.bf16.mxu0 0
        %2679 = vmatpush1.bf16.msra.mxu0 %v1839
        %2680 = vmatprep.subr.bf16.mxu0 0
        %2681 = vmatpush1.bf16.msra.mxu0 %v1842
        %2682 = vmatprep.subr.bf16.mxu0 0
        %2683 = vmatpush1.bf16.msra.mxu0 %v1845
        %2684 = vmatprep.subr.bf16.mxu0 0
        %2685 = vmatpush1.bf16.msra.mxu0 %v1848
        %2686 = vmatprep.subr.bf16.mxu0 0
        %2687 = vmatpush1.bf16.msra.mxu0 %v1851
        %2688 = vmatprep.subr.bf16.mxu0 0
        %2689 = vmatpush1.bf16.msra.mxu0 %v1854
        %2690 = vmatprep.subr.bf16.mxu0 0
        %2691 = vmatpush1.bf16.msra.mxu0 %v1857
        %2692 = vmatprep.subr.bf16.mxu0 0
        %2693 = vmatpush1.bf16.msra.mxu0 %v1860
        %2694 = vmatprep.subr.bf16.mxu0 0
        %2695 = vmatpush1.bf16.msra.mxu0 %v1863
        %2696 = vmatprep.mubr.bf16.mxu0 %v887
        %2697 = vmatmul.mubr.bf16.gmra.mrb[0].mxu0 %v886
        %v2698 = vpop.f32.mrb[0].mxu0
        %v2699 = vadd.f32 %v2634, %v2698
        %v2700 = vpop.f32.mrb[0].mxu0
        %v2701 = vpop.f32.mrb[0].mxu0
        %v2702 = vadd.f32 %v2637, %v2701
        %v2703 = vpop.f32.mrb[0].mxu0
        %2704 = vmatprep.mubr.bf16.mxu0 %v896
        %2705 = vmatmul.mubr.bf16.gmra.mrb[0].mxu0 %v895
        %v2706 = vpop.f32.mrb[0].mxu0
        %v2707 = vadd.f32 %v2642, %v2706
        %v2708 = vpop.f32.mrb[0].mxu0
        %v2709 = vpop.f32.mrb[0].mxu0
        %v2710 = vadd.f32 %v2645, %v2709
        %v2711 = vpop.f32.mrb[0].mxu0
        %2712 = vmatprep.mubr.bf16.mxu0 %v905
        %2713 = vmatmul.mubr.bf16.gmra.mrb[0].mxu0 %v904
        %v2714 = vpop.f32.mrb[0].mxu0
        %v2715 = vadd.f32 %v2650, %v2714
        %v2716 = vpop.f32.mrb[0].mxu0
        %v2717 = vpop.f32.mrb[0].mxu0
        %v2718 = vadd.f32 %v2653, %v2717
        %v2719 = vpop.f32.mrb[0].mxu0
        %2720 = vmatprep.mubr.bf16.mxu0 %v914
        %2721 = vmatmul.mubr.bf16.gmra.mrb[0].mxu0 %v913
        %v2722 = vpop.f32.mrb[0].mxu0
        %v2723 = vadd.f32 %v2658, %v2722
        %v2724 = vpop.f32.mrb[0].mxu0
        %v2725 = vpop.f32.mrb[0].mxu0
        %v2726 = vadd.f32 %v2661, %v2725
        %v2727 = vpop.f32.mrb[0].mxu0
        %2728 = vdwg.mxu0
        %2729 = vmatprep.subr.bf16.mxu0 0
        %2730 = vmatpush1.bf16.msra.mxu0 %v1866
        %2731 = vmatprep.subr.bf16.mxu0 0
        %2732 = vmatpush1.bf16.msra.mxu0 %v1869
        %2733 = vmatprep.subr.bf16.mxu0 0
        %2734 = vmatpush1.bf16.msra.mxu0 %v1872
        %2735 = vmatprep.subr.bf16.mxu0 0
        %2736 = vmatpush1.bf16.msra.mxu0 %v1875
        %2737 = vmatprep.subr.bf16.mxu0 0
        %2738 = vmatpush1.bf16.msra.mxu0 %v1878
        %2739 = vmatprep.subr.bf16.mxu0 0
        %2740 = vmatpush1.bf16.msra.mxu0 %v1881
        %2741 = vmatprep.subr.bf16.mxu0 0
        %2742 = vmatpush1.bf16.msra.mxu0 %v1884
        %2743 = vmatprep.subr.bf16.mxu0 0
        %2744 = vmatpush1.bf16.msra.mxu0 %v1887
        %2745 = vmatprep.subr.bf16.mxu0 0
        %2746 = vmatpush1.bf16.msra.mxu0 0
        %2747 = vmatprep.subr.bf16.mxu0 0
        %2748 = vmatpush1.bf16.msra.mxu0 0
        %2749 = vmatprep.subr.bf16.mxu0 0
        %2750 = vmatpush1.bf16.msra.mxu0 0
        %2751 = vmatprep.subr.bf16.mxu0 0
        %2752 = vmatpush1.bf16.msra.mxu0 0
        %2753 = vmatprep.subr.bf16.mxu0 0
        %2754 = vmatpush1.bf16.msra.mxu0 0
        %2755 = vmatprep.subr.bf16.mxu0 0
        %2756 = vmatpush1.bf16.msra.mxu0 0
        %2757 = vmatprep.subr.bf16.mxu0 0
        %2758 = vmatpush1.bf16.msra.mxu0 0
        %2759 = vmatprep.subr.bf16.mxu0 0
        %2760 = vmatpush1.bf16.msra.mxu0 0
        %2761 = vmatprep.mubr.bf16.mxu0 0
        %2762 = vmatmul.mubr.bf16.gmra.mrb[0].mxu0 %v888
        %v2763 = vpop.f32.mrb[0].mxu0
        %v2764 = vadd.f32 %v2699, %v2763
        %v2765 = vpop.f32.mrb[0].mxu0
        %v2766 = vpop.f32.mrb[0].mxu0
        %v2767 = vadd.f32 %v2702, %v2766
        %v2768 = vpop.f32.mrb[0].mxu0
        %2769 = vmatprep.mubr.bf16.mxu0 0
        %2770 = vmatmul.mubr.bf16.gmra.mrb[0].mxu0 %v897
        %v2771 = vpop.f32.mrb[0].mxu0
        %v2772 = vadd.f32 %v2707, %v2771
        %v2773 = vpop.f32.mrb[0].mxu0
        %v2774 = vpop.f32.mrb[0].mxu0
        %v2775 = vadd.f32 %v2710, %v2774
        %v2776 = vpop.f32.mrb[0].mxu0
        %2777 = vmatprep.mubr.bf16.mxu0 0
        %2778 = vmatmul.mubr.bf16.gmra.mrb[0].mxu0 %v906
        %v2779 = vpop.f32.mrb[0].mxu0
        %v2780 = vadd.f32 %v2715, %v2779
        %v2781 = vpop.f32.mrb[0].mxu0
        %v2782 = vpop.f32.mrb[0].mxu0
        %v2783 = vadd.f32 %v2718, %v2782
        %v2784 = vpop.f32.mrb[0].mxu0
        %2785 = vmatprep.mubr.bf16.mxu0 0
        %2786 = vmatmul.mubr.bf16.gmra.mrb[0].mxu0 %v915
        %v2787 = vpop.f32.mrb[0].mxu0
        %v2788 = vadd.f32 %v2723, %v2787
        %v2789 = vpop.f32.mrb[0].mxu0
        %v2790 = vpop.f32.mrb[0].mxu0
        %v2791 = vadd.f32 %v2726, %v2790
        %v2792 = vpop.f32.mrb[0].mxu0
        %2793 = vdwg.mxu0
        %v2794 = vld [vmem:[%s2] sm:$0x7]
        %v2796 = vlaneseq
        %v2797 = vshrl.u32 %v2796, 7
        %v2798 = vsub.s32 0, %v2797
        %v2799 = vrot.slane %v2794, %v2798
        %v2800 = vlaneseq
        %v2801 = vshrl.u32 %v2800, 7
        %v2802 = vsub.s32 1, %v2801
        %v2803 = vrot.slane %v2794, %v2802
        %v2804 = vlaneseq
        %v2805 = vshrl.u32 %v2804, 7
        %v2806 = vsub.s32 2, %v2805
        %v2807 = vrot.slane %v2794, %v2806
        %v2811 = vmul.f32 %v2431, %v2799
        %v2812 = vmul.f32 %v2433, %v2803
        %v2813 = vmul.f32 %v2764, %v2807
        %v2814 = vmul.f32 %v2435, %v2799
        %v2815 = vmul.f32 %v2437, %v2803
        %v2816 = vmul.f32 %v2767, %v2807
        %v2817 = vmul.f32 %v2441, %v2799
        %v2818 = vmul.f32 %v2443, %v2803
        %v2819 = vmul.f32 %v2772, %v2807
        %v2820 = vmul.f32 %v2445, %v2799
        %v2821 = vmul.f32 %v2447, %v2803
        %v2822 = vmul.f32 %v2775, %v2807
        %v2823 = vmul.f32 %v2451, %v2799
        %v2824 = vmul.f32 %v2453, %v2803
        %v2825 = vmul.f32 %v2780, %v2807
        %v2826 = vmul.f32 %v2455, %v2799
        %v2827 = vmul.f32 %v2457, %v2803
        %v2828 = vmul.f32 %v2783, %v2807
        %v2829 = vmul.f32 %v2461, %v2799
        %v2830 = vmul.f32 %v2463, %v2803
        %v2831 = vmul.f32 %v2788, %v2807
        %v2832 = vmul.f32 %v2465, %v2799
        %v2833 = vmul.f32 %v2467, %v2803
        %v2834 = vmul.f32 %v2791, %v2807
        %v2835 = vld [vmem:[%s3] sm:$0x7]
        %v2837 = vlaneseq
        %v2838 = vshrl.u32 %v2837, 7
        %v2839 = vsub.s32 0, %v2838
        %v2840 = vrot.slane %v2835, %v2839
        %v2841 = vlaneseq
        %v2842 = vshrl.u32 %v2841, 7
        %v2843 = vsub.s32 1, %v2842
        %v2844 = vrot.slane %v2835, %v2843
        %v2845 = vlaneseq
        %v2846 = vshrl.u32 %v2845, 7
        %v2847 = vsub.s32 2, %v2846
        %v2848 = vrot.slane %v2835, %v2847
        %v2852 = vadd.f32 %v2811, %v2840
        %v2853 = vadd.f32 %v2812, %v2844
        %v2854 = vadd.f32 %v2813, %v2848
        %v2855 = vadd.f32 %v2814, %v2840
        %v2856 = vadd.f32 %v2815, %v2844
        %v2857 = vadd.f32 %v2816, %v2848
        %v2858 = vadd.f32 %v2817, %v2840
        %v2859 = vadd.f32 %v2818, %v2844
        %v2860 = vadd.f32 %v2819, %v2848
        %v2861 = vadd.f32 %v2820, %v2840
        %v2862 = vadd.f32 %v2821, %v2844
        %v2863 = vadd.f32 %v2822, %v2848
        %v2864 = vadd.f32 %v2823, %v2840
        %v2865 = vadd.f32 %v2824, %v2844
        %v2866 = vadd.f32 %v2825, %v2848
        %v2867 = vadd.f32 %v2826, %v2840
        %v2868 = vadd.f32 %v2827, %v2844
        %v2869 = vadd.f32 %v2828, %v2848
        %v2870 = vadd.f32 %v2829, %v2840
        %v2871 = vadd.f32 %v2830, %v2844
        %v2872 = vadd.f32 %v2831, %v2848
        %v2873 = vadd.f32 %v2832, %v2840
        %v2874 = vadd.f32 %v2833, %v2844
        %v2875 = vadd.f32 %v2834, %v2848
        %v2876 = vmax.f32 %v2852, 0.0
        %v2877 = vmax.f32 %v2853, 0.0
        %v2878 = vmax.f32 %v2854, 0.0
        %v2879 = vmax.f32 %v2855, 0.0
        %v2880 = vmax.f32 %v2856, 0.0
        %v2881 = vmax.f32 %v2857, 0.0
        %v2882 = vmax.f32 %v2858, 0.0
        %v2883 = vmax.f32 %v2859, 0.0
        %v2884 = vmax.f32 %v2860, 0.0
        %v2885 = vmax.f32 %v2861, 0.0
        %v2886 = vmax.f32 %v2862, 0.0
        %v2887 = vmax.f32 %v2863, 0.0
        %v2888 = vmax.f32 %v2864, 0.0
        %v2889 = vmax.f32 %v2865, 0.0
        %v2890 = vmax.f32 %v2866, 0.0
        %v2891 = vmax.f32 %v2867, 0.0
        %v2892 = vmax.f32 %v2868, 0.0
        %v2893 = vmax.f32 %v2869, 0.0
        %v2894 = vmax.f32 %v2870, 0.0
        %v2895 = vmax.f32 %v2871, 0.0
        %v2896 = vmax.f32 %v2872, 0.0
        %v2897 = vmax.f32 %v2873, 0.0
        %v2898 = vmax.f32 %v2874, 0.0
        %v2899 = vmax.f32 %v2875, 0.0
        %v2900 = vlaneseq
        %v2901 = vshrl.u32 %v2900, 7
        %v2902 = vadd.s32 %v2901, 8
        %v2903 = vadd.s32 %v2901, 16
        %v2904 = vadd.s32 %v2901, 24
        %v2905 = vadd.s32 %v2901, 32
        %v2906 = vadd.s32 %v2901, 40
        %v2907 = vadd.s32 %v2901, 48
        %v2908 = vadd.s32 %v2901, 56
        %vm2909 = vcmp.lt.s32.totalorder %v2901, 0
        %v2910 = vsub.s32 0, %v2901
        %v2911 = vsel %vm2909, %v2910, %v2901
        %v2912 = vshrl.u32 %v2911, 3
        %v2913 = vand.u32 %v2911, 7
        %v2914 = vsub.s32 0, %v2913
        %v2915 = vsel %vm2909, %v2914, %v2913
        %vm2916 = vcmp.lt.s32.totalorder %v2902, 0
        %v2917 = vsub.s32 0, %v2902
        %v2918 = vsel %vm2916, %v2917, %v2902
        %v2919 = vshrl.u32 %v2918, 3
        %v2920 = vand.u32 %v2918, 7
        %v2921 = vsub.s32 0, %v2920
        %v2922 = vsel %vm2916, %v2921, %v2920
        %vm2923 = vcmp.lt.s32.totalorder %v2903, 0
        %v2924 = vsub.s32 0, %v2903
        %v2925 = vsel %vm2923, %v2924, %v2903
        %v2926 = vshrl.u32 %v2925, 3
        %v2927 = vand.u32 %v2925, 7
        %v2928 = vsub.s32 0, %v2927
        %v2929 = vsel %vm2923, %v2928, %v2927
        %vm2930 = vcmp.lt.s32.totalorder %v2904, 0
        %v2931 = vsub.s32 0, %v2904
        %v2932 = vsel %vm2930, %v2931, %v2904
        %v2933 = vshrl.u32 %v2932, 3
        %v2934 = vand.u32 %v2932, 7
        %v2935 = vsub.s32 0, %v2934
        %v2936 = vsel %vm2930, %v2935, %v2934
        %vm2937 = vcmp.lt.s32.totalorder %v2905, 0
        %v2938 = vsub.s32 0, %v2905
        %v2939 = vsel %vm2937, %v2938, %v2905
        %v2940 = vshrl.u32 %v2939, 3
        %v2941 = vand.u32 %v2939, 7
        %v2942 = vsub.s32 0, %v2941
        %v2943 = vsel %vm2937, %v2942, %v2941
        %vm2944 = vcmp.lt.s32.totalorder %v2906, 0
        %v2945 = vsub.s32 0, %v2906
        %v2946 = vsel %vm2944, %v2945, %v2906
        %v2947 = vshrl.u32 %v2946, 3
        %v2948 = vand.u32 %v2946, 7
        %v2949 = vsub.s32 0, %v2948
        %v2950 = vsel %vm2944, %v2949, %v2948
        %vm2951 = vcmp.lt.s32.totalorder %v2907, 0
        %v2952 = vsub.s32 0, %v2907
        %v2953 = vsel %vm2951, %v2952, %v2907
        %v2954 = vshrl.u32 %v2953, 3
        %v2955 = vand.u32 %v2953, 7
        %v2956 = vsub.s32 0, %v2955
        %v2957 = vsel %vm2951, %v2956, %v2955
        %vm2958 = vcmp.lt.s32.totalorder %v2908, 0
        %v2959 = vsub.s32 0, %v2908
        %v2960 = vsel %vm2958, %v2959, %v2908
        %v2961 = vshrl.u32 %v2960, 3
        %v2962 = vand.u32 %v2960, 7
        %v2963 = vsub.s32 0, %v2962
        %v2964 = vsel %vm2958, %v2963, %v2962
        %vm2965 = vcmp.ne.s32.totalorder %v2915, 0
        %vm2966 = vcmp.ne.s32.totalorder %v2922, 0
        %vm2967 = vcmp.ne.s32.totalorder %v2929, 0
        %vm2968 = vcmp.ne.s32.totalorder %v2936, 0
        %vm2969 = vcmp.ne.s32.totalorder %v2943, 0
        %vm2970 = vcmp.ne.s32.totalorder %v2950, 0
        %vm2971 = vcmp.ne.s32.totalorder %v2957, 0
        %vm2972 = vcmp.ne.s32.totalorder %v2964, 0
        %vm2973 = vcmp.lt.s32.totalorder %v2915, 0
        %vm2974 = vcmp.lt.s32.totalorder %v2922, 0
        %vm2975 = vcmp.lt.s32.totalorder %v2929, 0
        %vm2976 = vcmp.lt.s32.totalorder %v2936, 0
        %vm2977 = vcmp.lt.s32.totalorder %v2943, 0
        %vm2978 = vcmp.lt.s32.totalorder %v2950, 0
        %vm2979 = vcmp.lt.s32.totalorder %v2957, 0
        %vm2980 = vcmp.lt.s32.totalorder %v2964, 0
        %vm2981 = vmand %vm2973, %vm2965
        %vm2982 = vmand %vm2974, %vm2966
        %vm2983 = vmand %vm2975, %vm2967
        %vm2984 = vmand %vm2976, %vm2968
        %vm2985 = vmand %vm2977, %vm2969
        %vm2986 = vmand %vm2978, %vm2970
        %vm2987 = vmand %vm2979, %vm2971
        %vm2988 = vmand %vm2980, %vm2972
        %v2989 = vadd.s32 %v2915, 8
        %v2990 = vadd.s32 %v2922, 8
        %v2991 = vadd.s32 %v2929, 8
        %v2992 = vadd.s32 %v2936, 8
        %v2993 = vadd.s32 %v2943, 8
        %v2994 = vadd.s32 %v2950, 8
        %v2995 = vadd.s32 %v2957, 8
        %v2996 = vadd.s32 %v2964, 8
        %v2997 = vsel %vm2981, %v2989, %v2915
        %v2998 = vsel %vm2982, %v2990, %v2922
        %v2999 = vsel %vm2983, %v2991, %v2929
        %v3000 = vsel %vm2984, %v2992, %v2936
        %v3001 = vsel %vm2985, %v2993, %v2943
        %v3002 = vsel %vm2986, %v2994, %v2950
        %v3003 = vsel %vm2987, %v2995, %v2957
        %v3004 = vsel %vm2988, %v2996, %v2964
        %vm3013 = vcmask 1042432
        %v3014 = vrot.slane %v2876, 5
        %v3015 = vrot.slane %v2879, 5
        %v3016 = vsel %vm3013, %v3014, %v3015
        %v3017 = vrot.slane %v2882, 5
        %v3018 = vsel %vm3013, %v3015, %v3017
        %v3019 = vrot.slane %v2885, 5
        %v3020 = vsel %vm3013, %v3017, %v3019
        %v3021 = vrot.slane %v2888, 5
        %v3022 = vsel %vm3013, %v3019, %v3021
        %v3023 = vrot.slane %v2891, 5
        %v3024 = vsel %vm3013, %v3021, %v3023
        %v3025 = vrot.slane %v2894, 5
        %v3026 = vsel %vm3013, %v3023, %v3025
        %v3027 = vrot.slane %v2897, 5
        %v3028 = vsel %vm3013, %v3025, %v3027
        %v3037 = vsel %vm3013, 0.0, %v3014
        %v3038 = vadd.s32 %v2997, 4294967293
        %v3039 = vadd.s32 %v2998, 4294967293
        %v3040 = vadd.s32 %v2999, 4294967293
        %v3041 = vadd.s32 %v3000, 4294967293
        %v3042 = vadd.s32 %v3001, 4294967293
        %v3043 = vadd.s32 %v3002, 4294967293
        %v3044 = vadd.s32 %v3003, 4294967293
        %v3045 = vadd.s32 %v3004, 4294967293
        %vm3046 = vcmp.ge.s32.totalorder %v3038, 0
        %vm3047 = vcmp.ge.s32.totalorder %v3039, 0
        %vm3048 = vcmp.ge.s32.totalorder %v3040, 0
        %vm3049 = vcmp.ge.s32.totalorder %v3041, 0
        %vm3050 = vcmp.ge.s32.totalorder %v3042, 0
        %vm3051 = vcmp.ge.s32.totalorder %v3043, 0
        %vm3052 = vcmp.ge.s32.totalorder %v3044, 0
        %vm3053 = vcmp.ge.s32.totalorder %v3045, 0
        %vm3054 = vcmp.lt.s32.totalorder %v3038, 8
        %vm3055 = vcmp.lt.s32.totalorder %v3039, 8
        %vm3056 = vcmp.lt.s32.totalorder %v3040, 8
        %vm3057 = vcmp.lt.s32.totalorder %v3041, 8
        %vm3058 = vcmp.lt.s32.totalorder %v3042, 8
        %vm3059 = vcmp.lt.s32.totalorder %v3043, 8
        %vm3060 = vcmp.lt.s32.totalorder %v3044, 8
        %vm3061 = vcmp.lt.s32.totalorder %v3045, 8
        %vm3062 = vmand %vm3046, %vm3054
        %vm3063 = vmand %vm3047, %vm3055
        %vm3064 = vmand %vm3048, %vm3056
        %vm3065 = vmand %vm3049, %vm3057
        %vm3066 = vmand %vm3050, %vm3058
        %vm3067 = vmand %vm3051, %vm3059
        %vm3068 = vmand %vm3052, %vm3060
        %vm3069 = vmand %vm3053, %vm3061
        %v3070 = vsel %vm3062, 1, 0
        %v3071 = vsel %vm3063, 1, 0
        %v3072 = vsel %vm3064, 1, 0
        %v3073 = vsel %vm3065, 1, 0
        %v3074 = vsel %vm3066, 1, 0
        %v3075 = vsel %vm3067, 1, 0
        %v3076 = vsel %vm3068, 1, 0
        %v3077 = vsel %vm3069, 1, 0
        %vm3078 = vcmp.eq.s32.totalorder %v3070, 1
        %vm3079 = vcmp.eq.s32.totalorder %v3071, 1
        %vm3080 = vcmp.eq.s32.totalorder %v3072, 1
        %vm3081 = vcmp.eq.s32.totalorder %v3073, 1
        %vm3082 = vcmp.eq.s32.totalorder %v3074, 1
        %vm3083 = vcmp.eq.s32.totalorder %v3075, 1
        %vm3084 = vcmp.eq.s32.totalorder %v3076, 1
        %vm3085 = vcmp.eq.s32.totalorder %v3077, 1
        %v3086 = vsel %vm3078, %v3037, 0.0
        %v3087 = vsel %vm3079, %v3016, 0.0
        %v3088 = vsel %vm3080, %v3018, 0.0
        %v3089 = vsel %vm3081, %v3020, 0.0
        %v3090 = vsel %vm3082, %v3022, 0.0
        %v3091 = vsel %vm3083, %v3024, 0.0
        %v3092 = vsel %vm3084, %v3026, 0.0
        %v3093 = vsel %vm3085, %v3028, 0.0
        %v3094 = vpack.c.bf16 %v3087, %v3086
        %v3095 = vpack.c.bf16 %v3089, %v3088
        %v3096 = vpack.c.bf16 %v3091, %v3090
        %v3097 = vpack.c.bf16 %v3093, %v3092
        %vm3098 = vcmask 1041408
        %v3099 = vrot.slane %v2876, 6
        %v3100 = vrot.slane %v2879, 6
        %v3101 = vsel %vm3098, %v3099, %v3100
        %v3102 = vrot.slane %v2882, 6
        %v3103 = vsel %vm3098, %v3100, %v3102
        %v3104 = vrot.slane %v2885, 6
        %v3105 = vsel %vm3098, %v3102, %v3104
        %v3106 = vrot.slane %v2888, 6
        %v3107 = vsel %vm3098, %v3104, %v3106
        %v3108 = vrot.slane %v2891, 6
        %v3109 = vsel %vm3098, %v3106, %v3108
        %v3110 = vrot.slane %v2894, 6
        %v3111 = vsel %vm3098, %v3108, %v3110
        %v3112 = vrot.slane %v2897, 6
        %v3113 = vsel %vm3098, %v3110, %v3112
        %v3122 = vsel %vm3098, 0.0, %v3099
        %v3123 = vadd.s32 %v2997, 4294967294
        %v3124 = vadd.s32 %v2998, 4294967294
        %v3125 = vadd.s32 %v2999, 4294967294
        %v3126 = vadd.s32 %v3000, 4294967294
        %v3127 = vadd.s32 %v3001, 4294967294
        %v3128 = vadd.s32 %v3002, 4294967294
        %v3129 = vadd.s32 %v3003, 4294967294
        %v3130 = vadd.s32 %v3004, 4294967294
        %vm3131 = vcmp.ge.s32.totalorder %v3123, 0
        %vm3132 = vcmp.ge.s32.totalorder %v3124, 0
        %vm3133 = vcmp.ge.s32.totalorder %v3125, 0
        %vm3134 = vcmp.ge.s32.totalorder %v3126, 0
        %vm3135 = vcmp.ge.s32.totalorder %v3127, 0
        %vm3136 = vcmp.ge.s32.totalorder %v3128, 0
        %vm3137 = vcmp.ge.s32.totalorder %v3129, 0
        %vm3138 = vcmp.ge.s32.totalorder %v3130, 0
        %vm3139 = vcmp.lt.s32.totalorder %v3123, 8
        %vm3140 = vcmp.lt.s32.totalorder %v3124, 8
        %vm3141 = vcmp.lt.s32.totalorder %v3125, 8
        %vm3142 = vcmp.lt.s32.totalorder %v3126, 8
        %vm3143 = vcmp.lt.s32.totalorder %v3127, 8
        %vm3144 = vcmp.lt.s32.totalorder %v3128, 8
        %vm3145 = vcmp.lt.s32.totalorder %v3129, 8
        %vm3146 = vcmp.lt.s32.totalorder %v3130, 8
        %vm3147 = vmand %vm3131, %vm3139
        %vm3148 = vmand %vm3132, %vm3140
        %vm3149 = vmand %vm3133, %vm3141
        %vm3150 = vmand %vm3134, %vm3142
        %vm3151 = vmand %vm3135, %vm3143
        %vm3152 = vmand %vm3136, %vm3144
        %vm3153 = vmand %vm3137, %vm3145
        %vm3154 = vmand %vm3138, %vm3146
        %v3155 = vsel %vm3147, 1, 0
        %v3156 = vsel %vm3148, 1, 0
        %v3157 = vsel %vm3149, 1, 0
        %v3158 = vsel %vm3150, 1, 0
        %v3159 = vsel %vm3151, 1, 0
        %v3160 = vsel %vm3152, 1, 0
        %v3161 = vsel %vm3153, 1, 0
        %v3162 = vsel %vm3154, 1, 0
        %vm3163 = vcmp.eq.s32.totalorder %v3155, 1
        %vm3164 = vcmp.eq.s32.totalorder %v3156, 1
        %vm3165 = vcmp.eq.s32.totalorder %v3157, 1
        %vm3166 = vcmp.eq.s32.totalorder %v3158, 1
        %vm3167 = vcmp.eq.s32.totalorder %v3159, 1
        %vm3168 = vcmp.eq.s32.totalorder %v3160, 1
        %vm3169 = vcmp.eq.s32.totalorder %v3161, 1
        %vm3170 = vcmp.eq.s32.totalorder %v3162, 1
        %v3171 = vsel %vm3163, %v3122, 0.0
        %v3172 = vsel %vm3164, %v3101, 0.0
        %v3173 = vsel %vm3165, %v3103, 0.0
        %v3174 = vsel %vm3166, %v3105, 0.0
        %v3175 = vsel %vm3167, %v3107, 0.0
        %v3176 = vsel %vm3168, %v3109, 0.0
        %v3177 = vsel %vm3169, %v3111, 0.0
        %v3178 = vsel %vm3170, %v3113, 0.0
        %v3179 = vpack.c.bf16 %v3172, %v3171
        %v3180 = vpack.c.bf16 %v3174, %v3173
        %v3181 = vpack.c.bf16 %v3176, %v3175
        %v3182 = vpack.c.bf16 %v3178, %v3177
        %vm3183 = vcmask 1040384
        %v3184 = vrot.slane %v2876, 7
        %v3185 = vrot.slane %v2879, 7
        %v3186 = vsel %vm3183, %v3184, %v3185
        %v3187 = vrot.slane %v2882, 7
        %v3188 = vsel %vm3183, %v3185, %v3187
        %v3189 = vrot.slane %v2885, 7
        %v3190 = vsel %vm3183, %v3187, %v3189
        %v3191 = vrot.slane %v2888, 7
        %v3192 = vsel %vm3183, %v3189, %v3191
        %v3193 = vrot.slane %v2891, 7
        %v3194 = vsel %vm3183, %v3191, %v3193
        %v3195 = vrot.slane %v2894, 7
        %v3196 = vsel %vm3183, %v3193, %v3195
        %v3197 = vrot.slane %v2897, 7
        %v3198 = vsel %vm3183, %v3195, %v3197
        %v3207 = vsel %vm3183, 0.0, %v3184
        %v3208 = vadd.s32 %v2997, 4294967295
        %v3209 = vadd.s32 %v2998, 4294967295
        %v3210 = vadd.s32 %v2999, 4294967295
        %v3211 = vadd.s32 %v3000, 4294967295
        %v3212 = vadd.s32 %v3001, 4294967295
        %v3213 = vadd.s32 %v3002, 4294967295
        %v3214 = vadd.s32 %v3003, 4294967295
        %v3215 = vadd.s32 %v3004, 4294967295
        %vm3216 = vcmp.ge.s32.totalorder %v3208, 0
        %vm3217 = vcmp.ge.s32.totalorder %v3209, 0
        %vm3218 = vcmp.ge.s32.totalorder %v3210, 0
        %vm3219 = vcmp.ge.s32.totalorder %v3211, 0
        %vm3220 = vcmp.ge.s32.totalorder %v3212, 0
        %vm3221 = vcmp.ge.s32.totalorder %v3213, 0
        %vm3222 = vcmp.ge.s32.totalorder %v3214, 0
        %vm3223 = vcmp.ge.s32.totalorder %v3215, 0
        %vm3224 = vcmp.lt.s32.totalorder %v3208, 8
        %vm3225 = vcmp.lt.s32.totalorder %v3209, 8
        %vm3226 = vcmp.lt.s32.totalorder %v3210, 8
        %vm3227 = vcmp.lt.s32.totalorder %v3211, 8
        %vm3228 = vcmp.lt.s32.totalorder %v3212, 8
        %vm3229 = vcmp.lt.s32.totalorder %v3213, 8
        %vm3230 = vcmp.lt.s32.totalorder %v3214, 8
        %vm3231 = vcmp.lt.s32.totalorder %v3215, 8
        %vm3232 = vmand %vm3216, %vm3224
        %vm3233 = vmand %vm3217, %vm3225
        %vm3234 = vmand %vm3218, %vm3226
        %vm3235 = vmand %vm3219, %vm3227
        %vm3236 = vmand %vm3220, %vm3228
        %vm3237 = vmand %vm3221, %vm3229
        %vm3238 = vmand %vm3222, %vm3230
        %vm3239 = vmand %vm3223, %vm3231
        %v3240 = vsel %vm3232, 1, 0
        %v3241 = vsel %vm3233, 1, 0
        %v3242 = vsel %vm3234, 1, 0
        %v3243 = vsel %vm3235, 1, 0
        %v3244 = vsel %vm3236, 1, 0
        %v3245 = vsel %vm3237, 1, 0
        %v3246 = vsel %vm3238, 1, 0
        %v3247 = vsel %vm3239, 1, 0
        %vm3248 = vcmp.eq.s32.totalorder %v3240, 1
        %vm3249 = vcmp.eq.s32.totalorder %v3241, 1
        %vm3250 = vcmp.eq.s32.totalorder %v3242, 1
        %vm3251 = vcmp.eq.s32.totalorder %v3243, 1
        %vm3252 = vcmp.eq.s32.totalorder %v3244, 1
        %vm3253 = vcmp.eq.s32.totalorder %v3245, 1
        %vm3254 = vcmp.eq.s32.totalorder %v3246, 1
        %vm3255 = vcmp.eq.s32.totalorder %v3247, 1
        %v3256 = vsel %vm3248, %v3207, 0.0
        %v3257 = vsel %vm3249, %v3186, 0.0
        %v3258 = vsel %vm3250, %v3188, 0.0
        %v3259 = vsel %vm3251, %v3190, 0.0
        %v3260 = vsel %vm3252, %v3192, 0.0
        %v3261 = vsel %vm3253, %v3194, 0.0
        %v3262 = vsel %vm3254, %v3196, 0.0
        %v3263 = vsel %vm3255, %v3198, 0.0
        %v3264 = vpack.c.bf16 %v3257, %v3256
        %v3265 = vpack.c.bf16 %v3259, %v3258
        %v3266 = vpack.c.bf16 %v3261, %v3260
        %v3267 = vpack.c.bf16 %v3263, %v3262
        %v3268 = vpack.c.bf16 %v2879, %v2876
        %v3269 = vpack.c.bf16 %v2885, %v2882
        %v3270 = vpack.c.bf16 %v2891, %v2888
        %v3271 = vpack.c.bf16 %v2897, %v2894
        %vm3272 = vcmask 1046528
        %v3273 = vrot.slane %v2876, 1
        %v3274 = vrot.slane %v2879, 1
        %v3275 = vsel %vm3272, %v3273, %v3274
        %v3276 = vrot.slane %v2882, 1
        %v3277 = vsel %vm3272, %v3274, %v3276
        %v3278 = vrot.slane %v2885, 1
        %v3279 = vsel %vm3272, %v3276, %v3278
        %v3280 = vrot.slane %v2888, 1
        %v3281 = vsel %vm3272, %v3278, %v3280
        %v3282 = vrot.slane %v2891, 1
        %v3283 = vsel %vm3272, %v3280, %v3282
        %v3284 = vrot.slane %v2894, 1
        %v3285 = vsel %vm3272, %v3282, %v3284
        %v3286 = vrot.slane %v2897, 1
        %v3287 = vsel %vm3272, %v3284, %v3286
        %v3296 = vsel %vm3272, %v3286, 0.0
        %v3297 = vadd.s32 %v2997, 1
        %v3298 = vadd.s32 %v2998, 1
        %v3299 = vadd.s32 %v2999, 1
        %v3300 = vadd.s32 %v3000, 1
        %v3301 = vadd.s32 %v3001, 1
        %v3302 = vadd.s32 %v3002, 1
        %v3303 = vadd.s32 %v3003, 1
        %v3304 = vadd.s32 %v3004, 1
        %vm3305 = vcmp.ge.s32.totalorder %v3297, 0
        %vm3306 = vcmp.ge.s32.totalorder %v3298, 0
        %vm3307 = vcmp.ge.s32.totalorder %v3299, 0
        %vm3308 = vcmp.ge.s32.totalorder %v3300, 0
        %vm3309 = vcmp.ge.s32.totalorder %v3301, 0
        %vm3310 = vcmp.ge.s32.totalorder %v3302, 0
        %vm3311 = vcmp.ge.s32.totalorder %v3303, 0
        %vm3312 = vcmp.ge.s32.totalorder %v3304, 0
        %vm3313 = vcmp.lt.s32.totalorder %v3297, 8
        %vm3314 = vcmp.lt.s32.totalorder %v3298, 8
        %vm3315 = vcmp.lt.s32.totalorder %v3299, 8
        %vm3316 = vcmp.lt.s32.totalorder %v3300, 8
        %vm3317 = vcmp.lt.s32.totalorder %v3301, 8
        %vm3318 = vcmp.lt.s32.totalorder %v3302, 8
        %vm3319 = vcmp.lt.s32.totalorder %v3303, 8
        %vm3320 = vcmp.lt.s32.totalorder %v3304, 8
        %vm3321 = vmand %vm3305, %vm3313
        %vm3322 = vmand %vm3306, %vm3314
        %vm3323 = vmand %vm3307, %vm3315
        %vm3324 = vmand %vm3308, %vm3316
        %vm3325 = vmand %vm3309, %vm3317
        %vm3326 = vmand %vm3310, %vm3318
        %vm3327 = vmand %vm3311, %vm3319
        %vm3328 = vmand %vm3312, %vm3320
        %v3329 = vsel %vm3321, 1, 0
        %v3330 = vsel %vm3322, 1, 0
        %v3331 = vsel %vm3323, 1, 0
        %v3332 = vsel %vm3324, 1, 0
        %v3333 = vsel %vm3325, 1, 0
        %v3334 = vsel %vm3326, 1, 0
        %v3335 = vsel %vm3327, 1, 0
        %v3336 = vsel %vm3328, 1, 0
        %vm3337 = vcmp.eq.s32.totalorder %v3329, 1
        %vm3338 = vcmp.eq.s32.totalorder %v3330, 1
        %vm3339 = vcmp.eq.s32.totalorder %v3331, 1
        %vm3340 = vcmp.eq.s32.totalorder %v3332, 1
        %vm3341 = vcmp.eq.s32.totalorder %v3333, 1
        %vm3342 = vcmp.eq.s32.totalorder %v3334, 1
        %vm3343 = vcmp.eq.s32.totalorder %v3335, 1
        %vm3344 = vcmp.eq.s32.totalorder %v3336, 1
        %v3345 = vsel %vm3337, %v3275, 0.0
        %v3346 = vsel %vm3338, %v3277, 0.0
        %v3347 = vsel %vm3339, %v3279, 0.0
        %v3348 = vsel %vm3340, %v3281, 0.0
        %v3349 = vsel %vm3341, %v3283, 0.0
        %v3350 = vsel %vm3342, %v3285, 0.0
        %v3351 = vsel %vm3343, %v3287, 0.0
        %v3352 = vsel %vm3344, %v3296, 0.0
        %v3353 = vpack.c.bf16 %v3346, %v3345
        %v3354 = vpack.c.bf16 %v3348, %v3347
        %v3355 = vpack.c.bf16 %v3350, %v3349
        %v3356 = vpack.c.bf16 %v3352, %v3351
        %vm3357 = vcmask 1045504
        %v3358 = vrot.slane %v2876, 2
        %v3359 = vrot.slane %v2879, 2
        %v3360 = vsel %vm3357, %v3358, %v3359
        %v3361 = vrot.slane %v2882, 2
        %v3362 = vsel %vm3357, %v3359, %v3361
        %v3363 = vrot.slane %v2885, 2
        %v3364 = vsel %vm3357, %v3361, %v3363
        %v3365 = vrot.slane %v2888, 2
        %v3366 = vsel %vm3357, %v3363, %v3365
        %v3367 = vrot.slane %v2891, 2
        %v3368 = vsel %vm3357, %v3365, %v3367
        %v3369 = vrot.slane %v2894, 2
        %v3370 = vsel %vm3357, %v3367, %v3369
        %v3371 = vrot.slane %v2897, 2
        %v3372 = vsel %vm3357, %v3369, %v3371
        %v3381 = vsel %vm3357, %v3371, 0.0
        %v3382 = vadd.s32 %v2997, 2
        %v3383 = vadd.s32 %v2998, 2
        %v3384 = vadd.s32 %v2999, 2
        %v3385 = vadd.s32 %v3000, 2
        %v3386 = vadd.s32 %v3001, 2
        %v3387 = vadd.s32 %v3002, 2
        %v3388 = vadd.s32 %v3003, 2
        %v3389 = vadd.s32 %v3004, 2
        %vm3390 = vcmp.ge.s32.totalorder %v3382, 0
        %vm3391 = vcmp.ge.s32.totalorder %v3383, 0
        %vm3392 = vcmp.ge.s32.totalorder %v3384, 0
        %vm3393 = vcmp.ge.s32.totalorder %v3385, 0
        %vm3394 = vcmp.ge.s32.totalorder %v3386, 0
        %vm3395 = vcmp.ge.s32.totalorder %v3387, 0
        %vm3396 = vcmp.ge.s32.totalorder %v3388, 0
        %vm3397 = vcmp.ge.s32.totalorder %v3389, 0
        %vm3398 = vcmp.lt.s32.totalorder %v3382, 8
        %vm3399 = vcmp.lt.s32.totalorder %v3383, 8
        %vm3400 = vcmp.lt.s32.totalorder %v3384, 8
        %vm3401 = vcmp.lt.s32.totalorder %v3385, 8
        %vm3402 = vcmp.lt.s32.totalorder %v3386, 8
        %vm3403 = vcmp.lt.s32.totalorder %v3387, 8
        %vm3404 = vcmp.lt.s32.totalorder %v3388, 8
        %vm3405 = vcmp.lt.s32.totalorder %v3389, 8
        %vm3406 = vmand %vm3390, %vm3398
        %vm3407 = vmand %vm3391, %vm3399
        %vm3408 = vmand %vm3392, %vm3400
        %vm3409 = vmand %vm3393, %vm3401
        %vm3410 = vmand %vm3394, %vm3402
        %vm3411 = vmand %vm3395, %vm3403
        %vm3412 = vmand %vm3396, %vm3404
        %vm3413 = vmand %vm3397, %vm3405
        %v3414 = vsel %vm3406, 1, 0
        %v3415 = vsel %vm3407, 1, 0
        %v3416 = vsel %vm3408, 1, 0
        %v3417 = vsel %vm3409, 1, 0
        %v3418 = vsel %vm3410, 1, 0
        %v3419 = vsel %vm3411, 1, 0
        %v3420 = vsel %vm3412, 1, 0
        %v3421 = vsel %vm3413, 1, 0
        %vm3422 = vcmp.eq.s32.totalorder %v3414, 1
        %vm3423 = vcmp.eq.s32.totalorder %v3415, 1
        %vm3424 = vcmp.eq.s32.totalorder %v3416, 1
        %vm3425 = vcmp.eq.s32.totalorder %v3417, 1
        %vm3426 = vcmp.eq.s32.totalorder %v3418, 1
        %vm3427 = vcmp.eq.s32.totalorder %v3419, 1
        %vm3428 = vcmp.eq.s32.totalorder %v3420, 1
        %vm3429 = vcmp.eq.s32.totalorder %v3421, 1
        %v3430 = vsel %vm3422, %v3360, 0.0
        %v3431 = vsel %vm3423, %v3362, 0.0
        %v3432 = vsel %vm3424, %v3364, 0.0
        %v3433 = vsel %vm3425, %v3366, 0.0
        %v3434 = vsel %vm3426, %v3368, 0.0
        %v3435 = vsel %vm3427, %v3370, 0.0
        %v3436 = vsel %vm3428, %v3372, 0.0
        %v3437 = vsel %vm3429, %v3381, 0.0
        %v3438 = vpack.c.bf16 %v3431, %v3430
        %v3439 = vpack.c.bf16 %v3433, %v3432
        %v3440 = vpack.c.bf16 %v3435, %v3434
        %v3441 = vpack.c.bf16 %v3437, %v3436
        %vm3442 = vcmask 1044480
        %v3443 = vrot.slane %v2876, 3
        %v3444 = vrot.slane %v2879, 3
        %v3445 = vsel %vm3442, %v3443, %v3444
        %v3446 = vrot.slane %v2882, 3
        %v3447 = vsel %vm3442, %v3444, %v3446
        %v3448 = vrot.slane %v2885, 3
        %v3449 = vsel %vm3442, %v3446, %v3448
        %v3450 = vrot.slane %v2888, 3
        %v3451 = vsel %vm3442, %v3448, %v3450
        %v3452 = vrot.slane %v2891, 3
        %v3453 = vsel %vm3442, %v3450, %v3452
        %v3454 = vrot.slane %v2894, 3
        %v3455 = vsel %vm3442, %v3452, %v3454
        %v3456 = vrot.slane %v2897, 3
        %v3457 = vsel %vm3442, %v3454, %v3456
        %v3466 = vsel %vm3442, %v3456, 0.0
        %v3467 = vadd.s32 %v2997, 3
        %v3468 = vadd.s32 %v2998, 3
        %v3469 = vadd.s32 %v2999, 3
        %v3470 = vadd.s32 %v3000, 3
        %v3471 = vadd.s32 %v3001, 3
        %v3472 = vadd.s32 %v3002, 3
        %v3473 = vadd.s32 %v3003, 3
        %v3474 = vadd.s32 %v3004, 3
        %vm3475 = vcmp.ge.s32.totalorder %v3467, 0
        %vm3476 = vcmp.ge.s32.totalorder %v3468, 0
        %vm3477 = vcmp.ge.s32.totalorder %v3469, 0
        %vm3478 = vcmp.ge.s32.totalorder %v3470, 0
        %vm3479 = vcmp.ge.s32.totalorder %v3471, 0
        %vm3480 = vcmp.ge.s32.totalorder %v3472, 0
        %vm3481 = vcmp.ge.s32.totalorder %v3473, 0
        %vm3482 = vcmp.ge.s32.totalorder %v3474, 0
        %vm3483 = vcmp.lt.s32.totalorder %v3467, 8
        %vm3484 = vcmp.lt.s32.totalorder %v3468, 8
        %vm3485 = vcmp.lt.s32.totalorder %v3469, 8
        %vm3486 = vcmp.lt.s32.totalorder %v3470, 8
        %vm3487 = vcmp.lt.s32.totalorder %v3471, 8
        %vm3488 = vcmp.lt.s32.totalorder %v3472, 8
        %vm3489 = vcmp.lt.s32.totalorder %v3473, 8
        %vm3490 = vcmp.lt.s32.totalorder %v3474, 8
        %vm3491 = vmand %vm3475, %vm3483
        %vm3492 = vmand %vm3476, %vm3484
        %vm3493 = vmand %vm3477, %vm3485
        %vm3494 = vmand %vm3478, %vm3486
        %vm3495 = vmand %vm3479, %vm3487
        %vm3496 = vmand %vm3480, %vm3488
        %vm3497 = vmand %vm3481, %vm3489
        %vm3498 = vmand %vm3482, %vm3490
        %v3499 = vsel %vm3491, 1, 0
        %v3500 = vsel %vm3492, 1, 0
        %v3501 = vsel %vm3493, 1, 0
        %v3502 = vsel %vm3494, 1, 0
        %v3503 = vsel %vm3495, 1, 0
        %v3504 = vsel %vm3496, 1, 0
        %v3505 = vsel %vm3497, 1, 0
        %v3506 = vsel %vm3498, 1, 0
        %vm3507 = vcmp.eq.s32.totalorder %v3499, 1
        %vm3508 = vcmp.eq.s32.totalorder %v3500, 1
        %vm3509 = vcmp.eq.s32.totalorder %v3501, 1
        %vm3510 = vcmp.eq.s32.totalorder %v3502, 1
        %vm3511 = vcmp.eq.s32.totalorder %v3503, 1
        %vm3512 = vcmp.eq.s32.totalorder %v3504, 1
        %vm3513 = vcmp.eq.s32.totalorder %v3505, 1
        %vm3514 = vcmp.eq.s32.totalorder %v3506, 1
        %v3515 = vsel %vm3507, %v3445, 0.0
        %v3516 = vsel %vm3508, %v3447, 0.0
        %v3517 = vsel %vm3509, %v3449, 0.0
        %v3518 = vsel %vm3510, %v3451, 0.0
        %v3519 = vsel %vm3511, %v3453, 0.0
        %v3520 = vsel %vm3512, %v3455, 0.0
        %v3521 = vsel %vm3513, %v3457, 0.0
        %v3522 = vsel %vm3514, %v3466, 0.0
        %v3523 = vpack.c.bf16 %v3516, %v3515
        %v3524 = vpack.c.bf16 %v3518, %v3517
        %v3525 = vpack.c.bf16 %v3520, %v3519
        %v3526 = vpack.c.bf16 %v3522, %v3521
        %v3527 = vld [vmem:[%s4] sm:$0xff]
        %v3528 = vld [vmem:[%s4 + $0x8] sm:$0xff]
        %v3529 = vld [vmem:[%s4 + $0x10] sm:$0xff]
        %v3530 = vld [vmem:[%s4 + $0x18] sm:$0xff]
        %v3531 = vld [vmem:[%s4 + $0x20] sm:$0xff]
        %v3532 = vld [vmem:[%s4 + $0x28] sm:$0xff]
        %v3533 = vld [vmem:[%s4 + $0x30] sm:$0xff]
        %v3534 = vld [vmem:[%s4 + $0x38] sm:$0xff]
        %v3535 = vld [vmem:[%s4 + $0x40] sm:$0xff]
        %v3536 = vld [vmem:[%s4 + $0x48] sm:$0xff]
        %v3537 = vld [vmem:[%s4 + $0x50] sm:$0xff]
        %v3538 = vld [vmem:[%s4 + $0x58] sm:$0xff]
        %v3539 = vld [vmem:[%s4 + $0x60] sm:$0xff]
        %v3540 = vld [vmem:[%s4 + $0x68] sm:$0xff]
        %v3541 = vld [vmem:[%s4 + $0x70] sm:$0xff]
        %v3542 = vld [vmem:[%s4 + $0x78] sm:$0xff]
        %v3543 = vld [vmem:[%s4 + $0x80] sm:$0xff]
        %v3544 = vld [vmem:[%s4 + $0x88] sm:$0xff]
        %v3545 = vld [vmem:[%s4 + $0x90] sm:$0xff]
        %v3546 = vld [vmem:[%s4 + $0x98] sm:$0xff]
        %v3547 = vld [vmem:[%s4 + $0xa0] sm:$0xff]
        %v3548 = vld [vmem:[%s4 + $0xa8] sm:$0xff]
        %v3549 = vld [vmem:[%s4 + $0xb0] sm:$0xff]
        %v3550 = vld [vmem:[%s4 + $0xb8] sm:$0xff]
        %v3551 = vld [vmem:[%s4 + $0xc0] sm:$0xff]
        %v3552 = vld [vmem:[%s4 + $0xc8] sm:$0xff]
        %v3553 = vld [vmem:[%s4 + $0xd0] sm:$0xff]
        %v3554 = vld [vmem:[%s4 + $0xd8] sm:$0xff]
        %v3555 = vld [vmem:[%s4 + $0xe0] sm:$0xff]
        %v3556 = vld [vmem:[%s4 + $0xe8] sm:$0xff]
        %v3557 = vld [vmem:[%s4 + $0xf0] sm:$0xff]
        %v3558 = vld [vmem:[%s4 + $0xf8] sm:$0xff]
        %v3559 = vld [vmem:[%s4 + $0x100] sm:$0xff]
        %v3560 = vld [vmem:[%s4 + $0x108] sm:$0xff]
        %v3561 = vld [vmem:[%s4 + $0x110] sm:$0xff]
        %v3562 = vld [vmem:[%s4 + $0x118] sm:$0xff]
        %v3563 = vld [vmem:[%s4 + $0x120] sm:$0xff]
        %v3564 = vld [vmem:[%s4 + $0x128] sm:$0xff]
        %v3565 = vld [vmem:[%s4 + $0x130] sm:$0xff]
        %v3566 = vld [vmem:[%s4 + $0x138] sm:$0xff]
        %v3567 = vld [vmem:[%s4 + $0x140] sm:$0xff]
        %v3568 = vld [vmem:[%s4 + $0x148] sm:$0xff]
        %v3569 = vld [vmem:[%s4 + $0x150] sm:$0xff]
        %v3570 = vld [vmem:[%s4 + $0x158] sm:$0xff]
        %v3571 = vld [vmem:[%s4 + $0x160] sm:$0xff]
        %v3572 = vld [vmem:[%s4 + $0x168] sm:$0xff]
        %v3573 = vld [vmem:[%s4 + $0x170] sm:$0xff]
        %v3574 = vld [vmem:[%s4 + $0x178] sm:$0xff]
        %v3575 = vld [vmem:[%s4 + $0x180] sm:$0xff]
        %v3576 = vld [vmem:[%s4 + $0x188] sm:$0xff]
        %v3577 = vld [vmem:[%s4 + $0x190] sm:$0xff]
        %v3578 = vld [vmem:[%s4 + $0x198] sm:$0xff]
        %v3579 = vld [vmem:[%s4 + $0x1a0] sm:$0xff]
        %v3580 = vld [vmem:[%s4 + $0x1a8] sm:$0xff]
        %v3581 = vld [vmem:[%s4 + $0x1b0] sm:$0xff]
        %v3582 = vld [vmem:[%s4 + $0x1b8] sm:$0xff]
        %v3583 = vld [vmem:[%s4 + $0x1c0] sm:$0xff]
        %v3584 = vld [vmem:[%s4 + $0x1c8] sm:$0xff]
        %v3585 = vld [vmem:[%s4 + $0x1d0] sm:$0xff]
        %v3586 = vld [vmem:[%s4 + $0x1d8] sm:$0xff]
        %v3587 = vld [vmem:[%s4 + $0x1e0] sm:$0xff]
        %v3588 = vld [vmem:[%s4 + $0x1e8] sm:$0xff]
        %v3589 = vld [vmem:[%s4 + $0x1f0] sm:$0xff]
        %v3590 = vld [vmem:[%s4 + $0x1f8] sm:$0xff]
        %v3591 = vld [vmem:[%s4 + $0x200] sm:$0xff]
        %v3592 = vld [vmem:[%s4 + $0x208] sm:$0xff]
        %v3593 = vld [vmem:[%s4 + $0x210] sm:$0xff]
        %v3594 = vld [vmem:[%s4 + $0x218] sm:$0xff]
        %v3595 = vld [vmem:[%s4 + $0x220] sm:$0xff]
        %v3596 = vld [vmem:[%s4 + $0x228] sm:$0xff]
        %v3597 = vld [vmem:[%s4 + $0x230] sm:$0xff]
        %v3598 = vld [vmem:[%s4 + $0x238] sm:$0xff]
        %v3599 = vld [vmem:[%s4 + $0x240] sm:$0xff]
        %v3600 = vld [vmem:[%s4 + $0x248] sm:$0xff]
        %v3601 = vld [vmem:[%s4 + $0x250] sm:$0xff]
        %v3602 = vld [vmem:[%s4 + $0x258] sm:$0xff]
        %v3603 = vld [vmem:[%s4 + $0x260] sm:$0xff]
        %v3604 = vld [vmem:[%s4 + $0x268] sm:$0xff]
        %v3605 = vld [vmem:[%s4 + $0x270] sm:$0xff]
        %v3606 = vld [vmem:[%s4 + $0x278] sm:$0xff]
        %v3607 = vld [vmem:[%s4 + $0x280] sm:$0xff]
        %v3608 = vld [vmem:[%s4 + $0x288] sm:$0xff]
        %v3609 = vld [vmem:[%s4 + $0x290] sm:$0xff]
        %v3610 = vld [vmem:[%s4 + $0x298] sm:$0xff]
        %v3611 = vld [vmem:[%s4 + $0x2a0] sm:$0xff]
        %v3612 = vld [vmem:[%s4 + $0x2a8] sm:$0xff]
        %v3613 = vld [vmem:[%s4 + $0x2b0] sm:$0xff]
        %v3614 = vld [vmem:[%s4 + $0x2b8] sm:$0xff]
        %v3615 = vld [vmem:[%s4 + $0x2c0] sm:$0xff]
        %v3616 = vld [vmem:[%s4 + $0x2c8] sm:$0xff]
        %v3617 = vld [vmem:[%s4 + $0x2d0] sm:$0xff]
        %v3618 = vld [vmem:[%s4 + $0x2d8] sm:$0xff]
        %v3619 = vld [vmem:[%s4 + $0x2e0] sm:$0xff]
        %v3620 = vld [vmem:[%s4 + $0x2e8] sm:$0xff]
        %v3621 = vld [vmem:[%s4 + $0x2f0] sm:$0xff]
        %v3622 = vld [vmem:[%s4 + $0x2f8] sm:$0xff]
        %v3623 = vld [vmem:[%s4 + $0x300] sm:$0xff]
        %v3624 = vld [vmem:[%s4 + $0x308] sm:$0xff]
        %v3625 = vld [vmem:[%s4 + $0x310] sm:$0xff]
        %v3626 = vld [vmem:[%s4 + $0x318] sm:$0xff]
        %v3627 = vld [vmem:[%s4 + $0x320] sm:$0xff]
        %v3628 = vld [vmem:[%s4 + $0x328] sm:$0xff]
        %v3629 = vld [vmem:[%s4 + $0x330] sm:$0xff]
        %v3630 = vld [vmem:[%s4 + $0x338] sm:$0xff]
        %v3631 = vld [vmem:[%s4 + $0x340] sm:$0xff]
        %v3632 = vld [vmem:[%s4 + $0x348] sm:$0xff]
        %v3633 = vld [vmem:[%s4 + $0x350] sm:$0xff]
        %v3634 = vld [vmem:[%s4 + $0x358] sm:$0xff]
        %v3635 = vld [vmem:[%s4 + $0x360] sm:$0xff]
        %v3636 = vld [vmem:[%s4 + $0x368] sm:$0xff]
        %v3637 = vld [vmem:[%s4 + $0x370] sm:$0xff]
        %v3638 = vld [vmem:[%s4 + $0x378] sm:$0xff]
        %v3751 = vunpack.c.l.b16 %v3527
        %v3752 = vunpack.c.h.b16 %v3527
        %v3753 = vunpack.c.l.b16 %v3528
        %v3754 = vunpack.c.h.b16 %v3528
        %v3755 = vunpack.c.l.b16 %v3529
        %v3756 = vunpack.c.h.b16 %v3529
        %v3757 = vunpack.c.l.b16 %v3530
        %v3758 = vunpack.c.h.b16 %v3530
        %v3759 = vunpack.c.l.b16 %v3531
        %v3760 = vunpack.c.h.b16 %v3531
        %v3761 = vunpack.c.l.b16 %v3532
        %v3762 = vunpack.c.h.b16 %v3532
        %v3763 = vunpack.c.l.b16 %v3533
        %v3764 = vunpack.c.h.b16 %v3533
        %v3765 = vunpack.c.l.b16 %v3534
        %v3766 = vunpack.c.h.b16 %v3534
        %v3767 = vunpack.c.l.b16 %v3535
        %v3768 = vunpack.c.h.b16 %v3535
        %v3769 = vunpack.c.l.b16 %v3536
        %v3770 = vunpack.c.h.b16 %v3536
        %v3771 = vunpack.c.l.b16 %v3537
        %v3772 = vunpack.c.h.b16 %v3537
        %v3773 = vunpack.c.l.b16 %v3538
        %v3774 = vunpack.c.h.b16 %v3538
        %v3775 = vunpack.c.l.b16 %v3539
        %v3776 = vunpack.c.h.b16 %v3539
        %v3777 = vunpack.c.l.b16 %v3540
        %v3778 = vunpack.c.h.b16 %v3540
        %v3779 = vunpack.c.l.b16 %v3541
        %v3780 = vunpack.c.h.b16 %v3541
        %v3781 = vunpack.c.l.b16 %v3542
        %v3782 = vunpack.c.h.b16 %v3542
        %v3783 = vunpack.c.l.b16 %v3543
        %v3784 = vunpack.c.h.b16 %v3543
        %v3785 = vunpack.c.l.b16 %v3544
        %v3786 = vunpack.c.h.b16 %v3544
        %v3787 = vunpack.c.l.b16 %v3545
        %v3788 = vunpack.c.h.b16 %v3545
        %v3789 = vunpack.c.l.b16 %v3546
        %v3790 = vunpack.c.h.b16 %v3546
        %v3791 = vunpack.c.l.b16 %v3547
        %v3792 = vunpack.c.h.b16 %v3547
        %v3793 = vunpack.c.l.b16 %v3548
        %v3794 = vunpack.c.h.b16 %v3548
        %v3795 = vunpack.c.l.b16 %v3549
        %v3796 = vunpack.c.h.b16 %v3549
        %v3797 = vunpack.c.l.b16 %v3550
        %v3798 = vunpack.c.h.b16 %v3550
        %v3799 = vunpack.c.l.b16 %v3551
        %v3800 = vunpack.c.h.b16 %v3551
        %v3801 = vunpack.c.l.b16 %v3552
        %v3802 = vunpack.c.h.b16 %v3552
        %v3803 = vunpack.c.l.b16 %v3553
        %v3804 = vunpack.c.h.b16 %v3553
        %v3805 = vunpack.c.l.b16 %v3554
        %v3806 = vunpack.c.h.b16 %v3554
        %v3807 = vunpack.c.l.b16 %v3555
        %v3808 = vunpack.c.h.b16 %v3555
        %v3809 = vunpack.c.l.b16 %v3556
        %v3810 = vunpack.c.h.b16 %v3556
        %v3811 = vunpack.c.l.b16 %v3557
        %v3812 = vunpack.c.h.b16 %v3557
        %v3813 = vunpack.c.l.b16 %v3558
        %v3814 = vunpack.c.h.b16 %v3558
        %v3815 = vunpack.c.l.b16 %v3559
        %v3816 = vunpack.c.h.b16 %v3559
        %v3817 = vunpack.c.l.b16 %v3560
        %v3818 = vunpack.c.h.b16 %v3560
        %v3819 = vunpack.c.l.b16 %v3561
        %v3820 = vunpack.c.h.b16 %v3561
        %v3821 = vunpack.c.l.b16 %v3562
        %v3822 = vunpack.c.h.b16 %v3562
        %v3823 = vunpack.c.l.b16 %v3563
        %v3824 = vunpack.c.h.b16 %v3563
        %v3825 = vunpack.c.l.b16 %v3564
        %v3826 = vunpack.c.h.b16 %v3564
        %v3827 = vunpack.c.l.b16 %v3565
        %v3828 = vunpack.c.h.b16 %v3565
        %v3829 = vunpack.c.l.b16 %v3566
        %v3830 = vunpack.c.h.b16 %v3566
        %v3831 = vunpack.c.l.b16 %v3567
        %v3832 = vunpack.c.h.b16 %v3567
        %v3833 = vunpack.c.l.b16 %v3568
        %v3834 = vunpack.c.h.b16 %v3568
        %v3835 = vunpack.c.l.b16 %v3569
        %v3836 = vunpack.c.h.b16 %v3569
        %v3837 = vunpack.c.l.b16 %v3570
        %v3838 = vunpack.c.h.b16 %v3570
        %v3839 = vunpack.c.l.b16 %v3571
        %v3840 = vunpack.c.h.b16 %v3571
        %v3841 = vunpack.c.l.b16 %v3572
        %v3842 = vunpack.c.h.b16 %v3572
        %v3843 = vunpack.c.l.b16 %v3573
        %v3844 = vunpack.c.h.b16 %v3573
        %v3845 = vunpack.c.l.b16 %v3574
        %v3846 = vunpack.c.h.b16 %v3574
        %v3847 = vunpack.c.l.b16 %v3575
        %v3848 = vunpack.c.h.b16 %v3575
        %v3849 = vunpack.c.l.b16 %v3576
        %v3850 = vunpack.c.h.b16 %v3576
        %v3851 = vunpack.c.l.b16 %v3577
        %v3852 = vunpack.c.h.b16 %v3577
        %v3853 = vunpack.c.l.b16 %v3578
        %v3854 = vunpack.c.h.b16 %v3578
        %v3855 = vunpack.c.l.b16 %v3579
        %v3856 = vunpack.c.h.b16 %v3579
        %v3857 = vunpack.c.l.b16 %v3580
        %v3858 = vunpack.c.h.b16 %v3580
        %v3859 = vunpack.c.l.b16 %v3581
        %v3860 = vunpack.c.h.b16 %v3581
        %v3861 = vunpack.c.l.b16 %v3582
        %v3862 = vunpack.c.h.b16 %v3582
        %v3863 = vunpack.c.l.b16 %v3583
        %v3864 = vunpack.c.h.b16 %v3583
        %v3865 = vunpack.c.l.b16 %v3584
        %v3866 = vunpack.c.h.b16 %v3584
        %v3867 = vunpack.c.l.b16 %v3585
        %v3868 = vunpack.c.h.b16 %v3585
        %v3869 = vunpack.c.l.b16 %v3586
        %v3870 = vunpack.c.h.b16 %v3586
        %v3871 = vunpack.c.l.b16 %v3587
        %v3872 = vunpack.c.h.b16 %v3587
        %v3873 = vunpack.c.l.b16 %v3588
        %v3874 = vunpack.c.h.b16 %v3588
        %v3875 = vunpack.c.l.b16 %v3589
        %v3876 = vunpack.c.h.b16 %v3589
        %v3877 = vunpack.c.l.b16 %v3590
        %v3878 = vunpack.c.h.b16 %v3590
        %v3879 = vunpack.c.l.b16 %v3591
        %v3880 = vunpack.c.h.b16 %v3591
        %v3881 = vunpack.c.l.b16 %v3592
        %v3882 = vunpack.c.h.b16 %v3592
        %v3883 = vunpack.c.l.b16 %v3593
        %v3884 = vunpack.c.h.b16 %v3593
        %v3885 = vunpack.c.l.b16 %v3594
        %v3886 = vunpack.c.h.b16 %v3594
        %v3887 = vunpack.c.l.b16 %v3595
        %v3888 = vunpack.c.h.b16 %v3595
        %v3889 = vunpack.c.l.b16 %v3596
        %v3890 = vunpack.c.h.b16 %v3596
        %v3891 = vunpack.c.l.b16 %v3597
        %v3892 = vunpack.c.h.b16 %v3597
        %v3893 = vunpack.c.l.b16 %v3598
        %v3894 = vunpack.c.h.b16 %v3598
        %v3895 = vunpack.c.l.b16 %v3599
        %v3896 = vunpack.c.h.b16 %v3599
        %v3897 = vunpack.c.l.b16 %v3600
        %v3898 = vunpack.c.h.b16 %v3600
        %v3899 = vunpack.c.l.b16 %v3601
        %v3900 = vunpack.c.h.b16 %v3601
        %v3901 = vunpack.c.l.b16 %v3602
        %v3902 = vunpack.c.h.b16 %v3602
        %v3903 = vunpack.c.l.b16 %v3603
        %v3904 = vunpack.c.h.b16 %v3603
        %v3905 = vunpack.c.l.b16 %v3604
        %v3906 = vunpack.c.h.b16 %v3604
        %v3907 = vunpack.c.l.b16 %v3605
        %v3908 = vunpack.c.h.b16 %v3605
        %v3909 = vunpack.c.l.b16 %v3606
        %v3910 = vunpack.c.h.b16 %v3606
        %v3911 = vunpack.c.l.b16 %v3607
        %v3912 = vunpack.c.h.b16 %v3607
        %v3913 = vunpack.c.l.b16 %v3608
        %v3914 = vunpack.c.h.b16 %v3608
        %v3915 = vunpack.c.l.b16 %v3609
        %v3916 = vunpack.c.h.b16 %v3609
        %v3917 = vunpack.c.l.b16 %v3610
        %v3918 = vunpack.c.h.b16 %v3610
        %v3919 = vunpack.c.l.b16 %v3611
        %v3920 = vunpack.c.h.b16 %v3611
        %v3921 = vunpack.c.l.b16 %v3612
        %v3922 = vunpack.c.h.b16 %v3612
        %v3923 = vunpack.c.l.b16 %v3613
        %v3924 = vunpack.c.h.b16 %v3613
        %v3925 = vunpack.c.l.b16 %v3614
        %v3926 = vunpack.c.h.b16 %v3614
        %v3927 = vunpack.c.l.b16 %v3615
        %v3928 = vunpack.c.h.b16 %v3615
        %v3929 = vunpack.c.l.b16 %v3616
        %v3930 = vunpack.c.h.b16 %v3616
        %v3931 = vunpack.c.l.b16 %v3617
        %v3932 = vunpack.c.h.b16 %v3617
        %v3933 = vunpack.c.l.b16 %v3618
        %v3934 = vunpack.c.h.b16 %v3618
        %v3935 = vunpack.c.l.b16 %v3619
        %v3936 = vunpack.c.h.b16 %v3619
        %v3937 = vunpack.c.l.b16 %v3620
        %v3938 = vunpack.c.h.b16 %v3620
        %v3939 = vunpack.c.l.b16 %v3621
        %v3940 = vunpack.c.h.b16 %v3621
        %v3941 = vunpack.c.l.b16 %v3622
        %v3942 = vunpack.c.h.b16 %v3622
        %v3943 = vunpack.c.l.b16 %v3623
        %v3944 = vunpack.c.h.b16 %v3623
        %v3945 = vunpack.c.l.b16 %v3624
        %v3946 = vunpack.c.h.b16 %v3624
        %v3947 = vunpack.c.l.b16 %v3625
        %v3948 = vunpack.c.h.b16 %v3625
        %v3949 = vunpack.c.l.b16 %v3626
        %v3950 = vunpack.c.h.b16 %v3626
        %v3951 = vunpack.c.l.b16 %v3627
        %v3952 = vunpack.c.h.b16 %v3627
        %v3953 = vunpack.c.l.b16 %v3628
        %v3954 = vunpack.c.h.b16 %v3628
        %v3955 = vunpack.c.l.b16 %v3629
        %v3956 = vunpack.c.h.b16 %v3629
        %v3957 = vunpack.c.l.b16 %v3630
        %v3958 = vunpack.c.h.b16 %v3630
        %v3959 = vunpack.c.l.b16 %v3631
        %v3960 = vunpack.c.h.b16 %v3631
        %v3961 = vunpack.c.l.b16 %v3632
        %v3962 = vunpack.c.h.b16 %v3632
        %v3963 = vunpack.c.l.b16 %v3633
        %v3964 = vunpack.c.h.b16 %v3633
        %v3965 = vunpack.c.l.b16 %v3634
        %v3966 = vunpack.c.h.b16 %v3634
        %v3967 = vunpack.c.l.b16 %v3635
        %v3968 = vunpack.c.h.b16 %v3635
        %v3969 = vunpack.c.l.b16 %v3636
        %v3970 = vunpack.c.h.b16 %v3636
        %v3971 = vunpack.c.l.b16 %v3637
        %v3972 = vunpack.c.h.b16 %v3637
        %v3973 = vunpack.c.l.b16 %v3638
        %v3974 = vunpack.c.h.b16 %v3638
        %v3975 = vpack.c.b16 %v3753, %v3751
        %v3976 = vpack.c.b16 %v3754, %v3752
        %v3977 = vpack.c.b16 %v3757, %v3755
        %v3978 = vpack.c.b16 %v3758, %v3756
        %v3979 = vpack.c.b16 %v3761, %v3759
        %v3980 = vpack.c.b16 %v3762, %v3760
        %v3981 = vpack.c.b16 %v3765, %v3763
        %v3982 = vpack.c.b16 %v3766, %v3764
        %v3983 = vpack.c.b16 %v3769, %v3767
        %v3984 = vpack.c.b16 %v3770, %v3768
        %v3985 = vpack.c.b16 %v3773, %v3771
        %v3986 = vpack.c.b16 %v3774, %v3772
        %v3987 = vpack.c.b16 %v3777, %v3775
        %v3988 = vpack.c.b16 %v3778, %v3776
        %v3989 = vpack.c.b16 %v3781, %v3779
        %v3990 = vpack.c.b16 %v3782, %v3780
        %v3991 = vpack.c.b16 %v3785, %v3783
        %v3992 = vpack.c.b16 %v3786, %v3784
        %v3993 = vpack.c.b16 %v3789, %v3787
        %v3994 = vpack.c.b16 %v3790, %v3788
        %v3995 = vpack.c.b16 %v3793, %v3791
        %v3996 = vpack.c.b16 %v3794, %v3792
        %v3997 = vpack.c.b16 %v3797, %v3795
        %v3998 = vpack.c.b16 %v3798, %v3796
        %v3999 = vpack.c.b16 %v3801, %v3799
        %v4000 = vpack.c.b16 %v3802, %v3800
        %v4001 = vpack.c.b16 %v3805, %v3803
        %v4002 = vpack.c.b16 %v3806, %v3804
        %v4003 = vpack.c.b16 %v3809, %v3807
        %v4004 = vpack.c.b16 %v3810, %v3808
        %v4005 = vpack.c.b16 %v3813, %v3811
        %v4006 = vpack.c.b16 %v3814, %v3812
        %v4007 = vpack.c.b16 %v3817, %v3815
        %v4008 = vpack.c.b16 %v3818, %v3816
        %v4009 = vpack.c.b16 %v3821, %v3819
        %v4010 = vpack.c.b16 %v3822, %v3820
        %v4011 = vpack.c.b16 %v3825, %v3823
        %v4012 = vpack.c.b16 %v3826, %v3824
        %v4013 = vpack.c.b16 %v3829, %v3827
        %v4014 = vpack.c.b16 %v3830, %v3828
        %v4015 = vpack.c.b16 %v3833, %v3831
        %v4016 = vpack.c.b16 %v3834, %v3832
        %v4017 = vpack.c.b16 %v3837, %v3835
        %v4018 = vpack.c.b16 %v3838, %v3836
        %v4019 = vpack.c.b16 %v3841, %v3839
        %v4020 = vpack.c.b16 %v3842, %v3840
        %v4021 = vpack.c.b16 %v3845, %v3843
        %v4022 = vpack.c.b16 %v3846, %v3844
        %v4023 = vpack.c.b16 %v3849, %v3847
        %v4024 = vpack.c.b16 %v3850, %v3848
        %v4025 = vpack.c.b16 %v3853, %v3851
        %v4026 = vpack.c.b16 %v3854, %v3852
        %v4027 = vpack.c.b16 %v3857, %v3855
        %v4028 = vpack.c.b16 %v3858, %v3856
        %v4029 = vpack.c.b16 %v3861, %v3859
        %v4030 = vpack.c.b16 %v3862, %v3860
        %v4031 = vpack.c.b16 %v3865, %v3863
        %v4032 = vpack.c.b16 %v3866, %v3864
        %v4033 = vpack.c.b16 %v3869, %v3867
        %v4034 = vpack.c.b16 %v3870, %v3868
        %v4035 = vpack.c.b16 %v3873, %v3871
        %v4036 = vpack.c.b16 %v3874, %v3872
        %v4037 = vpack.c.b16 %v3877, %v3875
        %v4038 = vpack.c.b16 %v3878, %v3876
        %v4039 = vpack.c.b16 %v3881, %v3879
        %v4040 = vpack.c.b16 %v3882, %v3880
        %v4041 = vpack.c.b16 %v3885, %v3883
        %v4042 = vpack.c.b16 %v3886, %v3884
        %v4043 = vpack.c.b16 %v3889, %v3887
        %v4044 = vpack.c.b16 %v3890, %v3888
        %v4045 = vpack.c.b16 %v3893, %v3891
        %v4046 = vpack.c.b16 %v3894, %v3892
        %v4047 = vpack.c.b16 %v3897, %v3895
        %v4048 = vpack.c.b16 %v3898, %v3896
        %v4049 = vpack.c.b16 %v3901, %v3899
        %v4050 = vpack.c.b16 %v3902, %v3900
        %v4051 = vpack.c.b16 %v3905, %v3903
        %v4052 = vpack.c.b16 %v3906, %v3904
        %v4053 = vpack.c.b16 %v3909, %v3907
        %v4054 = vpack.c.b16 %v3910, %v3908
        %v4055 = vpack.c.b16 %v3913, %v3911
        %v4056 = vpack.c.b16 %v3914, %v3912
        %v4057 = vpack.c.b16 %v3917, %v3915
        %v4058 = vpack.c.b16 %v3918, %v3916
        %v4059 = vpack.c.b16 %v3921, %v3919
        %v4060 = vpack.c.b16 %v3922, %v3920
        %v4061 = vpack.c.b16 %v3925, %v3923
        %v4062 = vpack.c.b16 %v3926, %v3924
        %v4063 = vpack.c.b16 %v3929, %v3927
        %v4064 = vpack.c.b16 %v3930, %v3928
        %v4065 = vpack.c.b16 %v3933, %v3931
        %v4066 = vpack.c.b16 %v3934, %v3932
        %v4067 = vpack.c.b16 %v3937, %v3935
        %v4068 = vpack.c.b16 %v3938, %v3936
        %v4069 = vpack.c.b16 %v3941, %v3939
        %v4070 = vpack.c.b16 %v3942, %v3940
        %v4071 = vpack.c.b16 %v3945, %v3943
        %v4072 = vpack.c.b16 %v3946, %v3944
        %v4073 = vpack.c.b16 %v3949, %v3947
        %v4074 = vpack.c.b16 %v3950, %v3948
        %v4075 = vpack.c.b16 %v3953, %v3951
        %v4076 = vpack.c.b16 %v3954, %v3952
        %v4077 = vpack.c.b16 %v3957, %v3955
        %v4078 = vpack.c.b16 %v3958, %v3956
        %v4079 = vpack.c.b16 %v3961, %v3959
        %v4080 = vpack.c.b16 %v3962, %v3960
        %v4081 = vpack.c.b16 %v3965, %v3963
        %v4082 = vpack.c.b16 %v3966, %v3964
        %v4083 = vpack.c.b16 %v3969, %v3967
        %v4084 = vpack.c.b16 %v3970, %v3968
        %v4085 = vpack.c.b16 %v3973, %v3971
        %v4086 = vpack.c.b16 %v3974, %v3972
        %4199 = vmatprep.subr.bf16.mxu0 %v3976
        %4200 = vmatpush1.bf16.msra.mxu0 %v3975
        %4201 = vmatprep.subr.bf16.mxu0 %v3978
        %4202 = vmatpush1.bf16.msra.mxu0 %v3977
        %4203 = vmatprep.subr.bf16.mxu0 %v3980
        %4204 = vmatpush1.bf16.msra.mxu0 %v3979
        %4205 = vmatprep.subr.bf16.mxu0 %v3982
        %4206 = vmatpush1.bf16.msra.mxu0 %v3981
        %4207 = vmatprep.subr.bf16.mxu0 %v3984
        %4208 = vmatpush1.bf16.msra.mxu0 %v3983
        %4209 = vmatprep.subr.bf16.mxu0 %v3986
        %4210 = vmatpush1.bf16.msra.mxu0 %v3985
        %4211 = vmatprep.subr.bf16.mxu0 %v3988
        %4212 = vmatpush1.bf16.msra.mxu0 %v3987
        %4213 = vmatprep.subr.bf16.mxu0 %v3990
        %4214 = vmatpush1.bf16.msra.mxu0 %v3989
        %4215 = vmatprep.subr.bf16.mxu0 %v3992
        %4216 = vmatpush1.bf16.msra.mxu0 %v3991
        %4217 = vmatprep.subr.bf16.mxu0 %v3994
        %4218 = vmatpush1.bf16.msra.mxu0 %v3993
        %4219 = vmatprep.subr.bf16.mxu0 %v3996
        %4220 = vmatpush1.bf16.msra.mxu0 %v3995
        %4221 = vmatprep.subr.bf16.mxu0 %v3998
        %4222 = vmatpush1.bf16.msra.mxu0 %v3997
        %4223 = vmatprep.subr.bf16.mxu0 %v4000
        %4224 = vmatpush1.bf16.msra.mxu0 %v3999
        %4225 = vmatprep.subr.bf16.mxu0 %v4002
        %4226 = vmatpush1.bf16.msra.mxu0 %v4001
        %4227 = vmatprep.subr.bf16.mxu0 %v4004
        %4228 = vmatpush1.bf16.msra.mxu0 %v4003
        %4229 = vmatprep.subr.bf16.mxu0 %v4006
        %4230 = vmatpush1.bf16.msra.mxu0 %v4005
        %4231 = vmatprep.mubr.bf16.mxu0 %v3179
        %4232 = vmatmul.mubr.bf16.gmra.mrb[0].mxu0 %v3094
        %v4233 = vpop.f32.mrb[0].mxu0
        %v4234 = vadd.f32 0.0, %v4233
        %v4235 = vpop.f32.mrb[0].mxu0
        %v4236 = vadd.f32 0.0, %v4235
        %v4237 = vpop.f32.mrb[0].mxu0
        %v4238 = vadd.f32 0.0, %v4237
        %v4239 = vpop.f32.mrb[0].mxu0
        %v4240 = vadd.f32 0.0, %v4239
        %4241 = vmatprep.mubr.bf16.mxu0 %v3180
        %4242 = vmatmul.mubr.bf16.gmra.mrb[0].mxu0 %v3095
        %v4243 = vpop.f32.mrb[0].mxu0
        %v4244 = vadd.f32 0.0, %v4243
        %v4245 = vpop.f32.mrb[0].mxu0
        %v4246 = vadd.f32 0.0, %v4245
        %v4247 = vpop.f32.mrb[0].mxu0
        %v4248 = vadd.f32 0.0, %v4247
        %v4249 = vpop.f32.mrb[0].mxu0
        %v4250 = vadd.f32 0.0, %v4249
        %4251 = vmatprep.mubr.bf16.mxu0 %v3181
        %4252 = vmatmul.mubr.bf16.gmra.mrb[0].mxu0 %v3096
        %v4253 = vpop.f32.mrb[0].mxu0
        %v4254 = vadd.f32 0.0, %v4253
        %v4255 = vpop.f32.mrb[0].mxu0
        %v4256 = vadd.f32 0.0, %v4255
        %v4257 = vpop.f32.mrb[0].mxu0
        %v4258 = vadd.f32 0.0, %v4257
        %v4259 = vpop.f32.mrb[0].mxu0
        %v4260 = vadd.f32 0.0, %v4259
        %4261 = vmatprep.mubr.bf16.mxu0 %v3182
        %4262 = vmatmul.mubr.bf16.gmra.mrb[0].mxu0 %v3097
        %v4263 = vpop.f32.mrb[0].mxu0
        %v4264 = vadd.f32 0.0, %v4263
        %v4265 = vpop.f32.mrb[0].mxu0
        %v4266 = vadd.f32 0.0, %v4265
        %v4267 = vpop.f32.mrb[0].mxu0
        %v4268 = vadd.f32 0.0, %v4267
        %v4269 = vpop.f32.mrb[0].mxu0
        %v4270 = vadd.f32 0.0, %v4269
        %4271 = vdwg.mxu0
        %4272 = vmatprep.subr.bf16.mxu0 %v4008
        %4273 = vmatpush1.bf16.msra.mxu0 %v4007
        %4274 = vmatprep.subr.bf16.mxu0 %v4010
        %4275 = vmatpush1.bf16.msra.mxu0 %v4009
        %4276 = vmatprep.subr.bf16.mxu0 %v4012
        %4277 = vmatpush1.bf16.msra.mxu0 %v4011
        %4278 = vmatprep.subr.bf16.mxu0 %v4014
        %4279 = vmatpush1.bf16.msra.mxu0 %v4013
        %4280 = vmatprep.subr.bf16.mxu0 %v4016
        %4281 = vmatpush1.bf16.msra.mxu0 %v4015
        %4282 = vmatprep.subr.bf16.mxu0 %v4018
        %4283 = vmatpush1.bf16.msra.mxu0 %v4017
        %4284 = vmatprep.subr.bf16.mxu0 %v4020
        %4285 = vmatpush1.bf16.msra.mxu0 %v4019
        %4286 = vmatprep.subr.bf16.mxu0 %v4022
        %4287 = vmatpush1.bf16.msra.mxu0 %v4021
        %4288 = vmatprep.subr.bf16.mxu0 %v4024
        %4289 = vmatpush1.bf16.msra.mxu0 %v4023
        %4290 = vmatprep.subr.bf16.mxu0 %v4026
        %4291 = vmatpush1.bf16.msra.mxu0 %v4025
        %4292 = vmatprep.subr.bf16.mxu0 %v4028
        %4293 = vmatpush1.bf16.msra.mxu0 %v4027
        %4294 = vmatprep.subr.bf16.mxu0 %v4030
        %4295 = vmatpush1.bf16.msra.mxu0 %v4029
        %4296 = vmatprep.subr.bf16.mxu0 %v4032
        %4297 = vmatpush1.bf16.msra.mxu0 %v4031
        %4298 = vmatprep.subr.bf16.mxu0 %v4034
        %4299 = vmatpush1.bf16.msra.mxu0 %v4033
        %4300 = vmatprep.subr.bf16.mxu0 %v4036
        %4301 = vmatpush1.bf16.msra.mxu0 %v4035
        %4302 = vmatprep.subr.bf16.mxu0 %v4038
        %4303 = vmatpush1.bf16.msra.mxu0 %v4037
        %4304 = vmatprep.mubr.bf16.mxu0 %v3268
        %4305 = vmatmul.mubr.bf16.gmra.mrb[0].mxu0 %v3264
        %v4306 = vpop.f32.mrb[0].mxu0
        %v4307 = vadd.f32 %v4234, %v4306
        %v4308 = vpop.f32.mrb[0].mxu0
        %v4309 = vadd.f32 %v4236, %v4308
        %v4310 = vpop.f32.mrb[0].mxu0
        %v4311 = vadd.f32 %v4238, %v4310
        %v4312 = vpop.f32.mrb[0].mxu0
        %v4313 = vadd.f32 %v4240, %v4312
        %4314 = vmatprep.mubr.bf16.mxu0 %v3269
        %4315 = vmatmul.mubr.bf16.gmra.mrb[0].mxu0 %v3265
        %v4316 = vpop.f32.mrb[0].mxu0
        %v4317 = vadd.f32 %v4244, %v4316
        %v4318 = vpop.f32.mrb[0].mxu0
        %v4319 = vadd.f32 %v4246, %v4318
        %v4320 = vpop.f32.mrb[0].mxu0
        %v4321 = vadd.f32 %v4248, %v4320
        %v4322 = vpop.f32.mrb[0].mxu0
        %v4323 = vadd.f32 %v4250, %v4322
        %4324 = vmatprep.mubr.bf16.mxu0 %v3270
        %4325 = vmatmul.mubr.bf16.gmra.mrb[0].mxu0 %v3266
        %v4326 = vpop.f32.mrb[0].mxu0
        %v4327 = vadd.f32 %v4254, %v4326
        %v4328 = vpop.f32.mrb[0].mxu0
        %v4329 = vadd.f32 %v4256, %v4328
        %v4330 = vpop.f32.mrb[0].mxu0
        %v4331 = vadd.f32 %v4258, %v4330
        %v4332 = vpop.f32.mrb[0].mxu0
        %v4333 = vadd.f32 %v4260, %v4332
        %4334 = vmatprep.mubr.bf16.mxu0 %v3271
        %4335 = vmatmul.mubr.bf16.gmra.mrb[0].mxu0 %v3267
        %v4336 = vpop.f32.mrb[0].mxu0
        %v4337 = vadd.f32 %v4264, %v4336
        %v4338 = vpop.f32.mrb[0].mxu0
        %v4339 = vadd.f32 %v4266, %v4338
        %v4340 = vpop.f32.mrb[0].mxu0
        %v4341 = vadd.f32 %v4268, %v4340
        %v4342 = vpop.f32.mrb[0].mxu0
        %v4343 = vadd.f32 %v4270, %v4342
        %4344 = vdwg.mxu0
        %4345 = vmatprep.subr.bf16.mxu0 %v4040
        %4346 = vmatpush1.bf16.msra.mxu0 %v4039
        %4347 = vmatprep.subr.bf16.mxu0 %v4042
        %4348 = vmatpush1.bf16.msra.mxu0 %v4041
        %4349 = vmatprep.subr.bf16.mxu0 %v4044
        %4350 = vmatpush1.bf16.msra.mxu0 %v4043
        %4351 = vmatprep.subr.bf16.mxu0 %v4046
        %4352 = vmatpush1.bf16.msra.mxu0 %v4045
        %4353 = vmatprep.subr.bf16.mxu0 %v4048
        %4354 = vmatpush1.bf16.msra.mxu0 %v4047
        %4355 = vmatprep.subr.bf16.mxu0 %v4050
        %4356 = vmatpush1.bf16.msra.mxu0 %v4049
        %4357 = vmatprep.subr.bf16.mxu0 %v4052
        %4358 = vmatpush1.bf16.msra.mxu0 %v4051
        %4359 = vmatprep.subr.bf16.mxu0 %v4054
        %4360 = vmatpush1.bf16.msra.mxu0 %v4053
        %4361 = vmatprep.subr.bf16.mxu0 %v4056
        %4362 = vmatpush1.bf16.msra.mxu0 %v4055
        %4363 = vmatprep.subr.bf16.mxu0 %v4058
        %4364 = vmatpush1.bf16.msra.mxu0 %v4057
        %4365 = vmatprep.subr.bf16.mxu0 %v4060
        %4366 = vmatpush1.bf16.msra.mxu0 %v4059
        %4367 = vmatprep.subr.bf16.mxu0 %v4062
        %4368 = vmatpush1.bf16.msra.mxu0 %v4061
        %4369 = vmatprep.subr.bf16.mxu0 %v4064
        %4370 = vmatpush1.bf16.msra.mxu0 %v4063
        %4371 = vmatprep.subr.bf16.mxu0 %v4066
        %4372 = vmatpush1.bf16.msra.mxu0 %v4065
        %4373 = vmatprep.subr.bf16.mxu0 %v4068
        %4374 = vmatpush1.bf16.msra.mxu0 %v4067
        %4375 = vmatprep.subr.bf16.mxu0 %v4070
        %4376 = vmatpush1.bf16.msra.mxu0 %v4069
        %4377 = vmatprep.mubr.bf16.mxu0 %v3438
        %4378 = vmatmul.mubr.bf16.gmra.mrb[0].mxu0 %v3353
        %v4379 = vpop.f32.mrb[0].mxu0
        %v4380 = vadd.f32 %v4307, %v4379
        %v4381 = vpop.f32.mrb[0].mxu0
        %v4382 = vadd.f32 %v4309, %v4381
        %v4383 = vpop.f32.mrb[0].mxu0
        %v4384 = vadd.f32 %v4311, %v4383
        %v4385 = vpop.f32.mrb[0].mxu0
        %v4386 = vadd.f32 %v4313, %v4385
        %4387 = vmatprep.mubr.bf16.mxu0 %v3439
        %4388 = vmatmul.mubr.bf16.gmra.mrb[0].mxu0 %v3354
        %v4389 = vpop.f32.mrb[0].mxu0
        %v4390 = vadd.f32 %v4317, %v4389
        %v4391 = vpop.f32.mrb[0].mxu0
        %v4392 = vadd.f32 %v4319, %v4391
        %v4393 = vpop.f32.mrb[0].mxu0
        %v4394 = vadd.f32 %v4321, %v4393
        %v4395 = vpop.f32.mrb[0].mxu0
        %v4396 = vadd.f32 %v4323, %v4395
        %4397 = vmatprep.mubr.bf16.mxu0 %v3440
        %4398 = vmatmul.mubr.bf16.gmra.mrb[0].mxu0 %v3355
        %v4399 = vpop.f32.mrb[0].mxu0
        %v4400 = vadd.f32 %v4327, %v4399
        %v4401 = vpop.f32.mrb[0].mxu0
        %v4402 = vadd.f32 %v4329, %v4401
        %v4403 = vpop.f32.mrb[0].mxu0
        %v4404 = vadd.f32 %v4331, %v4403
        %v4405 = vpop.f32.mrb[0].mxu0
        %v4406 = vadd.f32 %v4333, %v4405
        %4407 = vmatprep.mubr.bf16.mxu0 %v3441
        %4408 = vmatmul.mubr.bf16.gmra.mrb[0].mxu0 %v3356
        %v4409 = vpop.f32.mrb[0].mxu0
        %v4410 = vadd.f32 %v4337, %v4409
        %v4411 = vpop.f32.mrb[0].mxu0
        %v4412 = vadd.f32 %v4339, %v4411
        %v4413 = vpop.f32.mrb[0].mxu0
        %v4414 = vadd.f32 %v4341, %v4413
        %v4415 = vpop.f32.mrb[0].mxu0
        %v4416 = vadd.f32 %v4343, %v4415
        %4417 = vdwg.mxu0
        %4418 = vmatprep.subr.bf16.mxu0 %v4072
        %4419 = vmatpush1.bf16.msra.mxu0 %v4071
        %4420 = vmatprep.subr.bf16.mxu0 %v4074
        %4421 = vmatpush1.bf16.msra.mxu0 %v4073
        %4422 = vmatprep.subr.bf16.mxu0 %v4076
        %4423 = vmatpush1.bf16.msra.mxu0 %v4075
        %4424 = vmatprep.subr.bf16.mxu0 %v4078
        %4425 = vmatpush1.bf16.msra.mxu0 %v4077
        %4426 = vmatprep.subr.bf16.mxu0 %v4080
        %4427 = vmatpush1.bf16.msra.mxu0 %v4079
        %4428 = vmatprep.subr.bf16.mxu0 %v4082
        %4429 = vmatpush1.bf16.msra.mxu0 %v4081
        %4430 = vmatprep.subr.bf16.mxu0 %v4084
        %4431 = vmatpush1.bf16.msra.mxu0 %v4083
        %4432 = vmatprep.subr.bf16.mxu0 %v4086
        %4433 = vmatpush1.bf16.msra.mxu0 %v4085
        %4434 = vmatprep.subr.bf16.mxu0 0
        %4435 = vmatpush1.bf16.msra.mxu0 0
        %4436 = vmatprep.subr.bf16.mxu0 0
        %4437 = vmatpush1.bf16.msra.mxu0 0
        %4438 = vmatprep.subr.bf16.mxu0 0
        %4439 = vmatpush1.bf16.msra.mxu0 0
        %4440 = vmatprep.subr.bf16.mxu0 0
        %4441 = vmatpush1.bf16.msra.mxu0 0
        %4442 = vmatprep.subr.bf16.mxu0 0
        %4443 = vmatpush1.bf16.msra.mxu0 0
        %4444 = vmatprep.subr.bf16.mxu0 0
        %4445 = vmatpush1.bf16.msra.mxu0 0
        %4446 = vmatprep.subr.bf16.mxu0 0
        %4447 = vmatpush1.bf16.msra.mxu0 0
        %4448 = vmatprep.subr.bf16.mxu0 0
        %4449 = vmatpush1.bf16.msra.mxu0 0
        %4450 = vmatprep.mubr.bf16.mxu0 0
        %4451 = vmatmul.mubr.bf16.gmra.mrb[0].mxu0 %v3523
        %v4452 = vpop.f32.mrb[0].mxu0
        %v4453 = vadd.f32 %v4380, %v4452
        %v4454 = vpop.f32.mrb[0].mxu0
        %v4455 = vadd.f32 %v4382, %v4454
        %v4456 = vpop.f32.mrb[0].mxu0
        %v4457 = vadd.f32 %v4384, %v4456
        %v4458 = vpop.f32.mrb[0].mxu0
        %v4459 = vadd.f32 %v4386, %v4458
        %4460 = vmatprep.mubr.bf16.mxu0 0
        %4461 = vmatmul.mubr.bf16.gmra.mrb[0].mxu0 %v3524
        %v4462 = vpop.f32.mrb[0].mxu0
        %v4463 = vadd.f32 %v4390, %v4462
        %v4464 = vpop.f32.mrb[0].mxu0
        %v4465 = vadd.f32 %v4392, %v4464
        %v4466 = vpop.f32.mrb[0].mxu0
        %v4467 = vadd.f32 %v4394, %v4466
        %v4468 = vpop.f32.mrb[0].mxu0
        %v4469 = vadd.f32 %v4396, %v4468
        %4470 = vmatprep.mubr.bf16.mxu0 0
        %4471 = vmatmul.mubr.bf16.gmra.mrb[0].mxu0 %v3525
        %v4472 = vpop.f32.mrb[0].mxu0
        %v4473 = vadd.f32 %v4400, %v4472
        %v4474 = vpop.f32.mrb[0].mxu0
        %v4475 = vadd.f32 %v4402, %v4474
        %v4476 = vpop.f32.mrb[0].mxu0
        %v4477 = vadd.f32 %v4404, %v4476
        %v4478 = vpop.f32.mrb[0].mxu0
        %v4479 = vadd.f32 %v4406, %v4478
        %4480 = vmatprep.mubr.bf16.mxu0 0
        %4481 = vmatmul.mubr.bf16.gmra.mrb[0].mxu0 %v3526
        %v4482 = vpop.f32.mrb[0].mxu0
        %v4483 = vadd.f32 %v4410, %v4482
        %v4484 = vpop.f32.mrb[0].mxu0
        %v4485 = vadd.f32 %v4412, %v4484
        %v4486 = vpop.f32.mrb[0].mxu0
        %v4487 = vadd.f32 %v4414, %v4486
        %v4488 = vpop.f32.mrb[0].mxu0
        %v4489 = vadd.f32 %v4416, %v4488
        %4490 = vdwg.mxu0
        %v4491 = vld [vmem:[%s5] sm:$0x3]
        %v4493 = vlaneseq
        %v4494 = vshrl.u32 %v4493, 7
        %v4495 = vsub.s32 0, %v4494
        %v4496 = vrot.slane %v4491, %v4495
        %v4497 = vlaneseq
        %v4498 = vshrl.u32 %v4497, 7
        %v4499 = vsub.s32 1, %v4498
        %v4500 = vrot.slane %v4491, %v4499
        %v4503 = vmul.f32 %v4453, %v4496
        %v4504 = vmul.f32 %v4455, %v4500
        %v4505 = vmul.f32 %v4457, %v4496
        %v4506 = vmul.f32 %v4459, %v4500
        %v4507 = vmul.f32 %v4463, %v4496
        %v4508 = vmul.f32 %v4465, %v4500
        %v4509 = vmul.f32 %v4467, %v4496
        %v4510 = vmul.f32 %v4469, %v4500
        %v4511 = vmul.f32 %v4473, %v4496
        %v4512 = vmul.f32 %v4475, %v4500
        %v4513 = vmul.f32 %v4477, %v4496
        %v4514 = vmul.f32 %v4479, %v4500
        %v4515 = vmul.f32 %v4483, %v4496
        %v4516 = vmul.f32 %v4485, %v4500
        %v4517 = vmul.f32 %v4487, %v4496
        %v4518 = vmul.f32 %v4489, %v4500
        %v4519 = vld [vmem:[%s6] sm:$0x3]
        %v4521 = vlaneseq
        %v4522 = vshrl.u32 %v4521, 7
        %v4523 = vsub.s32 0, %v4522
        %v4524 = vrot.slane %v4519, %v4523
        %v4525 = vlaneseq
        %v4526 = vshrl.u32 %v4525, 7
        %v4527 = vsub.s32 1, %v4526
        %v4528 = vrot.slane %v4519, %v4527
        %v4531 = vadd.f32 %v4503, %v4524
        %v4532 = vadd.f32 %v4504, %v4528
        %v4533 = vadd.f32 %v4505, %v4524
        %v4534 = vadd.f32 %v4506, %v4528
        %v4535 = vadd.f32 %v4507, %v4524
        %v4536 = vadd.f32 %v4508, %v4528
        %v4537 = vadd.f32 %v4509, %v4524
        %v4538 = vadd.f32 %v4510, %v4528
        %v4539 = vadd.f32 %v4511, %v4524
        %v4540 = vadd.f32 %v4512, %v4528
        %v4541 = vadd.f32 %v4513, %v4524
        %v4542 = vadd.f32 %v4514, %v4528
        %v4543 = vadd.f32 %v4515, %v4524
        %v4544 = vadd.f32 %v4516, %v4528
        %v4545 = vadd.f32 %v4517, %v4524
        %v4546 = vadd.f32 %v4518, %v4528
        %v4547 = vmax.f32 %v4531, 0.0
        %v4548 = vmax.f32 %v4532, 0.0
        %v4549 = vmax.f32 %v4533, 0.0
        %v4550 = vmax.f32 %v4534, 0.0
        %v4551 = vmax.f32 %v4535, 0.0
        %v4552 = vmax.f32 %v4536, 0.0
        %v4553 = vmax.f32 %v4537, 0.0
        %v4554 = vmax.f32 %v4538, 0.0
        %v4555 = vmax.f32 %v4539, 0.0
        %v4556 = vmax.f32 %v4540, 0.0
        %v4557 = vmax.f32 %v4541, 0.0
        %v4558 = vmax.f32 %v4542, 0.0
        %v4559 = vmax.f32 %v4543, 0.0
        %v4560 = vmax.f32 %v4544, 0.0
        %v4561 = vmax.f32 %v4545, 0.0
        %v4562 = vmax.f32 %v4546, 0.0
        %v4563 = vpack.c.bf16 0.0, 0.0
        %v4564 = vpack.c.bf16 %v4547, 0.0
        %v4565 = vpack.c.bf16 %v4548, 0.0
        %v4566 = vpack.c.bf16 %v4551, %v4549
        %v4567 = vpack.c.bf16 %v4552, %v4550
        %v4568 = vpack.c.bf16 %v4555, %v4553
        %v4569 = vpack.c.bf16 %v4556, %v4554
        %v4570 = vpack.c.bf16 %v4549, %v4547
        %v4571 = vpack.c.bf16 %v4550, %v4548
        %v4572 = vpack.c.bf16 %v4553, %v4551
        %v4573 = vpack.c.bf16 %v4554, %v4552
        %v4574 = vpack.c.bf16 %v4557, %v4555
        %v4575 = vpack.c.bf16 %v4558, %v4556
        %v4576 = vpack.c.bf16 %v4559, %v4557
        %v4577 = vpack.c.bf16 %v4560, %v4558
        %v4578 = vpack.c.bf16 %v4561, %v4559
        %v4579 = vpack.c.bf16 %v4562, %v4560
        %v4580 = vpack.c.bf16 0.0, %v4561
        %v4581 = vpack.c.bf16 0.0, %v4562
        %4589 = vrot.lane.b32.xlu0 %v4563, 32
        %v4590 = vpop.permute.xlu0 %4589
        %4591 = vrot.lane.b32.xlu0 %v4570, 32
        %v4592 = vpop.permute.xlu0 %4591
        %4593 = vrot.lane.b32.xlu0 %v4571, 32
        %v4594 = vpop.permute.xlu0 %4593
        %4595 = vrot.lane.b32.xlu0 %v4572, 32
        %v4596 = vpop.permute.xlu0 %4595
        %4597 = vrot.lane.b32.xlu0 %v4573, 32
        %v4598 = vpop.permute.xlu0 %4597
        %4599 = vrot.lane.b32.xlu0 %v4574, 32
        %v4600 = vpop.permute.xlu0 %4599
        %4601 = vrot.lane.b32.xlu0 %v4575, 32
        %v4602 = vpop.permute.xlu0 %4601
        %vm4603 = vcmask 261120
        %v4604 = vsel %vm4603, %v4592, %v4594
        %v4605 = vsel %vm4603, %v4596, %v4598
        %v4606 = vsel %vm4603, %v4600, %v4602
        %4615 = vrot.lane.b32.xlu0 %v4564, 64
        %v4616 = vpop.permute.xlu0 %4615
        %4617 = vrot.lane.b32.xlu0 %v4565, 64
        %v4618 = vpop.permute.xlu0 %4617
        %4619 = vrot.lane.b32.xlu0 %v4566, 64
        %v4620 = vpop.permute.xlu0 %4619
        %4621 = vrot.lane.b32.xlu0 %v4567, 64
        %v4622 = vpop.permute.xlu0 %4621
        %4623 = vrot.lane.b32.xlu0 %v4568, 64
        %v4624 = vpop.permute.xlu0 %4623
        %4625 = vrot.lane.b32.xlu0 %v4569, 64
        %v4626 = vpop.permute.xlu0 %4625
        %4627 = vrot.lane.b32.xlu0 %v4576, 64
        %v4628 = vpop.permute.xlu0 %4627
        %4629 = vrot.lane.b32.xlu0 %v4577, 64
        %v4630 = vpop.permute.xlu0 %4629
        %vm4631 = vcmask 523264
        %v4632 = vsel %vm4631, %v4616, %v4618
        %v4633 = vsel %vm4631, %v4620, %v4622
        %v4634 = vsel %vm4631, %v4624, %v4626
        %v4635 = vsel %vm4631, %v4628, %v4630
        %4638 = vrot.lane.b32.xlu0 %v4570, 96
        %v4639 = vpop.permute.xlu0 %4638
        %4640 = vrot.lane.b32.xlu0 %v4571, 96
        %v4641 = vpop.permute.xlu0 %4640
        %4642 = vrot.lane.b32.xlu0 %v4572, 96
        %v4643 = vpop.permute.xlu0 %4642
        %4644 = vrot.lane.b32.xlu0 %v4573, 96
        %v4645 = vpop.permute.xlu0 %4644
        %4646 = vrot.lane.b32.xlu0 %v4574, 96
        %v4647 = vpop.permute.xlu0 %4646
        %4648 = vrot.lane.b32.xlu0 %v4575, 96
        %v4649 = vpop.permute.xlu0 %4648
        %4650 = vrot.lane.b32.xlu0 %v4578, 96
        %v4651 = vpop.permute.xlu0 %4650
        %4652 = vrot.lane.b32.xlu0 %v4579, 96
        %v4653 = vpop.permute.xlu0 %4652
        %vm4654 = vcmask 785408
        %v4655 = vsel %vm4654, %v4639, %v4641
        %v4656 = vsel %vm4654, %v4643, %v4645
        %v4657 = vsel %vm4654, %v4647, %v4649
        %v4658 = vsel %vm4654, %v4651, %v4653
        %4663 = vrot.lane.b32.xlu0 %v4578, 32
        %v4664 = vpop.permute.xlu0 %4663
        %4665 = vrot.lane.b32.xlu0 %v4579, 32
        %v4666 = vpop.permute.xlu0 %4665
        %v4667 = vsel %vm4603, %v4664, %v4666
        %4670 = vrot.lane.b32.xlu0 %v4580, 64
        %v4671 = vpop.permute.xlu0 %4670
        %4672 = vrot.lane.b32.xlu0 %v4581, 64
        %v4673 = vpop.permute.xlu0 %4672
        %4674 = vrot.lane.b32.xlu0 %v4563, 64
        %v4675 = vpop.permute.xlu0 %4674
        %v4676 = vsel %vm4631, %v4671, %v4673
        %vm4677 = vcmask 261120
        %v4680 = vsel %vm4677, %v4563, %v4590
        %v4684 = vsel %vm4677, %v4565, %v4592
        %v4688 = vsel %vm4677, %v4567, %v4596
        %v4692 = vsel %vm4677, %v4569, %v4600
        %vm4694 = vcmask 523264
        %v4696 = vsel %vm4694, %v4590, %v4616
        %v4700 = vsel %vm4694, %v4604, %v4620
        %v4704 = vsel %vm4694, %v4605, %v4624
        %v4708 = vsel %vm4694, %v4606, %v4628
        %vm4710 = vcmask 785408
        %v4713 = vsel %vm4710, %v4632, %v4639
        %v4717 = vsel %vm4710, %v4633, %v4643
        %v4721 = vsel %vm4710, %v4634, %v4647
        %v4725 = vsel %vm4710, %v4635, %v4651
        %v4729 = vsel %vm4677, %v4577, %v4664
        %v4732 = vsel %vm4677, %v4581, %v4590
        %v4736 = vsel %vm4694, %v4667, %v4671
        %v4739 = vsel %vm4694, %v4590, %v4675
        %v4741 = vld [vmem:[%s7] sm:$0xff]
        %v4742 = vld [vmem:[%s7 + $0x8] sm:$0xff]
        %v4743 = vld [vmem:[%s7 + $0x10] sm:$0xff]
        %v4744 = vld [vmem:[%s7 + $0x18] sm:$0xff]
        %v4745 = vld [vmem:[%s7 + $0x20] sm:$0xff]
        %v4746 = vld [vmem:[%s7 + $0x28] sm:$0xff]
        %v4747 = vld [vmem:[%s7 + $0x30] sm:$0xff]
        %v4748 = vld [vmem:[%s7 + $0x38] sm:$0xff]
        %v4749 = vld [vmem:[%s7 + $0x40] sm:$0xff]
        %v4750 = vld [vmem:[%s7 + $0x48] sm:$0xff]
        %v4751 = vld [vmem:[%s7 + $0x50] sm:$0xff]
        %v4752 = vld [vmem:[%s7 + $0x58] sm:$0xff]
        %v4753 = vld [vmem:[%s7 + $0x60] sm:$0xff]
        %v4754 = vld [vmem:[%s7 + $0x68] sm:$0xff]
        %v4755 = vld [vmem:[%s7 + $0x70] sm:$0xff]
        %v4756 = vld [vmem:[%s7 + $0x78] sm:$0xff]
        %v4757 = vld [vmem:[%s7 + $0x80] sm:$0xff]
        %v4758 = vld [vmem:[%s7 + $0x88] sm:$0xff]
        %v4759 = vld [vmem:[%s7 + $0x90] sm:$0xff]
        %v4760 = vld [vmem:[%s7 + $0x98] sm:$0xff]
        %v4761 = vld [vmem:[%s7 + $0xa0] sm:$0xff]
        %v4762 = vld [vmem:[%s7 + $0xa8] sm:$0xff]
        %v4763 = vld [vmem:[%s7 + $0xb0] sm:$0xff]
        %v4764 = vld [vmem:[%s7 + $0xb8] sm:$0xff]
        %v4765 = vld [vmem:[%s7 + $0xc0] sm:$0xff]
        %v4766 = vld [vmem:[%s7 + $0xc8] sm:$0xff]
        %v4767 = vld [vmem:[%s7 + $0xd0] sm:$0xff]
        %v4768 = vld [vmem:[%s7 + $0xd8] sm:$0xff]
        %v4769 = vld [vmem:[%s7 + $0xe0] sm:$0xff]
        %v4770 = vld [vmem:[%s7 + $0xe8] sm:$0xff]
        %v4771 = vld [vmem:[%s7 + $0xf0] sm:$0xff]
        %v4772 = vld [vmem:[%s7 + $0xf8] sm:$0xff]
        %v4773 = vld [vmem:[%s7 + $0x100] sm:$0xff]
        %v4774 = vld [vmem:[%s7 + $0x108] sm:$0xff]
        %v4775 = vld [vmem:[%s7 + $0x110] sm:$0xff]
        %v4776 = vld [vmem:[%s7 + $0x118] sm:$0xff]
        %v4777 = vld [vmem:[%s7 + $0x120] sm:$0xff]
        %v4778 = vld [vmem:[%s7 + $0x128] sm:$0xff]
        %v4779 = vld [vmem:[%s7 + $0x130] sm:$0xff]
        %v4780 = vld [vmem:[%s7 + $0x138] sm:$0xff]
        %v4781 = vld [vmem:[%s7 + $0x140] sm:$0xff]
        %v4782 = vld [vmem:[%s7 + $0x148] sm:$0xff]
        %v4783 = vld [vmem:[%s7 + $0x150] sm:$0xff]
        %v4784 = vld [vmem:[%s7 + $0x158] sm:$0xff]
        %v4785 = vld [vmem:[%s7 + $0x160] sm:$0xff]
        %v4786 = vld [vmem:[%s7 + $0x168] sm:$0xff]
        %v4787 = vld [vmem:[%s7 + $0x170] sm:$0xff]
        %v4788 = vld [vmem:[%s7 + $0x178] sm:$0xff]
        %v4789 = vld [vmem:[%s7 + $0x180] sm:$0xff]
        %v4790 = vld [vmem:[%s7 + $0x188] sm:$0xff]
        %v4791 = vld [vmem:[%s7 + $0x190] sm:$0xff]
        %v4792 = vld [vmem:[%s7 + $0x198] sm:$0xff]
        %v4793 = vld [vmem:[%s7 + $0x1a0] sm:$0xff]
        %v4794 = vld [vmem:[%s7 + $0x1a8] sm:$0xff]
        %v4795 = vld [vmem:[%s7 + $0x1b0] sm:$0xff]
        %v4796 = vld [vmem:[%s7 + $0x1b8] sm:$0xff]
        %v4797 = vld [vmem:[%s7 + $0x1c0] sm:$0xff]
        %v4798 = vld [vmem:[%s7 + $0x1c8] sm:$0xff]
        %v4799 = vld [vmem:[%s7 + $0x1d0] sm:$0xff]
        %v4800 = vld [vmem:[%s7 + $0x1d8] sm:$0xff]
        %v4801 = vld [vmem:[%s7 + $0x1e0] sm:$0xff]
        %v4802 = vld [vmem:[%s7 + $0x1e8] sm:$0xff]
        %v4803 = vld [vmem:[%s7 + $0x1f0] sm:$0xff]
        %v4804 = vld [vmem:[%s7 + $0x1f8] sm:$0xff]
        %v4805 = vld [vmem:[%s7 + $0x200] sm:$0xff]
        %v4806 = vld [vmem:[%s7 + $0x208] sm:$0xff]
        %v4807 = vld [vmem:[%s7 + $0x210] sm:$0xff]
        %v4808 = vld [vmem:[%s7 + $0x218] sm:$0xff]
        %v4809 = vld [vmem:[%s7 + $0x220] sm:$0xff]
        %v4810 = vld [vmem:[%s7 + $0x228] sm:$0xff]
        %v4811 = vld [vmem:[%s7 + $0x230] sm:$0xff]
        %v4812 = vld [vmem:[%s7 + $0x238] sm:$0xff]
        %v4813 = vld [vmem:[%s7 + $0x240] sm:$0xff]
        %v4814 = vld [vmem:[%s7 + $0x248] sm:$0xff]
        %v4815 = vld [vmem:[%s7 + $0x250] sm:$0xff]
        %v4816 = vld [vmem:[%s7 + $0x258] sm:$0xff]
        %v4817 = vld [vmem:[%s7 + $0x260] sm:$0xff]
        %v4818 = vld [vmem:[%s7 + $0x268] sm:$0xff]
        %v4819 = vld [vmem:[%s7 + $0x270] sm:$0xff]
        %v4820 = vld [vmem:[%s7 + $0x278] sm:$0xff]
        %v4821 = vld [vmem:[%s7 + $0x280] sm:$0xff]
        %v4822 = vld [vmem:[%s7 + $0x288] sm:$0xff]
        %v4823 = vld [vmem:[%s7 + $0x290] sm:$0xff]
        %v4824 = vld [vmem:[%s7 + $0x298] sm:$0xff]
        %v4825 = vld [vmem:[%s7 + $0x2a0] sm:$0xff]
        %v4826 = vld [vmem:[%s7 + $0x2a8] sm:$0xff]
        %v4827 = vld [vmem:[%s7 + $0x2b0] sm:$0xff]
        %v4828 = vld [vmem:[%s7 + $0x2b8] sm:$0xff]
        %v4829 = vld [vmem:[%s7 + $0x2c0] sm:$0xff]
        %v4830 = vld [vmem:[%s7 + $0x2c8] sm:$0xff]
        %v4831 = vld [vmem:[%s7 + $0x2d0] sm:$0xff]
        %v4832 = vld [vmem:[%s7 + $0x2d8] sm:$0xff]
        %v4833 = vld [vmem:[%s7 + $0x2e0] sm:$0xff]
        %v4834 = vld [vmem:[%s7 + $0x2e8] sm:$0xff]
        %v4835 = vld [vmem:[%s7 + $0x2f0] sm:$0xff]
        %v4836 = vld [vmem:[%s7 + $0x2f8] sm:$0xff]
        %v4837 = vld [vmem:[%s7 + $0x300] sm:$0xff]
        %v4838 = vld [vmem:[%s7 + $0x308] sm:$0xff]
        %v4839 = vld [vmem:[%s7 + $0x310] sm:$0xff]
        %v4840 = vld [vmem:[%s7 + $0x318] sm:$0xff]
        %v4841 = vld [vmem:[%s7 + $0x320] sm:$0xff]
        %v4842 = vld [vmem:[%s7 + $0x328] sm:$0xff]
        %v4843 = vld [vmem:[%s7 + $0x330] sm:$0xff]
        %v4844 = vld [vmem:[%s7 + $0x338] sm:$0xff]
        %v4845 = vld [vmem:[%s7 + $0x340] sm:$0xff]
        %v4846 = vld [vmem:[%s7 + $0x348] sm:$0xff]
        %v4847 = vld [vmem:[%s7 + $0x350] sm:$0xff]
        %v4848 = vld [vmem:[%s7 + $0x358] sm:$0xff]
        %v4849 = vld [vmem:[%s7 + $0x360] sm:$0xff]
        %v4850 = vld [vmem:[%s7 + $0x368] sm:$0xff]
        %v4851 = vld [vmem:[%s7 + $0x370] sm:$0xff]
        %v4852 = vld [vmem:[%s7 + $0x378] sm:$0xff]
        %v4853 = vld [vmem:[%s7 + $0x380] sm:$0xff]
        %v4854 = vld [vmem:[%s7 + $0x388] sm:$0xff]
        %v4855 = vld [vmem:[%s7 + $0x390] sm:$0xff]
        %v4856 = vld [vmem:[%s7 + $0x398] sm:$0xff]
        %v4857 = vld [vmem:[%s7 + $0x3a0] sm:$0xff]
        %v4858 = vld [vmem:[%s7 + $0x3a8] sm:$0xff]
        %v4859 = vld [vmem:[%s7 + $0x3b0] sm:$0xff]
        %v4860 = vld [vmem:[%s7 + $0x3b8] sm:$0xff]
        %v4861 = vld [vmem:[%s7 + $0x3c0] sm:$0xff]
        %v4862 = vld [vmem:[%s7 + $0x3c8] sm:$0xff]
        %v4863 = vld [vmem:[%s7 + $0x3d0] sm:$0xff]
        %v4864 = vld [vmem:[%s7 + $0x3d8] sm:$0xff]
        %v4865 = vld [vmem:[%s7 + $0x3e0] sm:$0xff]
        %v4866 = vld [vmem:[%s7 + $0x3e8] sm:$0xff]
        %v4867 = vld [vmem:[%s7 + $0x3f0] sm:$0xff]
        %v4868 = vld [vmem:[%s7 + $0x3f8] sm:$0xff]
        %v4869 = vld [vmem:[%s7 + $0x400] sm:$0xff]
        %v4870 = vld [vmem:[%s7 + $0x408] sm:$0xff]
        %v4871 = vld [vmem:[%s7 + $0x410] sm:$0xff]
        %v4872 = vld [vmem:[%s7 + $0x418] sm:$0xff]
        %v4873 = vld [vmem:[%s7 + $0x420] sm:$0xff]
        %v4874 = vld [vmem:[%s7 + $0x428] sm:$0xff]
        %v4875 = vld [vmem:[%s7 + $0x430] sm:$0xff]
        %v4876 = vld [vmem:[%s7 + $0x438] sm:$0xff]
        %v4877 = vld [vmem:[%s7 + $0x440] sm:$0xff]
        %v4878 = vld [vmem:[%s7 + $0x448] sm:$0xff]
        %v4879 = vld [vmem:[%s7 + $0x450] sm:$0xff]
        %v4880 = vld [vmem:[%s7 + $0x458] sm:$0xff]
        %v5021 = vunpack.c.l.b16 %v4741
        %v5022 = vunpack.c.h.b16 %v4741
        %v5023 = vunpack.c.l.b16 %v4742
        %v5024 = vunpack.c.h.b16 %v4742
        %v5025 = vunpack.c.l.b16 %v4743
        %v5026 = vunpack.c.h.b16 %v4743
        %v5027 = vunpack.c.l.b16 %v4744
        %v5028 = vunpack.c.h.b16 %v4744
        %v5029 = vunpack.c.l.b16 %v4745
        %v5030 = vunpack.c.h.b16 %v4745
        %v5031 = vunpack.c.l.b16 %v4746
        %v5032 = vunpack.c.h.b16 %v4746
        %v5033 = vunpack.c.l.b16 %v4747
        %v5034 = vunpack.c.h.b16 %v4747
        %v5035 = vunpack.c.l.b16 %v4748
        %v5036 = vunpack.c.h.b16 %v4748
        %v5037 = vunpack.c.l.b16 %v4749
        %v5038 = vunpack.c.h.b16 %v4749
        %v5039 = vunpack.c.l.b16 %v4750
        %v5040 = vunpack.c.h.b16 %v4750
        %v5041 = vunpack.c.l.b16 %v4751
        %v5042 = vunpack.c.h.b16 %v4751
        %v5043 = vunpack.c.l.b16 %v4752
        %v5044 = vunpack.c.h.b16 %v4752
        %v5045 = vunpack.c.l.b16 %v4753
        %v5046 = vunpack.c.h.b16 %v4753
        %v5047 = vunpack.c.l.b16 %v4754
        %v5048 = vunpack.c.h.b16 %v4754
        %v5049 = vunpack.c.l.b16 %v4755
        %v5050 = vunpack.c.h.b16 %v4755
        %v5051 = vunpack.c.l.b16 %v4756
        %v5052 = vunpack.c.h.b16 %v4756
        %v5053 = vunpack.c.l.b16 %v4757
        %v5054 = vunpack.c.h.b16 %v4757
        %v5055 = vunpack.c.l.b16 %v4758
        %v5056 = vunpack.c.h.b16 %v4758
        %v5057 = vunpack.c.l.b16 %v4759
        %v5058 = vunpack.c.h.b16 %v4759
        %v5059 = vunpack.c.l.b16 %v4760
        %v5060 = vunpack.c.h.b16 %v4760
        %v5061 = vunpack.c.l.b16 %v4761
        %v5062 = vunpack.c.h.b16 %v4761
        %v5063 = vunpack.c.l.b16 %v4762
        %v5064 = vunpack.c.h.b16 %v4762
        %v5065 = vunpack.c.l.b16 %v4763
        %v5066 = vunpack.c.h.b16 %v4763
        %v5067 = vunpack.c.l.b16 %v4764
        %v5068 = vunpack.c.h.b16 %v4764
        %v5069 = vunpack.c.l.b16 %v4765
        %v5070 = vunpack.c.h.b16 %v4765
        %v5071 = vunpack.c.l.b16 %v4766
        %v5072 = vunpack.c.h.b16 %v4766
        %v5073 = vunpack.c.l.b16 %v4767
        %v5074 = vunpack.c.h.b16 %v4767
        %v5075 = vunpack.c.l.b16 %v4768
        %v5076 = vunpack.c.h.b16 %v4768
        %v5077 = vunpack.c.l.b16 %v4769
        %v5078 = vunpack.c.h.b16 %v4769
        %v5079 = vunpack.c.l.b16 %v4770
        %v5080 = vunpack.c.h.b16 %v4770
        %v5081 = vunpack.c.l.b16 %v4771
        %v5082 = vunpack.c.h.b16 %v4771
        %v5083 = vunpack.c.l.b16 %v4772
        %v5084 = vunpack.c.h.b16 %v4772
        %v5085 = vunpack.c.l.b16 %v4773
        %v5086 = vunpack.c.h.b16 %v4773
        %v5087 = vunpack.c.l.b16 %v4774
        %v5088 = vunpack.c.h.b16 %v4774
        %v5089 = vunpack.c.l.b16 %v4775
        %v5090 = vunpack.c.h.b16 %v4775
        %v5091 = vunpack.c.l.b16 %v4776
        %v5092 = vunpack.c.h.b16 %v4776
        %v5093 = vunpack.c.l.b16 %v4777
        %v5094 = vunpack.c.h.b16 %v4777
        %v5095 = vunpack.c.l.b16 %v4778
        %v5096 = vunpack.c.h.b16 %v4778
        %v5097 = vunpack.c.l.b16 %v4779
        %v5098 = vunpack.c.h.b16 %v4779
        %v5099 = vunpack.c.l.b16 %v4780
        %v5100 = vunpack.c.h.b16 %v4780
        %v5101 = vunpack.c.l.b16 %v4781
        %v5102 = vunpack.c.h.b16 %v4781
        %v5103 = vunpack.c.l.b16 %v4782
        %v5104 = vunpack.c.h.b16 %v4782
        %v5105 = vunpack.c.l.b16 %v4783
        %v5106 = vunpack.c.h.b16 %v4783
        %v5107 = vunpack.c.l.b16 %v4784
        %v5108 = vunpack.c.h.b16 %v4784
        %v5109 = vunpack.c.l.b16 %v4785
        %v5110 = vunpack.c.h.b16 %v4785
        %v5111 = vunpack.c.l.b16 %v4786
        %v5112 = vunpack.c.h.b16 %v4786
        %v5113 = vunpack.c.l.b16 %v4787
        %v5114 = vunpack.c.h.b16 %v4787
        %v5115 = vunpack.c.l.b16 %v4788
        %v5116 = vunpack.c.h.b16 %v4788
        %v5117 = vunpack.c.l.b16 %v4789
        %v5118 = vunpack.c.h.b16 %v4789
        %v5119 = vunpack.c.l.b16 %v4790
        %v5120 = vunpack.c.h.b16 %v4790
        %v5121 = vunpack.c.l.b16 %v4791
        %v5122 = vunpack.c.h.b16 %v4791
        %v5123 = vunpack.c.l.b16 %v4792
        %v5124 = vunpack.c.h.b16 %v4792
        %v5125 = vunpack.c.l.b16 %v4793
        %v5126 = vunpack.c.h.b16 %v4793
        %v5127 = vunpack.c.l.b16 %v4794
        %v5128 = vunpack.c.h.b16 %v4794
        %v5129 = vunpack.c.l.b16 %v4795
        %v5130 = vunpack.c.h.b16 %v4795
        %v5131 = vunpack.c.l.b16 %v4796
        %v5132 = vunpack.c.h.b16 %v4796
        %v5133 = vunpack.c.l.b16 %v4797
        %v5134 = vunpack.c.h.b16 %v4797
        %v5135 = vunpack.c.l.b16 %v4798
        %v5136 = vunpack.c.h.b16 %v4798
        %v5137 = vunpack.c.l.b16 %v4799
        %v5138 = vunpack.c.h.b16 %v4799
        %v5139 = vunpack.c.l.b16 %v4800
        %v5140 = vunpack.c.h.b16 %v4800
        %v5141 = vunpack.c.l.b16 %v4801
        %v5142 = vunpack.c.h.b16 %v4801
        %v5143 = vunpack.c.l.b16 %v4802
        %v5144 = vunpack.c.h.b16 %v4802
        %v5145 = vunpack.c.l.b16 %v4803
        %v5146 = vunpack.c.h.b16 %v4803
        %v5147 = vunpack.c.l.b16 %v4804
        %v5148 = vunpack.c.h.b16 %v4804
        %v5149 = vunpack.c.l.b16 %v4805
        %v5150 = vunpack.c.h.b16 %v4805
        %v5151 = vunpack.c.l.b16 %v4806
        %v5152 = vunpack.c.h.b16 %v4806
        %v5153 = vunpack.c.l.b16 %v4807
        %v5154 = vunpack.c.h.b16 %v4807
        %v5155 = vunpack.c.l.b16 %v4808
        %v5156 = vunpack.c.h.b16 %v4808
        %v5157 = vunpack.c.l.b16 %v4809
        %v5158 = vunpack.c.h.b16 %v4809
        %v5159 = vunpack.c.l.b16 %v4810
        %v5160 = vunpack.c.h.b16 %v4810
        %v5161 = vunpack.c.l.b16 %v4811
        %v5162 = vunpack.c.h.b16 %v4811
        %v5163 = vunpack.c.l.b16 %v4812
        %v5164 = vunpack.c.h.b16 %v4812
        %v5165 = vunpack.c.l.b16 %v4813
        %v5166 = vunpack.c.h.b16 %v4813
        %v5167 = vunpack.c.l.b16 %v4814
        %v5168 = vunpack.c.h.b16 %v4814
        %v5169 = vunpack.c.l.b16 %v4815
        %v5170 = vunpack.c.h.b16 %v4815
        %v5171 = vunpack.c.l.b16 %v4816
        %v5172 = vunpack.c.h.b16 %v4816
        %v5173 = vunpack.c.l.b16 %v4817
        %v5174 = vunpack.c.h.b16 %v4817
        %v5175 = vunpack.c.l.b16 %v4818
        %v5176 = vunpack.c.h.b16 %v4818
        %v5177 = vunpack.c.l.b16 %v4819
        %v5178 = vunpack.c.h.b16 %v4819
        %v5179 = vunpack.c.l.b16 %v4820
        %v5180 = vunpack.c.h.b16 %v4820
        %v5181 = vunpack.c.l.b16 %v4821
        %v5182 = vunpack.c.h.b16 %v4821
        %v5183 = vunpack.c.l.b16 %v4822
        %v5184 = vunpack.c.h.b16 %v4822
        %v5185 = vunpack.c.l.b16 %v4823
        %v5186 = vunpack.c.h.b16 %v4823
        %v5187 = vunpack.c.l.b16 %v4824
        %v5188 = vunpack.c.h.b16 %v4824
        %v5189 = vunpack.c.l.b16 %v4825
        %v5190 = vunpack.c.h.b16 %v4825
        %v5191 = vunpack.c.l.b16 %v4826
        %v5192 = vunpack.c.h.b16 %v4826
        %v5193 = vunpack.c.l.b16 %v4827
        %v5194 = vunpack.c.h.b16 %v4827
        %v5195 = vunpack.c.l.b16 %v4828
        %v5196 = vunpack.c.h.b16 %v4828
        %v5197 = vunpack.c.l.b16 %v4829
        %v5198 = vunpack.c.h.b16 %v4829
        %v5199 = vunpack.c.l.b16 %v4830
        %v5200 = vunpack.c.h.b16 %v4830
        %v5201 = vunpack.c.l.b16 %v4831
        %v5202 = vunpack.c.h.b16 %v4831
        %v5203 = vunpack.c.l.b16 %v4832
        %v5204 = vunpack.c.h.b16 %v4832
        %v5205 = vunpack.c.l.b16 %v4833
        %v5206 = vunpack.c.h.b16 %v4833
        %v5207 = vunpack.c.l.b16 %v4834
        %v5208 = vunpack.c.h.b16 %v4834
        %v5209 = vunpack.c.l.b16 %v4835
        %v5210 = vunpack.c.h.b16 %v4835
        %v5211 = vunpack.c.l.b16 %v4836
        %v5212 = vunpack.c.h.b16 %v4836
        %v5213 = vunpack.c.l.b16 %v4837
        %v5214 = vunpack.c.h.b16 %v4837
        %v5215 = vunpack.c.l.b16 %v4838
        %v5216 = vunpack.c.h.b16 %v4838
        %v5217 = vunpack.c.l.b16 %v4839
        %v5218 = vunpack.c.h.b16 %v4839
        %v5219 = vunpack.c.l.b16 %v4840
        %v5220 = vunpack.c.h.b16 %v4840
        %v5221 = vunpack.c.l.b16 %v4841
        %v5222 = vunpack.c.h.b16 %v4841
        %v5223 = vunpack.c.l.b16 %v4842
        %v5224 = vunpack.c.h.b16 %v4842
        %v5225 = vunpack.c.l.b16 %v4843
        %v5226 = vunpack.c.h.b16 %v4843
        %v5227 = vunpack.c.l.b16 %v4844
        %v5228 = vunpack.c.h.b16 %v4844
        %v5229 = vunpack.c.l.b16 %v4845
        %v5230 = vunpack.c.h.b16 %v4845
        %v5231 = vunpack.c.l.b16 %v4846
        %v5232 = vunpack.c.h.b16 %v4846
        %v5233 = vunpack.c.l.b16 %v4847
        %v5234 = vunpack.c.h.b16 %v4847
        %v5235 = vunpack.c.l.b16 %v4848
        %v5236 = vunpack.c.h.b16 %v4848
        %v5237 = vunpack.c.l.b16 %v4849
        %v5238 = vunpack.c.h.b16 %v4849
        %v5239 = vunpack.c.l.b16 %v4850
        %v5240 = vunpack.c.h.b16 %v4850
        %v5241 = vunpack.c.l.b16 %v4851
        %v5242 = vunpack.c.h.b16 %v4851
        %v5243 = vunpack.c.l.b16 %v4852
        %v5244 = vunpack.c.h.b16 %v4852
        %v5245 = vunpack.c.l.b16 %v4853
        %v5246 = vunpack.c.h.b16 %v4853
        %v5247 = vunpack.c.l.b16 %v4854
        %v5248 = vunpack.c.h.b16 %v4854
        %v5249 = vunpack.c.l.b16 %v4855
        %v5250 = vunpack.c.h.b16 %v4855
        %v5251 = vunpack.c.l.b16 %v4856
        %v5252 = vunpack.c.h.b16 %v4856
        %v5253 = vunpack.c.l.b16 %v4857
        %v5254 = vunpack.c.h.b16 %v4857
        %v5255 = vunpack.c.l.b16 %v4858
        %v5256 = vunpack.c.h.b16 %v4858
        %v5257 = vunpack.c.l.b16 %v4859
        %v5258 = vunpack.c.h.b16 %v4859
        %v5259 = vunpack.c.l.b16 %v4860
        %v5260 = vunpack.c.h.b16 %v4860
        %v5261 = vunpack.c.l.b16 %v4861
        %v5262 = vunpack.c.h.b16 %v4861
        %v5263 = vunpack.c.l.b16 %v4862
        %v5264 = vunpack.c.h.b16 %v4862
        %v5265 = vunpack.c.l.b16 %v4863
        %v5266 = vunpack.c.h.b16 %v4863
        %v5267 = vunpack.c.l.b16 %v4864
        %v5268 = vunpack.c.h.b16 %v4864
        %v5269 = vunpack.c.l.b16 %v4865
        %v5270 = vunpack.c.h.b16 %v4865
        %v5271 = vunpack.c.l.b16 %v4866
        %v5272 = vunpack.c.h.b16 %v4866
        %v5273 = vunpack.c.l.b16 %v4867
        %v5274 = vunpack.c.h.b16 %v4867
        %v5275 = vunpack.c.l.b16 %v4868
        %v5276 = vunpack.c.h.b16 %v4868
        %v5277 = vunpack.c.l.b16 %v4869
        %v5278 = vunpack.c.h.b16 %v4869
        %v5279 = vunpack.c.l.b16 %v4870
        %v5280 = vunpack.c.h.b16 %v4870
        %v5281 = vunpack.c.l.b16 %v4871
        %v5282 = vunpack.c.h.b16 %v4871
        %v5283 = vunpack.c.l.b16 %v4872
        %v5284 = vunpack.c.h.b16 %v4872
        %v5285 = vunpack.c.l.b16 %v4873
        %v5286 = vunpack.c.h.b16 %v4873
        %v5287 = vunpack.c.l.b16 %v4874
        %v5288 = vunpack.c.h.b16 %v4874
        %v5289 = vunpack.c.l.b16 %v4875
        %v5290 = vunpack.c.h.b16 %v4875
        %v5291 = vunpack.c.l.b16 %v4876
        %v5292 = vunpack.c.h.b16 %v4876
        %v5293 = vunpack.c.l.b16 %v4877
        %v5294 = vunpack.c.h.b16 %v4877
        %v5295 = vunpack.c.l.b16 %v4878
        %v5296 = vunpack.c.h.b16 %v4878
        %v5297 = vunpack.c.l.b16 %v4879
        %v5298 = vunpack.c.h.b16 %v4879
        %v5299 = vunpack.c.l.b16 %v4880
        %v5300 = vunpack.c.h.b16 %v4880
        %v5301 = vpack.c.b16 %v5023, %v5021
        %v5302 = vpack.c.b16 %v5024, %v5022
        %v5303 = vpack.c.b16 %v5027, %v5025
        %v5304 = vpack.c.b16 %v5028, %v5026
        %v5305 = vpack.c.b16 %v5031, %v5029
        %v5306 = vpack.c.b16 %v5032, %v5030
        %v5307 = vpack.c.b16 %v5035, %v5033
        %v5308 = vpack.c.b16 %v5036, %v5034
        %v5309 = vpack.c.b16 %v5039, %v5037
        %v5310 = vpack.c.b16 %v5040, %v5038
        %v5311 = vpack.c.b16 %v5043, %v5041
        %v5312 = vpack.c.b16 %v5044, %v5042
        %v5313 = vpack.c.b16 %v5047, %v5045
        %v5314 = vpack.c.b16 %v5048, %v5046
        %v5315 = vpack.c.b16 %v5051, %v5049
        %v5316 = vpack.c.b16 %v5052, %v5050
        %v5317 = vpack.c.b16 %v5055, %v5053
        %v5318 = vpack.c.b16 %v5056, %v5054
        %v5319 = vpack.c.b16 %v5059, %v5057
        %v5320 = vpack.c.b16 %v5060, %v5058
        %v5321 = vpack.c.b16 %v5063, %v5061
        %v5322 = vpack.c.b16 %v5064, %v5062
        %v5323 = vpack.c.b16 %v5067, %v5065
        %v5324 = vpack.c.b16 %v5068, %v5066
        %v5325 = vpack.c.b16 %v5071, %v5069
        %v5326 = vpack.c.b16 %v5072, %v5070
        %v5327 = vpack.c.b16 %v5075, %v5073
        %v5328 = vpack.c.b16 %v5076, %v5074
        %v5329 = vpack.c.b16 %v5079, %v5077
        %v5330 = vpack.c.b16 %v5080, %v5078
        %v5331 = vpack.c.b16 %v5083, %v5081
        %v5332 = vpack.c.b16 %v5084, %v5082
        %v5333 = vpack.c.b16 %v5087, %v5085
        %v5334 = vpack.c.b16 %v5088, %v5086
        %v5335 = vpack.c.b16 %v5091, %v5089
        %v5336 = vpack.c.b16 %v5092, %v5090
        %v5337 = vpack.c.b16 %v5095, %v5093
        %v5338 = vpack.c.b16 %v5096, %v5094
        %v5339 = vpack.c.b16 %v5099, %v5097
        %v5340 = vpack.c.b16 %v5100, %v5098
        %v5341 = vpack.c.b16 %v5103, %v5101
        %v5342 = vpack.c.b16 %v5104, %v5102
        %v5343 = vpack.c.b16 %v5107, %v5105
        %v5344 = vpack.c.b16 %v5108, %v5106
        %v5345 = vpack.c.b16 %v5111, %v5109
        %v5346 = vpack.c.b16 %v5112, %v5110
        %v5347 = vpack.c.b16 %v5115, %v5113
        %v5348 = vpack.c.b16 %v5116, %v5114
        %v5349 = vpack.c.b16 %v5119, %v5117
        %v5350 = vpack.c.b16 %v5120, %v5118
        %v5351 = vpack.c.b16 %v5123, %v5121
        %v5352 = vpack.c.b16 %v5124, %v5122
        %v5353 = vpack.c.b16 %v5127, %v5125
        %v5354 = vpack.c.b16 %v5128, %v5126
        %v5355 = vpack.c.b16 %v5131, %v5129
        %v5356 = vpack.c.b16 %v5132, %v5130
        %v5357 = vpack.c.b16 %v5135, %v5133
        %v5358 = vpack.c.b16 %v5136, %v5134
        %v5359 = vpack.c.b16 %v5139, %v5137
        %v5360 = vpack.c.b16 %v5140, %v5138
        %v5361 = vpack.c.b16 %v5143, %v5141
        %v5362 = vpack.c.b16 %v5144, %v5142
        %v5363 = vpack.c.b16 %v5147, %v5145
        %v5364 = vpack.c.b16 %v5148, %v5146
        %v5365 = vpack.c.b16 %v5151, %v5149
        %v5366 = vpack.c.b16 %v5152, %v5150
        %v5367 = vpack.c.b16 %v5155, %v5153
        %v5368 = vpack.c.b16 %v5156, %v5154
        %v5369 = vpack.c.b16 %v5159, %v5157
        %v5370 = vpack.c.b16 %v5160, %v5158
        %v5371 = vpack.c.b16 %v5163, %v5161
        %v5372 = vpack.c.b16 %v5164, %v5162
        %v5373 = vpack.c.b16 %v5167, %v5165
        %v5374 = vpack.c.b16 %v5168, %v5166
        %v5375 = vpack.c.b16 %v5171, %v5169
        %v5376 = vpack.c.b16 %v5172, %v5170
        %v5377 = vpack.c.b16 %v5175, %v5173
        %v5378 = vpack.c.b16 %v5176, %v5174
        %v5379 = vpack.c.b16 %v5179, %v5177
        %v5380 = vpack.c.b16 %v5180, %v5178
        %v5381 = vpack.c.b16 %v5183, %v5181
        %v5382 = vpack.c.b16 %v5184, %v5182
        %v5383 = vpack.c.b16 %v5187, %v5185
        %v5384 = vpack.c.b16 %v5188, %v5186
        %v5385 = vpack.c.b16 %v5191, %v5189
        %v5386 = vpack.c.b16 %v5192, %v5190
        %v5387 = vpack.c.b16 %v5195, %v5193
        %v5388 = vpack.c.b16 %v5196, %v5194
        %v5389 = vpack.c.b16 %v5199, %v5197
        %v5390 = vpack.c.b16 %v5200, %v5198
        %v5391 = vpack.c.b16 %v5203, %v5201
        %v5392 = vpack.c.b16 %v5204, %v5202
        %v5393 = vpack.c.b16 %v5207, %v5205
        %v5394 = vpack.c.b16 %v5208, %v5206
        %v5395 = vpack.c.b16 %v5211, %v5209
        %v5396 = vpack.c.b16 %v5212, %v5210
        %v5397 = vpack.c.b16 %v5215, %v5213
        %v5398 = vpack.c.b16 %v5216, %v5214
        %v5399 = vpack.c.b16 %v5219, %v5217
        %v5400 = vpack.c.b16 %v5220, %v5218
        %v5401 = vpack.c.b16 %v5223, %v5221
        %v5402 = vpack.c.b16 %v5224, %v5222
        %v5403 = vpack.c.b16 %v5227, %v5225
        %v5404 = vpack.c.b16 %v5228, %v5226
        %v5405 = vpack.c.b16 %v5231, %v5229
        %v5406 = vpack.c.b16 %v5232, %v5230
        %v5407 = vpack.c.b16 %v5235, %v5233
        %v5408 = vpack.c.b16 %v5236, %v5234
        %v5409 = vpack.c.b16 %v5239, %v5237
        %v5410 = vpack.c.b16 %v5240, %v5238
        %v5411 = vpack.c.b16 %v5243, %v5241
        %v5412 = vpack.c.b16 %v5244, %v5242
        %v5413 = vpack.c.b16 %v5247, %v5245
        %v5414 = vpack.c.b16 %v5248, %v5246
        %v5415 = vpack.c.b16 %v5251, %v5249
        %v5416 = vpack.c.b16 %v5252, %v5250
        %v5417 = vpack.c.b16 %v5255, %v5253
        %v5418 = vpack.c.b16 %v5256, %v5254
        %v5419 = vpack.c.b16 %v5259, %v5257
        %v5420 = vpack.c.b16 %v5260, %v5258
        %v5421 = vpack.c.b16 %v5263, %v5261
        %v5422 = vpack.c.b16 %v5264, %v5262
        %v5423 = vpack.c.b16 %v5267, %v5265
        %v5424 = vpack.c.b16 %v5268, %v5266
        %v5425 = vpack.c.b16 %v5271, %v5269
        %v5426 = vpack.c.b16 %v5272, %v5270
        %v5427 = vpack.c.b16 %v5275, %v5273
        %v5428 = vpack.c.b16 %v5276, %v5274
        %v5429 = vpack.c.b16 %v5279, %v5277
        %v5430 = vpack.c.b16 %v5280, %v5278
        %v5431 = vpack.c.b16 %v5283, %v5281
        %v5432 = vpack.c.b16 %v5284, %v5282
        %v5433 = vpack.c.b16 %v5287, %v5285
        %v5434 = vpack.c.b16 %v5288, %v5286
        %v5435 = vpack.c.b16 %v5291, %v5289
        %v5436 = vpack.c.b16 %v5292, %v5290
        %v5437 = vpack.c.b16 %v5295, %v5293
        %v5438 = vpack.c.b16 %v5296, %v5294
        %v5439 = vpack.c.b16 %v5299, %v5297
        %v5440 = vpack.c.b16 %v5300, %v5298
        %v5581 = vsel %vm4710, %v4634, 0
        %v5583 = vsel %vm4710, %v4635, 0
        %v5586 = vsel %vm4710, %v4676, 0
        %v5588 = vsel %vm4710, %v4675, 0
        %5590 = vmatprep.subr.bf16.mxu0 %v5302
        %5591 = vmatpush1.bf16.msra.mxu0 %v5301
        %5592 = vmatprep.subr.bf16.mxu0 %v5304
        %5593 = vmatpush1.bf16.msra.mxu0 %v5303
        %5594 = vmatprep.subr.bf16.mxu0 %v5306
        %5595 = vmatpush1.bf16.msra.mxu0 %v5305
        %5596 = vmatprep.subr.bf16.mxu0 %v5308
        %5597 = vmatpush1.bf16.msra.mxu0 %v5307
        %5598 = vmatprep.subr.bf16.mxu0 %v5310
        %5599 = vmatpush1.bf16.msra.mxu0 %v5309
        %5600 = vmatprep.subr.bf16.mxu0 %v5312
        %5601 = vmatpush1.bf16.msra.mxu0 %v5311
        %5602 = vmatprep.subr.bf16.mxu0 %v5314
        %5603 = vmatpush1.bf16.msra.mxu0 %v5313
        %5604 = vmatprep.subr.bf16.mxu0 %v5316
        %5605 = vmatpush1.bf16.msra.mxu0 %v5315
        %5606 = vmatprep.subr.bf16.mxu0 %v5318
        %5607 = vmatpush1.bf16.msra.mxu0 %v5317
        %5608 = vmatprep.subr.bf16.mxu0 %v5320
        %5609 = vmatpush1.bf16.msra.mxu0 %v5319
        %5610 = vmatprep.subr.bf16.mxu0 %v5322
        %5611 = vmatpush1.bf16.msra.mxu0 %v5321
        %5612 = vmatprep.subr.bf16.mxu0 %v5324
        %5613 = vmatpush1.bf16.msra.mxu0 %v5323
        %5614 = vmatprep.subr.bf16.mxu0 %v5326
        %5615 = vmatpush1.bf16.msra.mxu0 %v5325
        %5616 = vmatprep.subr.bf16.mxu0 %v5328
        %5617 = vmatpush1.bf16.msra.mxu0 %v5327
        %5618 = vmatprep.subr.bf16.mxu0 %v5330
        %5619 = vmatpush1.bf16.msra.mxu0 %v5329
        %5620 = vmatprep.subr.bf16.mxu0 %v5332
        %5621 = vmatpush1.bf16.msra.mxu0 %v5331
        %5622 = vmatprep.mubr.bf16.mxu0 %v4680
        %5623 = vmatmul.mubr.bf16.gmra.mrb[0].mxu0 %v4563
        %v5624 = vpop.f32.mrb[0].mxu0
        %v5625 = vadd.f32 0.0, %v5624
        %v5626 = vpop.f32.mrb[0].mxu0
        %v5627 = vadd.f32 0.0, %v5626
        %v5628 = vpop.f32.mrb[0].mxu0
        %v5629 = vadd.f32 0.0, %v5628
        %v5630 = vpop.f32.mrb[0].mxu0
        %v5631 = vadd.f32 0.0, %v5630
        %5632 = vmatprep.mubr.bf16.mxu0 %v4684
        %5633 = vmatmul.mubr.bf16.gmra.mrb[0].mxu0 %v4564
        %v5634 = vpop.f32.mrb[0].mxu0
        %v5635 = vadd.f32 0.0, %v5634
        %v5636 = vpop.f32.mrb[0].mxu0
        %v5637 = vadd.f32 0.0, %v5636
        %v5638 = vpop.f32.mrb[0].mxu0
        %v5639 = vadd.f32 0.0, %v5638
        %v5640 = vpop.f32.mrb[0].mxu0
        %v5641 = vadd.f32 0.0, %v5640
        %5642 = vmatprep.mubr.bf16.mxu0 %v4688
        %5643 = vmatmul.mubr.bf16.gmra.mrb[0].mxu0 %v4566
        %v5644 = vpop.f32.mrb[0].mxu0
        %v5645 = vadd.f32 0.0, %v5644
        %v5646 = vpop.f32.mrb[0].mxu0
        %v5647 = vadd.f32 0.0, %v5646
        %v5648 = vpop.f32.mrb[0].mxu0
        %v5649 = vadd.f32 0.0, %v5648
        %v5650 = vpop.f32.mrb[0].mxu0
        %v5651 = vadd.f32 0.0, %v5650
        %5652 = vmatprep.mubr.bf16.mxu0 %v4692
        %5653 = vmatmul.mubr.bf16.gmra.mrb[0].mxu0 %v4568
        %v5654 = vpop.f32.mrb[0].mxu0
        %v5655 = vadd.f32 0.0, %v5654
        %v5656 = vpop.f32.mrb[0].mxu0
        %v5657 = vadd.f32 0.0, %v5656
        %v5658 = vpop.f32.mrb[0].mxu0
        %v5659 = vadd.f32 0.0, %v5658
        %v5660 = vpop.f32.mrb[0].mxu0
        %v5661 = vadd.f32 0.0, %v5660
        %5662 = vdwg.mxu0
        %5663 = vmatprep.subr.bf16.mxu0 %v5334
        %5664 = vmatpush1.bf16.msra.mxu0 %v5333
        %5665 = vmatprep.subr.bf16.mxu0 %v5336
        %5666 = vmatpush1.bf16.msra.mxu0 %v5335
        %5667 = vmatprep.subr.bf16.mxu0 %v5338
        %5668 = vmatpush1.bf16.msra.mxu0 %v5337
        %5669 = vmatprep.subr.bf16.mxu0 %v5340
        %5670 = vmatpush1.bf16.msra.mxu0 %v5339
        %5671 = vmatprep.subr.bf16.mxu0 %v5342
        %5672 = vmatpush1.bf16.msra.mxu0 %v5341
        %5673 = vmatprep.subr.bf16.mxu0 %v5344
        %5674 = vmatpush1.bf16.msra.mxu0 %v5343
        %5675 = vmatprep.subr.bf16.mxu0 %v5346
        %5676 = vmatpush1.bf16.msra.mxu0 %v5345
        %5677 = vmatprep.subr.bf16.mxu0 %v5348
        %5678 = vmatpush1.bf16.msra.mxu0 %v5347
        %5679 = vmatprep.subr.bf16.mxu0 %v5350
        %5680 = vmatpush1.bf16.msra.mxu0 %v5349
        %5681 = vmatprep.subr.bf16.mxu0 %v5352
        %5682 = vmatpush1.bf16.msra.mxu0 %v5351
        %5683 = vmatprep.subr.bf16.mxu0 %v5354
        %5684 = vmatpush1.bf16.msra.mxu0 %v5353
        %5685 = vmatprep.subr.bf16.mxu0 %v5356
        %5686 = vmatpush1.bf16.msra.mxu0 %v5355
        %5687 = vmatprep.subr.bf16.mxu0 %v5358
        %5688 = vmatpush1.bf16.msra.mxu0 %v5357
        %5689 = vmatprep.subr.bf16.mxu0 %v5360
        %5690 = vmatpush1.bf16.msra.mxu0 %v5359
        %5691 = vmatprep.subr.bf16.mxu0 %v5362
        %5692 = vmatpush1.bf16.msra.mxu0 %v5361
        %5693 = vmatprep.subr.bf16.mxu0 %v5364
        %5694 = vmatpush1.bf16.msra.mxu0 %v5363
        %5695 = vmatprep.mubr.bf16.mxu0 %v4713
        %5696 = vmatmul.mubr.bf16.gmra.mrb[0].mxu0 %v4696
        %v5697 = vpop.f32.mrb[0].mxu0
        %v5698 = vadd.f32 %v5625, %v5697
        %v5699 = vpop.f32.mrb[0].mxu0
        %v5700 = vadd.f32 %v5627, %v5699
        %v5701 = vpop.f32.mrb[0].mxu0
        %v5702 = vadd.f32 %v5629, %v5701
        %v5703 = vpop.f32.mrb[0].mxu0
        %v5704 = vadd.f32 %v5631, %v5703
        %5705 = vmatprep.mubr.bf16.mxu0 %v4717
        %5706 = vmatmul.mubr.bf16.gmra.mrb[0].mxu0 %v4700
        %v5707 = vpop.f32.mrb[0].mxu0
        %v5708 = vadd.f32 %v5635, %v5707
        %v5709 = vpop.f32.mrb[0].mxu0
        %v5710 = vadd.f32 %v5637, %v5709
        %v5711 = vpop.f32.mrb[0].mxu0
        %v5712 = vadd.f32 %v5639, %v5711
        %v5713 = vpop.f32.mrb[0].mxu0
        %v5714 = vadd.f32 %v5641, %v5713
        %5715 = vmatprep.mubr.bf16.mxu0 %v4721
        %5716 = vmatmul.mubr.bf16.gmra.mrb[0].mxu0 %v4704
        %v5717 = vpop.f32.mrb[0].mxu0
        %v5718 = vadd.f32 %v5645, %v5717
        %v5719 = vpop.f32.mrb[0].mxu0
        %v5720 = vadd.f32 %v5647, %v5719
        %v5721 = vpop.f32.mrb[0].mxu0
        %v5722 = vadd.f32 %v5649, %v5721
        %v5723 = vpop.f32.mrb[0].mxu0
        %v5724 = vadd.f32 %v5651, %v5723
        %5725 = vmatprep.mubr.bf16.mxu0 %v4725
        %5726 = vmatmul.mubr.bf16.gmra.mrb[0].mxu0 %v4708
        %v5727 = vpop.f32.mrb[0].mxu0
        %v5728 = vadd.f32 %v5655, %v5727
        %v5729 = vpop.f32.mrb[0].mxu0
        %v5730 = vadd.f32 %v5657, %v5729
        %v5731 = vpop.f32.mrb[0].mxu0
        %v5732 = vadd.f32 %v5659, %v5731
        %v5733 = vpop.f32.mrb[0].mxu0
        %v5734 = vadd.f32 %v5661, %v5733
        %5735 = vdwg.mxu0
        %5736 = vmatprep.subr.bf16.mxu0 %v5366
        %5737 = vmatpush1.bf16.msra.mxu0 %v5365
        %5738 = vmatprep.subr.bf16.mxu0 %v5368
        %5739 = vmatpush1.bf16.msra.mxu0 %v5367
        %5740 = vmatprep.subr.bf16.mxu0 %v5370
        %5741 = vmatpush1.bf16.msra.mxu0 %v5369
        %5742 = vmatprep.subr.bf16.mxu0 %v5372
        %5743 = vmatpush1.bf16.msra.mxu0 %v5371
        %5744 = vmatprep.subr.bf16.mxu0 %v5374
        %5745 = vmatpush1.bf16.msra.mxu0 %v5373
        %5746 = vmatprep.subr.bf16.mxu0 %v5376
        %5747 = vmatpush1.bf16.msra.mxu0 %v5375
        %5748 = vmatprep.subr.bf16.mxu0 %v5378
        %5749 = vmatpush1.bf16.msra.mxu0 %v5377
        %5750 = vmatprep.subr.bf16.mxu0 %v5380
        %5751 = vmatpush1.bf16.msra.mxu0 %v5379
        %5752 = vmatprep.subr.bf16.mxu0 %v5382
        %5753 = vmatpush1.bf16.msra.mxu0 %v5381
        %5754 = vmatprep.subr.bf16.mxu0 %v5384
        %5755 = vmatpush1.bf16.msra.mxu0 %v5383
        %5756 = vmatprep.subr.bf16.mxu0 %v5386
        %5757 = vmatpush1.bf16.msra.mxu0 %v5385
        %5758 = vmatprep.subr.bf16.mxu0 %v5388
        %5759 = vmatpush1.bf16.msra.mxu0 %v5387
        %5760 = vmatprep.subr.bf16.mxu0 %v5390
        %5761 = vmatpush1.bf16.msra.mxu0 %v5389
        %5762 = vmatprep.subr.bf16.mxu0 %v5392
        %5763 = vmatpush1.bf16.msra.mxu0 %v5391
        %5764 = vmatprep.subr.bf16.mxu0 %v5394
        %5765 = vmatpush1.bf16.msra.mxu0 %v5393
        %5766 = vmatprep.subr.bf16.mxu0 %v5396
        %5767 = vmatpush1.bf16.msra.mxu0 %v5395
        %5768 = vmatprep.mubr.bf16.mxu0 %v4566
        %5769 = vmatmul.mubr.bf16.gmra.mrb[0].mxu0 %v4655
        %v5770 = vpop.f32.mrb[0].mxu0
        %v5771 = vadd.f32 %v5698, %v5770
        %v5772 = vpop.f32.mrb[0].mxu0
        %v5773 = vadd.f32 %v5700, %v5772
        %v5774 = vpop.f32.mrb[0].mxu0
        %v5775 = vadd.f32 %v5702, %v5774
        %v5776 = vpop.f32.mrb[0].mxu0
        %v5777 = vadd.f32 %v5704, %v5776
        %5778 = vmatprep.mubr.bf16.mxu0 %v4568
        %5779 = vmatmul.mubr.bf16.gmra.mrb[0].mxu0 %v4656
        %v5780 = vpop.f32.mrb[0].mxu0
        %v5781 = vadd.f32 %v5708, %v5780
        %v5782 = vpop.f32.mrb[0].mxu0
        %v5783 = vadd.f32 %v5710, %v5782
        %v5784 = vpop.f32.mrb[0].mxu0
        %v5785 = vadd.f32 %v5712, %v5784
        %v5786 = vpop.f32.mrb[0].mxu0
        %v5787 = vadd.f32 %v5714, %v5786
        %5788 = vmatprep.mubr.bf16.mxu0 %v4576
        %5789 = vmatmul.mubr.bf16.gmra.mrb[0].mxu0 %v4657
        %v5790 = vpop.f32.mrb[0].mxu0
        %v5791 = vadd.f32 %v5718, %v5790
        %v5792 = vpop.f32.mrb[0].mxu0
        %v5793 = vadd.f32 %v5720, %v5792
        %v5794 = vpop.f32.mrb[0].mxu0
        %v5795 = vadd.f32 %v5722, %v5794
        %v5796 = vpop.f32.mrb[0].mxu0
        %v5797 = vadd.f32 %v5724, %v5796
        %5798 = vmatprep.mubr.bf16.mxu0 %v4580
        %5799 = vmatmul.mubr.bf16.gmra.mrb[0].mxu0 %v4658
        %v5800 = vpop.f32.mrb[0].mxu0
        %v5801 = vadd.f32 %v5728, %v5800
        %v5802 = vpop.f32.mrb[0].mxu0
        %v5803 = vadd.f32 %v5730, %v5802
        %v5804 = vpop.f32.mrb[0].mxu0
        %v5805 = vadd.f32 %v5732, %v5804
        %v5806 = vpop.f32.mrb[0].mxu0
        %v5807 = vadd.f32 %v5734, %v5806
        %5808 = vdwg.mxu0
        %5809 = vmatprep.subr.bf16.mxu0 %v5398
        %5810 = vmatpush1.bf16.msra.mxu0 %v5397
        %5811 = vmatprep.subr.bf16.mxu0 %v5400
        %5812 = vmatpush1.bf16.msra.mxu0 %v5399
        %5813 = vmatprep.subr.bf16.mxu0 %v5402
        %5814 = vmatpush1.bf16.msra.mxu0 %v5401
        %5815 = vmatprep.subr.bf16.mxu0 %v5404
        %5816 = vmatpush1.bf16.msra.mxu0 %v5403
        %5817 = vmatprep.subr.bf16.mxu0 %v5406
        %5818 = vmatpush1.bf16.msra.mxu0 %v5405
        %5819 = vmatprep.subr.bf16.mxu0 %v5408
        %5820 = vmatpush1.bf16.msra.mxu0 %v5407
        %5821 = vmatprep.subr.bf16.mxu0 %v5410
        %5822 = vmatpush1.bf16.msra.mxu0 %v5409
        %5823 = vmatprep.subr.bf16.mxu0 %v5412
        %5824 = vmatpush1.bf16.msra.mxu0 %v5411
        %5825 = vmatprep.subr.bf16.mxu0 %v5414
        %5826 = vmatpush1.bf16.msra.mxu0 %v5413
        %5827 = vmatprep.subr.bf16.mxu0 %v5416
        %5828 = vmatpush1.bf16.msra.mxu0 %v5415
        %5829 = vmatprep.subr.bf16.mxu0 %v5418
        %5830 = vmatpush1.bf16.msra.mxu0 %v5417
        %5831 = vmatprep.subr.bf16.mxu0 %v5420
        %5832 = vmatpush1.bf16.msra.mxu0 %v5419
        %5833 = vmatprep.subr.bf16.mxu0 %v5422
        %5834 = vmatpush1.bf16.msra.mxu0 %v5421
        %5835 = vmatprep.subr.bf16.mxu0 %v5424
        %5836 = vmatpush1.bf16.msra.mxu0 %v5423
        %5837 = vmatprep.subr.bf16.mxu0 %v5426
        %5838 = vmatpush1.bf16.msra.mxu0 %v5425
        %5839 = vmatprep.subr.bf16.mxu0 %v5428
        %5840 = vmatpush1.bf16.msra.mxu0 %v5427
        %5841 = vmatprep.mubr.bf16.mxu0 %v4704
        %5842 = vmatmul.mubr.bf16.gmra.mrb[0].mxu0 %v4688
        %v5843 = vpop.f32.mrb[0].mxu0
        %v5844 = vadd.f32 %v5771, %v5843
        %v5845 = vpop.f32.mrb[0].mxu0
        %v5846 = vadd.f32 %v5773, %v5845
        %v5847 = vpop.f32.mrb[0].mxu0
        %v5848 = vadd.f32 %v5775, %v5847
        %v5849 = vpop.f32.mrb[0].mxu0
        %v5850 = vadd.f32 %v5777, %v5849
        %5851 = vmatprep.mubr.bf16.mxu0 %v4708
        %5852 = vmatmul.mubr.bf16.gmra.mrb[0].mxu0 %v4692
        %v5853 = vpop.f32.mrb[0].mxu0
        %v5854 = vadd.f32 %v5781, %v5853
        %v5855 = vpop.f32.mrb[0].mxu0
        %v5856 = vadd.f32 %v5783, %v5855
        %v5857 = vpop.f32.mrb[0].mxu0
        %v5858 = vadd.f32 %v5785, %v5857
        %v5859 = vpop.f32.mrb[0].mxu0
        %v5860 = vadd.f32 %v5787, %v5859
        %5861 = vmatprep.mubr.bf16.mxu0 %v4736
        %5862 = vmatmul.mubr.bf16.gmra.mrb[0].mxu0 %v4729
        %v5863 = vpop.f32.mrb[0].mxu0
        %v5864 = vadd.f32 %v5791, %v5863
        %v5865 = vpop.f32.mrb[0].mxu0
        %v5866 = vadd.f32 %v5793, %v5865
        %v5867 = vpop.f32.mrb[0].mxu0
        %v5868 = vadd.f32 %v5795, %v5867
        %v5869 = vpop.f32.mrb[0].mxu0
        %v5870 = vadd.f32 %v5797, %v5869
        %5871 = vmatprep.mubr.bf16.mxu0 %v4739
        %5872 = vmatmul.mubr.bf16.gmra.mrb[0].mxu0 %v4732
        %v5873 = vpop.f32.mrb[0].mxu0
        %v5874 = vadd.f32 %v5801, %v5873
        %v5875 = vpop.f32.mrb[0].mxu0
        %v5876 = vadd.f32 %v5803, %v5875
        %v5877 = vpop.f32.mrb[0].mxu0
        %v5878 = vadd.f32 %v5805, %v5877
        %v5879 = vpop.f32.mrb[0].mxu0
        %v5880 = vadd.f32 %v5807, %v5879
        %5881 = vdwg.mxu0
        %5882 = vmatprep.subr.bf16.mxu0 %v5430
        %5883 = vmatpush1.bf16.msra.mxu0 %v5429
        %5884 = vmatprep.subr.bf16.mxu0 %v5432
        %5885 = vmatpush1.bf16.msra.mxu0 %v5431
        %5886 = vmatprep.subr.bf16.mxu0 %v5434
        %5887 = vmatpush1.bf16.msra.mxu0 %v5433
        %5888 = vmatprep.subr.bf16.mxu0 %v5436
        %5889 = vmatpush1.bf16.msra.mxu0 %v5435
        %5890 = vmatprep.subr.bf16.mxu0 %v5438
        %5891 = vmatpush1.bf16.msra.mxu0 %v5437
        %5892 = vmatprep.subr.bf16.mxu0 %v5440
        %5893 = vmatpush1.bf16.msra.mxu0 %v5439
        %5894 = vmatprep.subr.bf16.mxu0 0
        %5895 = vmatpush1.bf16.msra.mxu0 0
        %5896 = vmatprep.subr.bf16.mxu0 0
        %5897 = vmatpush1.bf16.msra.mxu0 0
        %5898 = vmatprep.subr.bf16.mxu0 0
        %5899 = vmatpush1.bf16.msra.mxu0 0
        %5900 = vmatprep.subr.bf16.mxu0 0
        %5901 = vmatpush1.bf16.msra.mxu0 0
        %5902 = vmatprep.subr.bf16.mxu0 0
        %5903 = vmatpush1.bf16.msra.mxu0 0
        %5904 = vmatprep.subr.bf16.mxu0 0
        %5905 = vmatpush1.bf16.msra.mxu0 0
        %5906 = vmatprep.subr.bf16.mxu0 0
        %5907 = vmatpush1.bf16.msra.mxu0 0
        %5908 = vmatprep.subr.bf16.mxu0 0
        %5909 = vmatpush1.bf16.msra.mxu0 0
        %5910 = vmatprep.subr.bf16.mxu0 0
        %5911 = vmatpush1.bf16.msra.mxu0 0
        %5912 = vmatprep.subr.bf16.mxu0 0
        %5913 = vmatpush1.bf16.msra.mxu0 0
        %5914 = vmatprep.mubr.bf16.mxu0 0
        %5915 = vmatmul.mubr.bf16.gmra.mrb[0].mxu0 %v5581
        %v5916 = vpop.f32.mrb[0].mxu0
        %v5917 = vadd.f32 %v5844, %v5916
        %v5918 = vpop.f32.mrb[0].mxu0
        %v5919 = vadd.f32 %v5846, %v5918
        %v5920 = vpop.f32.mrb[0].mxu0
        %v5921 = vadd.f32 %v5848, %v5920
        %v5922 = vpop.f32.mrb[0].mxu0
        %v5923 = vadd.f32 %v5850, %v5922
        %5924 = vmatprep.mubr.bf16.mxu0 0
        %5925 = vmatmul.mubr.bf16.gmra.mrb[0].mxu0 %v5583
        %v5926 = vpop.f32.mrb[0].mxu0
        %v5927 = vadd.f32 %v5854, %v5926
        %v5928 = vpop.f32.mrb[0].mxu0
        %v5929 = vadd.f32 %v5856, %v5928
        %v5930 = vpop.f32.mrb[0].mxu0
        %v5931 = vadd.f32 %v5858, %v5930
        %v5932 = vpop.f32.mrb[0].mxu0
        %v5933 = vadd.f32 %v5860, %v5932
        %5934 = vmatprep.mubr.bf16.mxu0 0
        %5935 = vmatmul.mubr.bf16.gmra.mrb[0].mxu0 %v5586
        %v5936 = vpop.f32.mrb[0].mxu0
        %v5937 = vadd.f32 %v5864, %v5936
        %v5938 = vpop.f32.mrb[0].mxu0
        %v5939 = vadd.f32 %v5866, %v5938
        %v5940 = vpop.f32.mrb[0].mxu0
        %v5941 = vadd.f32 %v5868, %v5940
        %v5942 = vpop.f32.mrb[0].mxu0
        %v5943 = vadd.f32 %v5870, %v5942
        %5944 = vmatprep.mubr.bf16.mxu0 0
        %5945 = vmatmul.mubr.bf16.gmra.mrb[0].mxu0 %v5588
        %v5946 = vpop.f32.mrb[0].mxu0
        %v5947 = vadd.f32 %v5874, %v5946
        %v5948 = vpop.f32.mrb[0].mxu0
        %v5949 = vadd.f32 %v5876, %v5948
        %v5950 = vpop.f32.mrb[0].mxu0
        %v5951 = vadd.f32 %v5878, %v5950
        %v5952 = vpop.f32.mrb[0].mxu0
        %v5953 = vadd.f32 %v5880, %v5952
        %5954 = vdwg.mxu0
        %v5955 = vld [vmem:[%s8] sm:$0x3]
        %v5957 = vlaneseq
        %v5958 = vshrl.u32 %v5957, 7
        %v5959 = vsub.s32 0, %v5958
        %v5960 = vrot.slane %v5955, %v5959
        %v5961 = vlaneseq
        %v5962 = vshrl.u32 %v5961, 7
        %v5963 = vsub.s32 1, %v5962
        %v5964 = vrot.slane %v5955, %v5963
        %v5967 = vmul.f32 %v5917, %v5960
        %v5968 = vmul.f32 %v5919, %v5964
        %v5969 = vmul.f32 %v5921, %v5960
        %v5970 = vmul.f32 %v5923, %v5964
        %v5971 = vmul.f32 %v5927, %v5960
        %v5972 = vmul.f32 %v5929, %v5964
        %v5973 = vmul.f32 %v5931, %v5960
        %v5974 = vmul.f32 %v5933, %v5964
        %v5975 = vmul.f32 %v5937, %v5960
        %v5976 = vmul.f32 %v5939, %v5964
        %v5977 = vmul.f32 %v5941, %v5960
        %v5978 = vmul.f32 %v5943, %v5964
        %v5979 = vmul.f32 %v5947, %v5960
        %v5980 = vmul.f32 %v5949, %v5964
        %v5981 = vmul.f32 %v5951, %v5960
        %v5982 = vmul.f32 %v5953, %v5964
        %v5983 = vld [vmem:[%s9] sm:$0x3]
        %v5985 = vlaneseq
        %v5986 = vshrl.u32 %v5985, 7
        %v5987 = vsub.s32 0, %v5986
        %v5988 = vrot.slane %v5983, %v5987
        %v5989 = vlaneseq
        %v5990 = vshrl.u32 %v5989, 7
        %v5991 = vsub.s32 1, %v5990
        %v5992 = vrot.slane %v5983, %v5991
        %v5995 = vadd.f32 %v5967, %v5988
        %v5996 = vadd.f32 %v5968, %v5992
        %v5997 = vadd.f32 %v5969, %v5988
        %v5998 = vadd.f32 %v5970, %v5992
        %v5999 = vadd.f32 %v5971, %v5988
        %v6000 = vadd.f32 %v5972, %v5992
        %v6001 = vadd.f32 %v5973, %v5988
        %v6002 = vadd.f32 %v5974, %v5992
        %v6003 = vadd.f32 %v5975, %v5988
        %v6004 = vadd.f32 %v5976, %v5992
        %v6005 = vadd.f32 %v5977, %v5988
        %v6006 = vadd.f32 %v5978, %v5992
        %v6007 = vadd.f32 %v5979, %v5988
        %v6008 = vadd.f32 %v5980, %v5992
        %v6009 = vadd.f32 %v5981, %v5988
        %v6010 = vadd.f32 %v5982, %v5992
        %v6011 = vmax.f32 %v5995, 0.0
        %v6012 = vmax.f32 %v5996, 0.0
        %v6013 = vmax.f32 %v5997, 0.0
        %v6014 = vmax.f32 %v5998, 0.0
        %v6015 = vmax.f32 %v5999, 0.0
        %v6016 = vmax.f32 %v6000, 0.0
        %v6017 = vmax.f32 %v6001, 0.0
        %v6018 = vmax.f32 %v6002, 0.0
        %v6019 = vmax.f32 %v6003, 0.0
        %v6020 = vmax.f32 %v6004, 0.0
        %v6021 = vmax.f32 %v6005, 0.0
        %v6022 = vmax.f32 %v6006, 0.0
        %v6023 = vmax.f32 %v6007, 0.0
        %v6024 = vmax.f32 %v6008, 0.0
        %v6025 = vmax.f32 %v6009, 0.0
        %v6026 = vmax.f32 %v6010, 0.0
        %6043 = vrot.lane.b32.xlu0 %v2877, 64
        %v6044 = vpop.permute.xlu0 %6043
        %6045 = vrot.lane.b32.xlu0 %v2878, 64
        %v6046 = vpop.permute.xlu0 %6045
        %6047 = vrot.lane.b32.xlu0 %v2880, 64
        %v6048 = vpop.permute.xlu0 %6047
        %6049 = vrot.lane.b32.xlu0 %v2881, 64
        %v6050 = vpop.permute.xlu0 %6049
        %6051 = vrot.lane.b32.xlu0 %v2883, 64
        %v6052 = vpop.permute.xlu0 %6051
        %6053 = vrot.lane.b32.xlu0 %v2884, 64
        %v6054 = vpop.permute.xlu0 %6053
        %6055 = vrot.lane.b32.xlu0 %v2886, 64
        %v6056 = vpop.permute.xlu0 %6055
        %6057 = vrot.lane.b32.xlu0 %v2887, 64
        %v6058 = vpop.permute.xlu0 %6057
        %6059 = vrot.lane.b32.xlu0 %v2889, 64
        %v6060 = vpop.permute.xlu0 %6059
        %6061 = vrot.lane.b32.xlu0 %v2890, 64
        %v6062 = vpop.permute.xlu0 %6061
        %6063 = vrot.lane.b32.xlu0 %v2892, 64
        %v6064 = vpop.permute.xlu0 %6063
        %6065 = vrot.lane.b32.xlu0 %v2893, 64
        %v6066 = vpop.permute.xlu0 %6065
        %6067 = vrot.lane.b32.xlu0 %v2895, 64
        %v6068 = vpop.permute.xlu0 %6067
        %6069 = vrot.lane.b32.xlu0 %v2896, 64
        %v6070 = vpop.permute.xlu0 %6069
        %6071 = vrot.lane.b32.xlu0 %v2898, 64
        %v6072 = vpop.permute.xlu0 %6071
        %6073 = vrot.lane.b32.xlu0 %v2899, 64
        %v6074 = vpop.permute.xlu0 %6073
        %v6075 = vsel %vm4694, %v6044, %v6046
        %v6076 = vsel %vm4694, %v6048, %v6050
        %v6077 = vsel %vm4694, %v6052, %v6054
        %v6078 = vsel %vm4694, %v6056, %v6058
        %v6079 = vsel %vm4694, %v6060, %v6062
        %v6080 = vsel %vm4694, %v6064, %v6066
        %v6081 = vsel %vm4694, %v6068, %v6070
        %v6082 = vsel %vm4694, %v6072, %v6074
        %v6099 = vsel %vm4694, %v6012, %v6044
        %v6100 = vsel %vm4694, %v6014, %v6048
        %v6101 = vsel %vm4694, %v6016, %v6052
        %v6102 = vsel %vm4694, %v6018, %v6056
        %v6103 = vsel %vm4694, %v6020, %v6060
        %v6104 = vsel %vm4694, %v6022, %v6064
        %v6105 = vsel %vm4694, %v6024, %v6068
        %v6106 = vsel %vm4694, %v6026, %v6072
        %v6107 = vpack.c.bf16 %v6013, %v6011
        %v6108 = vpack.c.bf16 %v6100, %v6099
        %v6109 = vpack.c.bf16 %v6076, %v6075
        %v6110 = vpack.c.bf16 %v6017, %v6015
        %v6111 = vpack.c.bf16 %v6102, %v6101
        %v6112 = vpack.c.bf16 %v6078, %v6077
        %v6113 = vpack.c.bf16 %v6021, %v6019
        %v6114 = vpack.c.bf16 %v6104, %v6103
        %v6115 = vpack.c.bf16 %v6080, %v6079
        %v6116 = vpack.c.bf16 %v6025, %v6023
        %v6117 = vpack.c.bf16 %v6106, %v6105
        %v6118 = vpack.c.bf16 %v6082, %v6081
        %v6119 = vld [vmem:[%s10] sm:$0xff]
        %v6120 = vld [vmem:[%s10 + $0x8] sm:$0xff]
        %v6121 = vld [vmem:[%s10 + $0x10] sm:$0xff]
        %v6122 = vld [vmem:[%s10 + $0x18] sm:$0xff]
        %v6123 = vld [vmem:[%s10 + $0x20] sm:$0xf]
        %v6124 = vld [vmem:[%s10 + $0x24] sm:$0xff]
        %v6125 = vld [vmem:[%s10 + $0x2c] sm:$0xff]
        %v6126 = vld [vmem:[%s10 + $0x34] sm:$0xff]
        %v6127 = vld [vmem:[%s10 + $0x3c] sm:$0xff]
        %v6128 = vld [vmem:[%s10 + $0x44] sm:$0xf]
        %v6129 = vld [vmem:[%s10 + $0x48] sm:$0xff]
        %v6130 = vld [vmem:[%s10 + $0x50] sm:$0xff]
        %v6131 = vld [vmem:[%s10 + $0x58] sm:$0xff]
        %v6132 = vld [vmem:[%s10 + $0x60] sm:$0xff]
        %v6133 = vld [vmem:[%s10 + $0x68] sm:$0xf]
        %v6134 = vld [vmem:[%s10 + $0x6c] sm:$0xff]
        %v6135 = vld [vmem:[%s10 + $0x74] sm:$0xff]
        %v6136 = vld [vmem:[%s10 + $0x7c] sm:$0xff]
        %v6137 = vld [vmem:[%s10 + $0x84] sm:$0xff]
        %v6138 = vld [vmem:[%s10 + $0x8c] sm:$0xf]
        %v6139 = vld [vmem:[%s10 + $0x90] sm:$0xff]
        %v6140 = vld [vmem:[%s10 + $0x98] sm:$0xff]
        %v6141 = vld [vmem:[%s10 + $0xa0] sm:$0xff]
        %v6142 = vld [vmem:[%s10 + $0xa8] sm:$0xff]
        %v6143 = vld [vmem:[%s10 + $0xb0] sm:$0xf]
        %v6144 = vld [vmem:[%s10 + $0xb4] sm:$0xff]
        %v6145 = vld [vmem:[%s10 + $0xbc] sm:$0xff]
        %v6146 = vld [vmem:[%s10 + $0xc4] sm:$0xff]
        %v6147 = vld [vmem:[%s10 + $0xcc] sm:$0xff]
        %v6148 = vld [vmem:[%s10 + $0xd4] sm:$0xf]
        %v6149 = vld [vmem:[%s10 + $0xd8] sm:$0xff]
        %v6150 = vld [vmem:[%s10 + $0xe0] sm:$0xff]
        %v6151 = vld [vmem:[%s10 + $0xe8] sm:$0xff]
        %v6152 = vld [vmem:[%s10 + $0xf0] sm:$0xff]
        %v6153 = vld [vmem:[%s10 + $0xf8] sm:$0xf]
        %v6154 = vld [vmem:[%s10 + $0xfc] sm:$0xff]
        %v6155 = vld [vmem:[%s10 + $0x104] sm:$0xff]
        %v6156 = vld [vmem:[%s10 + $0x10c] sm:$0xff]
        %v6157 = vld [vmem:[%s10 + $0x114] sm:$0xff]
        %v6158 = vld [vmem:[%s10 + $0x11c] sm:$0xf]
        %v6159 = vld [vmem:[%s10 + $0x120] sm:$0xff]
        %v6160 = vld [vmem:[%s10 + $0x128] sm:$0xff]
        %v6161 = vld [vmem:[%s10 + $0x130] sm:$0xff]
        %v6162 = vld [vmem:[%s10 + $0x138] sm:$0xff]
        %v6163 = vld [vmem:[%s10 + $0x140] sm:$0xf]
        %v6164 = vld [vmem:[%s10 + $0x144] sm:$0xff]
        %v6165 = vld [vmem:[%s10 + $0x14c] sm:$0xff]
        %v6166 = vld [vmem:[%s10 + $0x154] sm:$0xff]
        %v6167 = vld [vmem:[%s10 + $0x15c] sm:$0xff]
        %v6168 = vld [vmem:[%s10 + $0x164] sm:$0xf]
        %v6169 = vld [vmem:[%s10 + $0x168] sm:$0xff]
        %v6170 = vld [vmem:[%s10 + $0x170] sm:$0xff]
        %v6171 = vld [vmem:[%s10 + $0x178] sm:$0xff]
        %v6172 = vld [vmem:[%s10 + $0x180] sm:$0xff]
        %v6173 = vld [vmem:[%s10 + $0x188] sm:$0xf]
        %v6174 = vld [vmem:[%s10 + $0x18c] sm:$0xff]
        %v6175 = vld [vmem:[%s10 + $0x194] sm:$0xff]
        %v6176 = vld [vmem:[%s10 + $0x19c] sm:$0xff]
        %v6177 = vld [vmem:[%s10 + $0x1a4] sm:$0xff]
        %v6178 = vld [vmem:[%s10 + $0x1ac] sm:$0xf]
        %v6179 = vld [vmem:[%s10 + $0x1b0] sm:$0xff]
        %v6180 = vld [vmem:[%s10 + $0x1b8] sm:$0xff]
        %v6181 = vld [vmem:[%s10 + $0x1c0] sm:$0xff]
        %v6182 = vld [vmem:[%s10 + $0x1c8] sm:$0xff]
        %v6183 = vld [vmem:[%s10 + $0x1d0] sm:$0xf]
        %v6184 = vld [vmem:[%s10 + $0x1d4] sm:$0xff]
        %v6185 = vld [vmem:[%s10 + $0x1dc] sm:$0xff]
        %v6186 = vld [vmem:[%s10 + $0x1e4] sm:$0xff]
        %v6187 = vld [vmem:[%s10 + $0x1ec] sm:$0xff]
        %v6188 = vld [vmem:[%s10 + $0x1f4] sm:$0xf]
        %v6189 = vld [vmem:[%s10 + $0x1f8] sm:$0xff]
        %v6190 = vld [vmem:[%s10 + $0x200] sm:$0xff]
        %v6191 = vld [vmem:[%s10 + $0x208] sm:$0xff]
        %v6192 = vld [vmem:[%s10 + $0x210] sm:$0xff]
        %v6193 = vld [vmem:[%s10 + $0x218] sm:$0xf]
        %v6194 = vld [vmem:[%s10 + $0x21c] sm:$0xff]
        %v6195 = vld [vmem:[%s10 + $0x224] sm:$0xff]
        %v6196 = vld [vmem:[%s10 + $0x22c] sm:$0xff]
        %v6197 = vld [vmem:[%s10 + $0x234] sm:$0xff]
        %v6198 = vld [vmem:[%s10 + $0x23c] sm:$0xf]
        %v6199 = vld [vmem:[%s10 + $0x240] sm:$0xff]
        %v6200 = vld [vmem:[%s10 + $0x248] sm:$0xff]
        %v6201 = vld [vmem:[%s10 + $0x250] sm:$0xff]
        %v6202 = vld [vmem:[%s10 + $0x258] sm:$0xff]
        %v6203 = vld [vmem:[%s10 + $0x260] sm:$0xf]
        %v6204 = vld [vmem:[%s10 + $0x264] sm:$0xff]
        %v6205 = vld [vmem:[%s10 + $0x26c] sm:$0xff]
        %v6206 = vld [vmem:[%s10 + $0x274] sm:$0xff]
        %v6207 = vld [vmem:[%s10 + $0x27c] sm:$0xff]
        %v6208 = vld [vmem:[%s10 + $0x284] sm:$0xf]
        %v6209 = vld [vmem:[%s10 + $0x288] sm:$0xff]
        %v6210 = vld [vmem:[%s10 + $0x290] sm:$0xff]
        %v6211 = vld [vmem:[%s10 + $0x298] sm:$0xff]
        %v6212 = vld [vmem:[%s10 + $0x2a0] sm:$0xff]
        %v6213 = vld [vmem:[%s10 + $0x2a8] sm:$0xf]
        %v6214 = vld [vmem:[%s10 + $0x2ac] sm:$0xff]
        %v6215 = vld [vmem:[%s10 + $0x2b4] sm:$0xff]
        %v6216 = vld [vmem:[%s10 + $0x2bc] sm:$0xff]
        %v6217 = vld [vmem:[%s10 + $0x2c4] sm:$0xff]
        %v6218 = vld [vmem:[%s10 + $0x2cc] sm:$0xf]
        %v6219 = vld [vmem:[%s10 + $0x2d0] sm:$0xff]
        %v6220 = vld [vmem:[%s10 + $0x2d8] sm:$0xff]
        %v6221 = vld [vmem:[%s10 + $0x2e0] sm:$0xff]
        %v6222 = vld [vmem:[%s10 + $0x2e8] sm:$0xff]
        %v6223 = vld [vmem:[%s10 + $0x2f0] sm:$0xf]
        %v6224 = vld [vmem:[%s10 + $0x2f4] sm:$0xff]
        %v6225 = vld [vmem:[%s10 + $0x2fc] sm:$0xff]
        %v6226 = vld [vmem:[%s10 + $0x304] sm:$0xff]
        %v6227 = vld [vmem:[%s10 + $0x30c] sm:$0xff]
        %v6228 = vld [vmem:[%s10 + $0x314] sm:$0xf]
        %v6229 = vld [vmem:[%s10 + $0x318] sm:$0xff]
        %v6230 = vld [vmem:[%s10 + $0x320] sm:$0xff]
        %v6231 = vld [vmem:[%s10 + $0x328] sm:$0xff]
        %v6232 = vld [vmem:[%s10 + $0x330] sm:$0xff]
        %v6233 = vld [vmem:[%s10 + $0x338] sm:$0xf]
        %v6234 = vld [vmem:[%s10 + $0x33c] sm:$0xff]
        %v6235 = vld [vmem:[%s10 + $0x344] sm:$0xff]
        %v6236 = vld [vmem:[%s10 + $0x34c] sm:$0xff]
        %v6237 = vld [vmem:[%s10 + $0x354] sm:$0xff]
        %v6238 = vld [vmem:[%s10 + $0x35c] sm:$0xf]
        %v6239 = vld [vmem:[%s10 + $0x360] sm:$0xff]
        %v6240 = vld [vmem:[%s10 + $0x368] sm:$0xff]
        %v6241 = vld [vmem:[%s10 + $0x370] sm:$0xff]
        %v6242 = vld [vmem:[%s10 + $0x378] sm:$0xff]
        %v6243 = vld [vmem:[%s10 + $0x380] sm:$0xf]
        %v6244 = vld [vmem:[%s10 + $0x384] sm:$0xff]
        %v6245 = vld [vmem:[%s10 + $0x38c] sm:$0xff]
        %v6246 = vld [vmem:[%s10 + $0x394] sm:$0xff]
        %v6247 = vld [vmem:[%s10 + $0x39c] sm:$0xff]
        %v6248 = vld [vmem:[%s10 + $0x3a4] sm:$0xf]
        %v6249 = vld [vmem:[%s10 + $0x3a8] sm:$0xff]
        %v6250 = vld [vmem:[%s10 + $0x3b0] sm:$0xff]
        %v6251 = vld [vmem:[%s10 + $0x3b8] sm:$0xff]
        %v6252 = vld [vmem:[%s10 + $0x3c0] sm:$0xff]
        %v6253 = vld [vmem:[%s10 + $0x3c8] sm:$0xf]
        %v6254 = vld [vmem:[%s10 + $0x3cc] sm:$0xff]
        %v6255 = vld [vmem:[%s10 + $0x3d4] sm:$0xff]
        %v6256 = vld [vmem:[%s10 + $0x3dc] sm:$0xff]
        %v6257 = vld [vmem:[%s10 + $0x3e4] sm:$0xff]
        %v6258 = vld [vmem:[%s10 + $0x3ec] sm:$0xf]
        %v6259 = vld [vmem:[%s10 + $0x3f0] sm:$0xff]
        %v6260 = vld [vmem:[%s10 + $0x3f8] sm:$0xff]
        %v6261 = vld [vmem:[%s10 + $0x400] sm:$0xff]
        %v6262 = vld [vmem:[%s10 + $0x408] sm:$0xff]
        %v6263 = vld [vmem:[%s10 + $0x410] sm:$0xf]
        %v6264 = vld [vmem:[%s10 + $0x414] sm:$0xff]
        %v6265 = vld [vmem:[%s10 + $0x41c] sm:$0xff]
        %v6266 = vld [vmem:[%s10 + $0x424] sm:$0xff]
        %v6267 = vld [vmem:[%s10 + $0x42c] sm:$0xff]
        %v6268 = vld [vmem:[%s10 + $0x434] sm:$0xf]
        %v6269 = vld [vmem:[%s10 + $0x438] sm:$0xff]
        %v6270 = vld [vmem:[%s10 + $0x440] sm:$0xff]
        %v6271 = vld [vmem:[%s10 + $0x448] sm:$0xff]
        %v6272 = vld [vmem:[%s10 + $0x450] sm:$0xff]
        %v6273 = vld [vmem:[%s10 + $0x458] sm:$0xf]
        %v6274 = vld [vmem:[%s10 + $0x45c] sm:$0xff]
        %v6275 = vld [vmem:[%s10 + $0x464] sm:$0xff]
        %v6276 = vld [vmem:[%s10 + $0x46c] sm:$0xff]
        %v6277 = vld [vmem:[%s10 + $0x474] sm:$0xff]
        %v6278 = vld [vmem:[%s10 + $0x47c] sm:$0xf]
        %v6279 = vld [vmem:[%s10 + $0x480] sm:$0xff]
        %v6280 = vld [vmem:[%s10 + $0x488] sm:$0xff]
        %v6281 = vld [vmem:[%s10 + $0x490] sm:$0xff]
        %v6282 = vld [vmem:[%s10 + $0x498] sm:$0xff]
        %v6283 = vld [vmem:[%s10 + $0x4a0] sm:$0xf]
        %v6284 = vld [vmem:[%s10 + $0x4a4] sm:$0xff]
        %v6285 = vld [vmem:[%s10 + $0x4ac] sm:$0xff]
        %v6286 = vld [vmem:[%s10 + $0x4b4] sm:$0xff]
        %v6287 = vld [vmem:[%s10 + $0x4bc] sm:$0xff]
        %v6288 = vld [vmem:[%s10 + $0x4c4] sm:$0xf]
        %v6289 = vld [vmem:[%s10 + $0x4c8] sm:$0xff]
        %v6290 = vld [vmem:[%s10 + $0x4d0] sm:$0xff]
        %v6291 = vld [vmem:[%s10 + $0x4d8] sm:$0xff]
        %v6292 = vld [vmem:[%s10 + $0x4e0] sm:$0xff]
        %v6293 = vld [vmem:[%s10 + $0x4e8] sm:$0xf]
        %v6294 = vld [vmem:[%s10 + $0x4ec] sm:$0xff]
        %v6295 = vld [vmem:[%s10 + $0x4f4] sm:$0xff]
        %v6296 = vld [vmem:[%s10 + $0x4fc] sm:$0xff]
        %v6297 = vld [vmem:[%s10 + $0x504] sm:$0xff]
        %v6298 = vld [vmem:[%s10 + $0x50c] sm:$0xf]
        %v6299 = vld [vmem:[%s10 + $0x510] sm:$0xff]
        %v6300 = vld [vmem:[%s10 + $0x518] sm:$0xff]
        %v6301 = vld [vmem:[%s10 + $0x520] sm:$0xff]
        %v6302 = vld [vmem:[%s10 + $0x528] sm:$0xff]
        %v6303 = vld [vmem:[%s10 + $0x530] sm:$0xf]
        %v6304 = vld [vmem:[%s10 + $0x534] sm:$0xff]
        %v6305 = vld [vmem:[%s10 + $0x53c] sm:$0xff]
        %v6306 = vld [vmem:[%s10 + $0x544] sm:$0xff]
        %v6307 = vld [vmem:[%s10 + $0x54c] sm:$0xff]
        %v6308 = vld [vmem:[%s10 + $0x554] sm:$0xf]
        %v6309 = vld [vmem:[%s10 + $0x558] sm:$0xff]
        %v6310 = vld [vmem:[%s10 + $0x560] sm:$0xff]
        %v6311 = vld [vmem:[%s10 + $0x568] sm:$0xff]
        %v6312 = vld [vmem:[%s10 + $0x570] sm:$0xff]
        %v6313 = vld [vmem:[%s10 + $0x578] sm:$0xf]
        %v6314 = vld [vmem:[%s10 + $0x57c] sm:$0xff]
        %v6315 = vld [vmem:[%s10 + $0x584] sm:$0xff]
        %v6316 = vld [vmem:[%s10 + $0x58c] sm:$0xff]
        %v6317 = vld [vmem:[%s10 + $0x594] sm:$0xff]
        %v6318 = vld [vmem:[%s10 + $0x59c] sm:$0xf]
        %v6319 = vld [vmem:[%s10 + $0x5a0] sm:$0xff]
        %v6320 = vld [vmem:[%s10 + $0x5a8] sm:$0xff]
        %v6321 = vld [vmem:[%s10 + $0x5b0] sm:$0xff]
        %v6322 = vld [vmem:[%s10 + $0x5b8] sm:$0xff]
        %v6323 = vld [vmem:[%s10 + $0x5c0] sm:$0xf]
        %v6324 = vld [vmem:[%s10 + $0x5c4] sm:$0xff]
        %v6325 = vld [vmem:[%s10 + $0x5cc] sm:$0xff]
        %v6326 = vld [vmem:[%s10 + $0x5d4] sm:$0xff]
        %v6327 = vld [vmem:[%s10 + $0x5dc] sm:$0xff]
        %v6328 = vld [vmem:[%s10 + $0x5e4] sm:$0xf]
        %v6329 = vld [vmem:[%s10 + $0x5e8] sm:$0xff]
        %v6330 = vld [vmem:[%s10 + $0x5f0] sm:$0xff]
        %v6331 = vld [vmem:[%s10 + $0x5f8] sm:$0xff]
        %v6332 = vld [vmem:[%s10 + $0x600] sm:$0xff]
        %v6333 = vld [vmem:[%s10 + $0x608] sm:$0xf]
        %v6334 = vld [vmem:[%s10 + $0x60c] sm:$0xff]
        %v6335 = vld [vmem:[%s10 + $0x614] sm:$0xff]
        %v6336 = vld [vmem:[%s10 + $0x61c] sm:$0xff]
        %v6337 = vld [vmem:[%s10 + $0x624] sm:$0xff]
        %v6338 = vld [vmem:[%s10 + $0x62c] sm:$0xf]
        %v6339 = vld [vmem:[%s10 + $0x630] sm:$0xff]
        %v6340 = vld [vmem:[%s10 + $0x638] sm:$0xff]
        %v6341 = vld [vmem:[%s10 + $0x640] sm:$0xff]
        %v6342 = vld [vmem:[%s10 + $0x648] sm:$0xff]
        %v6343 = vld [vmem:[%s10 + $0x650] sm:$0xf]
        %v6344 = vld [vmem:[%s10 + $0x654] sm:$0xff]
        %v6345 = vld [vmem:[%s10 + $0x65c] sm:$0xff]
        %v6346 = vld [vmem:[%s10 + $0x664] sm:$0xff]
        %v6347 = vld [vmem:[%s10 + $0x66c] sm:$0xff]
        %v6348 = vld [vmem:[%s10 + $0x674] sm:$0xf]
        %v6349 = vld [vmem:[%s10 + $0x678] sm:$0xff]
        %v6350 = vld [vmem:[%s10 + $0x680] sm:$0xff]
        %v6351 = vld [vmem:[%s10 + $0x688] sm:$0xff]
        %v6352 = vld [vmem:[%s10 + $0x690] sm:$0xff]
        %v6353 = vld [vmem:[%s10 + $0x698] sm:$0xf]
        %v6354 = vld [vmem:[%s10 + $0x69c] sm:$0xff]
        %v6355 = vld [vmem:[%s10 + $0x6a4] sm:$0xff]
        %v6356 = vld [vmem:[%s10 + $0x6ac] sm:$0xff]
        %v6357 = vld [vmem:[%s10 + $0x6b4] sm:$0xff]
        %v6358 = vld [vmem:[%s10 + $0x6bc] sm:$0xf]
        %v6599 = vunpack.c.l.b16 %v6119
        %v6600 = vunpack.c.h.b16 %v6119
        %v6601 = vunpack.c.l.b16 %v6120
        %v6602 = vunpack.c.h.b16 %v6120
        %v6603 = vunpack.c.l.b16 %v6121
        %v6604 = vunpack.c.h.b16 %v6121
        %v6605 = vunpack.c.l.b16 %v6122
        %v6606 = vunpack.c.h.b16 %v6122
        %v6607 = vunpack.c.l.b16 %v6123
        %v6608 = vunpack.c.l.b16 %v6124
        %v6609 = vunpack.c.h.b16 %v6124
        %v6610 = vunpack.c.l.b16 %v6125
        %v6611 = vunpack.c.h.b16 %v6125
        %v6612 = vunpack.c.l.b16 %v6126
        %v6613 = vunpack.c.h.b16 %v6126
        %v6614 = vunpack.c.l.b16 %v6127
        %v6615 = vunpack.c.h.b16 %v6127
        %v6616 = vunpack.c.l.b16 %v6128
        %v6617 = vunpack.c.l.b16 %v6129
        %v6618 = vunpack.c.h.b16 %v6129
        %v6619 = vunpack.c.l.b16 %v6130
        %v6620 = vunpack.c.h.b16 %v6130
        %v6621 = vunpack.c.l.b16 %v6131
        %v6622 = vunpack.c.h.b16 %v6131
        %v6623 = vunpack.c.l.b16 %v6132
        %v6624 = vunpack.c.h.b16 %v6132
        %v6625 = vunpack.c.l.b16 %v6133
        %v6626 = vunpack.c.l.b16 %v6134
        %v6627 = vunpack.c.h.b16 %v6134
        %v6628 = vunpack.c.l.b16 %v6135
        %v6629 = vunpack.c.h.b16 %v6135
        %v6630 = vunpack.c.l.b16 %v6136
        %v6631 = vunpack.c.h.b16 %v6136
        %v6632 = vunpack.c.l.b16 %v6137
        %v6633 = vunpack.c.h.b16 %v6137
        %v6634 = vunpack.c.l.b16 %v6138
        %v6635 = vunpack.c.l.b16 %v6139
        %v6636 = vunpack.c.h.b16 %v6139
        %v6637 = vunpack.c.l.b16 %v6140
        %v6638 = vunpack.c.h.b16 %v6140
        %v6639 = vunpack.c.l.b16 %v6141
        %v6640 = vunpack.c.h.b16 %v6141
        %v6641 = vunpack.c.l.b16 %v6142
        %v6642 = vunpack.c.h.b16 %v6142
        %v6643 = vunpack.c.l.b16 %v6143
        %v6644 = vunpack.c.l.b16 %v6144
        %v6645 = vunpack.c.h.b16 %v6144
        %v6646 = vunpack.c.l.b16 %v6145
        %v6647 = vunpack.c.h.b16 %v6145
        %v6648 = vunpack.c.l.b16 %v6146
        %v6649 = vunpack.c.h.b16 %v6146
        %v6650 = vunpack.c.l.b16 %v6147
        %v6651 = vunpack.c.h.b16 %v6147
        %v6652 = vunpack.c.l.b16 %v6148
        %v6653 = vunpack.c.l.b16 %v6149
        %v6654 = vunpack.c.h.b16 %v6149
        %v6655 = vunpack.c.l.b16 %v6150
        %v6656 = vunpack.c.h.b16 %v6150
        %v6657 = vunpack.c.l.b16 %v6151
        %v6658 = vunpack.c.h.b16 %v6151
        %v6659 = vunpack.c.l.b16 %v6152
        %v6660 = vunpack.c.h.b16 %v6152
        %v6661 = vunpack.c.l.b16 %v6153
        %v6662 = vunpack.c.l.b16 %v6154
        %v6663 = vunpack.c.h.b16 %v6154
        %v6664 = vunpack.c.l.b16 %v6155
        %v6665 = vunpack.c.h.b16 %v6155
        %v6666 = vunpack.c.l.b16 %v6156
        %v6667 = vunpack.c.h.b16 %v6156
        %v6668 = vunpack.c.l.b16 %v6157
        %v6669 = vunpack.c.h.b16 %v6157
        %v6670 = vunpack.c.l.b16 %v6158
        %v6671 = vunpack.c.l.b16 %v6159
        %v6672 = vunpack.c.h.b16 %v6159
        %v6673 = vunpack.c.l.b16 %v6160
        %v6674 = vunpack.c.h.b16 %v6160
        %v6675 = vunpack.c.l.b16 %v6161
        %v6676 = vunpack.c.h.b16 %v6161
        %v6677 = vunpack.c.l.b16 %v6162
        %v6678 = vunpack.c.h.b16 %v6162
        %v6679 = vunpack.c.l.b16 %v6163
        %v6680 = vunpack.c.l.b16 %v6164
        %v6681 = vunpack.c.h.b16 %v6164
        %v6682 = vunpack.c.l.b16 %v6165
        %v6683 = vunpack.c.h.b16 %v6165
        %v6684 = vunpack.c.l.b16 %v6166
        %v6685 = vunpack.c.h.b16 %v6166
        %v6686 = vunpack.c.l.b16 %v6167
        %v6687 = vunpack.c.h.b16 %v6167
        %v6688 = vunpack.c.l.b16 %v6168
        %v6689 = vunpack.c.l.b16 %v6169
        %v6690 = vunpack.c.h.b16 %v6169
        %v6691 = vunpack.c.l.b16 %v6170
        %v6692 = vunpack.c.h.b16 %v6170
        %v6693 = vunpack.c.l.b16 %v6171
        %v6694 = vunpack.c.h.b16 %v6171
        %v6695 = vunpack.c.l.b16 %v6172
        %v6696 = vunpack.c.h.b16 %v6172
        %v6697 = vunpack.c.l.b16 %v6173
        %v6698 = vunpack.c.l.b16 %v6174
        %v6699 = vunpack.c.h.b16 %v6174
        %v6700 = vunpack.c.l.b16 %v6175
        %v6701 = vunpack.c.h.b16 %v6175
        %v6702 = vunpack.c.l.b16 %v6176
        %v6703 = vunpack.c.h.b16 %v6176
        %v6704 = vunpack.c.l.b16 %v6177
        %v6705 = vunpack.c.h.b16 %v6177
        %v6706 = vunpack.c.l.b16 %v6178
        %v6707 = vunpack.c.l.b16 %v6179
        %v6708 = vunpack.c.h.b16 %v6179
        %v6709 = vunpack.c.l.b16 %v6180
        %v6710 = vunpack.c.h.b16 %v6180
        %v6711 = vunpack.c.l.b16 %v6181
        %v6712 = vunpack.c.h.b16 %v6181
        %v6713 = vunpack.c.l.b16 %v6182
        %v6714 = vunpack.c.h.b16 %v6182
        %v6715 = vunpack.c.l.b16 %v6183
        %v6716 = vunpack.c.l.b16 %v6184
        %v6717 = vunpack.c.h.b16 %v6184
        %v6718 = vunpack.c.l.b16 %v6185
        %v6719 = vunpack.c.h.b16 %v6185
        %v6720 = vunpack.c.l.b16 %v6186
        %v6721 = vunpack.c.h.b16 %v6186
        %v6722 = vunpack.c.l.b16 %v6187
        %v6723 = vunpack.c.h.b16 %v6187
        %v6724 = vunpack.c.l.b16 %v6188
        %v6725 = vunpack.c.l.b16 %v6189
        %v6726 = vunpack.c.h.b16 %v6189
        %v6727 = vunpack.c.l.b16 %v6190
        %v6728 = vunpack.c.h.b16 %v6190
        %v6729 = vunpack.c.l.b16 %v6191
        %v6730 = vunpack.c.h.b16 %v6191
        %v6731 = vunpack.c.l.b16 %v6192
        %v6732 = vunpack.c.h.b16 %v6192
        %v6733 = vunpack.c.l.b16 %v6193
        %v6734 = vunpack.c.l.b16 %v6194
        %v6735 = vunpack.c.h.b16 %v6194
        %v6736 = vunpack.c.l.b16 %v6195
        %v6737 = vunpack.c.h.b16 %v6195
        %v6738 = vunpack.c.l.b16 %v6196
        %v6739 = vunpack.c.h.b16 %v6196
        %v6740 = vunpack.c.l.b16 %v6197
        %v6741 = vunpack.c.h.b16 %v6197
        %v6742 = vunpack.c.l.b16 %v6198
        %v6743 = vunpack.c.l.b16 %v6199
        %v6744 = vunpack.c.h.b16 %v6199
        %v6745 = vunpack.c.l.b16 %v6200
        %v6746 = vunpack.c.h.b16 %v6200
        %v6747 = vunpack.c.l.b16 %v6201
        %v6748 = vunpack.c.h.b16 %v6201
        %v6749 = vunpack.c.l.b16 %v6202
        %v6750 = vunpack.c.h.b16 %v6202
        %v6751 = vunpack.c.l.b16 %v6203
        %v6752 = vunpack.c.l.b16 %v6204
        %v6753 = vunpack.c.h.b16 %v6204
        %v6754 = vunpack.c.l.b16 %v6205
        %v6755 = vunpack.c.h.b16 %v6205
        %v6756 = vunpack.c.l.b16 %v6206
        %v6757 = vunpack.c.h.b16 %v6206
        %v6758 = vunpack.c.l.b16 %v6207
        %v6759 = vunpack.c.h.b16 %v6207
        %v6760 = vunpack.c.l.b16 %v6208
        %v6761 = vunpack.c.l.b16 %v6209
        %v6762 = vunpack.c.h.b16 %v6209
        %v6763 = vunpack.c.l.b16 %v6210
        %v6764 = vunpack.c.h.b16 %v6210
        %v6765 = vunpack.c.l.b16 %v6211
        %v6766 = vunpack.c.h.b16 %v6211
        %v6767 = vunpack.c.l.b16 %v6212
        %v6768 = vunpack.c.h.b16 %v6212
        %v6769 = vunpack.c.l.b16 %v6213
        %v6770 = vunpack.c.l.b16 %v6214
        %v6771 = vunpack.c.h.b16 %v6214
        %v6772 = vunpack.c.l.b16 %v6215
        %v6773 = vunpack.c.h.b16 %v6215
        %v6774 = vunpack.c.l.b16 %v6216
        %v6775 = vunpack.c.h.b16 %v6216
        %v6776 = vunpack.c.l.b16 %v6217
        %v6777 = vunpack.c.h.b16 %v6217
        %v6778 = vunpack.c.l.b16 %v6218
        %v6779 = vunpack.c.l.b16 %v6219
        %v6780 = vunpack.c.h.b16 %v6219
        %v6781 = vunpack.c.l.b16 %v6220
        %v6782 = vunpack.c.h.b16 %v6220
        %v6783 = vunpack.c.l.b16 %v6221
        %v6784 = vunpack.c.h.b16 %v6221
        %v6785 = vunpack.c.l.b16 %v6222
        %v6786 = vunpack.c.h.b16 %v6222
        %v6787 = vunpack.c.l.b16 %v6223
        %v6788 = vunpack.c.l.b16 %v6224
        %v6789 = vunpack.c.h.b16 %v6224
        %v6790 = vunpack.c.l.b16 %v6225
        %v6791 = vunpack.c.h.b16 %v6225
        %v6792 = vunpack.c.l.b16 %v6226
        %v6793 = vunpack.c.h.b16 %v6226
        %v6794 = vunpack.c.l.b16 %v6227
        %v6795 = vunpack.c.h.b16 %v6227
        %v6796 = vunpack.c.l.b16 %v6228
        %v6797 = vunpack.c.l.b16 %v6229
        %v6798 = vunpack.c.h.b16 %v6229
        %v6799 = vunpack.c.l.b16 %v6230
        %v6800 = vunpack.c.h.b16 %v6230
        %v6801 = vunpack.c.l.b16 %v6231
        %v6802 = vunpack.c.h.b16 %v6231
        %v6803 = vunpack.c.l.b16 %v6232
        %v6804 = vunpack.c.h.b16 %v6232
        %v6805 = vunpack.c.l.b16 %v6233
        %v6806 = vunpack.c.l.b16 %v6234
        %v6807 = vunpack.c.h.b16 %v6234
        %v6808 = vunpack.c.l.b16 %v6235
        %v6809 = vunpack.c.h.b16 %v6235
        %v6810 = vunpack.c.l.b16 %v6236
        %v6811 = vunpack.c.h.b16 %v6236
        %v6812 = vunpack.c.l.b16 %v6237
        %v6813 = vunpack.c.h.b16 %v6237
        %v6814 = vunpack.c.l.b16 %v6238
        %v6815 = vunpack.c.l.b16 %v6239
        %v6816 = vunpack.c.h.b16 %v6239
        %v6817 = vunpack.c.l.b16 %v6240
        %v6818 = vunpack.c.h.b16 %v6240
        %v6819 = vunpack.c.l.b16 %v6241
        %v6820 = vunpack.c.h.b16 %v6241
        %v6821 = vunpack.c.l.b16 %v6242
        %v6822 = vunpack.c.h.b16 %v6242
        %v6823 = vunpack.c.l.b16 %v6243
        %v6824 = vunpack.c.l.b16 %v6244
        %v6825 = vunpack.c.h.b16 %v6244
        %v6826 = vunpack.c.l.b16 %v6245
        %v6827 = vunpack.c.h.b16 %v6245
        %v6828 = vunpack.c.l.b16 %v6246
        %v6829 = vunpack.c.h.b16 %v6246
        %v6830 = vunpack.c.l.b16 %v6247
        %v6831 = vunpack.c.h.b16 %v6247
        %v6832 = vunpack.c.l.b16 %v6248
        %v6833 = vunpack.c.l.b16 %v6249
        %v6834 = vunpack.c.h.b16 %v6249
        %v6835 = vunpack.c.l.b16 %v6250
        %v6836 = vunpack.c.h.b16 %v6250
        %v6837 = vunpack.c.l.b16 %v6251
        %v6838 = vunpack.c.h.b16 %v6251
        %v6839 = vunpack.c.l.b16 %v6252
        %v6840 = vunpack.c.h.b16 %v6252
        %v6841 = vunpack.c.l.b16 %v6253
        %v6842 = vunpack.c.l.b16 %v6254
        %v6843 = vunpack.c.h.b16 %v6254
        %v6844 = vunpack.c.l.b16 %v6255
        %v6845 = vunpack.c.h.b16 %v6255
        %v6846 = vunpack.c.l.b16 %v6256
        %v6847 = vunpack.c.h.b16 %v6256
        %v6848 = vunpack.c.l.b16 %v6257
        %v6849 = vunpack.c.h.b16 %v6257
        %v6850 = vunpack.c.l.b16 %v6258
        %v6851 = vunpack.c.l.b16 %v6259
        %v6852 = vunpack.c.h.b16 %v6259
        %v6853 = vunpack.c.l.b16 %v6260
        %v6854 = vunpack.c.h.b16 %v6260
        %v6855 = vunpack.c.l.b16 %v6261
        %v6856 = vunpack.c.h.b16 %v6261
        %v6857 = vunpack.c.l.b16 %v6262
        %v6858 = vunpack.c.h.b16 %v6262
        %v6859 = vunpack.c.l.b16 %v6263
        %v6860 = vunpack.c.l.b16 %v6264
        %v6861 = vunpack.c.h.b16 %v6264
        %v6862 = vunpack.c.l.b16 %v6265
        %v6863 = vunpack.c.h.b16 %v6265
        %v6864 = vunpack.c.l.b16 %v6266
        %v6865 = vunpack.c.h.b16 %v6266
        %v6866 = vunpack.c.l.b16 %v6267
        %v6867 = vunpack.c.h.b16 %v6267
        %v6868 = vunpack.c.l.b16 %v6268
        %v6869 = vunpack.c.l.b16 %v6269
        %v6870 = vunpack.c.h.b16 %v6269
        %v6871 = vunpack.c.l.b16 %v6270
        %v6872 = vunpack.c.h.b16 %v6270
        %v6873 = vunpack.c.l.b16 %v6271
        %v6874 = vunpack.c.h.b16 %v6271
        %v6875 = vunpack.c.l.b16 %v6272
        %v6876 = vunpack.c.h.b16 %v6272
        %v6877 = vunpack.c.l.b16 %v6273
        %v6878 = vunpack.c.l.b16 %v6274
        %v6879 = vunpack.c.h.b16 %v6274
        %v6880 = vunpack.c.l.b16 %v6275
        %v6881 = vunpack.c.h.b16 %v6275
        %v6882 = vunpack.c.l.b16 %v6276
        %v6883 = vunpack.c.h.b16 %v6276
        %v6884 = vunpack.c.l.b16 %v6277
        %v6885 = vunpack.c.h.b16 %v6277
        %v6886 = vunpack.c.l.b16 %v6278
        %v6887 = vunpack.c.l.b16 %v6279
        %v6888 = vunpack.c.h.b16 %v6279
        %v6889 = vunpack.c.l.b16 %v6280
        %v6890 = vunpack.c.h.b16 %v6280
        %v6891 = vunpack.c.l.b16 %v6281
        %v6892 = vunpack.c.h.b16 %v6281
        %v6893 = vunpack.c.l.b16 %v6282
        %v6894 = vunpack.c.h.b16 %v6282
        %v6895 = vunpack.c.l.b16 %v6283
        %v6896 = vunpack.c.l.b16 %v6284
        %v6897 = vunpack.c.h.b16 %v6284
        %v6898 = vunpack.c.l.b16 %v6285
        %v6899 = vunpack.c.h.b16 %v6285
        %v6900 = vunpack.c.l.b16 %v6286
        %v6901 = vunpack.c.h.b16 %v6286
        %v6902 = vunpack.c.l.b16 %v6287
        %v6903 = vunpack.c.h.b16 %v6287
        %v6904 = vunpack.c.l.b16 %v6288
        %v6905 = vunpack.c.l.b16 %v6289
        %v6906 = vunpack.c.h.b16 %v6289
        %v6907 = vunpack.c.l.b16 %v6290
        %v6908 = vunpack.c.h.b16 %v6290
        %v6909 = vunpack.c.l.b16 %v6291
        %v6910 = vunpack.c.h.b16 %v6291
        %v6911 = vunpack.c.l.b16 %v6292
        %v6912 = vunpack.c.h.b16 %v6292
        %v6913 = vunpack.c.l.b16 %v6293
        %v6914 = vunpack.c.l.b16 %v6294
        %v6915 = vunpack.c.h.b16 %v6294
        %v6916 = vunpack.c.l.b16 %v6295
        %v6917 = vunpack.c.h.b16 %v6295
        %v6918 = vunpack.c.l.b16 %v6296
        %v6919 = vunpack.c.h.b16 %v6296
        %v6920 = vunpack.c.l.b16 %v6297
        %v6921 = vunpack.c.h.b16 %v6297
        %v6922 = vunpack.c.l.b16 %v6298
        %v6923 = vunpack.c.l.b16 %v6299
        %v6924 = vunpack.c.h.b16 %v6299
        %v6925 = vunpack.c.l.b16 %v6300
        %v6926 = vunpack.c.h.b16 %v6300
        %v6927 = vunpack.c.l.b16 %v6301
        %v6928 = vunpack.c.h.b16 %v6301
        %v6929 = vunpack.c.l.b16 %v6302
        %v6930 = vunpack.c.h.b16 %v6302
        %v6931 = vunpack.c.l.b16 %v6303
        %v6932 = vunpack.c.l.b16 %v6304
        %v6933 = vunpack.c.h.b16 %v6304
        %v6934 = vunpack.c.l.b16 %v6305
        %v6935 = vunpack.c.h.b16 %v6305
        %v6936 = vunpack.c.l.b16 %v6306
        %v6937 = vunpack.c.h.b16 %v6306
        %v6938 = vunpack.c.l.b16 %v6307
        %v6939 = vunpack.c.h.b16 %v6307
        %v6940 = vunpack.c.l.b16 %v6308
        %v6941 = vunpack.c.l.b16 %v6309
        %v6942 = vunpack.c.h.b16 %v6309
        %v6943 = vunpack.c.l.b16 %v6310
        %v6944 = vunpack.c.h.b16 %v6310
        %v6945 = vunpack.c.l.b16 %v6311
        %v6946 = vunpack.c.h.b16 %v6311
        %v6947 = vunpack.c.l.b16 %v6312
        %v6948 = vunpack.c.h.b16 %v6312
        %v6949 = vunpack.c.l.b16 %v6313
        %v6950 = vunpack.c.l.b16 %v6314
        %v6951 = vunpack.c.h.b16 %v6314
        %v6952 = vunpack.c.l.b16 %v6315
        %v6953 = vunpack.c.h.b16 %v6315
        %v6954 = vunpack.c.l.b16 %v6316
        %v6955 = vunpack.c.h.b16 %v6316
        %v6956 = vunpack.c.l.b16 %v6317
        %v6957 = vunpack.c.h.b16 %v6317
        %v6958 = vunpack.c.l.b16 %v6318
        %v6959 = vunpack.c.l.b16 %v6319
        %v6960 = vunpack.c.h.b16 %v6319
        %v6961 = vunpack.c.l.b16 %v6320
        %v6962 = vunpack.c.h.b16 %v6320
        %v6963 = vunpack.c.l.b16 %v6321
        %v6964 = vunpack.c.h.b16 %v6321
        %v6965 = vunpack.c.l.b16 %v6322
        %v6966 = vunpack.c.h.b16 %v6322
        %v6967 = vunpack.c.l.b16 %v6323
        %v6968 = vunpack.c.l.b16 %v6324
        %v6969 = vunpack.c.h.b16 %v6324
        %v6970 = vunpack.c.l.b16 %v6325
        %v6971 = vunpack.c.h.b16 %v6325
        %v6972 = vunpack.c.l.b16 %v6326
        %v6973 = vunpack.c.h.b16 %v6326
        %v6974 = vunpack.c.l.b16 %v6327
        %v6975 = vunpack.c.h.b16 %v6327
        %v6976 = vunpack.c.l.b16 %v6328
        %v6977 = vunpack.c.l.b16 %v6329
        %v6978 = vunpack.c.h.b16 %v6329
        %v6979 = vunpack.c.l.b16 %v6330
        %v6980 = vunpack.c.h.b16 %v6330
        %v6981 = vunpack.c.l.b16 %v6331
        %v6982 = vunpack.c.h.b16 %v6331
        %v6983 = vunpack.c.l.b16 %v6332
        %v6984 = vunpack.c.h.b16 %v6332
        %v6985 = vunpack.c.l.b16 %v6333
        %v6986 = vunpack.c.l.b16 %v6334
        %v6987 = vunpack.c.h.b16 %v6334
        %v6988 = vunpack.c.l.b16 %v6335
        %v6989 = vunpack.c.h.b16 %v6335
        %v6990 = vunpack.c.l.b16 %v6336
        %v6991 = vunpack.c.h.b16 %v6336
        %v6992 = vunpack.c.l.b16 %v6337
        %v6993 = vunpack.c.h.b16 %v6337
        %v6994 = vunpack.c.l.b16 %v6338
        %v6995 = vunpack.c.l.b16 %v6339
        %v6996 = vunpack.c.h.b16 %v6339
        %v6997 = vunpack.c.l.b16 %v6340
        %v6998 = vunpack.c.h.b16 %v6340
        %v6999 = vunpack.c.l.b16 %v6341
        %v7000 = vunpack.c.h.b16 %v6341
        %v7001 = vunpack.c.l.b16 %v6342
        %v7002 = vunpack.c.h.b16 %v6342
        %v7003 = vunpack.c.l.b16 %v6343
        %v7004 = vunpack.c.l.b16 %v6344
        %v7005 = vunpack.c.h.b16 %v6344
        %v7006 = vunpack.c.l.b16 %v6345
        %v7007 = vunpack.c.h.b16 %v6345
        %v7008 = vunpack.c.l.b16 %v6346
        %v7009 = vunpack.c.h.b16 %v6346
        %v7010 = vunpack.c.l.b16 %v6347
        %v7011 = vunpack.c.h.b16 %v6347
        %v7012 = vunpack.c.l.b16 %v6348
        %v7013 = vunpack.c.l.b16 %v6349
        %v7014 = vunpack.c.h.b16 %v6349
        %v7015 = vunpack.c.l.b16 %v6350
        %v7016 = vunpack.c.h.b16 %v6350
        %v7017 = vunpack.c.l.b16 %v6351
        %v7018 = vunpack.c.h.b16 %v6351
        %v7019 = vunpack.c.l.b16 %v6352
        %v7020 = vunpack.c.h.b16 %v6352
        %v7021 = vunpack.c.l.b16 %v6353
        %v7022 = vunpack.c.l.b16 %v6354
        %v7023 = vunpack.c.h.b16 %v6354
        %v7024 = vunpack.c.l.b16 %v6355
        %v7025 = vunpack.c.h.b16 %v6355
        %v7026 = vunpack.c.l.b16 %v6356
        %v7027 = vunpack.c.h.b16 %v6356
        %v7028 = vunpack.c.l.b16 %v6357
        %v7029 = vunpack.c.h.b16 %v6357
        %v7030 = vunpack.c.l.b16 %v6358
        %v7031 = vpack.c.b16 %v6608, %v6599
        %v7032 = vpack.c.b16 %v6609, %v6600
        %v7033 = vpack.c.b16 %v6610, %v6601
        %v7034 = vpack.c.b16 %v6611, %v6602
        %v7035 = vpack.c.b16 %v6612, %v6603
        %v7036 = vpack.c.b16 %v6613, %v6604
        %v7037 = vpack.c.b16 %v6614, %v6605
        %v7038 = vpack.c.b16 %v6615, %v6606
        %v7039 = vpack.c.b16 %v6616, %v6607
        %v7040 = vpack.c.b16 %v6626, %v6617
        %v7041 = vpack.c.b16 %v6627, %v6618
        %v7042 = vpack.c.b16 %v6628, %v6619
        %v7043 = vpack.c.b16 %v6629, %v6620
        %v7044 = vpack.c.b16 %v6630, %v6621
        %v7045 = vpack.c.b16 %v6631, %v6622
        %v7046 = vpack.c.b16 %v6632, %v6623
        %v7047 = vpack.c.b16 %v6633, %v6624
        %v7048 = vpack.c.b16 %v6634, %v6625
        %v7049 = vpack.c.b16 %v6644, %v6635
        %v7050 = vpack.c.b16 %v6645, %v6636
        %v7051 = vpack.c.b16 %v6646, %v6637
        %v7052 = vpack.c.b16 %v6647, %v6638
        %v7053 = vpack.c.b16 %v6648, %v6639
        %v7054 = vpack.c.b16 %v6649, %v6640
        %v7055 = vpack.c.b16 %v6650, %v6641
        %v7056 = vpack.c.b16 %v6651, %v6642
        %v7057 = vpack.c.b16 %v6652, %v6643
        %v7058 = vpack.c.b16 %v6662, %v6653
        %v7059 = vpack.c.b16 %v6663, %v6654
        %v7060 = vpack.c.b16 %v6664, %v6655
        %v7061 = vpack.c.b16 %v6665, %v6656
        %v7062 = vpack.c.b16 %v6666, %v6657
        %v7063 = vpack.c.b16 %v6667, %v6658
        %v7064 = vpack.c.b16 %v6668, %v6659
        %v7065 = vpack.c.b16 %v6669, %v6660
        %v7066 = vpack.c.b16 %v6670, %v6661
        %v7067 = vpack.c.b16 %v6680, %v6671
        %v7068 = vpack.c.b16 %v6681, %v6672
        %v7069 = vpack.c.b16 %v6682, %v6673
        %v7070 = vpack.c.b16 %v6683, %v6674
        %v7071 = vpack.c.b16 %v6684, %v6675
        %v7072 = vpack.c.b16 %v6685, %v6676
        %v7073 = vpack.c.b16 %v6686, %v6677
        %v7074 = vpack.c.b16 %v6687, %v6678
        %v7075 = vpack.c.b16 %v6688, %v6679
        %v7076 = vpack.c.b16 %v6698, %v6689
        %v7077 = vpack.c.b16 %v6699, %v6690
        %v7078 = vpack.c.b16 %v6700, %v6691
        %v7079 = vpack.c.b16 %v6701, %v6692
        %v7080 = vpack.c.b16 %v6702, %v6693
        %v7081 = vpack.c.b16 %v6703, %v6694
        %v7082 = vpack.c.b16 %v6704, %v6695
        %v7083 = vpack.c.b16 %v6705, %v6696
        %v7084 = vpack.c.b16 %v6706, %v6697
        %v7085 = vpack.c.b16 %v6716, %v6707
        %v7086 = vpack.c.b16 %v6717, %v6708
        %v7087 = vpack.c.b16 %v6718, %v6709
        %v7088 = vpack.c.b16 %v6719, %v6710
        %v7089 = vpack.c.b16 %v6720, %v6711
        %v7090 = vpack.c.b16 %v6721, %v6712
        %v7091 = vpack.c.b16 %v6722, %v6713
        %v7092 = vpack.c.b16 %v6723, %v6714
        %v7093 = vpack.c.b16 %v6724, %v6715
        %v7094 = vpack.c.b16 %v6734, %v6725
        %v7095 = vpack.c.b16 %v6735, %v6726
        %v7096 = vpack.c.b16 %v6736, %v6727
        %v7097 = vpack.c.b16 %v6737, %v6728
        %v7098 = vpack.c.b16 %v6738, %v6729
        %v7099 = vpack.c.b16 %v6739, %v6730
        %v7100 = vpack.c.b16 %v6740, %v6731
        %v7101 = vpack.c.b16 %v6741, %v6732
        %v7102 = vpack.c.b16 %v6742, %v6733
        %v7103 = vpack.c.b16 %v6752, %v6743
        %v7104 = vpack.c.b16 %v6753, %v6744
        %v7105 = vpack.c.b16 %v6754, %v6745
        %v7106 = vpack.c.b16 %v6755, %v6746
        %v7107 = vpack.c.b16 %v6756, %v6747
        %v7108 = vpack.c.b16 %v6757, %v6748
        %v7109 = vpack.c.b16 %v6758, %v6749
        %v7110 = vpack.c.b16 %v6759, %v6750
        %v7111 = vpack.c.b16 %v6760, %v6751
        %v7112 = vpack.c.b16 %v6770, %v6761
        %v7113 = vpack.c.b16 %v6771, %v6762
        %v7114 = vpack.c.b16 %v6772, %v6763
        %v7115 = vpack.c.b16 %v6773, %v6764
        %v7116 = vpack.c.b16 %v6774, %v6765
        %v7117 = vpack.c.b16 %v6775, %v6766
        %v7118 = vpack.c.b16 %v6776, %v6767
        %v7119 = vpack.c.b16 %v6777, %v6768
        %v7120 = vpack.c.b16 %v6778, %v6769
        %v7121 = vpack.c.b16 %v6788, %v6779
        %v7122 = vpack.c.b16 %v6789, %v6780
        %v7123 = vpack.c.b16 %v6790, %v6781
        %v7124 = vpack.c.b16 %v6791, %v6782
        %v7125 = vpack.c.b16 %v6792, %v6783
        %v7126 = vpack.c.b16 %v6793, %v6784
        %v7127 = vpack.c.b16 %v6794, %v6785
        %v7128 = vpack.c.b16 %v6795, %v6786
        %v7129 = vpack.c.b16 %v6796, %v6787
        %v7130 = vpack.c.b16 %v6806, %v6797
        %v7131 = vpack.c.b16 %v6807, %v6798
        %v7132 = vpack.c.b16 %v6808, %v6799
        %v7133 = vpack.c.b16 %v6809, %v6800
        %v7134 = vpack.c.b16 %v6810, %v6801
        %v7135 = vpack.c.b16 %v6811, %v6802
        %v7136 = vpack.c.b16 %v6812, %v6803
        %v7137 = vpack.c.b16 %v6813, %v6804
        %v7138 = vpack.c.b16 %v6814, %v6805
        %v7139 = vpack.c.b16 %v6824, %v6815
        %v7140 = vpack.c.b16 %v6825, %v6816
        %v7141 = vpack.c.b16 %v6826, %v6817
        %v7142 = vpack.c.b16 %v6827, %v6818
        %v7143 = vpack.c.b16 %v6828, %v6819
        %v7144 = vpack.c.b16 %v6829, %v6820
        %v7145 = vpack.c.b16 %v6830, %v6821
        %v7146 = vpack.c.b16 %v6831, %v6822
        %v7147 = vpack.c.b16 %v6832, %v6823
        %v7148 = vpack.c.b16 %v6842, %v6833
        %v7149 = vpack.c.b16 %v6843, %v6834
        %v7150 = vpack.c.b16 %v6844, %v6835
        %v7151 = vpack.c.b16 %v6845, %v6836
        %v7152 = vpack.c.b16 %v6846, %v6837
        %v7153 = vpack.c.b16 %v6847, %v6838
        %v7154 = vpack.c.b16 %v6848, %v6839
        %v7155 = vpack.c.b16 %v6849, %v6840
        %v7156 = vpack.c.b16 %v6850, %v6841
        %v7157 = vpack.c.b16 %v6860, %v6851
        %v7158 = vpack.c.b16 %v6861, %v6852
        %v7159 = vpack.c.b16 %v6862, %v6853
        %v7160 = vpack.c.b16 %v6863, %v6854
        %v7161 = vpack.c.b16 %v6864, %v6855
        %v7162 = vpack.c.b16 %v6865, %v6856
        %v7163 = vpack.c.b16 %v6866, %v6857
        %v7164 = vpack.c.b16 %v6867, %v6858
        %v7165 = vpack.c.b16 %v6868, %v6859
        %v7166 = vpack.c.b16 %v6878, %v6869
        %v7167 = vpack.c.b16 %v6879, %v6870
        %v7168 = vpack.c.b16 %v6880, %v6871
        %v7169 = vpack.c.b16 %v6881, %v6872
        %v7170 = vpack.c.b16 %v6882, %v6873
        %v7171 = vpack.c.b16 %v6883, %v6874
        %v7172 = vpack.c.b16 %v6884, %v6875
        %v7173 = vpack.c.b16 %v6885, %v6876
        %v7174 = vpack.c.b16 %v6886, %v6877
        %v7175 = vpack.c.b16 %v6896, %v6887
        %v7176 = vpack.c.b16 %v6897, %v6888
        %v7177 = vpack.c.b16 %v6898, %v6889
        %v7178 = vpack.c.b16 %v6899, %v6890
        %v7179 = vpack.c.b16 %v6900, %v6891
        %v7180 = vpack.c.b16 %v6901, %v6892
        %v7181 = vpack.c.b16 %v6902, %v6893
        %v7182 = vpack.c.b16 %v6903, %v6894
        %v7183 = vpack.c.b16 %v6904, %v6895
        %v7184 = vpack.c.b16 %v6914, %v6905
        %v7185 = vpack.c.b16 %v6915, %v6906
        %v7186 = vpack.c.b16 %v6916, %v6907
        %v7187 = vpack.c.b16 %v6917, %v6908
        %v7188 = vpack.c.b16 %v6918, %v6909
        %v7189 = vpack.c.b16 %v6919, %v6910
        %v7190 = vpack.c.b16 %v6920, %v6911
        %v7191 = vpack.c.b16 %v6921, %v6912
        %v7192 = vpack.c.b16 %v6922, %v6913
        %v7193 = vpack.c.b16 %v6932, %v6923
        %v7194 = vpack.c.b16 %v6933, %v6924
        %v7195 = vpack.c.b16 %v6934, %v6925
        %v7196 = vpack.c.b16 %v6935, %v6926
        %v7197 = vpack.c.b16 %v6936, %v6927
        %v7198 = vpack.c.b16 %v6937, %v6928
        %v7199 = vpack.c.b16 %v6938, %v6929
        %v7200 = vpack.c.b16 %v6939, %v6930
        %v7201 = vpack.c.b16 %v6940, %v6931
        %v7202 = vpack.c.b16 %v6950, %v6941
        %v7203 = vpack.c.b16 %v6951, %v6942
        %v7204 = vpack.c.b16 %v6952, %v6943
        %v7205 = vpack.c.b16 %v6953, %v6944
        %v7206 = vpack.c.b16 %v6954, %v6945
        %v7207 = vpack.c.b16 %v6955, %v6946
        %v7208 = vpack.c.b16 %v6956, %v6947
        %v7209 = vpack.c.b16 %v6957, %v6948
        %v7210 = vpack.c.b16 %v6958, %v6949
        %v7211 = vpack.c.b16 %v6968, %v6959
        %v7212 = vpack.c.b16 %v6969, %v6960
        %v7213 = vpack.c.b16 %v6970, %v6961
        %v7214 = vpack.c.b16 %v6971, %v6962
        %v7215 = vpack.c.b16 %v6972, %v6963
        %v7216 = vpack.c.b16 %v6973, %v6964
        %v7217 = vpack.c.b16 %v6974, %v6965
        %v7218 = vpack.c.b16 %v6975, %v6966
        %v7219 = vpack.c.b16 %v6976, %v6967
        %v7220 = vpack.c.b16 %v6986, %v6977
        %v7221 = vpack.c.b16 %v6987, %v6978
        %v7222 = vpack.c.b16 %v6988, %v6979
        %v7223 = vpack.c.b16 %v6989, %v6980
        %v7224 = vpack.c.b16 %v6990, %v6981
        %v7225 = vpack.c.b16 %v6991, %v6982
        %v7226 = vpack.c.b16 %v6992, %v6983
        %v7227 = vpack.c.b16 %v6993, %v6984
        %v7228 = vpack.c.b16 %v6994, %v6985
        %v7229 = vpack.c.b16 %v7004, %v6995
        %v7230 = vpack.c.b16 %v7005, %v6996
        %v7231 = vpack.c.b16 %v7006, %v6997
        %v7232 = vpack.c.b16 %v7007, %v6998
        %v7233 = vpack.c.b16 %v7008, %v6999
        %v7234 = vpack.c.b16 %v7009, %v7000
        %v7235 = vpack.c.b16 %v7010, %v7001
        %v7236 = vpack.c.b16 %v7011, %v7002
        %v7237 = vpack.c.b16 %v7012, %v7003
        %v7238 = vpack.c.b16 %v7022, %v7013
        %v7239 = vpack.c.b16 %v7023, %v7014
        %v7240 = vpack.c.b16 %v7024, %v7015
        %v7241 = vpack.c.b16 %v7025, %v7016
        %v7242 = vpack.c.b16 %v7026, %v7017
        %v7243 = vpack.c.b16 %v7027, %v7018
        %v7244 = vpack.c.b16 %v7028, %v7019
        %v7245 = vpack.c.b16 %v7029, %v7020
        %v7246 = vpack.c.b16 %v7030, %v7021
        %7463 = vmatprep.subr.bf16.mxu0 %v7032
        %7464 = vmatpush1.bf16.msra.mxu0 %v7031
        %7465 = vmatprep.subr.bf16.mxu0 %v7041
        %7466 = vmatpush1.bf16.msra.mxu0 %v7040
        %7467 = vmatprep.subr.bf16.mxu0 %v7050
        %7468 = vmatpush1.bf16.msra.mxu0 %v7049
        %7469 = vmatprep.subr.bf16.mxu0 %v7059
        %7470 = vmatpush1.bf16.msra.mxu0 %v7058
        %7471 = vmatprep.subr.bf16.mxu0 %v7068
        %7472 = vmatpush1.bf16.msra.mxu0 %v7067
        %7473 = vmatprep.subr.bf16.mxu0 %v7077
        %7474 = vmatpush1.bf16.msra.mxu0 %v7076
        %7475 = vmatprep.subr.bf16.mxu0 %v7086
        %7476 = vmatpush1.bf16.msra.mxu0 %v7085
        %7477 = vmatprep.subr.bf16.mxu0 %v7095
        %7478 = vmatpush1.bf16.msra.mxu0 %v7094
        %7479 = vmatprep.subr.bf16.mxu0 %v7104
        %7480 = vmatpush1.bf16.msra.mxu0 %v7103
        %7481 = vmatprep.subr.bf16.mxu0 %v7113
        %7482 = vmatpush1.bf16.msra.mxu0 %v7112
        %7483 = vmatprep.subr.bf16.mxu0 %v7122
        %7484 = vmatpush1.bf16.msra.mxu0 %v7121
        %7485 = vmatprep.subr.bf16.mxu0 %v7131
        %7486 = vmatpush1.bf16.msra.mxu0 %v7130
        %7487 = vmatprep.subr.bf16.mxu0 %v7140
        %7488 = vmatpush1.bf16.msra.mxu0 %v7139
        %7489 = vmatprep.subr.bf16.mxu0 %v7149
        %7490 = vmatpush1.bf16.msra.mxu0 %v7148
        %7491 = vmatprep.subr.bf16.mxu0 %v7158
        %7492 = vmatpush1.bf16.msra.mxu0 %v7157
        %7493 = vmatprep.subr.bf16.mxu0 %v7167
        %7494 = vmatpush1.bf16.msra.mxu0 %v7166
        %7495 = vmatprep.mubr.bf16.mxu0 %v6108
        %7496 = vmatmul.mubr.bf16.gmra.mrb[0].mxu0 %v6107
        %v7497 = vpop.f32.mrb[0].mxu0
        %v7498 = vadd.f32 0.0, %v7497
        %v7499 = vpop.f32.mrb[0].mxu0
        %v7500 = vadd.f32 0.0, %v7499
        %v7501 = vpop.f32.mrb[0].mxu0
        %v7502 = vadd.f32 0.0, %v7501
        %v7503 = vpop.f32.mrb[0].mxu0
        %v7504 = vadd.f32 0.0, %v7503
        %7505 = vmatprep.mubr.bf16.mxu0 %v6111
        %7506 = vmatmul.mubr.bf16.gmra.mrb[0].mxu0 %v6110
        %v7507 = vpop.f32.mrb[0].mxu0
        %v7508 = vadd.f32 0.0, %v7507
        %v7509 = vpop.f32.mrb[0].mxu0
        %v7510 = vadd.f32 0.0, %v7509
        %v7511 = vpop.f32.mrb[0].mxu0
        %v7512 = vadd.f32 0.0, %v7511
        %v7513 = vpop.f32.mrb[0].mxu0
        %v7514 = vadd.f32 0.0, %v7513
        %7515 = vmatprep.mubr.bf16.mxu0 %v6114
        %7516 = vmatmul.mubr.bf16.gmra.mrb[0].mxu0 %v6113
        %v7517 = vpop.f32.mrb[0].mxu0
        %v7518 = vadd.f32 0.0, %v7517
        %v7519 = vpop.f32.mrb[0].mxu0
        %v7520 = vadd.f32 0.0, %v7519
        %v7521 = vpop.f32.mrb[0].mxu0
        %v7522 = vadd.f32 0.0, %v7521
        %v7523 = vpop.f32.mrb[0].mxu0
        %v7524 = vadd.f32 0.0, %v7523
        %7525 = vmatprep.mubr.bf16.mxu0 %v6117
        %7526 = vmatmul.mubr.bf16.gmra.mrb[0].mxu0 %v6116
        %v7527 = vpop.f32.mrb[0].mxu0
        %v7528 = vadd.f32 0.0, %v7527
        %v7529 = vpop.f32.mrb[0].mxu0
        %v7530 = vadd.f32 0.0, %v7529
        %v7531 = vpop.f32.mrb[0].mxu0
        %v7532 = vadd.f32 0.0, %v7531
        %v7533 = vpop.f32.mrb[0].mxu0
        %v7534 = vadd.f32 0.0, %v7533
        %7535 = vdwg.mxu0
        %7536 = vmatprep.subr.bf16.mxu0 %v7176
        %7537 = vmatpush1.bf16.msra.mxu0 %v7175
        %7538 = vmatprep.subr.bf16.mxu0 %v7185
        %7539 = vmatpush1.bf16.msra.mxu0 %v7184
        %7540 = vmatprep.subr.bf16.mxu0 %v7194
        %7541 = vmatpush1.bf16.msra.mxu0 %v7193
        %7542 = vmatprep.subr.bf16.mxu0 %v7203
        %7543 = vmatpush1.bf16.msra.mxu0 %v7202
        %7544 = vmatprep.subr.bf16.mxu0 %v7212
        %7545 = vmatpush1.bf16.msra.mxu0 %v7211
        %7546 = vmatprep.subr.bf16.mxu0 %v7221
        %7547 = vmatpush1.bf16.msra.mxu0 %v7220
        %7548 = vmatprep.subr.bf16.mxu0 %v7230
        %7549 = vmatpush1.bf16.msra.mxu0 %v7229
        %7550 = vmatprep.subr.bf16.mxu0 %v7239
        %7551 = vmatpush1.bf16.msra.mxu0 %v7238
        %7552 = vmatprep.subr.bf16.mxu0 0
        %7553 = vmatpush1.bf16.msra.mxu0 0
        %7554 = vmatprep.subr.bf16.mxu0 0
        %7555 = vmatpush1.bf16.msra.mxu0 0
        %7556 = vmatprep.subr.bf16.mxu0 0
        %7557 = vmatpush1.bf16.msra.mxu0 0
        %7558 = vmatprep.subr.bf16.mxu0 0
        %7559 = vmatpush1.bf16.msra.mxu0 0
        %7560 = vmatprep.subr.bf16.mxu0 0
        %7561 = vmatpush1.bf16.msra.mxu0 0
        %7562 = vmatprep.subr.bf16.mxu0 0
        %7563 = vmatpush1.bf16.msra.mxu0 0
        %7564 = vmatprep.subr.bf16.mxu0 0
        %7565 = vmatpush1.bf16.msra.mxu0 0
        %7566 = vmatprep.subr.bf16.mxu0 0
        %7567 = vmatpush1.bf16.msra.mxu0 0
        %7568 = vmatprep.mubr.bf16.mxu0 0
        %7569 = vmatmul.mubr.bf16.gmra.mrb[0].mxu0 %v6109
        %v7570 = vpop.f32.mrb[0].mxu0
        %v7571 = vadd.f32 %v7498, %v7570
        %v7572 = vpop.f32.mrb[0].mxu0
        %v7573 = vadd.f32 %v7500, %v7572
        %v7574 = vpop.f32.mrb[0].mxu0
        %v7575 = vadd.f32 %v7502, %v7574
        %v7576 = vpop.f32.mrb[0].mxu0
        %v7577 = vadd.f32 %v7504, %v7576
        %7578 = vmatprep.mubr.bf16.mxu0 0
        %7579 = vmatmul.mubr.bf16.gmra.mrb[0].mxu0 %v6112
        %v7580 = vpop.f32.mrb[0].mxu0
        %v7581 = vadd.f32 %v7508, %v7580
        %v7582 = vpop.f32.mrb[0].mxu0
        %v7583 = vadd.f32 %v7510, %v7582
        %v7584 = vpop.f32.mrb[0].mxu0
        %v7585 = vadd.f32 %v7512, %v7584
        %v7586 = vpop.f32.mrb[0].mxu0
        %v7587 = vadd.f32 %v7514, %v7586
        %7588 = vmatprep.mubr.bf16.mxu0 0
        %7589 = vmatmul.mubr.bf16.gmra.mrb[0].mxu0 %v6115
        %v7590 = vpop.f32.mrb[0].mxu0
        %v7591 = vadd.f32 %v7518, %v7590
        %v7592 = vpop.f32.mrb[0].mxu0
        %v7593 = vadd.f32 %v7520, %v7592
        %v7594 = vpop.f32.mrb[0].mxu0
        %v7595 = vadd.f32 %v7522, %v7594
        %v7596 = vpop.f32.mrb[0].mxu0
        %v7597 = vadd.f32 %v7524, %v7596
        %7598 = vmatprep.mubr.bf16.mxu0 0
        %7599 = vmatmul.mubr.bf16.gmra.mrb[0].mxu0 %v6118
        %v7600 = vpop.f32.mrb[0].mxu0
        %v7601 = vadd.f32 %v7528, %v7600
        %v7602 = vpop.f32.mrb[0].mxu0
        %v7603 = vadd.f32 %v7530, %v7602
        %v7604 = vpop.f32.mrb[0].mxu0
        %v7605 = vadd.f32 %v7532, %v7604
        %v7606 = vpop.f32.mrb[0].mxu0
        %v7607 = vadd.f32 %v7534, %v7606
        %7608 = vdwg.mxu0
        %7609 = vmatprep.subr.bf16.mxu0 %v7034
        %7610 = vmatpush1.bf16.msra.mxu0 %v7033
        %7611 = vmatprep.subr.bf16.mxu0 %v7043
        %7612 = vmatpush1.bf16.msra.mxu0 %v7042
        %7613 = vmatprep.subr.bf16.mxu0 %v7052
        %7614 = vmatpush1.bf16.msra.mxu0 %v7051
        %7615 = vmatprep.subr.bf16.mxu0 %v7061
        %7616 = vmatpush1.bf16.msra.mxu0 %v7060
        %7617 = vmatprep.subr.bf16.mxu0 %v7070
        %7618 = vmatpush1.bf16.msra.mxu0 %v7069
        %7619 = vmatprep.subr.bf16.mxu0 %v7079
        %7620 = vmatpush1.bf16.msra.mxu0 %v7078
        %7621 = vmatprep.subr.bf16.mxu0 %v7088
        %7622 = vmatpush1.bf16.msra.mxu0 %v7087
        %7623 = vmatprep.subr.bf16.mxu0 %v7097
        %7624 = vmatpush1.bf16.msra.mxu0 %v7096
        %7625 = vmatprep.subr.bf16.mxu0 %v7106
        %7626 = vmatpush1.bf16.msra.mxu0 %v7105
        %7627 = vmatprep.subr.bf16.mxu0 %v7115
        %7628 = vmatpush1.bf16.msra.mxu0 %v7114
        %7629 = vmatprep.subr.bf16.mxu0 %v7124
        %7630 = vmatpush1.bf16.msra.mxu0 %v7123
        %7631 = vmatprep.subr.bf16.mxu0 %v7133
        %7632 = vmatpush1.bf16.msra.mxu0 %v7132
        %7633 = vmatprep.subr.bf16.mxu0 %v7142
        %7634 = vmatpush1.bf16.msra.mxu0 %v7141
        %7635 = vmatprep.subr.bf16.mxu0 %v7151
        %7636 = vmatpush1.bf16.msra.mxu0 %v7150
        %7637 = vmatprep.subr.bf16.mxu0 %v7160
        %7638 = vmatpush1.bf16.msra.mxu0 %v7159
        %7639 = vmatprep.subr.bf16.mxu0 %v7169
        %7640 = vmatpush1.bf16.msra.mxu0 %v7168
        %7641 = vmatprep.mubr.bf16.mxu0 %v6108
        %7642 = vmatmul.mubr.bf16.gmra.mrb[0].mxu0 %v6107
        %v7643 = vpop.f32.mrb[0].mxu0
        %v7644 = vadd.f32 0.0, %v7643
        %v7645 = vpop.f32.mrb[0].mxu0
        %v7646 = vadd.f32 0.0, %v7645
        %v7647 = vpop.f32.mrb[0].mxu0
        %v7648 = vadd.f32 0.0, %v7647
        %v7649 = vpop.f32.mrb[0].mxu0
        %v7650 = vadd.f32 0.0, %v7649
        %7651 = vmatprep.mubr.bf16.mxu0 %v6111
        %7652 = vmatmul.mubr.bf16.gmra.mrb[0].mxu0 %v6110
        %v7653 = vpop.f32.mrb[0].mxu0
        %v7654 = vadd.f32 0.0, %v7653
        %v7655 = vpop.f32.mrb[0].mxu0
        %v7656 = vadd.f32 0.0, %v7655
        %v7657 = vpop.f32.mrb[0].mxu0
        %v7658 = vadd.f32 0.0, %v7657
        %v7659 = vpop.f32.mrb[0].mxu0
        %v7660 = vadd.f32 0.0, %v7659
        %7661 = vmatprep.mubr.bf16.mxu0 %v6114
        %7662 = vmatmul.mubr.bf16.gmra.mrb[0].mxu0 %v6113
        %v7663 = vpop.f32.mrb[0].mxu0
        %v7664 = vadd.f32 0.0, %v7663
        %v7665 = vpop.f32.mrb[0].mxu0
        %v7666 = vadd.f32 0.0, %v7665
        %v7667 = vpop.f32.mrb[0].mxu0
        %v7668 = vadd.f32 0.0, %v7667
        %v7669 = vpop.f32.mrb[0].mxu0
        %v7670 = vadd.f32 0.0, %v7669
        %7671 = vmatprep.mubr.bf16.mxu0 %v6117
        %7672 = vmatmul.mubr.bf16.gmra.mrb[0].mxu0 %v6116
        %v7673 = vpop.f32.mrb[0].mxu0
        %v7674 = vadd.f32 0.0, %v7673
        %v7675 = vpop.f32.mrb[0].mxu0
        %v7676 = vadd.f32 0.0, %v7675
        %v7677 = vpop.f32.mrb[0].mxu0
        %v7678 = vadd.f32 0.0, %v7677
        %v7679 = vpop.f32.mrb[0].mxu0
        %v7680 = vadd.f32 0.0, %v7679
        %7681 = vdwg.mxu0
        %7682 = vmatprep.subr.bf16.mxu0 %v7178
        %7683 = vmatpush1.bf16.msra.mxu0 %v7177
        %7684 = vmatprep.subr.bf16.mxu0 %v7187
        %7685 = vmatpush1.bf16.msra.mxu0 %v7186
        %7686 = vmatprep.subr.bf16.mxu0 %v7196
        %7687 = vmatpush1.bf16.msra.mxu0 %v7195
        %7688 = vmatprep.subr.bf16.mxu0 %v7205
        %7689 = vmatpush1.bf16.msra.mxu0 %v7204
        %7690 = vmatprep.subr.bf16.mxu0 %v7214
        %7691 = vmatpush1.bf16.msra.mxu0 %v7213
        %7692 = vmatprep.subr.bf16.mxu0 %v7223
        %7693 = vmatpush1.bf16.msra.mxu0 %v7222
        %7694 = vmatprep.subr.bf16.mxu0 %v7232
        %7695 = vmatpush1.bf16.msra.mxu0 %v7231
        %7696 = vmatprep.subr.bf16.mxu0 %v7241
        %7697 = vmatpush1.bf16.msra.mxu0 %v7240
        %7698 = vmatprep.subr.bf16.mxu0 0
        %7699 = vmatpush1.bf16.msra.mxu0 0
        %7700 = vmatprep.subr.bf16.mxu0 0
        %7701 = vmatpush1.bf16.msra.mxu0 0
        %7702 = vmatprep.subr.bf16.mxu0 0
        %7703 = vmatpush1.bf16.msra.mxu0 0
        %7704 = vmatprep.subr.bf16.mxu0 0
        %7705 = vmatpush1.bf16.msra.mxu0 0
        %7706 = vmatprep.subr.bf16.mxu0 0
        %7707 = vmatpush1.bf16.msra.mxu0 0
        %7708 = vmatprep.subr.bf16.mxu0 0
        %7709 = vmatpush1.bf16.msra.mxu0 0
        %7710 = vmatprep.subr.bf16.mxu0 0
        %7711 = vmatpush1.bf16.msra.mxu0 0
        %7712 = vmatprep.subr.bf16.mxu0 0
        %7713 = vmatpush1.bf16.msra.mxu0 0
        %7714 = vmatprep.mubr.bf16.mxu0 0
        %7715 = vmatmul.mubr.bf16.gmra.mrb[0].mxu0 %v6109
        %v7716 = vpop.f32.mrb[0].mxu0
        %v7717 = vadd.f32 %v7644, %v7716
        %v7718 = vpop.f32.mrb[0].mxu0
        %v7719 = vadd.f32 %v7646, %v7718
        %v7720 = vpop.f32.mrb[0].mxu0
        %v7721 = vadd.f32 %v7648, %v7720
        %v7722 = vpop.f32.mrb[0].mxu0
        %v7723 = vadd.f32 %v7650, %v7722
        %7724 = vmatprep.mubr.bf16.mxu0 0
        %7725 = vmatmul.mubr.bf16.gmra.mrb[0].mxu0 %v6112
        %v7726 = vpop.f32.mrb[0].mxu0
        %v7727 = vadd.f32 %v7654, %v7726
        %v7728 = vpop.f32.mrb[0].mxu0
        %v7729 = vadd.f32 %v7656, %v7728
        %v7730 = vpop.f32.mrb[0].mxu0
        %v7731 = vadd.f32 %v7658, %v7730
        %v7732 = vpop.f32.mrb[0].mxu0
        %v7733 = vadd.f32 %v7660, %v7732
        %7734 = vmatprep.mubr.bf16.mxu0 0
        %7735 = vmatmul.mubr.bf16.gmra.mrb[0].mxu0 %v6115
        %v7736 = vpop.f32.mrb[0].mxu0
        %v7737 = vadd.f32 %v7664, %v7736
        %v7738 = vpop.f32.mrb[0].mxu0
        %v7739 = vadd.f32 %v7666, %v7738
        %v7740 = vpop.f32.mrb[0].mxu0
        %v7741 = vadd.f32 %v7668, %v7740
        %v7742 = vpop.f32.mrb[0].mxu0
        %v7743 = vadd.f32 %v7670, %v7742
        %7744 = vmatprep.mubr.bf16.mxu0 0
        %7745 = vmatmul.mubr.bf16.gmra.mrb[0].mxu0 %v6118
        %v7746 = vpop.f32.mrb[0].mxu0
        %v7747 = vadd.f32 %v7674, %v7746
        %v7748 = vpop.f32.mrb[0].mxu0
        %v7749 = vadd.f32 %v7676, %v7748
        %v7750 = vpop.f32.mrb[0].mxu0
        %v7751 = vadd.f32 %v7678, %v7750
        %v7752 = vpop.f32.mrb[0].mxu0
        %v7753 = vadd.f32 %v7680, %v7752
        %7754 = vdwg.mxu0
        %7755 = vmatprep.subr.bf16.mxu0 %v7036
        %7756 = vmatpush1.bf16.msra.mxu0 %v7035
        %7757 = vmatprep.subr.bf16.mxu0 %v7045
        %7758 = vmatpush1.bf16.msra.mxu0 %v7044
        %7759 = vmatprep.subr.bf16.mxu0 %v7054
        %7760 = vmatpush1.bf16.msra.mxu0 %v7053
        %7761 = vmatprep.subr.bf16.mxu0 %v7063
        %7762 = vmatpush1.bf16.msra.mxu0 %v7062
        %7763 = vmatprep.subr.bf16.mxu0 %v7072
        %7764 = vmatpush1.bf16.msra.mxu0 %v7071
        %7765 = vmatprep.subr.bf16.mxu0 %v7081
        %7766 = vmatpush1.bf16.msra.mxu0 %v7080
        %7767 = vmatprep.subr.bf16.mxu0 %v7090
        %7768 = vmatpush1.bf16.msra.mxu0 %v7089
        %7769 = vmatprep.subr.bf16.mxu0 %v7099
        %7770 = vmatpush1.bf16.msra.mxu0 %v7098
        %7771 = vmatprep.subr.bf16.mxu0 %v7108
        %7772 = vmatpush1.bf16.msra.mxu0 %v7107
        %7773 = vmatprep.subr.bf16.mxu0 %v7117
        %7774 = vmatpush1.bf16.msra.mxu0 %v7116
        %7775 = vmatprep.subr.bf16.mxu0 %v7126
        %7776 = vmatpush1.bf16.msra.mxu0 %v7125
        %7777 = vmatprep.subr.bf16.mxu0 %v7135
        %7778 = vmatpush1.bf16.msra.mxu0 %v7134
        %7779 = vmatprep.subr.bf16.mxu0 %v7144
        %7780 = vmatpush1.bf16.msra.mxu0 %v7143
        %7781 = vmatprep.subr.bf16.mxu0 %v7153
        %7782 = vmatpush1.bf16.msra.mxu0 %v7152
        %7783 = vmatprep.subr.bf16.mxu0 %v7162
        %7784 = vmatpush1.bf16.msra.mxu0 %v7161
        %7785 = vmatprep.subr.bf16.mxu0 %v7171
        %7786 = vmatpush1.bf16.msra.mxu0 %v7170
        %7787 = vmatprep.mubr.bf16.mxu0 %v6108
        %7788 = vmatmul.mubr.bf16.gmra.mrb[0].mxu0 %v6107
        %v7789 = vpop.f32.mrb[0].mxu0
        %v7790 = vadd.f32 0.0, %v7789
        %v7791 = vpop.f32.mrb[0].mxu0
        %v7792 = vadd.f32 0.0, %v7791
        %v7793 = vpop.f32.mrb[0].mxu0
        %v7794 = vadd.f32 0.0, %v7793
        %v7795 = vpop.f32.mrb[0].mxu0
        %v7796 = vadd.f32 0.0, %v7795
        %7797 = vmatprep.mubr.bf16.mxu0 %v6111
        %7798 = vmatmul.mubr.bf16.gmra.mrb[0].mxu0 %v6110
        %v7799 = vpop.f32.mrb[0].mxu0
        %v7800 = vadd.f32 0.0, %v7799
        %v7801 = vpop.f32.mrb[0].mxu0
        %v7802 = vadd.f32 0.0, %v7801
        %v7803 = vpop.f32.mrb[0].mxu0
        %v7804 = vadd.f32 0.0, %v7803
        %v7805 = vpop.f32.mrb[0].mxu0
        %v7806 = vadd.f32 0.0, %v7805
        %7807 = vmatprep.mubr.bf16.mxu0 %v6114
        %7808 = vmatmul.mubr.bf16.gmra.mrb[0].mxu0 %v6113
        %v7809 = vpop.f32.mrb[0].mxu0
        %v7810 = vadd.f32 0.0, %v7809
        %v7811 = vpop.f32.mrb[0].mxu0
        %v7812 = vadd.f32 0.0, %v7811
        %v7813 = vpop.f32.mrb[0].mxu0
        %v7814 = vadd.f32 0.0, %v7813
        %v7815 = vpop.f32.mrb[0].mxu0
        %v7816 = vadd.f32 0.0, %v7815
        %7817 = vmatprep.mubr.bf16.mxu0 %v6117
        %7818 = vmatmul.mubr.bf16.gmra.mrb[0].mxu0 %v6116
        %v7819 = vpop.f32.mrb[0].mxu0
        %v7820 = vadd.f32 0.0, %v7819
        %v7821 = vpop.f32.mrb[0].mxu0
        %v7822 = vadd.f32 0.0, %v7821
        %v7823 = vpop.f32.mrb[0].mxu0
        %v7824 = vadd.f32 0.0, %v7823
        %v7825 = vpop.f32.mrb[0].mxu0
        %v7826 = vadd.f32 0.0, %v7825
        %7827 = vdwg.mxu0
        %7828 = vmatprep.subr.bf16.mxu0 %v7180
        %7829 = vmatpush1.bf16.msra.mxu0 %v7179
        %7830 = vmatprep.subr.bf16.mxu0 %v7189
        %7831 = vmatpush1.bf16.msra.mxu0 %v7188
        %7832 = vmatprep.subr.bf16.mxu0 %v7198
        %7833 = vmatpush1.bf16.msra.mxu0 %v7197
        %7834 = vmatprep.subr.bf16.mxu0 %v7207
        %7835 = vmatpush1.bf16.msra.mxu0 %v7206
        %7836 = vmatprep.subr.bf16.mxu0 %v7216
        %7837 = vmatpush1.bf16.msra.mxu0 %v7215
        %7838 = vmatprep.subr.bf16.mxu0 %v7225
        %7839 = vmatpush1.bf16.msra.mxu0 %v7224
        %7840 = vmatprep.subr.bf16.mxu0 %v7234
        %7841 = vmatpush1.bf16.msra.mxu0 %v7233
        %7842 = vmatprep.subr.bf16.mxu0 %v7243
        %7843 = vmatpush1.bf16.msra.mxu0 %v7242
        %7844 = vmatprep.subr.bf16.mxu0 0
        %7845 = vmatpush1.bf16.msra.mxu0 0
        %7846 = vmatprep.subr.bf16.mxu0 0
        %7847 = vmatpush1.bf16.msra.mxu0 0
        %7848 = vmatprep.subr.bf16.mxu0 0
        %7849 = vmatpush1.bf16.msra.mxu0 0
        %7850 = vmatprep.subr.bf16.mxu0 0
        %7851 = vmatpush1.bf16.msra.mxu0 0
        %7852 = vmatprep.subr.bf16.mxu0 0
        %7853 = vmatpush1.bf16.msra.mxu0 0
        %7854 = vmatprep.subr.bf16.mxu0 0
        %7855 = vmatpush1.bf16.msra.mxu0 0
        %7856 = vmatprep.subr.bf16.mxu0 0
        %7857 = vmatpush1.bf16.msra.mxu0 0
        %7858 = vmatprep.subr.bf16.mxu0 0
        %7859 = vmatpush1.bf16.msra.mxu0 0
        %7860 = vmatprep.mubr.bf16.mxu0 0
        %7861 = vmatmul.mubr.bf16.gmra.mrb[0].mxu0 %v6109
        %v7862 = vpop.f32.mrb[0].mxu0
        %v7863 = vadd.f32 %v7790, %v7862
        %v7864 = vpop.f32.mrb[0].mxu0
        %v7865 = vadd.f32 %v7792, %v7864
        %v7866 = vpop.f32.mrb[0].mxu0
        %v7867 = vadd.f32 %v7794, %v7866
        %v7868 = vpop.f32.mrb[0].mxu0
        %v7869 = vadd.f32 %v7796, %v7868
        %7870 = vmatprep.mubr.bf16.mxu0 0
        %7871 = vmatmul.mubr.bf16.gmra.mrb[0].mxu0 %v6112
        %v7872 = vpop.f32.mrb[0].mxu0
        %v7873 = vadd.f32 %v7800, %v7872
        %v7874 = vpop.f32.mrb[0].mxu0
        %v7875 = vadd.f32 %v7802, %v7874
        %v7876 = vpop.f32.mrb[0].mxu0
        %v7877 = vadd.f32 %v7804, %v7876
        %v7878 = vpop.f32.mrb[0].mxu0
        %v7879 = vadd.f32 %v7806, %v7878
        %7880 = vmatprep.mubr.bf16.mxu0 0
        %7881 = vmatmul.mubr.bf16.gmra.mrb[0].mxu0 %v6115
        %v7882 = vpop.f32.mrb[0].mxu0
        %v7883 = vadd.f32 %v7810, %v7882
        %v7884 = vpop.f32.mrb[0].mxu0
        %v7885 = vadd.f32 %v7812, %v7884
        %v7886 = vpop.f32.mrb[0].mxu0
        %v7887 = vadd.f32 %v7814, %v7886
        %v7888 = vpop.f32.mrb[0].mxu0
        %v7889 = vadd.f32 %v7816, %v7888
        %7890 = vmatprep.mubr.bf16.mxu0 0
        %7891 = vmatmul.mubr.bf16.gmra.mrb[0].mxu0 %v6118
        %v7892 = vpop.f32.mrb[0].mxu0
        %v7893 = vadd.f32 %v7820, %v7892
        %v7894 = vpop.f32.mrb[0].mxu0
        %v7895 = vadd.f32 %v7822, %v7894
        %v7896 = vpop.f32.mrb[0].mxu0
        %v7897 = vadd.f32 %v7824, %v7896
        %v7898 = vpop.f32.mrb[0].mxu0
        %v7899 = vadd.f32 %v7826, %v7898
        %7900 = vdwg.mxu0
        %7901 = vmatprep.subr.bf16.mxu0 %v7038
        %7902 = vmatpush1.bf16.msra.mxu0 %v7037
        %7903 = vmatprep.subr.bf16.mxu0 %v7047
        %7904 = vmatpush1.bf16.msra.mxu0 %v7046
        %7905 = vmatprep.subr.bf16.mxu0 %v7056
        %7906 = vmatpush1.bf16.msra.mxu0 %v7055
        %7907 = vmatprep.subr.bf16.mxu0 %v7065
        %7908 = vmatpush1.bf16.msra.mxu0 %v7064
        %7909 = vmatprep.subr.bf16.mxu0 %v7074
        %7910 = vmatpush1.bf16.msra.mxu0 %v7073
        %7911 = vmatprep.subr.bf16.mxu0 %v7083
        %7912 = vmatpush1.bf16.msra.mxu0 %v7082
        %7913 = vmatprep.subr.bf16.mxu0 %v7092
        %7914 = vmatpush1.bf16.msra.mxu0 %v7091
        %7915 = vmatprep.subr.bf16.mxu0 %v7101
        %7916 = vmatpush1.bf16.msra.mxu0 %v7100
        %7917 = vmatprep.subr.bf16.mxu0 %v7110
        %7918 = vmatpush1.bf16.msra.mxu0 %v7109
        %7919 = vmatprep.subr.bf16.mxu0 %v7119
        %7920 = vmatpush1.bf16.msra.mxu0 %v7118
        %7921 = vmatprep.subr.bf16.mxu0 %v7128
        %7922 = vmatpush1.bf16.msra.mxu0 %v7127
        %7923 = vmatprep.subr.bf16.mxu0 %v7137
        %7924 = vmatpush1.bf16.msra.mxu0 %v7136
        %7925 = vmatprep.subr.bf16.mxu0 %v7146
        %7926 = vmatpush1.bf16.msra.mxu0 %v7145
        %7927 = vmatprep.subr.bf16.mxu0 %v7155
        %7928 = vmatpush1.bf16.msra.mxu0 %v7154
        %7929 = vmatprep.subr.bf16.mxu0 %v7164
        %7930 = vmatpush1.bf16.msra.mxu0 %v7163
        %7931 = vmatprep.subr.bf16.mxu0 %v7173
        %7932 = vmatpush1.bf16.msra.mxu0 %v7172
        %7933 = vmatprep.mubr.bf16.mxu0 %v6108
        %7934 = vmatmul.mubr.bf16.gmra.mrb[0].mxu0 %v6107
        %v7935 = vpop.f32.mrb[0].mxu0
        %v7936 = vadd.f32 0.0, %v7935
        %v7937 = vpop.f32.mrb[0].mxu0
        %v7938 = vadd.f32 0.0, %v7937
        %v7939 = vpop.f32.mrb[0].mxu0
        %v7940 = vadd.f32 0.0, %v7939
        %v7941 = vpop.f32.mrb[0].mxu0
        %v7942 = vadd.f32 0.0, %v7941
        %7943 = vmatprep.mubr.bf16.mxu0 %v6111
        %7944 = vmatmul.mubr.bf16.gmra.mrb[0].mxu0 %v6110
        %v7945 = vpop.f32.mrb[0].mxu0
        %v7946 = vadd.f32 0.0, %v7945
        %v7947 = vpop.f32.mrb[0].mxu0
        %v7948 = vadd.f32 0.0, %v7947
        %v7949 = vpop.f32.mrb[0].mxu0
        %v7950 = vadd.f32 0.0, %v7949
        %v7951 = vpop.f32.mrb[0].mxu0
        %v7952 = vadd.f32 0.0, %v7951
        %7953 = vmatprep.mubr.bf16.mxu0 %v6114
        %7954 = vmatmul.mubr.bf16.gmra.mrb[0].mxu0 %v6113
        %v7955 = vpop.f32.mrb[0].mxu0
        %v7956 = vadd.f32 0.0, %v7955
        %v7957 = vpop.f32.mrb[0].mxu0
        %v7958 = vadd.f32 0.0, %v7957
        %v7959 = vpop.f32.mrb[0].mxu0
        %v7960 = vadd.f32 0.0, %v7959
        %v7961 = vpop.f32.mrb[0].mxu0
        %v7962 = vadd.f32 0.0, %v7961
        %7963 = vmatprep.mubr.bf16.mxu0 %v6117
        %7964 = vmatmul.mubr.bf16.gmra.mrb[0].mxu0 %v6116
        %v7965 = vpop.f32.mrb[0].mxu0
        %v7966 = vadd.f32 0.0, %v7965
        %v7967 = vpop.f32.mrb[0].mxu0
        %v7968 = vadd.f32 0.0, %v7967
        %v7969 = vpop.f32.mrb[0].mxu0
        %v7970 = vadd.f32 0.0, %v7969
        %v7971 = vpop.f32.mrb[0].mxu0
        %v7972 = vadd.f32 0.0, %v7971
        %7973 = vdwg.mxu0
        %7974 = vmatprep.subr.bf16.mxu0 %v7182
        %7975 = vmatpush1.bf16.msra.mxu0 %v7181
        %7976 = vmatprep.subr.bf16.mxu0 %v7191
        %7977 = vmatpush1.bf16.msra.mxu0 %v7190
        %7978 = vmatprep.subr.bf16.mxu0 %v7200
        %7979 = vmatpush1.bf16.msra.mxu0 %v7199
        %7980 = vmatprep.subr.bf16.mxu0 %v7209
        %7981 = vmatpush1.bf16.msra.mxu0 %v7208
        %7982 = vmatprep.subr.bf16.mxu0 %v7218
        %7983 = vmatpush1.bf16.msra.mxu0 %v7217
        %7984 = vmatprep.subr.bf16.mxu0 %v7227
        %7985 = vmatpush1.bf16.msra.mxu0 %v7226
        %7986 = vmatprep.subr.bf16.mxu0 %v7236
        %7987 = vmatpush1.bf16.msra.mxu0 %v7235
        %7988 = vmatprep.subr.bf16.mxu0 %v7245
        %7989 = vmatpush1.bf16.msra.mxu0 %v7244
        %7990 = vmatprep.subr.bf16.mxu0 0
        %7991 = vmatpush1.bf16.msra.mxu0 0
        %7992 = vmatprep.subr.bf16.mxu0 0
        %7993 = vmatpush1.bf16.msra.mxu0 0
        %7994 = vmatprep.subr.bf16.mxu0 0
        %7995 = vmatpush1.bf16.msra.mxu0 0
        %7996 = vmatprep.subr.bf16.mxu0 0
        %7997 = vmatpush1.bf16.msra.mxu0 0
        %7998 = vmatprep.subr.bf16.mxu0 0
        %7999 = vmatpush1.bf16.msra.mxu0 0
        %8000 = vmatprep.subr.bf16.mxu0 0
        %8001 = vmatpush1.bf16.msra.mxu0 0
        %8002 = vmatprep.subr.bf16.mxu0 0
        %8003 = vmatpush1.bf16.msra.mxu0 0
        %8004 = vmatprep.subr.bf16.mxu0 0
        %8005 = vmatpush1.bf16.msra.mxu0 0
        %8006 = vmatprep.mubr.bf16.mxu0 0
        %8007 = vmatmul.mubr.bf16.gmra.mrb[0].mxu0 %v6109
        %v8008 = vpop.f32.mrb[0].mxu0
        %v8009 = vadd.f32 %v7936, %v8008
        %v8010 = vpop.f32.mrb[0].mxu0
        %v8011 = vadd.f32 %v7938, %v8010
        %v8012 = vpop.f32.mrb[0].mxu0
        %v8013 = vadd.f32 %v7940, %v8012
        %v8014 = vpop.f32.mrb[0].mxu0
        %v8015 = vadd.f32 %v7942, %v8014
        %8016 = vmatprep.mubr.bf16.mxu0 0
        %8017 = vmatmul.mubr.bf16.gmra.mrb[0].mxu0 %v6112
        %v8018 = vpop.f32.mrb[0].mxu0
        %v8019 = vadd.f32 %v7946, %v8018
        %v8020 = vpop.f32.mrb[0].mxu0
        %v8021 = vadd.f32 %v7948, %v8020
        %v8022 = vpop.f32.mrb[0].mxu0
        %v8023 = vadd.f32 %v7950, %v8022
        %v8024 = vpop.f32.mrb[0].mxu0
        %v8025 = vadd.f32 %v7952, %v8024
        %8026 = vmatprep.mubr.bf16.mxu0 0
        %8027 = vmatmul.mubr.bf16.gmra.mrb[0].mxu0 %v6115
        %v8028 = vpop.f32.mrb[0].mxu0
        %v8029 = vadd.f32 %v7956, %v8028
        %v8030 = vpop.f32.mrb[0].mxu0
        %v8031 = vadd.f32 %v7958, %v8030
        %v8032 = vpop.f32.mrb[0].mxu0
        %v8033 = vadd.f32 %v7960, %v8032
        %v8034 = vpop.f32.mrb[0].mxu0
        %v8035 = vadd.f32 %v7962, %v8034
        %8036 = vmatprep.mubr.bf16.mxu0 0
        %8037 = vmatmul.mubr.bf16.gmra.mrb[0].mxu0 %v6118
        %v8038 = vpop.f32.mrb[0].mxu0
        %v8039 = vadd.f32 %v7966, %v8038
        %v8040 = vpop.f32.mrb[0].mxu0
        %v8041 = vadd.f32 %v7968, %v8040
        %v8042 = vpop.f32.mrb[0].mxu0
        %v8043 = vadd.f32 %v7970, %v8042
        %v8044 = vpop.f32.mrb[0].mxu0
        %v8045 = vadd.f32 %v7972, %v8044
        %8046 = vdwg.mxu0
        %8047 = vmatprep.subr.bf16.mxu0 0
        %8048 = vmatpush1.bf16.msra.mxu0 %v7039
        %8049 = vmatprep.subr.bf16.mxu0 0
        %8050 = vmatpush1.bf16.msra.mxu0 %v7048
        %8051 = vmatprep.subr.bf16.mxu0 0
        %8052 = vmatpush1.bf16.msra.mxu0 %v7057
        %8053 = vmatprep.subr.bf16.mxu0 0
        %8054 = vmatpush1.bf16.msra.mxu0 %v7066
        %8055 = vmatprep.subr.bf16.mxu0 0
        %8056 = vmatpush1.bf16.msra.mxu0 %v7075
        %8057 = vmatprep.subr.bf16.mxu0 0
        %8058 = vmatpush1.bf16.msra.mxu0 %v7084
        %8059 = vmatprep.subr.bf16.mxu0 0
        %8060 = vmatpush1.bf16.msra.mxu0 %v7093
        %8061 = vmatprep.subr.bf16.mxu0 0
        %8062 = vmatpush1.bf16.msra.mxu0 %v7102
        %8063 = vmatprep.subr.bf16.mxu0 0
        %8064 = vmatpush1.bf16.msra.mxu0 %v7111
        %8065 = vmatprep.subr.bf16.mxu0 0
        %8066 = vmatpush1.bf16.msra.mxu0 %v7120
        %8067 = vmatprep.subr.bf16.mxu0 0
        %8068 = vmatpush1.bf16.msra.mxu0 %v7129
        %8069 = vmatprep.subr.bf16.mxu0 0
        %8070 = vmatpush1.bf16.msra.mxu0 %v7138
        %8071 = vmatprep.subr.bf16.mxu0 0
        %8072 = vmatpush1.bf16.msra.mxu0 %v7147
        %8073 = vmatprep.subr.bf16.mxu0 0
        %8074 = vmatpush1.bf16.msra.mxu0 %v7156
        %8075 = vmatprep.subr.bf16.mxu0 0
        %8076 = vmatpush1.bf16.msra.mxu0 %v7165
        %8077 = vmatprep.subr.bf16.mxu0 0
        %8078 = vmatpush1.bf16.msra.mxu0 %v7174
        %8079 = vmatprep.mubr.bf16.mxu0 %v6108
        %8080 = vmatmul.mubr.bf16.gmra.mrb[0].mxu0 %v6107
        %v8081 = vpop.f32.mrb[0].mxu0
        %v8082 = vadd.f32 0.0, %v8081
        %v8083 = vpop.f32.mrb[0].mxu0
        %v8084 = vpop.f32.mrb[0].mxu0
        %v8085 = vadd.f32 0.0, %v8084
        %v8086 = vpop.f32.mrb[0].mxu0
        %8087 = vmatprep.mubr.bf16.mxu0 %v6111
        %8088 = vmatmul.mubr.bf16.gmra.mrb[0].mxu0 %v6110
        %v8089 = vpop.f32.mrb[0].mxu0
        %v8090 = vadd.f32 0.0, %v8089
        %v8091 = vpop.f32.mrb[0].mxu0
        %v8092 = vpop.f32.mrb[0].mxu0
        %v8093 = vadd.f32 0.0, %v8092
        %v8094 = vpop.f32.mrb[0].mxu0
        %8095 = vmatprep.mubr.bf16.mxu0 %v6114
        %8096 = vmatmul.mubr.bf16.gmra.mrb[0].mxu0 %v6113
        %v8097 = vpop.f32.mrb[0].mxu0
        %v8098 = vadd.f32 0.0, %v8097
        %v8099 = vpop.f32.mrb[0].mxu0
        %v8100 = vpop.f32.mrb[0].mxu0
        %v8101 = vadd.f32 0.0, %v8100
        %v8102 = vpop.f32.mrb[0].mxu0
        %8103 = vmatprep.mubr.bf16.mxu0 %v6117
        %8104 = vmatmul.mubr.bf16.gmra.mrb[0].mxu0 %v6116
        %v8105 = vpop.f32.mrb[0].mxu0
        %v8106 = vadd.f32 0.0, %v8105
        %v8107 = vpop.f32.mrb[0].mxu0
        %v8108 = vpop.f32.mrb[0].mxu0
        %v8109 = vadd.f32 0.0, %v8108
        %v8110 = vpop.f32.mrb[0].mxu0
        %8111 = vdwg.mxu0
        %8112 = vmatprep.subr.bf16.mxu0 0
        %8113 = vmatpush1.bf16.msra.mxu0 %v7183
        %8114 = vmatprep.subr.bf16.mxu0 0
        %8115 = vmatpush1.bf16.msra.mxu0 %v7192
        %8116 = vmatprep.subr.bf16.mxu0 0
        %8117 = vmatpush1.bf16.msra.mxu0 %v7201
        %8118 = vmatprep.subr.bf16.mxu0 0
        %8119 = vmatpush1.bf16.msra.mxu0 %v7210
        %8120 = vmatprep.subr.bf16.mxu0 0
        %8121 = vmatpush1.bf16.msra.mxu0 %v7219
        %8122 = vmatprep.subr.bf16.mxu0 0
        %8123 = vmatpush1.bf16.msra.mxu0 %v7228
        %8124 = vmatprep.subr.bf16.mxu0 0
        %8125 = vmatpush1.bf16.msra.mxu0 %v7237
        %8126 = vmatprep.subr.bf16.mxu0 0
        %8127 = vmatpush1.bf16.msra.mxu0 %v7246
        %8128 = vmatprep.subr.bf16.mxu0 0
        %8129 = vmatpush1.bf16.msra.mxu0 0
        %8130 = vmatprep.subr.bf16.mxu0 0
        %8131 = vmatpush1.bf16.msra.mxu0 0
        %8132 = vmatprep.subr.bf16.mxu0 0
        %8133 = vmatpush1.bf16.msra.mxu0 0
        %8134 = vmatprep.subr.bf16.mxu0 0
        %8135 = vmatpush1.bf16.msra.mxu0 0
        %8136 = vmatprep.subr.bf16.mxu0 0
        %8137 = vmatpush1.bf16.msra.mxu0 0
        %8138 = vmatprep.subr.bf16.mxu0 0
        %8139 = vmatpush1.bf16.msra.mxu0 0
        %8140 = vmatprep.subr.bf16.mxu0 0
        %8141 = vmatpush1.bf16.msra.mxu0 0
        %8142 = vmatprep.subr.bf16.mxu0 0
        %8143 = vmatpush1.bf16.msra.mxu0 0
        %8144 = vmatprep.mubr.bf16.mxu0 0
        %8145 = vmatmul.mubr.bf16.gmra.mrb[0].mxu0 %v6109
        %v8146 = vpop.f32.mrb[0].mxu0
        %v8147 = vadd.f32 %v8082, %v8146
        %v8148 = vpop.f32.mrb[0].mxu0
        %v8149 = vpop.f32.mrb[0].mxu0
        %v8150 = vadd.f32 %v8085, %v8149
        %v8151 = vpop.f32.mrb[0].mxu0
        %8152 = vmatprep.mubr.bf16.mxu0 0
        %8153 = vmatmul.mubr.bf16.gmra.mrb[0].mxu0 %v6112
        %v8154 = vpop.f32.mrb[0].mxu0
        %v8155 = vadd.f32 %v8090, %v8154
        %v8156 = vpop.f32.mrb[0].mxu0
        %v8157 = vpop.f32.mrb[0].mxu0
        %v8158 = vadd.f32 %v8093, %v8157
        %v8159 = vpop.f32.mrb[0].mxu0
        %8160 = vmatprep.mubr.bf16.mxu0 0
        %8161 = vmatmul.mubr.bf16.gmra.mrb[0].mxu0 %v6115
        %v8162 = vpop.f32.mrb[0].mxu0
        %v8163 = vadd.f32 %v8098, %v8162
        %v8164 = vpop.f32.mrb[0].mxu0
        %v8165 = vpop.f32.mrb[0].mxu0
        %v8166 = vadd.f32 %v8101, %v8165
        %v8167 = vpop.f32.mrb[0].mxu0
        %8168 = vmatprep.mubr.bf16.mxu0 0
        %8169 = vmatmul.mubr.bf16.gmra.mrb[0].mxu0 %v6118
        %v8170 = vpop.f32.mrb[0].mxu0
        %v8171 = vadd.f32 %v8106, %v8170
        %v8172 = vpop.f32.mrb[0].mxu0
        %v8173 = vpop.f32.mrb[0].mxu0
        %v8174 = vadd.f32 %v8109, %v8173
        %v8175 = vpop.f32.mrb[0].mxu0
        %8176 = vdwg.mxu0
        %v8177 = vld [vmem:[%s11] sm:$0xff]
        %v8178 = vld [vmem:[%s11 + $0x8] sm:$0x1]
        %v8181 = vlaneseq
        %v8182 = vshrl.u32 %v8181, 7
        %v8183 = vsub.s32 0, %v8182
        %v8184 = vrot.slane %v8177, %v8183
        %v8185 = vlaneseq
        %v8186 = vshrl.u32 %v8185, 7
        %v8187 = vsub.s32 1, %v8186
        %v8188 = vrot.slane %v8177, %v8187
        %v8189 = vlaneseq
        %v8190 = vshrl.u32 %v8189, 7
        %v8191 = vsub.s32 2, %v8190
        %v8192 = vrot.slane %v8177, %v8191
        %v8193 = vlaneseq
        %v8194 = vshrl.u32 %v8193, 7
        %v8195 = vsub.s32 3, %v8194
        %v8196 = vrot.slane %v8177, %v8195
        %v8197 = vlaneseq
        %v8198 = vshrl.u32 %v8197, 7
        %v8199 = vsub.s32 4, %v8198
        %v8200 = vrot.slane %v8177, %v8199
        %v8201 = vlaneseq
        %v8202 = vshrl.u32 %v8201, 7
        %v8203 = vsub.s32 5, %v8202
        %v8204 = vrot.slane %v8177, %v8203
        %v8205 = vlaneseq
        %v8206 = vshrl.u32 %v8205, 7
        %v8207 = vsub.s32 6, %v8206
        %v8208 = vrot.slane %v8177, %v8207
        %v8209 = vlaneseq
        %v8210 = vshrl.u32 %v8209, 7
        %v8211 = vsub.s32 7, %v8210
        %v8212 = vrot.slane %v8177, %v8211
        %v8213 = vlaneseq
        %v8214 = vshrl.u32 %v8213, 7
        %v8215 = vsub.s32 0, %v8214
        %v8216 = vrot.slane %v8178, %v8215
        %v8226 = vmul.f32 %v7571, %v8184
        %v8227 = vmul.f32 %v7573, %v8188
        %v8228 = vmul.f32 %v7717, %v8192
        %v8229 = vmul.f32 %v7719, %v8196
        %v8230 = vmul.f32 %v7863, %v8200
        %v8231 = vmul.f32 %v7865, %v8204
        %v8232 = vmul.f32 %v8009, %v8208
        %v8233 = vmul.f32 %v8011, %v8212
        %v8234 = vmul.f32 %v8147, %v8216
        %v8235 = vmul.f32 %v7575, %v8184
        %v8236 = vmul.f32 %v7577, %v8188
        %v8237 = vmul.f32 %v7721, %v8192
        %v8238 = vmul.f32 %v7723, %v8196
        %v8239 = vmul.f32 %v7867, %v8200
        %v8240 = vmul.f32 %v7869, %v8204
        %v8241 = vmul.f32 %v8013, %v8208
        %v8242 = vmul.f32 %v8015, %v8212
        %v8243 = vmul.f32 %v8150, %v8216
        %v8244 = vmul.f32 %v7581, %v8184
        %v8245 = vmul.f32 %v7583, %v8188
        %v8246 = vmul.f32 %v7727, %v8192
        %v8247 = vmul.f32 %v7729, %v8196
        %v8248 = vmul.f32 %v7873, %v8200
        %v8249 = vmul.f32 %v7875, %v8204
        %v8250 = vmul.f32 %v8019, %v8208
        %v8251 = vmul.f32 %v8021, %v8212
        %v8252 = vmul.f32 %v8155, %v8216
        %v8253 = vmul.f32 %v7585, %v8184
        %v8254 = vmul.f32 %v7587, %v8188
        %v8255 = vmul.f32 %v7731, %v8192
        %v8256 = vmul.f32 %v7733, %v8196
        %v8257 = vmul.f32 %v7877, %v8200
        %v8258 = vmul.f32 %v7879, %v8204
        %v8259 = vmul.f32 %v8023, %v8208
        %v8260 = vmul.f32 %v8025, %v8212
        %v8261 = vmul.f32 %v8158, %v8216
        %v8262 = vmul.f32 %v7591, %v8184
        %v8263 = vmul.f32 %v7593, %v8188
        %v8264 = vmul.f32 %v7737, %v8192
        %v8265 = vmul.f32 %v7739, %v8196
        %v8266 = vmul.f32 %v7883, %v8200
        %v8267 = vmul.f32 %v7885, %v8204
        %v8268 = vmul.f32 %v8029, %v8208
        %v8269 = vmul.f32 %v8031, %v8212
        %v8270 = vmul.f32 %v8163, %v8216
        %v8271 = vmul.f32 %v7595, %v8184
        %v8272 = vmul.f32 %v7597, %v8188
        %v8273 = vmul.f32 %v7741, %v8192
        %v8274 = vmul.f32 %v7743, %v8196
        %v8275 = vmul.f32 %v7887, %v8200
        %v8276 = vmul.f32 %v7889, %v8204
        %v8277 = vmul.f32 %v8033, %v8208
        %v8278 = vmul.f32 %v8035, %v8212
        %v8279 = vmul.f32 %v8166, %v8216
        %v8280 = vmul.f32 %v7601, %v8184
        %v8281 = vmul.f32 %v7603, %v8188
        %v8282 = vmul.f32 %v7747, %v8192
        %v8283 = vmul.f32 %v7749, %v8196
        %v8284 = vmul.f32 %v7893, %v8200
        %v8285 = vmul.f32 %v7895, %v8204
        %v8286 = vmul.f32 %v8039, %v8208
        %v8287 = vmul.f32 %v8041, %v8212
        %v8288 = vmul.f32 %v8171, %v8216
        %v8289 = vmul.f32 %v7605, %v8184
        %v8290 = vmul.f32 %v7607, %v8188
        %v8291 = vmul.f32 %v7751, %v8192
        %v8292 = vmul.f32 %v7753, %v8196
        %v8293 = vmul.f32 %v7897, %v8200
        %v8294 = vmul.f32 %v7899, %v8204
        %v8295 = vmul.f32 %v8043, %v8208
        %v8296 = vmul.f32 %v8045, %v8212
        %v8297 = vmul.f32 %v8174, %v8216
        %v8298 = vld [vmem:[%s12] sm:$0xff]
        %v8299 = vld [vmem:[%s12 + $0x8] sm:$0x1]
        %v8302 = vlaneseq
        %v8303 = vshrl.u32 %v8302, 7
        %v8304 = vsub.s32 0, %v8303
        %v8305 = vrot.slane %v8298, %v8304
        %v8306 = vlaneseq
        %v8307 = vshrl.u32 %v8306, 7
        %v8308 = vsub.s32 1, %v8307
        %v8309 = vrot.slane %v8298, %v8308
        %v8310 = vlaneseq
        %v8311 = vshrl.u32 %v8310, 7
        %v8312 = vsub.s32 2, %v8311
        %v8313 = vrot.slane %v8298, %v8312
        %v8314 = vlaneseq
        %v8315 = vshrl.u32 %v8314, 7
        %v8316 = vsub.s32 3, %v8315
        %v8317 = vrot.slane %v8298, %v8316
        %v8318 = vlaneseq
        %v8319 = vshrl.u32 %v8318, 7
        %v8320 = vsub.s32 4, %v8319
        %v8321 = vrot.slane %v8298, %v8320
        %v8322 = vlaneseq
        %v8323 = vshrl.u32 %v8322, 7
        %v8324 = vsub.s32 5, %v8323
        %v8325 = vrot.slane %v8298, %v8324
        %v8326 = vlaneseq
        %v8327 = vshrl.u32 %v8326, 7
        %v8328 = vsub.s32 6, %v8327
        %v8329 = vrot.slane %v8298, %v8328
        %v8330 = vlaneseq
        %v8331 = vshrl.u32 %v8330, 7
        %v8332 = vsub.s32 7, %v8331
        %v8333 = vrot.slane %v8298, %v8332
        %v8334 = vlaneseq
        %v8335 = vshrl.u32 %v8334, 7
        %v8336 = vsub.s32 0, %v8335
        %v8337 = vrot.slane %v8299, %v8336
        %v8347 = vadd.f32 %v8226, %v8305
        %v8348 = vadd.f32 %v8227, %v8309
        %v8349 = vadd.f32 %v8228, %v8313
        %v8350 = vadd.f32 %v8229, %v8317
        %v8351 = vadd.f32 %v8230, %v8321
        %v8352 = vadd.f32 %v8231, %v8325
        %v8353 = vadd.f32 %v8232, %v8329
        %v8354 = vadd.f32 %v8233, %v8333
        %v8355 = vadd.f32 %v8234, %v8337
        %v8356 = vadd.f32 %v8235, %v8305
        %v8357 = vadd.f32 %v8236, %v8309
        %v8358 = vadd.f32 %v8237, %v8313
        %v8359 = vadd.f32 %v8238, %v8317
        %v8360 = vadd.f32 %v8239, %v8321
        %v8361 = vadd.f32 %v8240, %v8325
        %v8362 = vadd.f32 %v8241, %v8329
        %v8363 = vadd.f32 %v8242, %v8333
        %v8364 = vadd.f32 %v8243, %v8337
        %v8365 = vadd.f32 %v8244, %v8305
        %v8366 = vadd.f32 %v8245, %v8309
        %v8367 = vadd.f32 %v8246, %v8313
        %v8368 = vadd.f32 %v8247, %v8317
        %v8369 = vadd.f32 %v8248, %v8321
        %v8370 = vadd.f32 %v8249, %v8325
        %v8371 = vadd.f32 %v8250, %v8329
        %v8372 = vadd.f32 %v8251, %v8333
        %v8373 = vadd.f32 %v8252, %v8337
        %v8374 = vadd.f32 %v8253, %v8305
        %v8375 = vadd.f32 %v8254, %v8309
        %v8376 = vadd.f32 %v8255, %v8313
        %v8377 = vadd.f32 %v8256, %v8317
        %v8378 = vadd.f32 %v8257, %v8321
        %v8379 = vadd.f32 %v8258, %v8325
        %v8380 = vadd.f32 %v8259, %v8329
        %v8381 = vadd.f32 %v8260, %v8333
        %v8382 = vadd.f32 %v8261, %v8337
        %v8383 = vadd.f32 %v8262, %v8305
        %v8384 = vadd.f32 %v8263, %v8309
        %v8385 = vadd.f32 %v8264, %v8313
        %v8386 = vadd.f32 %v8265, %v8317
        %v8387 = vadd.f32 %v8266, %v8321
        %v8388 = vadd.f32 %v8267, %v8325
        %v8389 = vadd.f32 %v8268, %v8329
        %v8390 = vadd.f32 %v8269, %v8333
        %v8391 = vadd.f32 %v8270, %v8337
        %v8392 = vadd.f32 %v8271, %v8305
        %v8393 = vadd.f32 %v8272, %v8309
        %v8394 = vadd.f32 %v8273, %v8313
        %v8395 = vadd.f32 %v8274, %v8317
        %v8396 = vadd.f32 %v8275, %v8321
        %v8397 = vadd.f32 %v8276, %v8325
        %v8398 = vadd.f32 %v8277, %v8329
        %v8399 = vadd.f32 %v8278, %v8333
        %v8400 = vadd.f32 %v8279, %v8337
        %v8401 = vadd.f32 %v8280, %v8305
        %v8402 = vadd.f32 %v8281, %v8309
        %v8403 = vadd.f32 %v8282, %v8313
        %v8404 = vadd.f32 %v8283, %v8317
        %v8405 = vadd.f32 %v8284, %v8321
        %v8406 = vadd.f32 %v8285, %v8325
        %v8407 = vadd.f32 %v8286, %v8329
        %v8408 = vadd.f32 %v8287, %v8333
        %v8409 = vadd.f32 %v8288, %v8337
        %v8410 = vadd.f32 %v8289, %v8305
        %v8411 = vadd.f32 %v8290, %v8309
        %v8412 = vadd.f32 %v8291, %v8313
        %v8413 = vadd.f32 %v8292, %v8317
        %v8414 = vadd.f32 %v8293, %v8321
        %v8415 = vadd.f32 %v8294, %v8325
        %v8416 = vadd.f32 %v8295, %v8329
        %v8417 = vadd.f32 %v8296, %v8333
        %v8418 = vadd.f32 %v8297, %v8337
        %8419 = vst [vmem:[%s433] sm:$0xff] %v8347
        %8420 = vst [vmem:[%s433 + $0x8] sm:$0xff] %v8348
        %8421 = vst [vmem:[%s433 + $0x10] sm:$0xff] %v8349
        %8422 = vst [vmem:[%s433 + $0x18] sm:$0xff] %v8350
        %8423 = vst [vmem:[%s433 + $0x20] sm:$0xff] %v8351
        %8424 = vst [vmem:[%s433 + $0x28] sm:$0xff] %v8352
        %8425 = vst [vmem:[%s433 + $0x30] sm:$0xff] %v8353
        %8426 = vst [vmem:[%s433 + $0x38] sm:$0xff] %v8354
        %8427 = vst [vmem:[%s433 + $0x40] sm:$0xff] %v8355
        %8428 = vst [vmem:[%s433 + $0x48] sm:$0xff] %v8356
        %8429 = vst [vmem:[%s433 + $0x50] sm:$0xff] %v8357
        %8430 = vst [vmem:[%s433 + $0x58] sm:$0xff] %v8358
        %8431 = vst [vmem:[%s433 + $0x60] sm:$0xff] %v8359
        %8432 = vst [vmem:[%s433 + $0x68] sm:$0xff] %v8360
        %8433 = vst [vmem:[%s433 + $0x70] sm:$0xff] %v8361
        %8434 = vst [vmem:[%s433 + $0x78] sm:$0xff] %v8362
        %8435 = vst [vmem:[%s433 + $0x80] sm:$0xff] %v8363
        %8436 = vst [vmem:[%s433 + $0x88] sm:$0xff] %v8364
        %8437 = vst [vmem:[%s433 + $0x90] sm:$0xff] %v8365
        %8438 = vst [vmem:[%s433 + $0x98] sm:$0xff] %v8366
        %8439 = vst [vmem:[%s433 + $0xa0] sm:$0xff] %v8367
        %8440 = vst [vmem:[%s433 + $0xa8] sm:$0xff] %v8368
        %8441 = vst [vmem:[%s433 + $0xb0] sm:$0xff] %v8369
        %8442 = vst [vmem:[%s433 + $0xb8] sm:$0xff] %v8370
        %8443 = vst [vmem:[%s433 + $0xc0] sm:$0xff] %v8371
        %8444 = vst [vmem:[%s433 + $0xc8] sm:$0xff] %v8372
        %8445 = vst [vmem:[%s433 + $0xd0] sm:$0xff] %v8373
        %8446 = vst [vmem:[%s433 + $0xd8] sm:$0xff] %v8374
        %8447 = vst [vmem:[%s433 + $0xe0] sm:$0xff] %v8375
        %8448 = vst [vmem:[%s433 + $0xe8] sm:$0xff] %v8376
        %8449 = vst [vmem:[%s433 + $0xf0] sm:$0xff] %v8377
        %8450 = vst [vmem:[%s433 + $0xf8] sm:$0xff] %v8378
        %8451 = vst [vmem:[%s433 + $0x100] sm:$0xff] %v8379
        %8452 = vst [vmem:[%s433 + $0x108] sm:$0xff] %v8380
        %8453 = vst [vmem:[%s433 + $0x110] sm:$0xff] %v8381
        %8454 = vst [vmem:[%s433 + $0x118] sm:$0xff] %v8382
        %8455 = vst [vmem:[%s433 + $0x120] sm:$0xff] %v8383
        %8456 = vst [vmem:[%s433 + $0x128] sm:$0xff] %v8384
        %8457 = vst [vmem:[%s433 + $0x130] sm:$0xff] %v8385
        %8458 = vst [vmem:[%s433 + $0x138] sm:$0xff] %v8386
        %8459 = vst [vmem:[%s433 + $0x140] sm:$0xff] %v8387
        %8460 = vst [vmem:[%s433 + $0x148] sm:$0xff] %v8388
        %8461 = vst [vmem:[%s433 + $0x150] sm:$0xff] %v8389
        %8462 = vst [vmem:[%s433 + $0x158] sm:$0xff] %v8390
        %8463 = vst [vmem:[%s433 + $0x160] sm:$0xff] %v8391
        %8464 = vst [vmem:[%s433 + $0x168] sm:$0xff] %v8392
        %8465 = vst [vmem:[%s433 + $0x170] sm:$0xff] %v8393
        %8466 = vst [vmem:[%s433 + $0x178] sm:$0xff] %v8394
        %8467 = vst [vmem:[%s433 + $0x180] sm:$0xff] %v8395
        %8468 = vst [vmem:[%s433 + $0x188] sm:$0xff] %v8396
        %8469 = vst [vmem:[%s433 + $0x190] sm:$0xff] %v8397
        %8470 = vst [vmem:[%s433 + $0x198] sm:$0xff] %v8398
        %8471 = vst [vmem:[%s433 + $0x1a0] sm:$0xff] %v8399
        %8472 = vst [vmem:[%s433 + $0x1a8] sm:$0xff] %v8400
        %8473 = vst [vmem:[%s433 + $0x1b0] sm:$0xff] %v8401
        %8474 = vst [vmem:[%s433 + $0x1b8] sm:$0xff] %v8402
        %8475 = vst [vmem:[%s433 + $0x1c0] sm:$0xff] %v8403
        %8476 = vst [vmem:[%s433 + $0x1c8] sm:$0xff] %v8404
        %8477 = vst [vmem:[%s433 + $0x1d0] sm:$0xff] %v8405
        %8478 = vst [vmem:[%s433 + $0x1d8] sm:$0xff] %v8406
        %8479 = vst [vmem:[%s433 + $0x1e0] sm:$0xff] %v8407
        %8480 = vst [vmem:[%s433 + $0x1e8] sm:$0xff] %v8408
        %8481 = vst [vmem:[%s433 + $0x1f0] sm:$0xff] %v8409
        %8482 = vst [vmem:[%s433 + $0x1f8] sm:$0xff] %v8410
        %8483 = vst [vmem:[%s433 + $0x200] sm:$0xff] %v8411
        %8484 = vst [vmem:[%s433 + $0x208] sm:$0xff] %v8412
        %8485 = vst [vmem:[%s433 + $0x210] sm:$0xff] %v8413
        %8486 = vst [vmem:[%s433 + $0x218] sm:$0xff] %v8414
        %8487 = vst [vmem:[%s433 + $0x220] sm:$0xff] %v8415
        %8488 = vst [vmem:[%s433 + $0x228] sm:$0xff] %v8416
        %8489 = vst [vmem:[%s433 + $0x230] sm:$0xff] %v8417
        %8490 = vst [vmem:[%s433 + $0x238] sm:$0xff] %v8418
        %s8491 = sand.u32 %s313, 1
        %s8492 = scalar_lea.sflag [#allocation3], %s8491
        %s8493 = sand.u32 %s313, 1
        %s8494 = smul.addr %s8493, 576
        %s8495 = scalar_lea.vmem [#allocation2], %s8494
        // Predicated region
        $region73: #{tpu_custom_call.1} parent=71 // pred_check
          %p8496 = pneg %p323
        $region74: #{tpu_custom_call.1} parent=71 // pred_check_branch
          %8498 = sbr.rel (%p8496) target = $region76
        $region75: #{tpu_custom_call.1} parent=71 // pred_region
          %s8500 = ssub.s32 9216, 9216
          %8501 = vsyncadd %s8492, %s8500
          %s8502 = smul.addr %s27, 72
          %s8503 = smul.addr %s8502, 128
          %s8504 = scalar_lea.hbm %s13, %s8503
          %s8505 = sshll.u32 %s8495, 4
          %s8506 = int_to_ptr.vmem [resolvable:$true] %s8505
          %8511 = dma.vmem_to_hbm [thread:$0]  %s8506, 9216, %s8504, %s8492, 1152, 1152, 72
        $region76: #{tpu_custom_call.1} parent=71 // pred_fallthru
          _
      $region72: #{tpu_custom_call.1} parent=5 // pred_fallthru
        _
      %p8512 = scmp.le.s32.totalorder 2, %s22
      // Predicated region
      $region77: #{tpu_custom_call.1} parent=5 // pred_check
        %p8513 = pneg %p8512
      $region78: #{tpu_custom_call.1} parent=5 // pred_check_branch
        %8515 = sbr.rel (%p8513) target = $region80
      $region79: #{tpu_custom_call.1} parent=5 // pred_region
        %s8516 = ssub.s32 %s22, 2
        // Predicated region
        $region81: #{tpu_custom_call.1} parent=79 // pred_check
          %p8517 = pneg %p329
        $region82: #{tpu_custom_call.1} parent=79 // pred_check_branch
          %8519 = sbr.rel (%p8517) target = $region84
        $region83: #{tpu_custom_call.1} parent=79 // pred_region
          %s8520 = sand.u32 %s314, 1
          %s8521 = scalar_lea.sflag [#allocation3], %s8520
          %s8522 = sand.u32 %s314, 1
          %s8523 = smul.addr %s8522, 576
          %s8524 = scalar_lea.vmem [#allocation2], %s8523
          %8525 = dma.done %s8521, 9216
        $region84: #{tpu_custom_call.1} parent=79 // pred_fallthru
          _
      $region80: #{tpu_custom_call.1} parent=5 // pred_fallthru
        _
    $region6: #{tpu_custom_call.1} parent=1 // loop_footer
      %s26 = sadd.s32 1, %s22
    $region7: #{tpu_custom_call.1} parent=1 // loop_footer_branch
      %21 = sbr.rel target = $region3
    $region8: #{tpu_custom_call.1} parent=1 // loop_exit
      _
    %8526 = vsyncpa [#allocation3], 1
    %s8527 = scalar_lea.sflag [#allocation3], 1
    %8528 = vsyncpa %s8527, 1

</llo_original>
